<compile_context>
chip_gen: v6e
topology: v6e:2x2x1
jax: 0.10.0
libtpu: 0.0.40
codegen_flags: <defaults>
</compile_context>

<pallas_src>
import jax
import jax.numpy as jnp
from jax import lax
from jax.experimental import pallas as pl
from jax.experimental.pallas import tpu as pltpu


def _round_up(x, m):
    return ((x + m - 1) // m) * m


def _is_v7x():
    try:
        kind = jax.devices()[0].device_kind.lower()
    except Exception:
        return False
    return ("v7" in kind) or ("7x" in kind)


# --------------------------------------------------------------------------
# Pallas kernel: one LSTM direction per grid step (0 = forward, 1 = backward)
# --------------------------------------------------------------------------
def _bilstm_dir_kernel(x_ref, lens_ref, wih_ref, whh_ref, b_ref,
                       out_ref, gx_ref):
    """
    x_ref   : (T*Bp, Dp)     bf16  time-major input, flattened (row t*Bp + b)
    lens_ref: (Bp, 1)        int32 sequence lengths (0 for padded batch rows)
    wih_ref : (Dp, 4*H2p)    bf16  input->gate weights of this direction
    whh_ref : (H2p, 4*H2p)   bf16  hidden->gate weights of this direction
    b_ref   : (1, 4*H2p)     f32   b_ih + b_hh (padded gate lanes are 0)
    out_ref : (T, Bp, H2p)   f32   this direction's half of the fused output
    gx_ref  : (T*Bp, 4*H2p)  bf16  VMEM scratch: hoisted input projection
    Gate layout along the 4*H2p axis is [i, f, o, g] (sigmoids contiguous).
    """
    T, Bp, H2p = out_ref.shape
    d = pl.program_id(0)                      # 0 = forward, 1 = backward

    # ---- hoisted input projection: one big MXU matmul, stored bf16 ----
    # TODO(synk): for very long T, chunk this projection over time
    # (emit_pipeline with X left in HBM) instead of one full slab.
    gx_ref[...] = jnp.dot(
        x_ref[...], wih_ref[...],
        preferred_element_type=jnp.float32).astype(jnp.bfloat16)

    lens = lens_ref[...]                      # (Bp, 1) int32
    bias = b_ref[...]                         # (1, 4*H2p) f32

    # Bounded unroll (largest of 8/4/2/1 dividing T): keeps LLO visibility
    # without exploding code size / vreg live ranges for realistic T.
    unroll = next(u for u in (8, 4, 2, 1) if T % u == 0)

    def make_step(time_of):
        def step(s, carry):
            h, c = carry
            t = time_of(s)                    # affine: s  or  T-1-s
            base = pl.multiple_of(t * Bp, Bp)
            # Whh is read from VMEM every step (vld feeds MXU) instead of
            # being pinned in vregs across the whole recurrence.
            gates = (jnp.dot(h.astype(jnp.bfloat16), whh_ref[...],
                             preferred_element_type=jnp.float32)
                     + gx_ref[pl.ds(base, Bp), :]     # bf16 -> promoted to f32
                     + bias)
            # One contiguous sigmoid slab + one tanh per step.
            # TODO(synk): on v6e/v7x the activations could run in bf16 on the
            # EUP (keep c/h in f32); kept f32 here for v5e and tolerance.
            sig = jax.nn.sigmoid(gates[:, :3 * H2p])
            i = sig[:, 0 * H2p:1 * H2p]
            f = sig[:, 1 * H2p:2 * H2p]
            o = sig[:, 2 * H2p:3 * H2p]
            g = jnp.tanh(gates[:, 3 * H2p:4 * H2p])
            c_new = f * c + i * g
            h_new = o * jnp.tanh(c_new)
            # packed-sequence semantics: state & output are zero for t>=len(b);
            # the backward pass therefore starts fresh at t = len(b) - 1.
            m = (lens > t).astype(jnp.float32)        # (Bp, 1)
            h = h_new * m
            c = c_new * m
            out_ref[t] = h                            # dense (Bp, H2p) store
            return (h, c)
        return step

    def zeros():
        z = jnp.zeros((Bp, H2p), jnp.float32)
        return (z, z)

    # Direction-specialized loops: no per-step jnp.where on the time index.
    @pl.when(d == 0)
    def _():
        lax.fori_loop(0, T, make_step(lambda s: s), zeros(), unroll=unroll)

    @pl.when(d == 1)
    def _():
        lax.fori_loop(0, T, make_step(lambda s: T - 1 - s), zeros(),
                      unroll=unroll)


def bilstm_pallas(x2d_bf16, lens_col, wih_st, whh_st, b_st, T, Bp):
    TB, Dp = x2d_bf16.shape
    H2p = whh_st.shape[1]
    G = 4 * H2p

    is_v7 = _is_v7x()
    # v7x: 2 TensorCores -> split the direction axis across cores; 64 MiB VMEM
    # per TC so keep the scoped limit at 32 MiB.  v5e/v6e: single TC (serial
    # direction loop), 128 MiB VMEM -> raise the limit.
    dim_sem = (pltpu.CORE_PARALLEL,) if is_v7 else ("parallel",)
    vmem_limit = (32 if is_v7 else 64) * 1024 * 1024

    return pl.pallas_call(
        _bilstm_dir_kernel,
        grid=(2,),  # direction axis: fwd / bwd
        in_specs=[
            # TODO(synk): pipeline_mode=pl.Buffered(1) on x/lens (constant
            # index_map) would avoid double-buffering the largest input.
            pl.BlockSpec((TB, Dp), lambda d: (0, 0)),
            pl.BlockSpec((Bp, 1), lambda d: (0, 0)),
            pl.BlockSpec((None, Dp, G), lambda d: (d, 0, 0)),
            pl.BlockSpec((None, H2p, G), lambda d: (d, 0, 0)),
            pl.BlockSpec((None, 1, G), lambda d: (d, 0, 0)),
        ],
        # Fused output: direction d owns the lane block [d*H2p, (d+1)*H2p).
        out_specs=pl.BlockSpec((T, Bp, H2p), lambda d: (0, 0, d)),
        out_shape=jax.ShapeDtypeStruct((T, Bp, 2 * H2p), jnp.float32),
        scratch_shapes=[pltpu.VMEM((TB, G), jnp.bfloat16)],
        compiler_params=pltpu.CompilerParams(
            dimension_semantics=dim_sem,
            vmem_limit_bytes=vmem_limit),
    )(x2d_bf16, lens_col, wih_st, whh_st, b_st)


# --------------------------------------------------------------------------
# Parameter preparation (lane-aligned padded gates in [i,f,o,g] order,
# embedding dim padded to a multiple of 128, directions stacked).
# --------------------------------------------------------------------------
_GATE_ORDER = (0, 1, 3, 2)   # PyTorch [i, f, g, o]  ->  kernel [i, f, o, g]


def _pad_gate_cols(w, H2, H2p):
    """(..., 4*H2) -> (..., 4*H2p): slot k holds gate _GATE_ORDER[k]; pads 0."""
    pad = [(0, 0)] * (w.ndim - 1) + [(0, H2p - H2)]
    return jnp.concatenate(
        [jnp.pad(w[..., g * H2:(g + 1) * H2], pad) for g in _GATE_ORDER],
        axis=-1)


def prepare_encoder_params(params):
    H2 = params["whh_f"].shape[0]
    H2p = _round_up(H2, 128)
    D = params["wih_f"].shape[0]
    Dp = _round_up(D, 128)

    def pack(wih, whh, b):
        wih_p = _pad_gate_cols(wih, H2, H2p)                 # (D, 4*H2p)
        wih_p = jnp.pad(wih_p, ((0, Dp - D), (0, 0)))        # (Dp, 4*H2p)
        whh_p = _pad_gate_cols(whh, H2, H2p)                 # (H2, 4*H2p)
        whh_p = jnp.pad(whh_p, ((0, H2p - H2), (0, 0)))      # (H2p, 4*H2p)
        b_p = _pad_gate_cols(b, H2, H2p)                     # (1, 4*H2p)
        return wih_p, whh_p, b_p

    wf, hf, bf = pack(params["wih_f"], params["whh_f"], params["b_f"])
    wb, hb, bb = pack(params["wih_b"], params["whh_b"], params["b_b"])

    # Frozen table: pad lanes to Dp and store bf16 (halves gather traffic,
    # removes the separate cast pass over (T,B,D)).
    emb = jnp.pad(params["word_embedding"],
                  ((0, 0), (0, Dp - D))).astype(jnp.bfloat16)
    return {
        "word_embedding": emb,                               # (vocab, Dp) bf16
        "wih": jnp.stack([wf, wb]).astype(jnp.bfloat16),     # (2, Dp, 4*H2p)
        "whh": jnp.stack([hf, hb]).astype(jnp.bfloat16),     # (2, H2p, 4*H2p)
        "b": jnp.stack([bf, bb]).astype(jnp.float32),        # (2, 1, 4*H2p)
        "H2": H2,
        "H2p": H2p,
        "Dp": Dp,
    }


# --------------------------------------------------------------------------
# Encoder forward (mirrors Encoder.forward, eval mode)
# --------------------------------------------------------------------------
def encoder_forward(word_seq_tensor, word_seq_lens, enc_params, trigger_position):
    emb_table = enc_params["word_embedding"]                  # (vocab, Dp) bf16
    H2 = enc_params["H2"]
    H2p = enc_params["H2p"]
    H = 2 * H2
    B, T = word_seq_tensor.shape
    Dp = emb_table.shape[1]
    Bp = _round_up(max(B, 8), 8)

    # Embedding lookup directly in time-major order (transpose the int ids,
    # not the (B,T,D) activations).  Dropout (self.word_drop) is identity here.
    # TODO(synk): fuse this gather into the kernel (scalar-prefetched ids +
    # per-row DMA) to avoid one HBM round-trip of the activations (v5e win).
    word_rep_tm = emb_table[word_seq_tensor.T]                # (T, B, Dp) bf16

    x_tm = jnp.pad(word_rep_tm, ((0, 0), (0, Bp - B), (0, 0)))  # (T, Bp, Dp)
    x2d = x_tm.reshape(T * Bp, Dp)
    lens_col = jnp.pad(word_seq_lens.astype(jnp.int32), (0, Bp - B))[:, None]

    # Masked BiLSTM == pack_padded_sequence + LSTM + pad_packed_sequence
    # (the sort / recover_idx permutation is semantically a no-op here).
    slab = bilstm_pallas(x2d, lens_col, enc_params["wih"], enc_params["whh"],
                         enc_params["b"], T, Bp)              # (T, Bp, 2*H2p)

    out_f = slab[:, :B, :H2]
    out_b = slab[:, :B, H2p:H2p + H2]
    output_tm = jnp.concatenate([out_f, out_b], axis=-1)      # (T, B, H)

    # No host sync: keep the static padded length T (positions past each
    # sequence length are exact zeros; torch's pad_packed_sequence trims to
    # max(word_seq_lens) — callers can slice with a static bound if needed).
    output = jnp.transpose(output_tm, (1, 0, 2))              # (B, T, H)

    sentence_mask = (word_seq_tensor != 0).astype(jnp.float32)  # (B, T)

    trigger_vec = None
    trigger_mask = None
    if trigger_position is not None:
        max_trig = max(len(tp) for tp in trigger_position)
        idx = jnp.asarray(
            [list(tp) + [0] * (max_trig - len(tp)) for tp in trigger_position],
            dtype=jnp.int32)                                  # (B, max_trig)
        trigger_mask = jnp.asarray(
            [[1.0] * len(tp) + [0.0] * (max_trig - len(tp))
             for tp in trigger_position], dtype=jnp.float32)  # (B, max_trig)
        gathered = jnp.take_along_axis(output, idx[:, :, None], axis=1)
        trigger_vec = gathered * trigger_mask[:, :, None]     # pads -> zeros

    return output, sentence_mask, trigger_vec, trigger_mask


# --------------------------------------------------------------------------
# Synthetic parameters (shapes follow nn.Embedding / nn.LSTM, pre-transposed,
# combined biases b_ih + b_hh, PyTorch gate order [i, f, g, o]).
# --------------------------------------------------------------------------
def init_params(key, vocab, embedding_dim, hidden_dim):
    H2 = hidden_dim // 2
    ks = jax.random.split(key, 9)
    emb = 0.5 * jax.random.normal(ks[0], (vocab, embedding_dim), jnp.float32)
    emb = emb.at[0].set(0.0)   # index 0 is padding
    s = 0.2

    def u(k, shape):
        return jax.random.uniform(k, shape, jnp.float32, -s, s)

    return {
        "word_embedding": emb,
        "wih_f": u(ks[1], (embedding_dim, 4 * H2)),
        "whh_f": u(ks[2], (H2, 4 * H2)),
        "b_f":   u(ks[3], (1, 4 * H2)) + u(ks[4], (1, 4 * H2)),
        "wih_b": u(ks[5], (embedding_dim, 4 * H2)),
        "whh_b": u(ks[6], (H2, 4 * H2)),
        "b_b":   u(ks[7], (1, 4 * H2)) + u(ks[8], (1, 4 * H2)),
    }

# TODO(synk): CharBiLSTM branch (config.use_char_rnn=True) and context_emb
# path not implemented; this kernel covers the default word-embedding path.


# --------------------------------------------------------------------------
# Pure-JAX reference (same bf16-operand / f32-accumulation scheme) for a
# lightweight numeric sanity check.
# --------------------------------------------------------------------------
def _bilstm_reference(word_seq_tensor, word_seq_lens, params):
    emb = params["word_embedding"]
    x_tm = jnp.transpose(emb[word_seq_tensor].astype(jnp.float32), (1, 0, 2))
    T, B, _ = x_tm.shape
    H2 = params["whh_f"].shape[0]

    def run(wih, whh, b, reverse):
        wih16 = wih.astype(jnp.bfloat16)
        whh16 = whh.astype(jnp.bfloat16)

        def step(carry, t):
            h, c = carry
            g = (jnp.dot(x_tm[t].astype(jnp.bfloat16), wih16,
                         preferred_element_type=jnp.float32)
                 + jnp.dot(h.astype(jnp.bfloat16), whh16,
                           preferred_element_type=jnp.float32) + b)
            i = jax.nn.sigmoid(g[:, :H2])
            f = jax.nn.sigmoid(g[:, H2:2 * H2])
            gg = jnp.tanh(g[:, 2 * H2:3 * H2])
            o = jax.nn.sigmoid(g[:, 3 * H2:])
            c_new = f * c + i * gg
            h_new = o * jnp.tanh(c_new)
            m = (t < word_seq_lens).astype(jnp.float32)[:, None]
            return (h_new * m, c_new * m), h_new * m

        ts = jnp.arange(T)
        ts = ts[::-1] if reverse else ts
        init = (jnp.zeros((B, H2), jnp.float32), jnp.zeros((B, H2), jnp.float32))
        _, hs = lax.scan(step, init, ts)
        return hs[::-1] if reverse else hs                    # (T, B, H2)

    out_f = run(params["wih_f"], params["whh_f"], params["b_f"], False)
    out_b = run(params["wih_b"], params["whh_b"], params["b_b"], True)
    return jnp.transpose(jnp.concatenate([out_f, out_b], -1), (1, 0, 2))


if __name__ == "__main__":
    B, T = 2, 8
    vocab, embedding_dim, hidden_dim = 20, 32, 32

    key = jax.random.PRNGKey(0)
    k_par, k_tok = jax.random.split(key)
    params = init_params(k_par, vocab, embedding_dim, hidden_dim)
    enc_params = prepare_encoder_params(params)

    word_seq_lens = jnp.asarray([8, 5], dtype=jnp.int32)
    tokens = jax.random.randint(k_tok, (B, T), 1, vocab, dtype=jnp.int32)
    pad = jnp.arange(T, dtype=jnp.int32)[None, :] >= word_seq_lens[:, None]
    word_seq_tensor = jnp.where(pad, 0, tokens)               # 0 = pad token

    trigger_position = [[1, 4, 5], [0, 2]]

    output, sentence_mask, trigger_vec, trigger_mask = encoder_forward(
        word_seq_tensor, word_seq_lens, enc_params, trigger_position)
    jax.block_until_ready((output, sentence_mask, trigger_vec, trigger_mask))

    assert output.shape == (B, T, hidden_dim)
    assert sentence_mask.shape == (B, T)
    assert trigger_vec.shape == (B, 3, hidden_dim)
    assert trigger_mask.shape == (B, 3)

    ref = _bilstm_reference(word_seq_tensor, word_seq_lens, params)
    err = float(jnp.max(jnp.abs(output - ref)))
    assert err < 1e-2, f"mismatch vs reference: {err}"

    print("KERNEL_OK")
</pallas_src>

<mosaic_0001>
module attributes {stable_mosaic.version = 11 : i64} {
  func.func @_bilstm_dir_kernel(%arg0: i32, %arg1: memref<64x128xbf16, #tpu.memory_space<vmem>>, %arg2: memref<8x1xi32, #tpu.memory_space<vmem>>, %arg3: memref<1x128x512xbf16, #tpu.memory_space<vmem>>, %arg4: memref<1x128x512xbf16, #tpu.memory_space<vmem>>, %arg5: memref<1x1x512xf32, #tpu.memory_space<vmem>>, %arg6: memref<8x8x128xf32, #tpu.memory_space<vmem>>, %arg7: memref<64x512xbf16, #tpu.memory_space<vmem>>) attributes {dimension_semantics = [#tpu.dimension_semantics<parallel>], iteration_bounds = array<i64: 2>, scalar_prefetch = 0 : i64, scratch_operands = 1 : i64, tpu.core_type = #tpu.core_type<tc>, window_params = [{pipeline_mode = #tpu.pipeline_mode<synchronous>, transform_indices = @transform_0, window_bounds = array<i64: 64, 128>}, {pipeline_mode = #tpu.pipeline_mode<synchronous>, transform_indices = @transform_1, window_bounds = array<i64: 8, 1>}, {transform_indices = @transform_2, window_bounds = array<i64: 1, 128, 512>}, {transform_indices = @transform_3, window_bounds = array<i64: 1, 128, 512>}, {transform_indices = @transform_4, window_bounds = array<i64: 1, 1, 512>}, {transform_indices = @transform_5, window_bounds = array<i64: 8, 8, 128>}]} {
    %c0 = arith.constant 0 : index
    %c0_0 = arith.constant 0 : index
    %0 = vector.load %arg1[%c0, %c0_0] : memref<64x128xbf16, #tpu.memory_space<vmem>>, vector<64x128xbf16>
    %c0_1 = arith.constant 0 : index
    %c0_2 = arith.constant 0 : index
    %c0_3 = arith.constant 0 : index
    %1 = vector.load %arg3[%c0_1, %c0_2, %c0_3] : memref<1x128x512xbf16, #tpu.memory_space<vmem>>, vector<1x128x512xbf16>
    %2 = vector.shape_cast %1 : vector<1x128x512xbf16> to vector<128x512xbf16>
    %cst = arith.constant dense<0.000000e+00> : vector<64x512xf32>
    %3 = tpu.matmul %0, %2, %cst {dimension_numbers = #tpu.dot_dimension_numbers<[1], [0], [0], [1], [0, 0, 1, 1], [], []>} : vector<64x128xbf16>, vector<128x512xbf16>, vector<64x512xf32> -> vector<64x512xf32>
    %4 = arith.truncf %3 : vector<64x512xf32> to vector<64x512xbf16>
    %c0_4 = arith.constant 0 : index
    %c0_5 = arith.constant 0 : index
    %5 = vector.load %arg7[%c0_4, %c0_5] : memref<64x512xbf16, #tpu.memory_space<vmem>>, vector<64x512xbf16>
    tpu.vector_store %arg7[%c0_4, %c0_5], %4 {strides = array<i32>} : memref<64x512xbf16, #tpu.memory_space<vmem>>, vector<64x512xbf16>,
    %c0_6 = arith.constant 0 : index
    %c0_7 = arith.constant 0 : index
    %6 = vector.load %arg2[%c0_6, %c0_7] : memref<8x1xi32, #tpu.memory_space<vmem>>, vector<8x1xi32>
    %c0_8 = arith.constant 0 : index
    %c0_9 = arith.constant 0 : index
    %c0_10 = arith.constant 0 : index
    %7 = vector.load %arg5[%c0_8, %c0_9, %c0_10] : memref<1x1x512xf32, #tpu.memory_space<vmem>>, vector<1x1x512xf32>
    %8 = vector.shape_cast %7 : vector<1x1x512xf32> to vector<1x512xf32>
    %c0_i32 = arith.constant 0 : i32
    %9 = arith.cmpi eq, %arg0, %c0_i32 : i32
    %10 = arith.extui %9 : i1 to i32
    %c0_i32_11 = arith.constant 0 : i32
    %11 = arith.cmpi ne, %10, %c0_i32_11 : i32
    scf.if %11 {
      %cst_13 = arith.constant 0.000000e+00 : f32
      %15 = vector.broadcast %cst_13 : f32 to vector<8x128xf32>
      %c0_i32_14 = arith.constant 0 : i32
      %c8_i32 = arith.constant 8 : i32
      %16 = arith.muli %c0_i32_14, %c8_i32 : i32
      %17 = tpu.assume_multiple %16, 8 : i32
      %18 = arith.truncf %15 : vector<8x128xf32> to vector<8x128xbf16>
      %c0_15 = arith.constant 0 : index
      %c0_16 = arith.constant 0 : index
      %c0_17 = arith.constant 0 : index
      %19 = vector.load %arg4[%c0_15, %c0_16, %c0_17] : memref<1x128x512xbf16, #tpu.memory_space<vmem>>, vector<1x128x512xbf16>
      %20 = vector.shape_cast %19 : vector<1x128x512xbf16> to vector<128x512xbf16>
      %cst_18 = arith.constant dense<0.000000e+00> : vector<8x512xf32>
      %21 = tpu.matmul %18, %20, %cst_18 {dimension_numbers = #tpu.dot_dimension_numbers<[1], [0], [0], [1], [0, 0, 1, 1], [], []>} : vector<8x128xbf16>, vector<128x512xbf16>, vector<8x512xf32> -> vector<8x512xf32>
      %22 = arith.index_cast %17 : i32 to index
      %c0_19 = arith.constant 0 : index
      %23 = vector.load %arg7[%22, %c0_19] : memref<64x512xbf16, #tpu.memory_space<vmem>>, vector<8x512xbf16>
      %24 = arith.extf %23 : vector<8x512xbf16> to vector<8x512xf32>
      %25 = arith.addf %21, %24 : vector<8x512xf32>
      %26 = vector.broadcast %8 : vector<1x512xf32> to vector<8x512xf32>
      %27 = arith.addf %25, %26 : vector<8x512xf32>
      %28 = vector.extract_strided_slice %27 {offsets = [0, 0], sizes = [8, 384], strides = [1, 1]} : vector<8x512xf32> to vector<8x384xf32>
      %29 = arith.negf %28 : vector<8x384xf32>
      %30 = math.exp %29 : vector<8x384xf32>
      %cst_20 = arith.constant 1.000000e+00 : f32
      %31 = vector.broadcast %cst_20 : f32 to vector<8x384xf32>
      %32 = arith.addf %31, %30 : vector<8x384xf32>
      %33 = arith.divf %31, %32 : vector<8x384xf32>
      %34 = vector.extract_strided_slice %33 {offsets = [0, 0], sizes = [8, 128], strides = [1, 1]} : vector<8x384xf32> to vector<8x128xf32>
      %35 = vector.extract_strided_slice %33 {offsets = [0, 128], sizes = [8, 128], strides = [1, 1]} : vector<8x384xf32> to vector<8x128xf32>
      %36 = vector.extract_strided_slice %33 {offsets = [0, 256], sizes = [8, 128], strides = [1, 1]} : vector<8x384xf32> to vector<8x128xf32>
      %37 = vector.extract_strided_slice %27 {offsets = [0, 384], sizes = [8, 128], strides = [1, 1]} : vector<8x512xf32> to vector<8x128xf32>
      %38 = math.tanh %37 : vector<8x128xf32>
      %39 = arith.mulf %35, %15 : vector<8x128xf32>
      %40 = arith.mulf %34, %38 : vector<8x128xf32>
      %41 = arith.addf %39, %40 : vector<8x128xf32>
      %42 = math.tanh %41 : vector<8x128xf32>
      %43 = arith.mulf %36, %42 : vector<8x128xf32>
      %44 = vector.broadcast %c0_i32_14 : i32 to vector<8x1xi32>
      %45 = arith.cmpi sgt, %6, %44 : vector<8x1xi32>
      %46 = arith.extui %45 : vector<8x1xi1> to vector<8x1xi32>
      %47 = arith.sitofp %46 : vector<8x1xi32> to vector<8x1xf32>
      %48 = vector.broadcast %47 : vector<8x1xf32> to vector<8x128xf32>
      %49 = arith.mulf %43, %48 : vector<8x128xf32>
      %50 = vector.broadcast %47 : vector<8x1xf32> to vector<8x128xf32>
      %51 = arith.mulf %41, %50 : vector<8x128xf32>
      %52 = arith.index_cast %c0_i32_14 : i32 to index
      %c0_21 = arith.constant 0 : index
      %c0_22 = arith.constant 0 : index
      %53 = vector.load %arg6[%52, %c0_21, %c0_22] : memref<8x8x128xf32, #tpu.memory_space<vmem>>, vector<1x8x128xf32>
      %54 = vector.shape_cast %53 : vector<1x8x128xf32> to vector<8x128xf32>
      %55 = vector.shape_cast %49 : vector<8x128xf32> to vector<1x8x128xf32>
      tpu.vector_store %arg6[%52, %c0_21, %c0_22], %55 {strides = array<i32>} : memref<8x8x128xf32, #tpu.memory_space<vmem>>, vector<1x8x128xf32>,
      %c1_i32_23 = arith.constant 1 : i32
      %c8_i32_24 = arith.constant 8 : i32
      %56 = arith.muli %c1_i32_23, %c8_i32_24 : i32
      %57 = tpu.assume_multiple %56, 8 : i32
      %58 = arith.truncf %49 : vector<8x128xf32> to vector<8x128xbf16>
      %c0_25 = arith.constant 0 : index
      %c0_26 = arith.constant 0 : index
      %c0_27 = arith.constant 0 : index
      %59 = vector.load %arg4[%c0_25, %c0_26, %c0_27] : memref<1x128x512xbf16, #tpu.memory_space<vmem>>, vector<1x128x512xbf16>
      %60 = vector.shape_cast %59 : vector<1x128x512xbf16> to vector<128x512xbf16>
      %cst_28 = arith.constant dense<0.000000e+00> : vector<8x512xf32>
      %61 = tpu.matmul %58, %60, %cst_28 {dimension_numbers = #tpu.dot_dimension_numbers<[1], [0], [0], [1], [0, 0, 1, 1], [], []>} : vector<8x128xbf16>, vector<128x512xbf16>, vector<8x512xf32> -> vector<8x512xf32>
      %62 = arith.index_cast %57 : i32 to index
      %c0_29 = arith.constant 0 : index
      %63 = vector.load %arg7[%62, %c0_29] : memref<64x512xbf16, #tpu.memory_space<vmem>>, vector<8x512xbf16>
      %64 = arith.extf %63 : vector<8x512xbf16> to vector<8x512xf32>
      %65 = arith.addf %61, %64 : vector<8x512xf32>
      %66 = vector.broadcast %8 : vector<1x512xf32> to vector<8x512xf32>
      %67 = arith.addf %65, %66 : vector<8x512xf32>
      %68 = vector.extract_strided_slice %67 {offsets = [0, 0], sizes = [8, 384], strides = [1, 1]} : vector<8x512xf32> to vector<8x384xf32>
      %69 = arith.negf %68 : vector<8x384xf32>
      %70 = math.exp %69 : vector<8x384xf32>
      %cst_30 = arith.constant 1.000000e+00 : f32
      %71 = vector.broadcast %cst_30 : f32 to vector<8x384xf32>
      %72 = arith.addf %71, %70 : vector<8x384xf32>
      %73 = arith.divf %71, %72 : vector<8x384xf32>
      %74 = vector.extract_strided_slice %73 {offsets = [0, 0], sizes = [8, 128], strides = [1, 1]} : vector<8x384xf32> to vector<8x128xf32>
      %75 = vector.extract_strided_slice %73 {offsets = [0, 128], sizes = [8, 128], strides = [1, 1]} : vector<8x384xf32> to vector<8x128xf32>
      %76 = vector.extract_strided_slice %73 {offsets = [0, 256], sizes = [8, 128], strides = [1, 1]} : vector<8x384xf32> to vector<8x128xf32>
      %77 = vector.extract_strided_slice %67 {offsets = [0, 384], sizes = [8, 128], strides = [1, 1]} : vector<8x512xf32> to vector<8x128xf32>
      %78 = math.tanh %77 : vector<8x128xf32>
      %79 = arith.mulf %75, %51 : vector<8x128xf32>
      %80 = arith.mulf %74, %78 : vector<8x128xf32>
      %81 = arith.addf %79, %80 : vector<8x128xf32>
      %82 = math.tanh %81 : vector<8x128xf32>
      %83 = arith.mulf %76, %82 : vector<8x128xf32>
      %84 = vector.broadcast %c1_i32_23 : i32 to vector<8x1xi32>
      %85 = arith.cmpi sgt, %6, %84 : vector<8x1xi32>
      %86 = arith.extui %85 : vector<8x1xi1> to vector<8x1xi32>
      %87 = arith.sitofp %86 : vector<8x1xi32> to vector<8x1xf32>
      %88 = vector.broadcast %87 : vector<8x1xf32> to vector<8x128xf32>
      %89 = arith.mulf %83, %88 : vector<8x128xf32>
      %90 = vector.broadcast %87 : vector<8x1xf32> to vector<8x128xf32>
      %91 = arith.mulf %81, %90 : vector<8x128xf32>
      %92 = arith.index_cast %c1_i32_23 : i32 to index
      %c0_31 = arith.constant 0 : index
      %c0_32 = arith.constant 0 : index
      %93 = vector.load %arg6[%92, %c0_31, %c0_32] : memref<8x8x128xf32, #tpu.memory_space<vmem>>, vector<1x8x128xf32>
      %94 = vector.shape_cast %93 : vector<1x8x128xf32> to vector<8x128xf32>
      %95 = vector.shape_cast %89 : vector<8x128xf32> to vector<1x8x128xf32>
      tpu.vector_store %arg6[%92, %c0_31, %c0_32], %95 {strides = array<i32>} : memref<8x8x128xf32, #tpu.memory_space<vmem>>, vector<1x8x128xf32>,
      %c2_i32 = arith.constant 2 : i32
      %c8_i32_33 = arith.constant 8 : i32
      %96 = arith.muli %c2_i32, %c8_i32_33 : i32
      %97 = tpu.assume_multiple %96, 8 : i32
      %98 = arith.truncf %89 : vector<8x128xf32> to vector<8x128xbf16>
      %c0_34 = arith.constant 0 : index
      %c0_35 = arith.constant 0 : index
      %c0_36 = arith.constant 0 : index
      %99 = vector.load %arg4[%c0_34, %c0_35, %c0_36] : memref<1x128x512xbf16, #tpu.memory_space<vmem>>, vector<1x128x512xbf16>
      %100 = vector.shape_cast %99 : vector<1x128x512xbf16> to vector<128x512xbf16>
      %cst_37 = arith.constant dense<0.000000e+00> : vector<8x512xf32>
      %101 = tpu.matmul %98, %100, %cst_37 {dimension_numbers = #tpu.dot_dimension_numbers<[1], [0], [0], [1], [0, 0, 1, 1], [], []>} : vector<8x128xbf16>, vector<128x512xbf16>, vector<8x512xf32> -> vector<8x512xf32>
      %102 = arith.index_cast %97 : i32 to index
      %c0_38 = arith.constant 0 : index
      %103 = vector.load %arg7[%102, %c0_38] : memref<64x512xbf16, #tpu.memory_space<vmem>>, vector<8x512xbf16>
      %104 = arith.extf %103 : vector<8x512xbf16> to vector<8x512xf32>
      %105 = arith.addf %101, %104 : vector<8x512xf32>
      %106 = vector.broadcast %8 : vector<1x512xf32> to vector<8x512xf32>
      %107 = arith.addf %105, %106 : vector<8x512xf32>
      %108 = vector.extract_strided_slice %107 {offsets = [0, 0], sizes = [8, 384], strides = [1, 1]} : vector<8x512xf32> to vector<8x384xf32>
      %109 = arith.negf %108 : vector<8x384xf32>
      %110 = math.exp %109 : vector<8x384xf32>
      %cst_39 = arith.constant 1.000000e+00 : f32
      %111 = vector.broadcast %cst_39 : f32 to vector<8x384xf32>
      %112 = arith.addf %111, %110 : vector<8x384xf32>
      %113 = arith.divf %111, %112 : vector<8x384xf32>
      %114 = vector.extract_strided_slice %113 {offsets = [0, 0], sizes = [8, 128], strides = [1, 1]} : vector<8x384xf32> to vector<8x128xf32>
      %115 = vector.extract_strided_slice %113 {offsets = [0, 128], sizes = [8, 128], strides = [1, 1]} : vector<8x384xf32> to vector<8x128xf32>
      %116 = vector.extract_strided_slice %113 {offsets = [0, 256], sizes = [8, 128], strides = [1, 1]} : vector<8x384xf32> to vector<8x128xf32>
      %117 = vector.extract_strided_slice %107 {offsets = [0, 384], sizes = [8, 128], strides = [1, 1]} : vector<8x512xf32> to vector<8x128xf32>
      %118 = math.tanh %117 : vector<8x128xf32>
      %119 = arith.mulf %115, %91 : vector<8x128xf32>
      %120 = arith.mulf %114, %118 : vector<8x128xf32>
      %121 = arith.addf %119, %120 : vector<8x128xf32>
      %122 = math.tanh %121 : vector<8x128xf32>
      %123 = arith.mulf %116, %122 : vector<8x128xf32>
      %124 = vector.broadcast %c2_i32 : i32 to vector<8x1xi32>
      %125 = arith.cmpi sgt, %6, %124 : vector<8x1xi32>
      %126 = arith.extui %125 : vector<8x1xi1> to vector<8x1xi32>
      %127 = arith.sitofp %126 : vector<8x1xi32> to vector<8x1xf32>
      %128 = vector.broadcast %127 : vector<8x1xf32> to vector<8x128xf32>
      %129 = arith.mulf %123, %128 : vector<8x128xf32>
      %130 = vector.broadcast %127 : vector<8x1xf32> to vector<8x128xf32>
      %131 = arith.mulf %121, %130 : vector<8x128xf32>
      %132 = arith.index_cast %c2_i32 : i32 to index
      %c0_40 = arith.constant 0 : index
      %c0_41 = arith.constant 0 : index
      %133 = vector.load %arg6[%132, %c0_40, %c0_41] : memref<8x8x128xf32, #tpu.memory_space<vmem>>, vector<1x8x128xf32>
      %134 = vector.shape_cast %133 : vector<1x8x128xf32> to vector<8x128xf32>
      %135 = vector.shape_cast %129 : vector<8x128xf32> to vector<1x8x128xf32>
      tpu.vector_store %arg6[%132, %c0_40, %c0_41], %135 {strides = array<i32>} : memref<8x8x128xf32, #tpu.memory_space<vmem>>, vector<1x8x128xf32>,
      %c3_i32 = arith.constant 3 : i32
      %c8_i32_42 = arith.constant 8 : i32
      %136 = arith.muli %c3_i32, %c8_i32_42 : i32
      %137 = tpu.assume_multiple %136, 8 : i32
      %138 = arith.truncf %129 : vector<8x128xf32> to vector<8x128xbf16>
      %c0_43 = arith.constant 0 : index
      %c0_44 = arith.constant 0 : index
      %c0_45 = arith.constant 0 : index
      %139 = vector.load %arg4[%c0_43, %c0_44, %c0_45] : memref<1x128x512xbf16, #tpu.memory_space<vmem>>, vector<1x128x512xbf16>
      %140 = vector.shape_cast %139 : vector<1x128x512xbf16> to vector<128x512xbf16>
      %cst_46 = arith.constant dense<0.000000e+00> : vector<8x512xf32>
      %141 = tpu.matmul %138, %140, %cst_46 {dimension_numbers = #tpu.dot_dimension_numbers<[1], [0], [0], [1], [0, 0, 1, 1], [], []>} : vector<8x128xbf16>, vector<128x512xbf16>, vector<8x512xf32> -> vector<8x512xf32>
      %142 = arith.index_cast %137 : i32 to index
      %c0_47 = arith.constant 0 : index
      %143 = vector.load %arg7[%142, %c0_47] : memref<64x512xbf16, #tpu.memory_space<vmem>>, vector<8x512xbf16>
      %144 = arith.extf %143 : vector<8x512xbf16> to vector<8x512xf32>
      %145 = arith.addf %141, %144 : vector<8x512xf32>
      %146 = vector.broadcast %8 : vector<1x512xf32> to vector<8x512xf32>
      %147 = arith.addf %145, %146 : vector<8x512xf32>
      %148 = vector.extract_strided_slice %147 {offsets = [0, 0], sizes = [8, 384], strides = [1, 1]} : vector<8x512xf32> to vector<8x384xf32>
      %149 = arith.negf %148 : vector<8x384xf32>
      %150 = math.exp %149 : vector<8x384xf32>
      %cst_48 = arith.constant 1.000000e+00 : f32
      %151 = vector.broadcast %cst_48 : f32 to vector<8x384xf32>
      %152 = arith.addf %151, %150 : vector<8x384xf32>
      %153 = arith.divf %151, %152 : vector<8x384xf32>
      %154 = vector.extract_strided_slice %153 {offsets = [0, 0], sizes = [8, 128], strides = [1, 1]} : vector<8x384xf32> to vector<8x128xf32>
      %155 = vector.extract_strided_slice %153 {offsets = [0, 128], sizes = [8, 128], strides = [1, 1]} : vector<8x384xf32> to vector<8x128xf32>
      %156 = vector.extract_strided_slice %153 {offsets = [0, 256], sizes = [8, 128], strides = [1, 1]} : vector<8x384xf32> to vector<8x128xf32>
      %157 = vector.extract_strided_slice %147 {offsets = [0, 384], sizes = [8, 128], strides = [1, 1]} : vector<8x512xf32> to vector<8x128xf32>
      %158 = math.tanh %157 : vector<8x128xf32>
      %159 = arith.mulf %155, %131 : vector<8x128xf32>
      %160 = arith.mulf %154, %158 : vector<8x128xf32>
      %161 = arith.addf %159, %160 : vector<8x128xf32>
      %162 = math.tanh %161 : vector<8x128xf32>
      %163 = arith.mulf %156, %162 : vector<8x128xf32>
      %164 = vector.broadcast %c3_i32 : i32 to vector<8x1xi32>
      %165 = arith.cmpi sgt, %6, %164 : vector<8x1xi32>
      %166 = arith.extui %165 : vector<8x1xi1> to vector<8x1xi32>
      %167 = arith.sitofp %166 : vector<8x1xi32> to vector<8x1xf32>
      %168 = vector.broadcast %167 : vector<8x1xf32> to vector<8x128xf32>
      %169 = arith.mulf %163, %168 : vector<8x128xf32>
      %170 = vector.broadcast %167 : vector<8x1xf32> to vector<8x128xf32>
      %171 = arith.mulf %161, %170 : vector<8x128xf32>
      %172 = arith.index_cast %c3_i32 : i32 to index
      %c0_49 = arith.constant 0 : index
      %c0_50 = arith.constant 0 : index
      %173 = vector.load %arg6[%172, %c0_49, %c0_50] : memref<8x8x128xf32, #tpu.memory_space<vmem>>, vector<1x8x128xf32>
      %174 = vector.shape_cast %173 : vector<1x8x128xf32> to vector<8x128xf32>
      %175 = vector.shape_cast %169 : vector<8x128xf32> to vector<1x8x128xf32>
      tpu.vector_store %arg6[%172, %c0_49, %c0_50], %175 {strides = array<i32>} : memref<8x8x128xf32, #tpu.memory_space<vmem>>, vector<1x8x128xf32>,
      %c4_i32 = arith.constant 4 : i32
      %c8_i32_51 = arith.constant 8 : i32
      %176 = arith.muli %c4_i32, %c8_i32_51 : i32
      %177 = tpu.assume_multiple %176, 8 : i32
      %178 = arith.truncf %169 : vector<8x128xf32> to vector<8x128xbf16>
      %c0_52 = arith.constant 0 : index
      %c0_53 = arith.constant 0 : index
      %c0_54 = arith.constant 0 : index
      %179 = vector.load %arg4[%c0_52, %c0_53, %c0_54] : memref<1x128x512xbf16, #tpu.memory_space<vmem>>, vector<1x128x512xbf16>
      %180 = vector.shape_cast %179 : vector<1x128x512xbf16> to vector<128x512xbf16>
      %cst_55 = arith.constant dense<0.000000e+00> : vector<8x512xf32>
      %181 = tpu.matmul %178, %180, %cst_55 {dimension_numbers = #tpu.dot_dimension_numbers<[1], [0], [0], [1], [0, 0, 1, 1], [], []>} : vector<8x128xbf16>, vector<128x512xbf16>, vector<8x512xf32> -> vector<8x512xf32>
      %182 = arith.index_cast %177 : i32 to index
      %c0_56 = arith.constant 0 : index
      %183 = vector.load %arg7[%182, %c0_56] : memref<64x512xbf16, #tpu.memory_space<vmem>>, vector<8x512xbf16>
      %184 = arith.extf %183 : vector<8x512xbf16> to vector<8x512xf32>
      %185 = arith.addf %181, %184 : vector<8x512xf32>
      %186 = vector.broadcast %8 : vector<1x512xf32> to vector<8x512xf32>
      %187 = arith.addf %185, %186 : vector<8x512xf32>
      %188 = vector.extract_strided_slice %187 {offsets = [0, 0], sizes = [8, 384], strides = [1, 1]} : vector<8x512xf32> to vector<8x384xf32>
      %189 = arith.negf %188 : vector<8x384xf32>
      %190 = math.exp %189 : vector<8x384xf32>
      %cst_57 = arith.constant 1.000000e+00 : f32
      %191 = vector.broadcast %cst_57 : f32 to vector<8x384xf32>
      %192 = arith.addf %191, %190 : vector<8x384xf32>
      %193 = arith.divf %191, %192 : vector<8x384xf32>
      %194 = vector.extract_strided_slice %193 {offsets = [0, 0], sizes = [8, 128], strides = [1, 1]} : vector<8x384xf32> to vector<8x128xf32>
      %195 = vector.extract_strided_slice %193 {offsets = [0, 128], sizes = [8, 128], strides = [1, 1]} : vector<8x384xf32> to vector<8x128xf32>
      %196 = vector.extract_strided_slice %193 {offsets = [0, 256], sizes = [8, 128], strides = [1, 1]} : vector<8x384xf32> to vector<8x128xf32>
      %197 = vector.extract_strided_slice %187 {offsets = [0, 384], sizes = [8, 128], strides = [1, 1]} : vector<8x512xf32> to vector<8x128xf32>
      %198 = math.tanh %197 : vector<8x128xf32>
      %199 = arith.mulf %195, %171 : vector<8x128xf32>
      %200 = arith.mulf %194, %198 : vector<8x128xf32>
      %201 = arith.addf %199, %200 : vector<8x128xf32>
      %202 = math.tanh %201 : vector<8x128xf32>
      %203 = arith.mulf %196, %202 : vector<8x128xf32>
      %204 = vector.broadcast %c4_i32 : i32 to vector<8x1xi32>
      %205 = arith.cmpi sgt, %6, %204 : vector<8x1xi32>
      %206 = arith.extui %205 : vector<8x1xi1> to vector<8x1xi32>
      %207 = arith.sitofp %206 : vector<8x1xi32> to vector<8x1xf32>
      %208 = vector.broadcast %207 : vector<8x1xf32> to vector<8x128xf32>
      %209 = arith.mulf %203, %208 : vector<8x128xf32>
      %210 = vector.broadcast %207 : vector<8x1xf32> to vector<8x128xf32>
      %211 = arith.mulf %201, %210 : vector<8x128xf32>
      %212 = arith.index_cast %c4_i32 : i32 to index
      %c0_58 = arith.constant 0 : index
      %c0_59 = arith.constant 0 : index
      %213 = vector.load %arg6[%212, %c0_58, %c0_59] : memref<8x8x128xf32, #tpu.memory_space<vmem>>, vector<1x8x128xf32>
      %214 = vector.shape_cast %213 : vector<1x8x128xf32> to vector<8x128xf32>
      %215 = vector.shape_cast %209 : vector<8x128xf32> to vector<1x8x128xf32>
      tpu.vector_store %arg6[%212, %c0_58, %c0_59], %215 {strides = array<i32>} : memref<8x8x128xf32, #tpu.memory_space<vmem>>, vector<1x8x128xf32>,
      %c5_i32 = arith.constant 5 : i32
      %c8_i32_60 = arith.constant 8 : i32
      %216 = arith.muli %c5_i32, %c8_i32_60 : i32
      %217 = tpu.assume_multiple %216, 8 : i32
      %218 = arith.truncf %209 : vector<8x128xf32> to vector<8x128xbf16>
      %c0_61 = arith.constant 0 : index
      %c0_62 = arith.constant 0 : index
      %c0_63 = arith.constant 0 : index
      %219 = vector.load %arg4[%c0_61, %c0_62, %c0_63] : memref<1x128x512xbf16, #tpu.memory_space<vmem>>, vector<1x128x512xbf16>
      %220 = vector.shape_cast %219 : vector<1x128x512xbf16> to vector<128x512xbf16>
      %cst_64 = arith.constant dense<0.000000e+00> : vector<8x512xf32>
      %221 = tpu.matmul %218, %220, %cst_64 {dimension_numbers = #tpu.dot_dimension_numbers<[1], [0], [0], [1], [0, 0, 1, 1], [], []>} : vector<8x128xbf16>, vector<128x512xbf16>, vector<8x512xf32> -> vector<8x512xf32>
      %222 = arith.index_cast %217 : i32 to index
      %c0_65 = arith.constant 0 : index
      %223 = vector.load %arg7[%222, %c0_65] : memref<64x512xbf16, #tpu.memory_space<vmem>>, vector<8x512xbf16>
      %224 = arith.extf %223 : vector<8x512xbf16> to vector<8x512xf32>
      %225 = arith.addf %221, %224 : vector<8x512xf32>
      %226 = vector.broadcast %8 : vector<1x512xf32> to vector<8x512xf32>
      %227 = arith.addf %225, %226 : vector<8x512xf32>
      %228 = vector.extract_strided_slice %227 {offsets = [0, 0], sizes = [8, 384], strides = [1, 1]} : vector<8x512xf32> to vector<8x384xf32>
      %229 = arith.negf %228 : vector<8x384xf32>
      %230 = math.exp %229 : vector<8x384xf32>
      %cst_66 = arith.constant 1.000000e+00 : f32
      %231 = vector.broadcast %cst_66 : f32 to vector<8x384xf32>
      %232 = arith.addf %231, %230 : vector<8x384xf32>
      %233 = arith.divf %231, %232 : vector<8x384xf32>
      %234 = vector.extract_strided_slice %233 {offsets = [0, 0], sizes = [8, 128], strides = [1, 1]} : vector<8x384xf32> to vector<8x128xf32>
      %235 = vector.extract_strided_slice %233 {offsets = [0, 128], sizes = [8, 128], strides = [1, 1]} : vector<8x384xf32> to vector<8x128xf32>
      %236 = vector.extract_strided_slice %233 {offsets = [0, 256], sizes = [8, 128], strides = [1, 1]} : vector<8x384xf32> to vector<8x128xf32>
      %237 = vector.extract_strided_slice %227 {offsets = [0, 384], sizes = [8, 128], strides = [1, 1]} : vector<8x512xf32> to vector<8x128xf32>
      %238 = math.tanh %237 : vector<8x128xf32>
      %239 = arith.mulf %235, %211 : vector<8x128xf32>
      %240 = arith.mulf %234, %238 : vector<8x128xf32>
      %241 = arith.addf %239, %240 : vector<8x128xf32>
      %242 = math.tanh %241 : vector<8x128xf32>
      %243 = arith.mulf %236, %242 : vector<8x128xf32>
      %244 = vector.broadcast %c5_i32 : i32 to vector<8x1xi32>
      %245 = arith.cmpi sgt, %6, %244 : vector<8x1xi32>
      %246 = arith.extui %245 : vector<8x1xi1> to vector<8x1xi32>
      %247 = arith.sitofp %246 : vector<8x1xi32> to vector<8x1xf32>
      %248 = vector.broadcast %247 : vector<8x1xf32> to vector<8x128xf32>
      %249 = arith.mulf %243, %248 : vector<8x128xf32>
      %250 = vector.broadcast %247 : vector<8x1xf32> to vector<8x128xf32>
      %251 = arith.mulf %241, %250 : vector<8x128xf32>
      %252 = arith.index_cast %c5_i32 : i32 to index
      %c0_67 = arith.constant 0 : index
      %c0_68 = arith.constant 0 : index
      %253 = vector.load %arg6[%252, %c0_67, %c0_68] : memref<8x8x128xf32, #tpu.memory_space<vmem>>, vector<1x8x128xf32>
      %254 = vector.shape_cast %253 : vector<1x8x128xf32> to vector<8x128xf32>
      %255 = vector.shape_cast %249 : vector<8x128xf32> to vector<1x8x128xf32>
      tpu.vector_store %arg6[%252, %c0_67, %c0_68], %255 {strides = array<i32>} : memref<8x8x128xf32, #tpu.memory_space<vmem>>, vector<1x8x128xf32>,
      %c6_i32 = arith.constant 6 : i32
      %c8_i32_69 = arith.constant 8 : i32
      %256 = arith.muli %c6_i32, %c8_i32_69 : i32
      %257 = tpu.assume_multiple %256, 8 : i32
      %258 = arith.truncf %249 : vector<8x128xf32> to vector<8x128xbf16>
      %c0_70 = arith.constant 0 : index
      %c0_71 = arith.constant 0 : index
      %c0_72 = arith.constant 0 : index
      %259 = vector.load %arg4[%c0_70, %c0_71, %c0_72] : memref<1x128x512xbf16, #tpu.memory_space<vmem>>, vector<1x128x512xbf16>
      %260 = vector.shape_cast %259 : vector<1x128x512xbf16> to vector<128x512xbf16>
      %cst_73 = arith.constant dense<0.000000e+00> : vector<8x512xf32>
      %261 = tpu.matmul %258, %260, %cst_73 {dimension_numbers = #tpu.dot_dimension_numbers<[1], [0], [0], [1], [0, 0, 1, 1], [], []>} : vector<8x128xbf16>, vector<128x512xbf16>, vector<8x512xf32> -> vector<8x512xf32>
      %262 = arith.index_cast %257 : i32 to index
      %c0_74 = arith.constant 0 : index
      %263 = vector.load %arg7[%262, %c0_74] : memref<64x512xbf16, #tpu.memory_space<vmem>>, vector<8x512xbf16>
      %264 = arith.extf %263 : vector<8x512xbf16> to vector<8x512xf32>
      %265 = arith.addf %261, %264 : vector<8x512xf32>
      %266 = vector.broadcast %8 : vector<1x512xf32> to vector<8x512xf32>
      %267 = arith.addf %265, %266 : vector<8x512xf32>
      %268 = vector.extract_strided_slice %267 {offsets = [0, 0], sizes = [8, 384], strides = [1, 1]} : vector<8x512xf32> to vector<8x384xf32>
      %269 = arith.negf %268 : vector<8x384xf32>
      %270 = math.exp %269 : vector<8x384xf32>
      %cst_75 = arith.constant 1.000000e+00 : f32
      %271 = vector.broadcast %cst_75 : f32 to vector<8x384xf32>
      %272 = arith.addf %271, %270 : vector<8x384xf32>
      %273 = arith.divf %271, %272 : vector<8x384xf32>
      %274 = vector.extract_strided_slice %273 {offsets = [0, 0], sizes = [8, 128], strides = [1, 1]} : vector<8x384xf32> to vector<8x128xf32>
      %275 = vector.extract_strided_slice %273 {offsets = [0, 128], sizes = [8, 128], strides = [1, 1]} : vector<8x384xf32> to vector<8x128xf32>
      %276 = vector.extract_strided_slice %273 {offsets = [0, 256], sizes = [8, 128], strides = [1, 1]} : vector<8x384xf32> to vector<8x128xf32>
      %277 = vector.extract_strided_slice %267 {offsets = [0, 384], sizes = [8, 128], strides = [1, 1]} : vector<8x512xf32> to vector<8x128xf32>
      %278 = math.tanh %277 : vector<8x128xf32>
      %279 = arith.mulf %275, %251 : vector<8x128xf32>
      %280 = arith.mulf %274, %278 : vector<8x128xf32>
      %281 = arith.addf %279, %280 : vector<8x128xf32>
      %282 = math.tanh %281 : vector<8x128xf32>
      %283 = arith.mulf %276, %282 : vector<8x128xf32>
      %284 = vector.broadcast %c6_i32 : i32 to vector<8x1xi32>
      %285 = arith.cmpi sgt, %6, %284 : vector<8x1xi32>
      %286 = arith.extui %285 : vector<8x1xi1> to vector<8x1xi32>
      %287 = arith.sitofp %286 : vector<8x1xi32> to vector<8x1xf32>
      %288 = vector.broadcast %287 : vector<8x1xf32> to vector<8x128xf32>
      %289 = arith.mulf %283, %288 : vector<8x128xf32>
      %290 = vector.broadcast %287 : vector<8x1xf32> to vector<8x128xf32>
      %291 = arith.mulf %281, %290 : vector<8x128xf32>
      %292 = arith.index_cast %c6_i32 : i32 to index
      %c0_76 = arith.constant 0 : index
      %c0_77 = arith.constant 0 : index
      %293 = vector.load %arg6[%292, %c0_76, %c0_77] : memref<8x8x128xf32, #tpu.memory_space<vmem>>, vector<1x8x128xf32>
      %294 = vector.shape_cast %293 : vector<1x8x128xf32> to vector<8x128xf32>
      %295 = vector.shape_cast %289 : vector<8x128xf32> to vector<1x8x128xf32>
      tpu.vector_store %arg6[%292, %c0_76, %c0_77], %295 {strides = array<i32>} : memref<8x8x128xf32, #tpu.memory_space<vmem>>, vector<1x8x128xf32>,
      %c7_i32 = arith.constant 7 : i32
      %c8_i32_78 = arith.constant 8 : i32
      %296 = arith.muli %c7_i32, %c8_i32_78 : i32
      %297 = tpu.assume_multiple %296, 8 : i32
      %298 = arith.truncf %289 : vector<8x128xf32> to vector<8x128xbf16>
      %c0_79 = arith.constant 0 : index
      %c0_80 = arith.constant 0 : index
      %c0_81 = arith.constant 0 : index
      %299 = vector.load %arg4[%c0_79, %c0_80, %c0_81] : memref<1x128x512xbf16, #tpu.memory_space<vmem>>, vector<1x128x512xbf16>
      %300 = vector.shape_cast %299 : vector<1x128x512xbf16> to vector<128x512xbf16>
      %cst_82 = arith.constant dense<0.000000e+00> : vector<8x512xf32>
      %301 = tpu.matmul %298, %300, %cst_82 {dimension_numbers = #tpu.dot_dimension_numbers<[1], [0], [0], [1], [0, 0, 1, 1], [], []>} : vector<8x128xbf16>, vector<128x512xbf16>, vector<8x512xf32> -> vector<8x512xf32>
      %302 = arith.index_cast %297 : i32 to index
      %c0_83 = arith.constant 0 : index
      %303 = vector.load %arg7[%302, %c0_83] : memref<64x512xbf16, #tpu.memory_space<vmem>>, vector<8x512xbf16>
      %304 = arith.extf %303 : vector<8x512xbf16> to vector<8x512xf32>
      %305 = arith.addf %301, %304 : vector<8x512xf32>
      %306 = vector.broadcast %8 : vector<1x512xf32> to vector<8x512xf32>
      %307 = arith.addf %305, %306 : vector<8x512xf32>
      %308 = vector.extract_strided_slice %307 {offsets = [0, 0], sizes = [8, 384], strides = [1, 1]} : vector<8x512xf32> to vector<8x384xf32>
      %309 = arith.negf %308 : vector<8x384xf32>
      %310 = math.exp %309 : vector<8x384xf32>
      %cst_84 = arith.constant 1.000000e+00 : f32
      %311 = vector.broadcast %cst_84 : f32 to vector<8x384xf32>
      %312 = arith.addf %311, %310 : vector<8x384xf32>
      %313 = arith.divf %311, %312 : vector<8x384xf32>
      %314 = vector.extract_strided_slice %313 {offsets = [0, 0], sizes = [8, 128], strides = [1, 1]} : vector<8x384xf32> to vector<8x128xf32>
      %315 = vector.extract_strided_slice %313 {offsets = [0, 128], sizes = [8, 128], strides = [1, 1]} : vector<8x384xf32> to vector<8x128xf32>
      %316 = vector.extract_strided_slice %313 {offsets = [0, 256], sizes = [8, 128], strides = [1, 1]} : vector<8x384xf32> to vector<8x128xf32>
      %317 = vector.extract_strided_slice %307 {offsets = [0, 384], sizes = [8, 128], strides = [1, 1]} : vector<8x512xf32> to vector<8x128xf32>
      %318 = math.tanh %317 : vector<8x128xf32>
      %319 = arith.mulf %315, %291 : vector<8x128xf32>
      %320 = arith.mulf %314, %318 : vector<8x128xf32>
      %321 = arith.addf %319, %320 : vector<8x128xf32>
      %322 = math.tanh %321 : vector<8x128xf32>
      %323 = arith.mulf %316, %322 : vector<8x128xf32>
      %324 = vector.broadcast %c7_i32 : i32 to vector<8x1xi32>
      %325 = arith.cmpi sgt, %6, %324 : vector<8x1xi32>
      %326 = arith.extui %325 : vector<8x1xi1> to vector<8x1xi32>
      %327 = arith.sitofp %326 : vector<8x1xi32> to vector<8x1xf32>
      %328 = vector.broadcast %327 : vector<8x1xf32> to vector<8x128xf32>
      %329 = arith.mulf %323, %328 : vector<8x128xf32>
      %330 = vector.broadcast %327 : vector<8x1xf32> to vector<8x128xf32>
      %331 = arith.mulf %321, %330 : vector<8x128xf32>
      %332 = arith.index_cast %c7_i32 : i32 to index
      %c0_85 = arith.constant 0 : index
      %c0_86 = arith.constant 0 : index
      %333 = vector.load %arg6[%332, %c0_85, %c0_86] : memref<8x8x128xf32, #tpu.memory_space<vmem>>, vector<1x8x128xf32>
      %334 = vector.shape_cast %333 : vector<1x8x128xf32> to vector<8x128xf32>
      %335 = vector.shape_cast %329 : vector<8x128xf32> to vector<1x8x128xf32>
      tpu.vector_store %arg6[%332, %c0_85, %c0_86], %335 {strides = array<i32>} : memref<8x8x128xf32, #tpu.memory_space<vmem>>, vector<1x8x128xf32>,
      %c8_i32_87 = arith.constant 8 : i32
    } else {
    }
    %c1_i32 = arith.constant 1 : i32
    %12 = arith.cmpi eq, %arg0, %c1_i32 : i32
    %13 = arith.extui %12 : i1 to i32
    %c0_i32_12 = arith.constant 0 : i32
    %14 = arith.cmpi ne, %13, %c0_i32_12 : i32
    scf.if %14 {
      %cst_13 = arith.constant 0.000000e+00 : f32
      %15 = vector.broadcast %cst_13 : f32 to vector<8x128xf32>
      %c0_i32_14 = arith.constant 0 : i32
      %c7_i32 = arith.constant 7 : i32
      %16 = arith.subi %c7_i32, %c0_i32_14 : i32
      %c8_i32 = arith.constant 8 : i32
      %17 = arith.muli %16, %c8_i32 : i32
      %18 = tpu.assume_multiple %17, 8 : i32
      %19 = arith.truncf %15 : vector<8x128xf32> to vector<8x128xbf16>
      %c0_15 = arith.constant 0 : index
      %c0_16 = arith.constant 0 : index
      %c0_17 = arith.constant 0 : index
      %20 = vector.load %arg4[%c0_15, %c0_16, %c0_17] : memref<1x128x512xbf16, #tpu.memory_space<vmem>>, vector<1x128x512xbf16>
      %21 = vector.shape_cast %20 : vector<1x128x512xbf16> to vector<128x512xbf16>
      %cst_18 = arith.constant dense<0.000000e+00> : vector<8x512xf32>
      %22 = tpu.matmul %19, %21, %cst_18 {dimension_numbers = #tpu.dot_dimension_numbers<[1], [0], [0], [1], [0, 0, 1, 1], [], []>} : vector<8x128xbf16>, vector<128x512xbf16>, vector<8x512xf32> -> vector<8x512xf32>
      %23 = arith.index_cast %18 : i32 to index
      %c0_19 = arith.constant 0 : index
      %24 = vector.load %arg7[%23, %c0_19] : memref<64x512xbf16, #tpu.memory_space<vmem>>, vector<8x512xbf16>
      %25 = arith.extf %24 : vector<8x512xbf16> to vector<8x512xf32>
      %26 = arith.addf %22, %25 : vector<8x512xf32>
      %27 = vector.broadcast %8 : vector<1x512xf32> to vector<8x512xf32>
      %28 = arith.addf %26, %27 : vector<8x512xf32>
      %29 = vector.extract_strided_slice %28 {offsets = [0, 0], sizes = [8, 384], strides = [1, 1]} : vector<8x512xf32> to vector<8x384xf32>
      %30 = arith.negf %29 : vector<8x384xf32>
      %31 = math.exp %30 : vector<8x384xf32>
      %cst_20 = arith.constant 1.000000e+00 : f32
      %32 = vector.broadcast %cst_20 : f32 to vector<8x384xf32>
      %33 = arith.addf %32, %31 : vector<8x384xf32>
      %34 = arith.divf %32, %33 : vector<8x384xf32>
      %35 = vector.extract_strided_slice %34 {offsets = [0, 0], sizes = [8, 128], strides = [1, 1]} : vector<8x384xf32> to vector<8x128xf32>
      %36 = vector.extract_strided_slice %34 {offsets = [0, 128], sizes = [8, 128], strides = [1, 1]} : vector<8x384xf32> to vector<8x128xf32>
      %37 = vector.extract_strided_slice %34 {offsets = [0, 256], sizes = [8, 128], strides = [1, 1]} : vector<8x384xf32> to vector<8x128xf32>
      %38 = vector.extract_strided_slice %28 {offsets = [0, 384], sizes = [8, 128], strides = [1, 1]} : vector<8x512xf32> to vector<8x128xf32>
      %39 = math.tanh %38 : vector<8x128xf32>
      %40 = arith.mulf %36, %15 : vector<8x128xf32>
      %41 = arith.mulf %35, %39 : vector<8x128xf32>
      %42 = arith.addf %40, %41 : vector<8x128xf32>
      %43 = math.tanh %42 : vector<8x128xf32>
      %44 = arith.mulf %37, %43 : vector<8x128xf32>
      %45 = vector.broadcast %16 : i32 to vector<8x1xi32>
      %46 = arith.cmpi sgt, %6, %45 : vector<8x1xi32>
      %47 = arith.extui %46 : vector<8x1xi1> to vector<8x1xi32>
      %48 = arith.sitofp %47 : vector<8x1xi32> to vector<8x1xf32>
      %49 = vector.broadcast %48 : vector<8x1xf32> to vector<8x128xf32>
      %50 = arith.mulf %44, %49 : vector<8x128xf32>
      %51 = vector.broadcast %48 : vector<8x1xf32> to vector<8x128xf32>
      %52 = arith.mulf %42, %51 : vector<8x128xf32>
      %53 = arith.index_cast %16 : i32 to index
      %c0_21 = arith.constant 0 : index
      %c0_22 = arith.constant 0 : index
      %54 = vector.load %arg6[%53, %c0_21, %c0_22] : memref<8x8x128xf32, #tpu.memory_space<vmem>>, vector<1x8x128xf32>
      %55 = vector.shape_cast %54 : vector<1x8x128xf32> to vector<8x128xf32>
      %56 = vector.shape_cast %50 : vector<8x128xf32> to vector<1x8x128xf32>
      tpu.vector_store %arg6[%53, %c0_21, %c0_22], %56 {strides = array<i32>} : memref<8x8x128xf32, #tpu.memory_space<vmem>>, vector<1x8x128xf32>,
      %c1_i32_23 = arith.constant 1 : i32
      %c7_i32_24 = arith.constant 7 : i32
      %57 = arith.subi %c7_i32_24, %c1_i32_23 : i32
      %c8_i32_25 = arith.constant 8 : i32
      %58 = arith.muli %57, %c8_i32_25 : i32
      %59 = tpu.assume_multiple %58, 8 : i32
      %60 = arith.truncf %50 : vector<8x128xf32> to vector<8x128xbf16>
      %c0_26 = arith.constant 0 : index
      %c0_27 = arith.constant 0 : index
      %c0_28 = arith.constant 0 : index
      %61 = vector.load %arg4[%c0_26, %c0_27, %c0_28] : memref<1x128x512xbf16, #tpu.memory_space<vmem>>, vector<1x128x512xbf16>
      %62 = vector.shape_cast %61 : vector<1x128x512xbf16> to vector<128x512xbf16>
      %cst_29 = arith.constant dense<0.000000e+00> : vector<8x512xf32>
      %63 = tpu.matmul %60, %62, %cst_29 {dimension_numbers = #tpu.dot_dimension_numbers<[1], [0], [0], [1], [0, 0, 1, 1], [], []>} : vector<8x128xbf16>, vector<128x512xbf16>, vector<8x512xf32> -> vector<8x512xf32>
      %64 = arith.index_cast %59 : i32 to index
      %c0_30 = arith.constant 0 : index
      %65 = vector.load %arg7[%64, %c0_30] : memref<64x512xbf16, #tpu.memory_space<vmem>>, vector<8x512xbf16>
      %66 = arith.extf %65 : vector<8x512xbf16> to vector<8x512xf32>
      %67 = arith.addf %63, %66 : vector<8x512xf32>
      %68 = vector.broadcast %8 : vector<1x512xf32> to vector<8x512xf32>
      %69 = arith.addf %67, %68 : vector<8x512xf32>
      %70 = vector.extract_strided_slice %69 {offsets = [0, 0], sizes = [8, 384], strides = [1, 1]} : vector<8x512xf32> to vector<8x384xf32>
      %71 = arith.negf %70 : vector<8x384xf32>
      %72 = math.exp %71 : vector<8x384xf32>
      %cst_31 = arith.constant 1.000000e+00 : f32
      %73 = vector.broadcast %cst_31 : f32 to vector<8x384xf32>
      %74 = arith.addf %73, %72 : vector<8x384xf32>
      %75 = arith.divf %73, %74 : vector<8x384xf32>
      %76 = vector.extract_strided_slice %75 {offsets = [0, 0], sizes = [8, 128], strides = [1, 1]} : vector<8x384xf32> to vector<8x128xf32>
      %77 = vector.extract_strided_slice %75 {offsets = [0, 128], sizes = [8, 128], strides = [1, 1]} : vector<8x384xf32> to vector<8x128xf32>
      %78 = vector.extract_strided_slice %75 {offsets = [0, 256], sizes = [8, 128], strides = [1, 1]} : vector<8x384xf32> to vector<8x128xf32>
      %79 = vector.extract_strided_slice %69 {offsets = [0, 384], sizes = [8, 128], strides = [1, 1]} : vector<8x512xf32> to vector<8x128xf32>
      %80 = math.tanh %79 : vector<8x128xf32>
      %81 = arith.mulf %77, %52 : vector<8x128xf32>
      %82 = arith.mulf %76, %80 : vector<8x128xf32>
      %83 = arith.addf %81, %82 : vector<8x128xf32>
      %84 = math.tanh %83 : vector<8x128xf32>
      %85 = arith.mulf %78, %84 : vector<8x128xf32>
      %86 = vector.broadcast %57 : i32 to vector<8x1xi32>
      %87 = arith.cmpi sgt, %6, %86 : vector<8x1xi32>
      %88 = arith.extui %87 : vector<8x1xi1> to vector<8x1xi32>
      %89 = arith.sitofp %88 : vector<8x1xi32> to vector<8x1xf32>
      %90 = vector.broadcast %89 : vector<8x1xf32> to vector<8x128xf32>
      %91 = arith.mulf %85, %90 : vector<8x128xf32>
      %92 = vector.broadcast %89 : vector<8x1xf32> to vector<8x128xf32>
      %93 = arith.mulf %83, %92 : vector<8x128xf32>
      %94 = arith.index_cast %57 : i32 to index
      %c0_32 = arith.constant 0 : index
      %c0_33 = arith.constant 0 : index
      %95 = vector.load %arg6[%94, %c0_32, %c0_33] : memref<8x8x128xf32, #tpu.memory_space<vmem>>, vector<1x8x128xf32>
      %96 = vector.shape_cast %95 : vector<1x8x128xf32> to vector<8x128xf32>
      %97 = vector.shape_cast %91 : vector<8x128xf32> to vector<1x8x128xf32>
      tpu.vector_store %arg6[%94, %c0_32, %c0_33], %97 {strides = array<i32>} : memref<8x8x128xf32, #tpu.memory_space<vmem>>, vector<1x8x128xf32>,
      %c2_i32 = arith.constant 2 : i32
      %c7_i32_34 = arith.constant 7 : i32
      %98 = arith.subi %c7_i32_34, %c2_i32 : i32
      %c8_i32_35 = arith.constant 8 : i32
      %99 = arith.muli %98, %c8_i32_35 : i32
      %100 = tpu.assume_multiple %99, 8 : i32
      %101 = arith.truncf %91 : vector<8x128xf32> to vector<8x128xbf16>
      %c0_36 = arith.constant 0 : index
      %c0_37 = arith.constant 0 : index
      %c0_38 = arith.constant 0 : index
      %102 = vector.load %arg4[%c0_36, %c0_37, %c0_38] : memref<1x128x512xbf16, #tpu.memory_space<vmem>>, vector<1x128x512xbf16>
      %103 = vector.shape_cast %102 : vector<1x128x512xbf16> to vector<128x512xbf16>
      %cst_39 = arith.constant dense<0.000000e+00> : vector<8x512xf32>
      %104 = tpu.matmul %101, %103, %cst_39 {dimension_numbers = #tpu.dot_dimension_numbers<[1], [0], [0], [1], [0, 0, 1, 1], [], []>} : vector<8x128xbf16>, vector<128x512xbf16>, vector<8x512xf32> -> vector<8x512xf32>
      %105 = arith.index_cast %100 : i32 to index
      %c0_40 = arith.constant 0 : index
      %106 = vector.load %arg7[%105, %c0_40] : memref<64x512xbf16, #tpu.memory_space<vmem>>, vector<8x512xbf16>
      %107 = arith.extf %106 : vector<8x512xbf16> to vector<8x512xf32>
      %108 = arith.addf %104, %107 : vector<8x512xf32>
      %109 = vector.broadcast %8 : vector<1x512xf32> to vector<8x512xf32>
      %110 = arith.addf %108, %109 : vector<8x512xf32>
      %111 = vector.extract_strided_slice %110 {offsets = [0, 0], sizes = [8, 384], strides = [1, 1]} : vector<8x512xf32> to vector<8x384xf32>
      %112 = arith.negf %111 : vector<8x384xf32>
      %113 = math.exp %112 : vector<8x384xf32>
      %cst_41 = arith.constant 1.000000e+00 : f32
      %114 = vector.broadcast %cst_41 : f32 to vector<8x384xf32>
      %115 = arith.addf %114, %113 : vector<8x384xf32>
      %116 = arith.divf %114, %115 : vector<8x384xf32>
      %117 = vector.extract_strided_slice %116 {offsets = [0, 0], sizes = [8, 128], strides = [1, 1]} : vector<8x384xf32> to vector<8x128xf32>
      %118 = vector.extract_strided_slice %116 {offsets = [0, 128], sizes = [8, 128], strides = [1, 1]} : vector<8x384xf32> to vector<8x128xf32>
      %119 = vector.extract_strided_slice %116 {offsets = [0, 256], sizes = [8, 128], strides = [1, 1]} : vector<8x384xf32> to vector<8x128xf32>
      %120 = vector.extract_strided_slice %110 {offsets = [0, 384], sizes = [8, 128], strides = [1, 1]} : vector<8x512xf32> to vector<8x128xf32>
      %121 = math.tanh %120 : vector<8x128xf32>
      %122 = arith.mulf %118, %93 : vector<8x128xf32>
      %123 = arith.mulf %117, %121 : vector<8x128xf32>
      %124 = arith.addf %122, %123 : vector<8x128xf32>
      %125 = math.tanh %124 : vector<8x128xf32>
      %126 = arith.mulf %119, %125 : vector<8x128xf32>
      %127 = vector.broadcast %98 : i32 to vector<8x1xi32>
      %128 = arith.cmpi sgt, %6, %127 : vector<8x1xi32>
      %129 = arith.extui %128 : vector<8x1xi1> to vector<8x1xi32>
      %130 = arith.sitofp %129 : vector<8x1xi32> to vector<8x1xf32>
      %131 = vector.broadcast %130 : vector<8x1xf32> to vector<8x128xf32>
      %132 = arith.mulf %126, %131 : vector<8x128xf32>
      %133 = vector.broadcast %130 : vector<8x1xf32> to vector<8x128xf32>
      %134 = arith.mulf %124, %133 : vector<8x128xf32>
      %135 = arith.index_cast %98 : i32 to index
      %c0_42 = arith.constant 0 : index
      %c0_43 = arith.constant 0 : index
      %136 = vector.load %arg6[%135, %c0_42, %c0_43] : memref<8x8x128xf32, #tpu.memory_space<vmem>>, vector<1x8x128xf32>
      %137 = vector.shape_cast %136 : vector<1x8x128xf32> to vector<8x128xf32>
      %138 = vector.shape_cast %132 : vector<8x128xf32> to vector<1x8x128xf32>
      tpu.vector_store %arg6[%135, %c0_42, %c0_43], %138 {strides = array<i32>} : memref<8x8x128xf32, #tpu.memory_space<vmem>>, vector<1x8x128xf32>,
      %c3_i32 = arith.constant 3 : i32
      %c7_i32_44 = arith.constant 7 : i32
      %139 = arith.subi %c7_i32_44, %c3_i32 : i32
      %c8_i32_45 = arith.constant 8 : i32
      %140 = arith.muli %139, %c8_i32_45 : i32
      %141 = tpu.assume_multiple %140, 8 : i32
      %142 = arith.truncf %132 : vector<8x128xf32> to vector<8x128xbf16>
      %c0_46 = arith.constant 0 : index
      %c0_47 = arith.constant 0 : index
      %c0_48 = arith.constant 0 : index
      %143 = vector.load %arg4[%c0_46, %c0_47, %c0_48] : memref<1x128x512xbf16, #tpu.memory_space<vmem>>, vector<1x128x512xbf16>
      %144 = vector.shape_cast %143 : vector<1x128x512xbf16> to vector<128x512xbf16>
      %cst_49 = arith.constant dense<0.000000e+00> : vector<8x512xf32>
      %145 = tpu.matmul %142, %144, %cst_49 {dimension_numbers = #tpu.dot_dimension_numbers<[1], [0], [0], [1], [0, 0, 1, 1], [], []>} : vector<8x128xbf16>, vector<128x512xbf16>, vector<8x512xf32> -> vector<8x512xf32>
      %146 = arith.index_cast %141 : i32 to index
      %c0_50 = arith.constant 0 : index
      %147 = vector.load %arg7[%146, %c0_50] : memref<64x512xbf16, #tpu.memory_space<vmem>>, vector<8x512xbf16>
      %148 = arith.extf %147 : vector<8x512xbf16> to vector<8x512xf32>
      %149 = arith.addf %145, %148 : vector<8x512xf32>
      %150 = vector.broadcast %8 : vector<1x512xf32> to vector<8x512xf32>
      %151 = arith.addf %149, %150 : vector<8x512xf32>
      %152 = vector.extract_strided_slice %151 {offsets = [0, 0], sizes = [8, 384], strides = [1, 1]} : vector<8x512xf32> to vector<8x384xf32>
      %153 = arith.negf %152 : vector<8x384xf32>
      %154 = math.exp %153 : vector<8x384xf32>
      %cst_51 = arith.constant 1.000000e+00 : f32
      %155 = vector.broadcast %cst_51 : f32 to vector<8x384xf32>
      %156 = arith.addf %155, %154 : vector<8x384xf32>
      %157 = arith.divf %155, %156 : vector<8x384xf32>
      %158 = vector.extract_strided_slice %157 {offsets = [0, 0], sizes = [8, 128], strides = [1, 1]} : vector<8x384xf32> to vector<8x128xf32>
      %159 = vector.extract_strided_slice %157 {offsets = [0, 128], sizes = [8, 128], strides = [1, 1]} : vector<8x384xf32> to vector<8x128xf32>
      %160 = vector.extract_strided_slice %157 {offsets = [0, 256], sizes = [8, 128], strides = [1, 1]} : vector<8x384xf32> to vector<8x128xf32>
      %161 = vector.extract_strided_slice %151 {offsets = [0, 384], sizes = [8, 128], strides = [1, 1]} : vector<8x512xf32> to vector<8x128xf32>
      %162 = math.tanh %161 : vector<8x128xf32>
      %163 = arith.mulf %159, %134 : vector<8x128xf32>
      %164 = arith.mulf %158, %162 : vector<8x128xf32>
      %165 = arith.addf %163, %164 : vector<8x128xf32>
      %166 = math.tanh %165 : vector<8x128xf32>
      %167 = arith.mulf %160, %166 : vector<8x128xf32>
      %168 = vector.broadcast %139 : i32 to vector<8x1xi32>
      %169 = arith.cmpi sgt, %6, %168 : vector<8x1xi32>
      %170 = arith.extui %169 : vector<8x1xi1> to vector<8x1xi32>
      %171 = arith.sitofp %170 : vector<8x1xi32> to vector<8x1xf32>
      %172 = vector.broadcast %171 : vector<8x1xf32> to vector<8x128xf32>
      %173 = arith.mulf %167, %172 : vector<8x128xf32>
      %174 = vector.broadcast %171 : vector<8x1xf32> to vector<8x128xf32>
      %175 = arith.mulf %165, %174 : vector<8x128xf32>
      %176 = arith.index_cast %139 : i32 to index
      %c0_52 = arith.constant 0 : index
      %c0_53 = arith.constant 0 : index
      %177 = vector.load %arg6[%176, %c0_52, %c0_53] : memref<8x8x128xf32, #tpu.memory_space<vmem>>, vector<1x8x128xf32>
      %178 = vector.shape_cast %177 : vector<1x8x128xf32> to vector<8x128xf32>
      %179 = vector.shape_cast %173 : vector<8x128xf32> to vector<1x8x128xf32>
      tpu.vector_store %arg6[%176, %c0_52, %c0_53], %179 {strides = array<i32>} : memref<8x8x128xf32, #tpu.memory_space<vmem>>, vector<1x8x128xf32>,
      %c4_i32 = arith.constant 4 : i32
      %c7_i32_54 = arith.constant 7 : i32
      %180 = arith.subi %c7_i32_54, %c4_i32 : i32
      %c8_i32_55 = arith.constant 8 : i32
      %181 = arith.muli %180, %c8_i32_55 : i32
      %182 = tpu.assume_multiple %181, 8 : i32
      %183 = arith.truncf %173 : vector<8x128xf32> to vector<8x128xbf16>
      %c0_56 = arith.constant 0 : index
      %c0_57 = arith.constant 0 : index
      %c0_58 = arith.constant 0 : index
      %184 = vector.load %arg4[%c0_56, %c0_57, %c0_58] : memref<1x128x512xbf16, #tpu.memory_space<vmem>>, vector<1x128x512xbf16>
      %185 = vector.shape_cast %184 : vector<1x128x512xbf16> to vector<128x512xbf16>
      %cst_59 = arith.constant dense<0.000000e+00> : vector<8x512xf32>
      %186 = tpu.matmul %183, %185, %cst_59 {dimension_numbers = #tpu.dot_dimension_numbers<[1], [0], [0], [1], [0, 0, 1, 1], [], []>} : vector<8x128xbf16>, vector<128x512xbf16>, vector<8x512xf32> -> vector<8x512xf32>
      %187 = arith.index_cast %182 : i32 to index
      %c0_60 = arith.constant 0 : index
      %188 = vector.load %arg7[%187, %c0_60] : memref<64x512xbf16, #tpu.memory_space<vmem>>, vector<8x512xbf16>
      %189 = arith.extf %188 : vector<8x512xbf16> to vector<8x512xf32>
      %190 = arith.addf %186, %189 : vector<8x512xf32>
      %191 = vector.broadcast %8 : vector<1x512xf32> to vector<8x512xf32>
      %192 = arith.addf %190, %191 : vector<8x512xf32>
      %193 = vector.extract_strided_slice %192 {offsets = [0, 0], sizes = [8, 384], strides = [1, 1]} : vector<8x512xf32> to vector<8x384xf32>
      %194 = arith.negf %193 : vector<8x384xf32>
      %195 = math.exp %194 : vector<8x384xf32>
      %cst_61 = arith.constant 1.000000e+00 : f32
      %196 = vector.broadcast %cst_61 : f32 to vector<8x384xf32>
      %197 = arith.addf %196, %195 : vector<8x384xf32>
      %198 = arith.divf %196, %197 : vector<8x384xf32>
      %199 = vector.extract_strided_slice %198 {offsets = [0, 0], sizes = [8, 128], strides = [1, 1]} : vector<8x384xf32> to vector<8x128xf32>
      %200 = vector.extract_strided_slice %198 {offsets = [0, 128], sizes = [8, 128], strides = [1, 1]} : vector<8x384xf32> to vector<8x128xf32>
      %201 = vector.extract_strided_slice %198 {offsets = [0, 256], sizes = [8, 128], strides = [1, 1]} : vector<8x384xf32> to vector<8x128xf32>
      %202 = vector.extract_strided_slice %192 {offsets = [0, 384], sizes = [8, 128], strides = [1, 1]} : vector<8x512xf32> to vector<8x128xf32>
      %203 = math.tanh %202 : vector<8x128xf32>
      %204 = arith.mulf %200, %175 : vector<8x128xf32>
      %205 = arith.mulf %199, %203 : vector<8x128xf32>
      %206 = arith.addf %204, %205 : vector<8x128xf32>
      %207 = math.tanh %206 : vector<8x128xf32>
      %208 = arith.mulf %201, %207 : vector<8x128xf32>
      %209 = vector.broadcast %180 : i32 to vector<8x1xi32>
      %210 = arith.cmpi sgt, %6, %209 : vector<8x1xi32>
      %211 = arith.extui %210 : vector<8x1xi1> to vector<8x1xi32>
      %212 = arith.sitofp %211 : vector<8x1xi32> to vector<8x1xf32>
      %213 = vector.broadcast %212 : vector<8x1xf32> to vector<8x128xf32>
      %214 = arith.mulf %208, %213 : vector<8x128xf32>
      %215 = vector.broadcast %212 : vector<8x1xf32> to vector<8x128xf32>
      %216 = arith.mulf %206, %215 : vector<8x128xf32>
      %217 = arith.index_cast %180 : i32 to index
      %c0_62 = arith.constant 0 : index
      %c0_63 = arith.constant 0 : index
      %218 = vector.load %arg6[%217, %c0_62, %c0_63] : memref<8x8x128xf32, #tpu.memory_space<vmem>>, vector<1x8x128xf32>
      %219 = vector.shape_cast %218 : vector<1x8x128xf32> to vector<8x128xf32>
      %220 = vector.shape_cast %214 : vector<8x128xf32> to vector<1x8x128xf32>
      tpu.vector_store %arg6[%217, %c0_62, %c0_63], %220 {strides = array<i32>} : memref<8x8x128xf32, #tpu.memory_space<vmem>>, vector<1x8x128xf32>,
      %c5_i32 = arith.constant 5 : i32
      %c7_i32_64 = arith.constant 7 : i32
      %221 = arith.subi %c7_i32_64, %c5_i32 : i32
      %c8_i32_65 = arith.constant 8 : i32
      %222 = arith.muli %221, %c8_i32_65 : i32
      %223 = tpu.assume_multiple %222, 8 : i32
      %224 = arith.truncf %214 : vector<8x128xf32> to vector<8x128xbf16>
      %c0_66 = arith.constant 0 : index
      %c0_67 = arith.constant 0 : index
      %c0_68 = arith.constant 0 : index
      %225 = vector.load %arg4[%c0_66, %c0_67, %c0_68] : memref<1x128x512xbf16, #tpu.memory_space<vmem>>, vector<1x128x512xbf16>
      %226 = vector.shape_cast %225 : vector<1x128x512xbf16> to vector<128x512xbf16>
      %cst_69 = arith.constant dense<0.000000e+00> : vector<8x512xf32>
      %227 = tpu.matmul %224, %226, %cst_69 {dimension_numbers = #tpu.dot_dimension_numbers<[1], [0], [0], [1], [0, 0, 1, 1], [], []>} : vector<8x128xbf16>, vector<128x512xbf16>, vector<8x512xf32> -> vector<8x512xf32>
      %228 = arith.index_cast %223 : i32 to index
      %c0_70 = arith.constant 0 : index
      %229 = vector.load %arg7[%228, %c0_70] : memref<64x512xbf16, #tpu.memory_space<vmem>>, vector<8x512xbf16>
      %230 = arith.extf %229 : vector<8x512xbf16> to vector<8x512xf32>
      %231 = arith.addf %227, %230 : vector<8x512xf32>
      %232 = vector.broadcast %8 : vector<1x512xf32> to vector<8x512xf32>
      %233 = arith.addf %231, %232 : vector<8x512xf32>
      %234 = vector.extract_strided_slice %233 {offsets = [0, 0], sizes = [8, 384], strides = [1, 1]} : vector<8x512xf32> to vector<8x384xf32>
      %235 = arith.negf %234 : vector<8x384xf32>
      %236 = math.exp %235 : vector<8x384xf32>
      %cst_71 = arith.constant 1.000000e+00 : f32
      %237 = vector.broadcast %cst_71 : f32 to vector<8x384xf32>
      %238 = arith.addf %237, %236 : vector<8x384xf32>
      %239 = arith.divf %237, %238 : vector<8x384xf32>
      %240 = vector.extract_strided_slice %239 {offsets = [0, 0], sizes = [8, 128], strides = [1, 1]} : vector<8x384xf32> to vector<8x128xf32>
      %241 = vector.extract_strided_slice %239 {offsets = [0, 128], sizes = [8, 128], strides = [1, 1]} : vector<8x384xf32> to vector<8x128xf32>
      %242 = vector.extract_strided_slice %239 {offsets = [0, 256], sizes = [8, 128], strides = [1, 1]} : vector<8x384xf32> to vector<8x128xf32>
      %243 = vector.extract_strided_slice %233 {offsets = [0, 384], sizes = [8, 128], strides = [1, 1]} : vector<8x512xf32> to vector<8x128xf32>
      %244 = math.tanh %243 : vector<8x128xf32>
      %245 = arith.mulf %241, %216 : vector<8x128xf32>
      %246 = arith.mulf %240, %244 : vector<8x128xf32>
      %247 = arith.addf %245, %246 : vector<8x128xf32>
      %248 = math.tanh %247 : vector<8x128xf32>
      %249 = arith.mulf %242, %248 : vector<8x128xf32>
      %250 = vector.broadcast %221 : i32 to vector<8x1xi32>
      %251 = arith.cmpi sgt, %6, %250 : vector<8x1xi32>
      %252 = arith.extui %251 : vector<8x1xi1> to vector<8x1xi32>
      %253 = arith.sitofp %252 : vector<8x1xi32> to vector<8x1xf32>
      %254 = vector.broadcast %253 : vector<8x1xf32> to vector<8x128xf32>
      %255 = arith.mulf %249, %254 : vector<8x128xf32>
      %256 = vector.broadcast %253 : vector<8x1xf32> to vector<8x128xf32>
      %257 = arith.mulf %247, %256 : vector<8x128xf32>
      %258 = arith.index_cast %221 : i32 to index
      %c0_72 = arith.constant 0 : index
      %c0_73 = arith.constant 0 : index
      %259 = vector.load %arg6[%258, %c0_72, %c0_73] : memref<8x8x128xf32, #tpu.memory_space<vmem>>, vector<1x8x128xf32>
      %260 = vector.shape_cast %259 : vector<1x8x128xf32> to vector<8x128xf32>
      %261 = vector.shape_cast %255 : vector<8x128xf32> to vector<1x8x128xf32>
      tpu.vector_store %arg6[%258, %c0_72, %c0_73], %261 {strides = array<i32>} : memref<8x8x128xf32, #tpu.memory_space<vmem>>, vector<1x8x128xf32>,
      %c6_i32 = arith.constant 6 : i32
      %c7_i32_74 = arith.constant 7 : i32
      %262 = arith.subi %c7_i32_74, %c6_i32 : i32
      %c8_i32_75 = arith.constant 8 : i32
      %263 = arith.muli %262, %c8_i32_75 : i32
      %264 = tpu.assume_multiple %263, 8 : i32
      %265 = arith.truncf %255 : vector<8x128xf32> to vector<8x128xbf16>
      %c0_76 = arith.constant 0 : index
      %c0_77 = arith.constant 0 : index
      %c0_78 = arith.constant 0 : index
      %266 = vector.load %arg4[%c0_76, %c0_77, %c0_78] : memref<1x128x512xbf16, #tpu.memory_space<vmem>>, vector<1x128x512xbf16>
      %267 = vector.shape_cast %266 : vector<1x128x512xbf16> to vector<128x512xbf16>
      %cst_79 = arith.constant dense<0.000000e+00> : vector<8x512xf32>
      %268 = tpu.matmul %265, %267, %cst_79 {dimension_numbers = #tpu.dot_dimension_numbers<[1], [0], [0], [1], [0, 0, 1, 1], [], []>} : vector<8x128xbf16>, vector<128x512xbf16>, vector<8x512xf32> -> vector<8x512xf32>
      %269 = arith.index_cast %264 : i32 to index
      %c0_80 = arith.constant 0 : index
      %270 = vector.load %arg7[%269, %c0_80] : memref<64x512xbf16, #tpu.memory_space<vmem>>, vector<8x512xbf16>
      %271 = arith.extf %270 : vector<8x512xbf16> to vector<8x512xf32>
      %272 = arith.addf %268, %271 : vector<8x512xf32>
      %273 = vector.broadcast %8 : vector<1x512xf32> to vector<8x512xf32>
      %274 = arith.addf %272, %273 : vector<8x512xf32>
      %275 = vector.extract_strided_slice %274 {offsets = [0, 0], sizes = [8, 384], strides = [1, 1]} : vector<8x512xf32> to vector<8x384xf32>
      %276 = arith.negf %275 : vector<8x384xf32>
      %277 = math.exp %276 : vector<8x384xf32>
      %cst_81 = arith.constant 1.000000e+00 : f32
      %278 = vector.broadcast %cst_81 : f32 to vector<8x384xf32>
      %279 = arith.addf %278, %277 : vector<8x384xf32>
      %280 = arith.divf %278, %279 : vector<8x384xf32>
      %281 = vector.extract_strided_slice %280 {offsets = [0, 0], sizes = [8, 128], strides = [1, 1]} : vector<8x384xf32> to vector<8x128xf32>
      %282 = vector.extract_strided_slice %280 {offsets = [0, 128], sizes = [8, 128], strides = [1, 1]} : vector<8x384xf32> to vector<8x128xf32>
      %283 = vector.extract_strided_slice %280 {offsets = [0, 256], sizes = [8, 128], strides = [1, 1]} : vector<8x384xf32> to vector<8x128xf32>
      %284 = vector.extract_strided_slice %274 {offsets = [0, 384], sizes = [8, 128], strides = [1, 1]} : vector<8x512xf32> to vector<8x128xf32>
      %285 = math.tanh %284 : vector<8x128xf32>
      %286 = arith.mulf %282, %257 : vector<8x128xf32>
      %287 = arith.mulf %281, %285 : vector<8x128xf32>
      %288 = arith.addf %286, %287 : vector<8x128xf32>
      %289 = math.tanh %288 : vector<8x128xf32>
      %290 = arith.mulf %283, %289 : vector<8x128xf32>
      %291 = vector.broadcast %262 : i32 to vector<8x1xi32>
      %292 = arith.cmpi sgt, %6, %291 : vector<8x1xi32>
      %293 = arith.extui %292 : vector<8x1xi1> to vector<8x1xi32>
      %294 = arith.sitofp %293 : vector<8x1xi32> to vector<8x1xf32>
      %295 = vector.broadcast %294 : vector<8x1xf32> to vector<8x128xf32>
      %296 = arith.mulf %290, %295 : vector<8x128xf32>
      %297 = vector.broadcast %294 : vector<8x1xf32> to vector<8x128xf32>
      %298 = arith.mulf %288, %297 : vector<8x128xf32>
      %299 = arith.index_cast %262 : i32 to index
      %c0_82 = arith.constant 0 : index
      %c0_83 = arith.constant 0 : index
      %300 = vector.load %arg6[%299, %c0_82, %c0_83] : memref<8x8x128xf32, #tpu.memory_space<vmem>>, vector<1x8x128xf32>
      %301 = vector.shape_cast %300 : vector<1x8x128xf32> to vector<8x128xf32>
      %302 = vector.shape_cast %296 : vector<8x128xf32> to vector<1x8x128xf32>
      tpu.vector_store %arg6[%299, %c0_82, %c0_83], %302 {strides = array<i32>} : memref<8x8x128xf32, #tpu.memory_space<vmem>>, vector<1x8x128xf32>,
      %c7_i32_84 = arith.constant 7 : i32
      %c7_i32_85 = arith.constant 7 : i32
      %303 = arith.subi %c7_i32_85, %c7_i32_84 : i32
      %c8_i32_86 = arith.constant 8 : i32
      %304 = arith.muli %303, %c8_i32_86 : i32
      %305 = tpu.assume_multiple %304, 8 : i32
      %306 = arith.truncf %296 : vector<8x128xf32> to vector<8x128xbf16>
      %c0_87 = arith.constant 0 : index
      %c0_88 = arith.constant 0 : index
      %c0_89 = arith.constant 0 : index
      %307 = vector.load %arg4[%c0_87, %c0_88, %c0_89] : memref<1x128x512xbf16, #tpu.memory_space<vmem>>, vector<1x128x512xbf16>
      %308 = vector.shape_cast %307 : vector<1x128x512xbf16> to vector<128x512xbf16>
      %cst_90 = arith.constant dense<0.000000e+00> : vector<8x512xf32>
      %309 = tpu.matmul %306, %308, %cst_90 {dimension_numbers = #tpu.dot_dimension_numbers<[1], [0], [0], [1], [0, 0, 1, 1], [], []>} : vector<8x128xbf16>, vector<128x512xbf16>, vector<8x512xf32> -> vector<8x512xf32>
      %310 = arith.index_cast %305 : i32 to index
      %c0_91 = arith.constant 0 : index
      %311 = vector.load %arg7[%310, %c0_91] : memref<64x512xbf16, #tpu.memory_space<vmem>>, vector<8x512xbf16>
      %312 = arith.extf %311 : vector<8x512xbf16> to vector<8x512xf32>
      %313 = arith.addf %309, %312 : vector<8x512xf32>
      %314 = vector.broadcast %8 : vector<1x512xf32> to vector<8x512xf32>
      %315 = arith.addf %313, %314 : vector<8x512xf32>
      %316 = vector.extract_strided_slice %315 {offsets = [0, 0], sizes = [8, 384], strides = [1, 1]} : vector<8x512xf32> to vector<8x384xf32>
      %317 = arith.negf %316 : vector<8x384xf32>
      %318 = math.exp %317 : vector<8x384xf32>
      %cst_92 = arith.constant 1.000000e+00 : f32
      %319 = vector.broadcast %cst_92 : f32 to vector<8x384xf32>
      %320 = arith.addf %319, %318 : vector<8x384xf32>
      %321 = arith.divf %319, %320 : vector<8x384xf32>
      %322 = vector.extract_strided_slice %321 {offsets = [0, 0], sizes = [8, 128], strides = [1, 1]} : vector<8x384xf32> to vector<8x128xf32>
      %323 = vector.extract_strided_slice %321 {offsets = [0, 128], sizes = [8, 128], strides = [1, 1]} : vector<8x384xf32> to vector<8x128xf32>
      %324 = vector.extract_strided_slice %321 {offsets = [0, 256], sizes = [8, 128], strides = [1, 1]} : vector<8x384xf32> to vector<8x128xf32>
      %325 = vector.extract_strided_slice %315 {offsets = [0, 384], sizes = [8, 128], strides = [1, 1]} : vector<8x512xf32> to vector<8x128xf32>
      %326 = math.tanh %325 : vector<8x128xf32>
      %327 = arith.mulf %323, %298 : vector<8x128xf32>
      %328 = arith.mulf %322, %326 : vector<8x128xf32>
      %329 = arith.addf %327, %328 : vector<8x128xf32>
      %330 = math.tanh %329 : vector<8x128xf32>
      %331 = arith.mulf %324, %330 : vector<8x128xf32>
      %332 = vector.broadcast %303 : i32 to vector<8x1xi32>
      %333 = arith.cmpi sgt, %6, %332 : vector<8x1xi32>
      %334 = arith.extui %333 : vector<8x1xi1> to vector<8x1xi32>
      %335 = arith.sitofp %334 : vector<8x1xi32> to vector<8x1xf32>
      %336 = vector.broadcast %335 : vector<8x1xf32> to vector<8x128xf32>
      %337 = arith.mulf %331, %336 : vector<8x128xf32>
      %338 = vector.broadcast %335 : vector<8x1xf32> to vector<8x128xf32>
      %339 = arith.mulf %329, %338 : vector<8x128xf32>
      %340 = arith.index_cast %303 : i32 to index
      %c0_93 = arith.constant 0 : index
      %c0_94 = arith.constant 0 : index
      %341 = vector.load %arg6[%340, %c0_93, %c0_94] : memref<8x8x128xf32, #tpu.memory_space<vmem>>, vector<1x8x128xf32>
      %342 = vector.shape_cast %341 : vector<1x8x128xf32> to vector<8x128xf32>
      %343 = vector.shape_cast %337 : vector<8x128xf32> to vector<1x8x128xf32>
      tpu.vector_store %arg6[%340, %c0_93, %c0_94], %343 {strides = array<i32>} : memref<8x8x128xf32, #tpu.memory_space<vmem>>, vector<1x8x128xf32>,
      %c8_i32_95 = arith.constant 8 : i32
    } else {
    }
    return
  }
  func.func @transform_0(%arg0: i32) -> (i32, i32) {
    %c0_i32 = arith.constant 0 : i32
    %c0_i32_0 = arith.constant 0 : i32
    %c0_i32_1 = arith.constant 0 : i32
    return %c0_i32, %c0_i32_0 : i32, i32
  }
  func.func @transform_1(%arg0: i32) -> (i32, i32) {
    %c0_i32 = arith.constant 0 : i32
    %c0_i32_0 = arith.constant 0 : i32
    %c0_i32_1 = arith.constant 0 : i32
    return %c0_i32, %c0_i32_0 : i32, i32
  }
  func.func @transform_2(%arg0: i32) -> (i32, i32, i32) {
    %c0_i32 = arith.constant 0 : i32
    %c0_i32_0 = arith.constant 0 : i32
    %c0_i32_1 = arith.constant 0 : i32
    return %arg0, %c0_i32, %c0_i32_0 : i32, i32, i32
  }
  func.func @transform_3(%arg0: i32) -> (i32, i32, i32) {
    %c0_i32 = arith.constant 0 : i32
    %c0_i32_0 = arith.constant 0 : i32
    %c0_i32_1 = arith.constant 0 : i32
    return %arg0, %c0_i32, %c0_i32_0 : i32, i32, i32
  }
  func.func @transform_4(%arg0: i32) -> (i32, i32, i32) {
    %c0_i32 = arith.constant 0 : i32
    %c0_i32_0 = arith.constant 0 : i32
    %c0_i32_1 = arith.constant 0 : i32
    return %arg0, %c0_i32, %c0_i32_0 : i32, i32, i32
  }
  func.func @transform_5(%arg0: i32) -> (i32, i32, i32) {
    %c0_i32 = arith.constant 0 : i32
    %c0_i32_0 = arith.constant 0 : i32
    %c0_i32_1 = arith.constant 0 : i32
    return %c0_i32, %c0_i32_0, %arg0 : i32, i32, i32
  }
}

</mosaic_0001>

<llo_original>
// kernel: tpu_custom_call.1
$region0: #{tpu_custom_call.1}
  #allocation0 [shape = 'u32[]', space=smem, size = 0x4, offset = 0x4, fixed_abs, tag = 'smem constant byte address 0x4 - core index']
  #allocation1 [shape = 'u32[144,128]{1,0:T(1,128)}', space=vmem, size = 0x12000, scoped, tag = 'internal scratch']
  #allocation2 [shape = 'bf16[64,512]{1,0:T(8,128)(2,1)}', space=vmem, size = 0x10000, scoped, tag = 'scratch operand']
  %s0 = inlined_call_operand.hbm [shape: bf16[64,128], index: 0, kind: input, shape index: {}]
  %s1 = inlined_call_operand.vmem [shape: s32[8,1], index: 1, kind: input, shape index: {}]
  %s2 = inlined_call_operand.hbm [shape: bf16[2,128,512], index: 2, kind: input, shape index: {}]
  %s3 = inlined_call_operand.hbm [shape: bf16[2,128,512], index: 3, kind: input, shape index: {}]
  %s4 = inlined_call_operand.vmem [shape: f32[2,1,512], index: 4, kind: input, shape index: {}]
  %s5 = inlined_call_operand.hbm [shape: f32[8,8,256], index: 5, kind: output, shape index: {}]
  %s6 = sld [smem:[#allocation0]]
  $region73: #{tpu_custom_call.1} parent=0
    _
  %s8 = ssub.s32 1, %s6
  %s9 = scalar_select 0, %s8, %s6
  $region1: #{tpu_custom_call.1} parent=0
    #allocation3 [shape = 'u8[16384]{0}', space=vmem, size = 0x4000, scoped, tag = 'input window, operand 0, single buffered']
    #allocation4 [shape = 's32[2]{0}', space=sflag, size = 0x8, scoped, tag = 'scoped memory for tpu_custom_call.1']
    #allocation5 [shape = 's32[2]{0}', space=sflag, size = 0x8, scoped, tag = 'scoped memory for tpu_custom_call.1']
    #allocation6 [shape = 'u8[262144]{0}', space=vmem, size = 0x40000, scoped, tag = 'input window, operand 2']
    #allocation7 [shape = 's32[2]{0}', space=sflag, size = 0x8, scoped, tag = 'scoped memory for tpu_custom_call.1']
    #allocation8 [shape = 'u8[262144]{0}', space=vmem, size = 0x40000, scoped, tag = 'input window, operand 3']
    #allocation9 [shape = 'u8[65536]{0}', space=vmem, size = 0x10000, scoped, tag = 'output window, operand 0']
    %10 = vsyncpa [#allocation4], 0
    %11 = vsyncpa [#allocation7], 0
    %s12 = scalar_lea.sflag [#allocation7], 1
    %13 = vsyncpa %s12, 0
    %14 = vsyncpa [#allocation5], 0
    %s15 = scalar_lea.sflag [#allocation5], 1
    %16 = vsyncpa %s15, 0
    loop: start=0, step=1, limit=4
    $region2: #{tpu_custom_call.1} parent=1 // loop_pre_header
      _
    $region3: #{tpu_custom_call.1} parent=1 // loop_header
      %s18 = sphi 0, %s22
      %p19 = scmp.ge.s32.totalorder %s18, 4
      %s26 = sphi 0, %s26
      %s28 = sphi 0, %s26
      %s29 = sphi 0, %s28
      %s43 = sphi 0, %s29
      %s47 = sphi 0, %s47
      %s49 = sphi 0, %s47
      %s50 = sphi 0, %s49
      %s64 = sphi 0, %s50
      %s70 = sphi 0, %s72
      %s73 = sphi 0, %s70
      %s74 = sphi 0, %s73
      %s90 = sphi 0, %s74
      %s96 = sphi 0, %s98
      %s99 = sphi 0, %s96
      %s100 = sphi 0, %s99
      %s116 = sphi 0, %s100
      %s122 = sphi 0, %s124
      %s125 = sphi 0, %s122
      %s126 = sphi 0, %s125
      %s142 = sphi 0, %s126
      %s148 = sphi 0, %s150
      %s151 = sphi 0, %s148
      %s152 = sphi 0, %s151
      %s168 = sphi 0, %s152
    $region4: #{tpu_custom_call.1} parent=1 // loop_header_branch
      %21 = sbr.rel (%p19) target = $region8
    $region5: #{tpu_custom_call.1} parent=1 // loop_body
      %s23 = ssub.s32 %s18, 1
      %s24 = ssub.s32 %s18, 2
      %s25 = sadd.s32 %s18, 1
      %s27 = sadd.s32 %s26, 1
      %p30 = scmp.eq.s32.totalorder %s18, 1
      %p31 = scmp.ne.s32.totalorder %s26, %s28
      %p32 = scmp.eq.s32.totalorder %s18, 0
      %p33 = por %p31, %p32
      %p34 = scmp.ne.s32.totalorder %s26, %s28
      %p35 = scmp.eq.s32.totalorder %s23, 1
      %p36 = por %p34, %p35
      %p37 = scmp.ne.s32.totalorder %s28, %s29
      %p38 = scmp.eq.s32.totalorder %s23, 0
      %p39 = por %p37, %p38
      %p40 = scmp.ne.s32.totalorder %s28, %s29
      %p41 = scmp.eq.s32.totalorder %s24, 1
      %p42 = por %p40, %p41
      %p44 = scmp.ne.s32.totalorder %s29, %s43
      %p45 = scmp.eq.s32.totalorder %s24, 0
      %p46 = por %p44, %p45
      %s48 = sadd.s32 %s47, 1
      %p51 = scmp.eq.s32.totalorder %s18, 1
      %p52 = scmp.ne.s32.totalorder %s47, %s49
      %p53 = scmp.eq.s32.totalorder %s18, 0
      %p54 = por %p52, %p53
      %p55 = scmp.ne.s32.totalorder %s47, %s49
      %p56 = scmp.eq.s32.totalorder %s23, 1
      %p57 = por %p55, %p56
      %p58 = scmp.ne.s32.totalorder %s49, %s50
      %p59 = scmp.eq.s32.totalorder %s23, 0
      %p60 = por %p58, %p59
      %p61 = scmp.ne.s32.totalorder %s49, %s50
      %p62 = scmp.eq.s32.totalorder %s24, 1
      %p63 = por %p61, %p62
      %p65 = scmp.ne.s32.totalorder %s50, %s64
      %p66 = scmp.eq.s32.totalorder %s24, 0
      %p67 = por %p65, %p66
      %s68 = ssub.s32 %s18, %s25
      %p69 = scmp.eq.s32.totalorder %s68, 0
      %s71 = sadd.s32 %s70, 1
      %s72 = scalar_select %p69, %s70, %s71
      %p75 = pneg %p69
      %p76 = scmp.eq.s32.totalorder %s18, 1
      %p77 = por %p75, %p76
      %p78 = scmp.ne.s32.totalorder %s70, %s73
      %p79 = scmp.eq.s32.totalorder %s18, 0
      %p80 = por %p78, %p79
      %p81 = scmp.ne.s32.totalorder %s70, %s73
      %p82 = scmp.eq.s32.totalorder %s23, 1
      %p83 = por %p81, %p82
      %p84 = scmp.ne.s32.totalorder %s73, %s74
      %p85 = scmp.eq.s32.totalorder %s23, 0
      %p86 = por %p84, %p85
      %p87 = scmp.ne.s32.totalorder %s73, %s74
      %p88 = scmp.eq.s32.totalorder %s24, 1
      %p89 = por %p87, %p88
      %p91 = scmp.ne.s32.totalorder %s74, %s90
      %p92 = scmp.eq.s32.totalorder %s24, 0
      %p93 = por %p91, %p92
      %s94 = ssub.s32 %s18, %s25
      %p95 = scmp.eq.s32.totalorder %s94, 0
      %s97 = sadd.s32 %s96, 1
      %s98 = scalar_select %p95, %s96, %s97
      %p101 = pneg %p95
      %p102 = scmp.eq.s32.totalorder %s18, 1
      %p103 = por %p101, %p102
      %p104 = scmp.ne.s32.totalorder %s96, %s99
      %p105 = scmp.eq.s32.totalorder %s18, 0
      %p106 = por %p104, %p105
      %p107 = scmp.ne.s32.totalorder %s96, %s99
      %p108 = scmp.eq.s32.totalorder %s23, 1
      %p109 = por %p107, %p108
      %p110 = scmp.ne.s32.totalorder %s99, %s100
      %p111 = scmp.eq.s32.totalorder %s23, 0
      %p112 = por %p110, %p111
      %p113 = scmp.ne.s32.totalorder %s99, %s100
      %p114 = scmp.eq.s32.totalorder %s24, 1
      %p115 = por %p113, %p114
      %p117 = scmp.ne.s32.totalorder %s100, %s116
      %p118 = scmp.eq.s32.totalorder %s24, 0
      %p119 = por %p117, %p118
      %s120 = ssub.s32 %s18, %s25
      %p121 = scmp.eq.s32.totalorder %s120, 0
      %s123 = sadd.s32 %s122, 1
      %s124 = scalar_select %p121, %s122, %s123
      %p127 = pneg %p121
      %p128 = scmp.eq.s32.totalorder %s18, 1
      %p129 = por %p127, %p128
      %p130 = scmp.ne.s32.totalorder %s122, %s125
      %p131 = scmp.eq.s32.totalorder %s18, 0
      %p132 = por %p130, %p131
      %p133 = scmp.ne.s32.totalorder %s122, %s125
      %p134 = scmp.eq.s32.totalorder %s23, 1
      %p135 = por %p133, %p134
      %p136 = scmp.ne.s32.totalorder %s125, %s126
      %p137 = scmp.eq.s32.totalorder %s23, 0
      %p138 = por %p136, %p137
      %p139 = scmp.ne.s32.totalorder %s125, %s126
      %p140 = scmp.eq.s32.totalorder %s24, 1
      %p141 = por %p139, %p140
      %p143 = scmp.ne.s32.totalorder %s126, %s142
      %p144 = scmp.eq.s32.totalorder %s24, 0
      %p145 = por %p143, %p144
      %s146 = ssub.s32 %s18, %s25
      %p147 = scmp.eq.s32.totalorder %s146, 0
      %s149 = sadd.s32 %s148, 1
      %s150 = scalar_select %p147, %s148, %s149
      %p153 = pneg %p147
      %p154 = scmp.eq.s32.totalorder %s18, 1
      %p155 = por %p153, %p154
      %p156 = scmp.ne.s32.totalorder %s148, %s151
      %p157 = scmp.eq.s32.totalorder %s18, 0
      %p158 = por %p156, %p157
      %p159 = scmp.ne.s32.totalorder %s148, %s151
      %p160 = scmp.eq.s32.totalorder %s23, 1
      %p161 = por %p159, %p160
      %p162 = scmp.ne.s32.totalorder %s151, %s152
      %p163 = scmp.eq.s32.totalorder %s23, 0
      %p164 = por %p162, %p163
      %p165 = scmp.ne.s32.totalorder %s151, %s152
      %p166 = scmp.eq.s32.totalorder %s24, 1
      %p167 = por %p165, %p166
      %p169 = scmp.ne.s32.totalorder %s152, %s168
      %p170 = scmp.eq.s32.totalorder %s24, 0
      %p171 = por %p169, %p170
      %p172 = scmp.le.s32.totalorder 1, %s18
      %p173 = scmp.lt.s32.totalorder %s18, 3
      %p174 = pnand %p172, %p173
      %p175 = pneg %p174
      // Predicated region
      $region9: #{tpu_custom_call.1} parent=5 // pred_check
        _
      $region10: #{tpu_custom_call.1} parent=5 // pred_check_branch
        %177 = sbr.rel (%p174) target = $region12
      $region11: #{tpu_custom_call.1} parent=5 // pred_region
        %s178 = ssub.s32 %s18, 1
        // Predicated region
        $region13: #{tpu_custom_call.1} parent=11 // pred_check
          %p179 = pneg %p39
        $region14: #{tpu_custom_call.1} parent=11 // pred_check_branch
          %181 = sbr.rel (%p179) target = $region16
        $region15: #{tpu_custom_call.1} parent=11 // pred_region
          %s183 = ssub.s32 512, 512
          %184 = vsyncadd [#allocation4], %s183
          %s185 = sshll.u32 [#allocation3], 4
          %s186 = int_to_ptr.vmem [resolvable:$true] %s185
          %191 = dma.hbm_to_vmem [thread:$0]  %s0, 512, %s186, [#allocation4], 64, 64, 4
        $region16: #{tpu_custom_call.1} parent=11 // pred_fallthru
          _
        // Predicated region
        $region17: #{tpu_custom_call.1} parent=11 // pred_check
          %p192 = pneg %p60
        $region18: #{tpu_custom_call.1} parent=11 // pred_check_branch
          %194 = sbr.rel (%p192) target = $region20
        $region19: #{tpu_custom_call.1} parent=11 // pred_region
          _
        $region20: #{tpu_custom_call.1} parent=11 // pred_fallthru
          _
      $region12: #{tpu_custom_call.1} parent=5 // pred_fallthru
        _
      %p195 = scmp.lt.s32.totalorder %s18, 2
      // Predicated region
      $region21: #{tpu_custom_call.1} parent=5 // pred_check
        %p196 = pneg %p195
      $region22: #{tpu_custom_call.1} parent=5 // pred_check_branch
        %198 = sbr.rel (%p196) target = $region24
      $region23: #{tpu_custom_call.1} parent=5 // pred_region
        // Predicated region
        $region25: #{tpu_custom_call.1} parent=23 // pred_check
          %p199 = pneg %p80
        $region26: #{tpu_custom_call.1} parent=23 // pred_check_branch
          %201 = sbr.rel (%p199) target = $region28
        $region27: #{tpu_custom_call.1} parent=23 // pred_region
          %s202 = sand.u32 %s18, 1
          %s203 = scalar_lea.sflag [#allocation7], %s202
          %s204 = sand.u32 %s70, 1
          %s205 = smul.addr %s204, 256
          %s206 = scalar_lea.vmem [#allocation6], %s205
          %s208 = ssub.s32 4096, 4096
          %209 = vsyncadd %s203, %s208
          %s210 = smul.addr %s18, 64
          %s211 = smul.addr %s210, 64
          %s212 = scalar_lea.hbm %s2, %s211
          %s213 = sshll.u32 %s206, 4
          %s214 = int_to_ptr.vmem [resolvable:$true] %s213
          %219 = dma.hbm_to_vmem [thread:$0]  %s212, 4096, %s214, %s203, 256, 256, 16
        $region28: #{tpu_custom_call.1} parent=23 // pred_fallthru
          _
        // Predicated region
        $region29: #{tpu_custom_call.1} parent=23 // pred_check
          %p220 = pneg %p106
        $region30: #{tpu_custom_call.1} parent=23 // pred_check_branch
          %222 = sbr.rel (%p220) target = $region32
        $region31: #{tpu_custom_call.1} parent=23 // pred_region
          %s223 = sand.u32 %s18, 1
          %s224 = scalar_lea.sflag [#allocation7], %s223
          %s225 = sand.u32 %s96, 1
          %s226 = smul.addr %s225, 256
          %s227 = scalar_lea.vmem [#allocation8], %s226
          %s229 = ssub.s32 4096, 4096
          %230 = vsyncadd %s224, %s229
          %s231 = smul.addr %s18, 64
          %s232 = smul.addr %s231, 64
          %s233 = scalar_lea.hbm %s3, %s232
          %s234 = sshll.u32 %s227, 4
          %s235 = int_to_ptr.vmem [resolvable:$true] %s234
          %240 = dma.hbm_to_vmem [thread:$0]  %s233, 4096, %s235, %s224, 256, 256, 16
        $region32: #{tpu_custom_call.1} parent=23 // pred_fallthru
          _
        // Predicated region
        $region33: #{tpu_custom_call.1} parent=23 // pred_check
          %p241 = pneg %p132
        $region34: #{tpu_custom_call.1} parent=23 // pred_check_branch
          %243 = sbr.rel (%p241) target = $region36
        $region35: #{tpu_custom_call.1} parent=23 // pred_region
          %p244 = scmp.lt.s32.totalorder %s18, 1
          %s245 = scalar_select %p244, %s18, 1
          %s246 = smul.addr %s245, 4
          %s247 = scalar_lea.vmem %s4, %s246
        $region36: #{tpu_custom_call.1} parent=23 // pred_fallthru
          _
      $region24: #{tpu_custom_call.1} parent=5 // pred_fallthru
        _
      %p248 = scmp.le.s32.totalorder 1, %s18
      %p249 = scmp.lt.s32.totalorder %s18, 3
      %p250 = pnand %p248, %p249
      %p251 = pneg %p250
      // Predicated region
      $region37: #{tpu_custom_call.1} parent=5 // pred_check
        _
      $region38: #{tpu_custom_call.1} parent=5 // pred_check_branch
        %253 = sbr.rel (%p250) target = $region40
      $region39: #{tpu_custom_call.1} parent=5 // pred_region
        %s254 = ssub.s32 %s18, 1
        // Predicated region
        $region41: #{tpu_custom_call.1} parent=39 // pred_check
          %p255 = pneg %p39
        $region42: #{tpu_custom_call.1} parent=39 // pred_check_branch
          %257 = sbr.rel (%p255) target = $region44
        $region43: #{tpu_custom_call.1} parent=39 // pred_region
          %258 = dma.done [#allocation4], 512
        $region44: #{tpu_custom_call.1} parent=39 // pred_fallthru
          _
        %s259 = sand.u32 %s23, 1
        %s260 = scalar_lea.sflag [#allocation7], %s259
        %s261 = sand.u32 %s73, 1
        %s262 = smul.addr %s261, 256
        %s263 = scalar_lea.vmem [#allocation6], %s262
        // Predicated region
        $region45: #{tpu_custom_call.1} parent=39 // pred_check
          %p264 = pneg %p86
        $region46: #{tpu_custom_call.1} parent=39 // pred_check_branch
          %266 = sbr.rel (%p264) target = $region48
        $region47: #{tpu_custom_call.1} parent=39 // pred_region
          %267 = dma.done %s260, 4096
        $region48: #{tpu_custom_call.1} parent=39 // pred_fallthru
          _
        %s268 = sand.u32 %s23, 1
        %s269 = scalar_lea.sflag [#allocation7], %s268
        %s270 = sand.u32 %s99, 1
        %s271 = smul.addr %s270, 256
        %s272 = scalar_lea.vmem [#allocation8], %s271
        // Predicated region
        $region49: #{tpu_custom_call.1} parent=39 // pred_check
          %p273 = pneg %p112
        $region50: #{tpu_custom_call.1} parent=39 // pred_check_branch
          %275 = sbr.rel (%p273) target = $region52
        $region51: #{tpu_custom_call.1} parent=39 // pred_region
          %276 = dma.done %s269, 4096
        $region52: #{tpu_custom_call.1} parent=39 // pred_fallthru
          _
        %p277 = pneg %p39
        %p278 = pneg %p36
        %p279 = pneg %p60
        %p280 = pneg %p57
        %s281 = sand.u32 %s23, 1
        %s282 = scalar_lea.sflag [#allocation7], %s281
        %s283 = sand.u32 %s73, 1
        %s284 = smul.addr %s283, 256
        %s285 = scalar_lea.vmem [#allocation6], %s284
        %p286 = pneg %p86
        %p287 = pneg %p83
        %s288 = sand.u32 %s23, 1
        %s289 = scalar_lea.sflag [#allocation7], %s288
        %s290 = sand.u32 %s99, 1
        %s291 = smul.addr %s290, 256
        %s292 = scalar_lea.vmem [#allocation8], %s291
        %p293 = pneg %p112
        %p294 = pneg %p109
        %p295 = scmp.lt.s32.totalorder %s23, 1
        %s296 = scalar_select %p295, %s23, 1
        %s297 = smul.addr %s296, 4
        %s298 = scalar_lea.vmem %s4, %s297
        %p299 = pneg %p138
        %p300 = pneg %p135
        %p301 = pneg %p164
        %p302 = pneg %p161
        %s303 = sand.u32 %s151, 1
        %s304 = scalar_lea.sflag [#allocation5], %s303
        %s305 = sand.u32 %s151, 1
        %s306 = smul.addr %s305, 64
        %s307 = scalar_lea.vmem [#allocation9], %s306
        %p308 = scmp.lt.s32.totalorder %s23, 1
        %s309 = scalar_select %p308, %s23, 1
        %s310 = smul.addr %s309, 4
        %s311 = scalar_lea.vmem %s4, %s310
        %v313 = vld [vmem:[#allocation3] sm:$0xf]
        %v314 = vld [vmem:[#allocation3 + $0x4] sm:$0xf]
        %v315 = vld [vmem:[#allocation3 + $0x8] sm:$0xf]
        %v316 = vld [vmem:[#allocation3 + $0xc] sm:$0xf]
        %v317 = vld [vmem:[#allocation3 + $0x10] sm:$0xf]
        %v318 = vld [vmem:[#allocation3 + $0x14] sm:$0xf]
        %v319 = vld [vmem:[#allocation3 + $0x18] sm:$0xf]
        %v320 = vld [vmem:[#allocation3 + $0x1c] sm:$0xf]
        %v321 = vld [vmem:[%s263] sm:$0xff]
        %v322 = vld [vmem:[%s263 + $0x8] sm:$0xff]
        %v323 = vld [vmem:[%s263 + $0x10] sm:$0xff]
        %v324 = vld [vmem:[%s263 + $0x18] sm:$0xff]
        %v325 = vld [vmem:[%s263 + $0x20] sm:$0xff]
        %v326 = vld [vmem:[%s263 + $0x28] sm:$0xff]
        %v327 = vld [vmem:[%s263 + $0x30] sm:$0xff]
        %v328 = vld [vmem:[%s263 + $0x38] sm:$0xff]
        %v329 = vld [vmem:[%s263 + $0x40] sm:$0xff]
        %v330 = vld [vmem:[%s263 + $0x48] sm:$0xff]
        %v331 = vld [vmem:[%s263 + $0x50] sm:$0xff]
        %v332 = vld [vmem:[%s263 + $0x58] sm:$0xff]
        %v333 = vld [vmem:[%s263 + $0x60] sm:$0xff]
        %v334 = vld [vmem:[%s263 + $0x68] sm:$0xff]
        %v335 = vld [vmem:[%s263 + $0x70] sm:$0xff]
        %v336 = vld [vmem:[%s263 + $0x78] sm:$0xff]
        %v337 = vld [vmem:[%s263 + $0x80] sm:$0xff]
        %v338 = vld [vmem:[%s263 + $0x88] sm:$0xff]
        %v339 = vld [vmem:[%s263 + $0x90] sm:$0xff]
        %v340 = vld [vmem:[%s263 + $0x98] sm:$0xff]
        %v341 = vld [vmem:[%s263 + $0xa0] sm:$0xff]
        %v342 = vld [vmem:[%s263 + $0xa8] sm:$0xff]
        %v343 = vld [vmem:[%s263 + $0xb0] sm:$0xff]
        %v344 = vld [vmem:[%s263 + $0xb8] sm:$0xff]
        %v345 = vld [vmem:[%s263 + $0xc0] sm:$0xff]
        %v346 = vld [vmem:[%s263 + $0xc8] sm:$0xff]
        %v347 = vld [vmem:[%s263 + $0xd0] sm:$0xff]
        %v348 = vld [vmem:[%s263 + $0xd8] sm:$0xff]
        %v349 = vld [vmem:[%s263 + $0xe0] sm:$0xff]
        %v350 = vld [vmem:[%s263 + $0xe8] sm:$0xff]
        %v351 = vld [vmem:[%s263 + $0xf0] sm:$0xff]
        %v352 = vld [vmem:[%s263 + $0xf8] sm:$0xff]
        %v361 = vunpack.c.l.b16 %v313
        %v362 = vunpack.c.l.b16 %v314
        %v363 = vunpack.c.l.b16 %v315
        %v364 = vunpack.c.l.b16 %v316
        %v365 = vunpack.c.l.b16 %v317
        %v366 = vunpack.c.l.b16 %v318
        %v367 = vunpack.c.l.b16 %v319
        %v368 = vunpack.c.l.b16 %v320
        %v369 = vpack.c.b16 %v362, %v361
        %v370 = vpack.c.b16 %v364, %v363
        %v371 = vpack.c.b16 %v366, %v365
        %v372 = vpack.c.b16 %v368, %v367
        %v409 = vunpack.c.l.b16 %v321
        %v410 = vunpack.c.h.b16 %v321
        %v411 = vunpack.c.l.b16 %v322
        %v412 = vunpack.c.h.b16 %v322
        %v413 = vunpack.c.l.b16 %v323
        %v414 = vunpack.c.h.b16 %v323
        %v415 = vunpack.c.l.b16 %v324
        %v416 = vunpack.c.h.b16 %v324
        %v417 = vunpack.c.l.b16 %v325
        %v418 = vunpack.c.h.b16 %v325
        %v419 = vunpack.c.l.b16 %v326
        %v420 = vunpack.c.h.b16 %v326
        %v421 = vunpack.c.l.b16 %v327
        %v422 = vunpack.c.h.b16 %v327
        %v423 = vunpack.c.l.b16 %v328
        %v424 = vunpack.c.h.b16 %v328
        %v425 = vunpack.c.l.b16 %v329
        %v426 = vunpack.c.h.b16 %v329
        %v427 = vunpack.c.l.b16 %v330
        %v428 = vunpack.c.h.b16 %v330
        %v429 = vunpack.c.l.b16 %v331
        %v430 = vunpack.c.h.b16 %v331
        %v431 = vunpack.c.l.b16 %v332
        %v432 = vunpack.c.h.b16 %v332
        %v433 = vunpack.c.l.b16 %v333
        %v434 = vunpack.c.h.b16 %v333
        %v435 = vunpack.c.l.b16 %v334
        %v436 = vunpack.c.h.b16 %v334
        %v437 = vunpack.c.l.b16 %v335
        %v438 = vunpack.c.h.b16 %v335
        %v439 = vunpack.c.l.b16 %v336
        %v440 = vunpack.c.h.b16 %v336
        %v441 = vunpack.c.l.b16 %v337
        %v442 = vunpack.c.h.b16 %v337
        %v443 = vunpack.c.l.b16 %v338
        %v444 = vunpack.c.h.b16 %v338
        %v445 = vunpack.c.l.b16 %v339
        %v446 = vunpack.c.h.b16 %v339
        %v447 = vunpack.c.l.b16 %v340
        %v448 = vunpack.c.h.b16 %v340
        %v449 = vunpack.c.l.b16 %v341
        %v450 = vunpack.c.h.b16 %v341
        %v451 = vunpack.c.l.b16 %v342
        %v452 = vunpack.c.h.b16 %v342
        %v453 = vunpack.c.l.b16 %v343
        %v454 = vunpack.c.h.b16 %v343
        %v455 = vunpack.c.l.b16 %v344
        %v456 = vunpack.c.h.b16 %v344
        %v457 = vunpack.c.l.b16 %v345
        %v458 = vunpack.c.h.b16 %v345
        %v459 = vunpack.c.l.b16 %v346
        %v460 = vunpack.c.h.b16 %v346
        %v461 = vunpack.c.l.b16 %v347
        %v462 = vunpack.c.h.b16 %v347
        %v463 = vunpack.c.l.b16 %v348
        %v464 = vunpack.c.h.b16 %v348
        %v465 = vunpack.c.l.b16 %v349
        %v466 = vunpack.c.h.b16 %v349
        %v467 = vunpack.c.l.b16 %v350
        %v468 = vunpack.c.h.b16 %v350
        %v469 = vunpack.c.l.b16 %v351
        %v470 = vunpack.c.h.b16 %v351
        %v471 = vunpack.c.l.b16 %v352
        %v472 = vunpack.c.h.b16 %v352
        %v473 = vpack.c.b16 %v413, %v409
        %v474 = vpack.c.b16 %v414, %v410
        %v475 = vpack.c.b16 %v415, %v411
        %v476 = vpack.c.b16 %v416, %v412
        %v477 = vpack.c.b16 %v421, %v417
        %v478 = vpack.c.b16 %v422, %v418
        %v479 = vpack.c.b16 %v423, %v419
        %v480 = vpack.c.b16 %v424, %v420
        %v481 = vpack.c.b16 %v429, %v425
        %v482 = vpack.c.b16 %v430, %v426
        %v483 = vpack.c.b16 %v431, %v427
        %v484 = vpack.c.b16 %v432, %v428
        %v485 = vpack.c.b16 %v437, %v433
        %v486 = vpack.c.b16 %v438, %v434
        %v487 = vpack.c.b16 %v439, %v435
        %v488 = vpack.c.b16 %v440, %v436
        %v489 = vpack.c.b16 %v445, %v441
        %v490 = vpack.c.b16 %v446, %v442
        %v491 = vpack.c.b16 %v447, %v443
        %v492 = vpack.c.b16 %v448, %v444
        %v493 = vpack.c.b16 %v453, %v449
        %v494 = vpack.c.b16 %v454, %v450
        %v495 = vpack.c.b16 %v455, %v451
        %v496 = vpack.c.b16 %v456, %v452
        %v497 = vpack.c.b16 %v461, %v457
        %v498 = vpack.c.b16 %v462, %v458
        %v499 = vpack.c.b16 %v463, %v459
        %v500 = vpack.c.b16 %v464, %v460
        %v501 = vpack.c.b16 %v469, %v465
        %v502 = vpack.c.b16 %v470, %v466
        %v503 = vpack.c.b16 %v471, %v467
        %v504 = vpack.c.b16 %v472, %v468
        %537 = vmatprep.subr.bf16.mxu0 %v502
        %538 = vmatpush1.bf16.msra.mxu0 %v501
        %539 = vmatprep.subr.bf16.mxu0 %v498
        %540 = vmatpush1.bf16.msra.mxu0 %v497
        %541 = vmatprep.subr.bf16.mxu0 %v494
        %542 = vmatpush1.bf16.msra.mxu0 %v493
        %543 = vmatprep.subr.bf16.mxu0 %v490
        %544 = vmatpush1.bf16.msra.mxu0 %v489
        %545 = vmatprep.subr.bf16.mxu0 %v486
        %546 = vmatpush1.bf16.msra.mxu0 %v485
        %547 = vmatprep.subr.bf16.mxu0 %v482
        %548 = vmatpush1.bf16.msra.mxu0 %v481
        %549 = vmatprep.subr.bf16.mxu0 %v478
        %550 = vmatpush1.bf16.msra.mxu0 %v477
        %551 = vmatprep.subr.bf16.mxu0 %v474
        %552 = vmatpush1.bf16.msra.mxu0 %v473
        %553 = vmatprep.subr.bf16.mxu0 0
        %554 = vmatpush2.bf16.msra.mxu0 0
        %555 = vmatprep.subr.bf16.mxu0 0
        %556 = vmatpush2.bf16.msra.mxu0 0
        %557 = vmatprep.subr.bf16.mxu0 0
        %558 = vmatpush2.bf16.msra.mxu0 0
        %559 = vmatprep.subr.bf16.mxu0 0
        %560 = vmatpush2.bf16.msra.mxu0 0
        %561 = vmatprep.subr.bf16.mxu0 0
        %562 = vmatpush2.bf16.msra.mxu0 0
        %563 = vmatprep.subr.bf16.mxu0 0
        %564 = vmatpush2.bf16.msra.mxu0 0
        %565 = vmatprep.subr.bf16.mxu0 0
        %566 = vmatpush2.bf16.msra.mxu0 0
        %567 = vmatprep.subr.bf16.mxu0 0
        %568 = vmatpush2.bf16.msra.mxu0 0
        %569 = vmatprep.mubr.bf16.mxu0 0
        %570 = vmatmul.mubr.bf16.gmra.mxu0 %v369
        %v571 = vpop.f32.mrf.mxu0
        %v572 = vadd.f32 0.0, %v571
        %v573 = vpop.f32.mrf.mxu0
        %v574 = vadd.f32 0.0, %v573
        %v575 = vpop.f32.mrf.mxu0
        %v576 = vadd.f32 0.0, %v575
        %v577 = vpop.f32.mrf.mxu0
        %v578 = vadd.f32 0.0, %v577
        %579 = vmatprep.mubr.bf16.mxu0 0
        %580 = vmatmul.mubr.bf16.gmra.mxu0 %v370
        %v581 = vpop.f32.mrf.mxu0
        %v582 = vadd.f32 0.0, %v581
        %v583 = vpop.f32.mrf.mxu0
        %v584 = vadd.f32 0.0, %v583
        %v585 = vpop.f32.mrf.mxu0
        %v586 = vadd.f32 0.0, %v585
        %v587 = vpop.f32.mrf.mxu0
        %v588 = vadd.f32 0.0, %v587
        %589 = vmatprep.mubr.bf16.mxu0 0
        %590 = vmatmul.mubr.bf16.gmra.mxu0 %v371
        %v591 = vpop.f32.mrf.mxu0
        %v592 = vadd.f32 0.0, %v591
        %v593 = vpop.f32.mrf.mxu0
        %v594 = vadd.f32 0.0, %v593
        %v595 = vpop.f32.mrf.mxu0
        %v596 = vadd.f32 0.0, %v595
        %v597 = vpop.f32.mrf.mxu0
        %v598 = vadd.f32 0.0, %v597
        %599 = vmatprep.mubr.bf16.mxu0 0
        %600 = vmatmul.mubr.bf16.gmra.mxu0 %v372
        %v601 = vpop.f32.mrf.mxu0
        %v602 = vadd.f32 0.0, %v601
        %v603 = vpop.f32.mrf.mxu0
        %v604 = vadd.f32 0.0, %v603
        %v605 = vpop.f32.mrf.mxu0
        %v606 = vadd.f32 0.0, %v605
        %v607 = vpop.f32.mrf.mxu0
        %v608 = vadd.f32 0.0, %v607
        %609 = vdwg.mxu0
        %610 = vmatprep.subr.bf16.mxu0 %v504
        %611 = vmatpush1.bf16.msra.mxu0 %v503
        %612 = vmatprep.subr.bf16.mxu0 %v500
        %613 = vmatpush1.bf16.msra.mxu0 %v499
        %614 = vmatprep.subr.bf16.mxu0 %v496
        %615 = vmatpush1.bf16.msra.mxu0 %v495
        %616 = vmatprep.subr.bf16.mxu0 %v492
        %617 = vmatpush1.bf16.msra.mxu0 %v491
        %618 = vmatprep.subr.bf16.mxu0 %v488
        %619 = vmatpush1.bf16.msra.mxu0 %v487
        %620 = vmatprep.subr.bf16.mxu0 %v484
        %621 = vmatpush1.bf16.msra.mxu0 %v483
        %622 = vmatprep.subr.bf16.mxu0 %v480
        %623 = vmatpush1.bf16.msra.mxu0 %v479
        %624 = vmatprep.subr.bf16.mxu0 %v476
        %625 = vmatpush1.bf16.msra.mxu0 %v475
        %626 = vmatprep.subr.bf16.mxu0 0
        %627 = vmatpush2.bf16.msra.mxu0 0
        %628 = vmatprep.subr.bf16.mxu0 0
        %629 = vmatpush2.bf16.msra.mxu0 0
        %630 = vmatprep.subr.bf16.mxu0 0
        %631 = vmatpush2.bf16.msra.mxu0 0
        %632 = vmatprep.subr.bf16.mxu0 0
        %633 = vmatpush2.bf16.msra.mxu0 0
        %634 = vmatprep.subr.bf16.mxu0 0
        %635 = vmatpush2.bf16.msra.mxu0 0
        %636 = vmatprep.subr.bf16.mxu0 0
        %637 = vmatpush2.bf16.msra.mxu0 0
        %638 = vmatprep.subr.bf16.mxu0 0
        %639 = vmatpush2.bf16.msra.mxu0 0
        %640 = vmatprep.subr.bf16.mxu0 0
        %641 = vmatpush2.bf16.msra.mxu0 0
        %642 = vmatprep.mubr.bf16.mxu0 0
        %643 = vmatmul.mubr.bf16.gmra.mxu0 %v369
        %v644 = vpop.f32.mrf.mxu0
        %v645 = vadd.f32 0.0, %v644
        %v646 = vpop.f32.mrf.mxu0
        %v647 = vadd.f32 0.0, %v646
        %v648 = vpop.f32.mrf.mxu0
        %v649 = vadd.f32 0.0, %v648
        %v650 = vpop.f32.mrf.mxu0
        %v651 = vadd.f32 0.0, %v650
        %652 = vmatprep.mubr.bf16.mxu0 0
        %653 = vmatmul.mubr.bf16.gmra.mxu0 %v370
        %v654 = vpop.f32.mrf.mxu0
        %v655 = vadd.f32 0.0, %v654
        %v656 = vpop.f32.mrf.mxu0
        %v657 = vadd.f32 0.0, %v656
        %v658 = vpop.f32.mrf.mxu0
        %v659 = vadd.f32 0.0, %v658
        %v660 = vpop.f32.mrf.mxu0
        %v661 = vadd.f32 0.0, %v660
        %662 = vmatprep.mubr.bf16.mxu0 0
        %663 = vmatmul.mubr.bf16.gmra.mxu0 %v371
        %v664 = vpop.f32.mrf.mxu0
        %v665 = vadd.f32 0.0, %v664
        %v666 = vpop.f32.mrf.mxu0
        %v667 = vadd.f32 0.0, %v666
        %v668 = vpop.f32.mrf.mxu0
        %v669 = vadd.f32 0.0, %v668
        %v670 = vpop.f32.mrf.mxu0
        %v671 = vadd.f32 0.0, %v670
        %672 = vmatprep.mubr.bf16.mxu0 0
        %673 = vmatmul.mubr.bf16.gmra.mxu0 %v372
        %v674 = vpop.f32.mrf.mxu0
        %v675 = vadd.f32 0.0, %v674
        %v676 = vpop.f32.mrf.mxu0
        %v677 = vadd.f32 0.0, %v676
        %v678 = vpop.f32.mrf.mxu0
        %v679 = vadd.f32 0.0, %v678
        %v680 = vpop.f32.mrf.mxu0
        %v681 = vadd.f32 0.0, %v680
        %682 = vdwg.mxu0
        %v683 = vpack.c.bf16 %v576, %v572
        %v684 = vpack.c.bf16 %v578, %v574
        %v685 = vpack.c.bf16 %v649, %v645
        %v686 = vpack.c.bf16 %v651, %v647
        %v687 = vpack.c.bf16 %v586, %v582
        %v688 = vpack.c.bf16 %v588, %v584
        %v689 = vpack.c.bf16 %v659, %v655
        %v690 = vpack.c.bf16 %v661, %v657
        %v691 = vpack.c.bf16 %v596, %v592
        %v692 = vpack.c.bf16 %v598, %v594
        %v693 = vpack.c.bf16 %v669, %v665
        %v694 = vpack.c.bf16 %v671, %v667
        %v695 = vpack.c.bf16 %v606, %v602
        %v696 = vpack.c.bf16 %v608, %v604
        %v697 = vpack.c.bf16 %v679, %v675
        %v698 = vpack.c.bf16 %v681, %v677
        %v715 = vunpack.c.l.b16 %v683
        %v716 = vunpack.c.l.b16 %v684
        %v717 = vunpack.c.l.b16 %v685
        %v718 = vunpack.c.l.b16 %v686
        %v719 = vunpack.c.h.b16 %v683
        %v720 = vunpack.c.h.b16 %v684
        %v721 = vunpack.c.h.b16 %v685
        %v722 = vunpack.c.h.b16 %v686
        %v723 = vunpack.c.l.b16 %v687
        %v724 = vunpack.c.l.b16 %v688
        %v725 = vunpack.c.l.b16 %v689
        %v726 = vunpack.c.l.b16 %v690
        %v727 = vunpack.c.h.b16 %v687
        %v728 = vunpack.c.h.b16 %v688
        %v729 = vunpack.c.h.b16 %v689
        %v730 = vunpack.c.h.b16 %v690
        %v731 = vunpack.c.l.b16 %v691
        %v732 = vunpack.c.l.b16 %v692
        %v733 = vunpack.c.l.b16 %v693
        %v734 = vunpack.c.l.b16 %v694
        %v735 = vunpack.c.h.b16 %v691
        %v736 = vunpack.c.h.b16 %v692
        %v737 = vunpack.c.h.b16 %v693
        %v738 = vunpack.c.h.b16 %v694
        %v739 = vunpack.c.l.b16 %v695
        %v740 = vunpack.c.l.b16 %v696
        %v741 = vunpack.c.l.b16 %v697
        %v742 = vunpack.c.l.b16 %v698
        %v743 = vunpack.c.h.b16 %v695
        %v744 = vunpack.c.h.b16 %v696
        %v745 = vunpack.c.h.b16 %v697
        %v746 = vunpack.c.h.b16 %v698
        %v747 = vpack.c.b16 %v716, %v715
        %v748 = vpack.c.b16 %v718, %v717
        %v749 = vpack.c.b16 %v720, %v719
        %v750 = vpack.c.b16 %v722, %v721
        %v751 = vpack.c.b16 %v724, %v723
        %v752 = vpack.c.b16 %v726, %v725
        %v753 = vpack.c.b16 %v728, %v727
        %v754 = vpack.c.b16 %v730, %v729
        %v755 = vpack.c.b16 %v732, %v731
        %v756 = vpack.c.b16 %v734, %v733
        %v757 = vpack.c.b16 %v736, %v735
        %v758 = vpack.c.b16 %v738, %v737
        %v759 = vpack.c.b16 %v740, %v739
        %v760 = vpack.c.b16 %v742, %v741
        %v761 = vpack.c.b16 %v744, %v743
        %v762 = vpack.c.b16 %v746, %v745
        %779 = vst [vmem:[#allocation2] sm:$0xff] %v747
        %780 = vst [vmem:[#allocation2 + $0x8] sm:$0xff] %v748
        %781 = vst [vmem:[#allocation2 + $0x10] sm:$0xff] %v749
        %782 = vst [vmem:[#allocation2 + $0x18] sm:$0xff] %v750
        %783 = vst [vmem:[#allocation2 + $0x20] sm:$0xff] %v751
        %784 = vst [vmem:[#allocation2 + $0x28] sm:$0xff] %v752
        %785 = vst [vmem:[#allocation2 + $0x30] sm:$0xff] %v753
        %786 = vst [vmem:[#allocation2 + $0x38] sm:$0xff] %v754
        %787 = vst [vmem:[#allocation2 + $0x40] sm:$0xff] %v755
        %788 = vst [vmem:[#allocation2 + $0x48] sm:$0xff] %v756
        %789 = vst [vmem:[#allocation2 + $0x50] sm:$0xff] %v757
        %790 = vst [vmem:[#allocation2 + $0x58] sm:$0xff] %v758
        %791 = vst [vmem:[#allocation2 + $0x60] sm:$0xff] %v759
        %792 = vst [vmem:[#allocation2 + $0x68] sm:$0xff] %v760
        %793 = vst [vmem:[#allocation2 + $0x70] sm:$0xff] %v761
        %794 = vst [vmem:[#allocation2 + $0x78] sm:$0xff] %v762
        %v795 = vld [vmem:[%s1] sm:$0xff]
        %v796 = vld [vmem:[%s311] sm:$0xf]
        %p797 = scmp.eq.s32.totalorder %s23, 0
        // Predicated region
        $region53: #{tpu_custom_call.1} parent=39 // pred_check
          %p798 = pneg %p797
        $region54: #{tpu_custom_call.1} parent=39 // pred_check_branch
          %800 = sbr.rel (%p798) target = $region56
        $region55: #{tpu_custom_call.1} parent=39 // pred_region
          %v801 = vld [vmem:[%s272] sm:$0xff]
          %v802 = vld [vmem:[%s272 + $0x8] sm:$0xff]
          %v803 = vld [vmem:[%s272 + $0x10] sm:$0xff]
          %v804 = vld [vmem:[%s272 + $0x18] sm:$0xff]
          %v805 = vld [vmem:[%s272 + $0x20] sm:$0xff]
          %v806 = vld [vmem:[%s272 + $0x28] sm:$0xff]
          %v807 = vld [vmem:[%s272 + $0x30] sm:$0xff]
          %v808 = vld [vmem:[%s272 + $0x38] sm:$0xff]
          %v809 = vld [vmem:[%s272 + $0x40] sm:$0xff]
          %v810 = vld [vmem:[%s272 + $0x48] sm:$0xff]
          %v811 = vld [vmem:[%s272 + $0x50] sm:$0xff]
          %v812 = vld [vmem:[%s272 + $0x58] sm:$0xff]
          %v813 = vld [vmem:[%s272 + $0x60] sm:$0xff]
          %v814 = vld [vmem:[%s272 + $0x68] sm:$0xff]
          %v815 = vld [vmem:[%s272 + $0x70] sm:$0xff]
          %v816 = vld [vmem:[%s272 + $0x78] sm:$0xff]
          %v817 = vld [vmem:[%s272 + $0x80] sm:$0xff]
          %v818 = vld [vmem:[%s272 + $0x88] sm:$0xff]
          %v819 = vld [vmem:[%s272 + $0x90] sm:$0xff]
          %v820 = vld [vmem:[%s272 + $0x98] sm:$0xff]
          %v821 = vld [vmem:[%s272 + $0xa0] sm:$0xff]
          %v822 = vld [vmem:[%s272 + $0xa8] sm:$0xff]
          %v823 = vld [vmem:[%s272 + $0xb0] sm:$0xff]
          %v824 = vld [vmem:[%s272 + $0xb8] sm:$0xff]
          %v825 = vld [vmem:[%s272 + $0xc0] sm:$0xff]
          %v826 = vld [vmem:[%s272 + $0xc8] sm:$0xff]
          %v827 = vld [vmem:[%s272 + $0xd0] sm:$0xff]
          %v828 = vld [vmem:[%s272 + $0xd8] sm:$0xff]
          %v829 = vld [vmem:[%s272 + $0xe0] sm:$0xff]
          %v830 = vld [vmem:[%s272 + $0xe8] sm:$0xff]
          %v831 = vld [vmem:[%s272 + $0xf0] sm:$0xff]
          %v832 = vld [vmem:[%s272 + $0xf8] sm:$0xff]
          %s833 = smul.u32 0, 4
          %s834 = smul.addr %s833, 4
          %s835 = scalar_lea.vmem [#allocation2], %s834
          %v836 = vld [vmem:[%s835] sm:$0xff]
          %v837 = vld [vmem:[%s835 + $0x8] sm:$0xff]
          %v838 = vunpack.c.l.bf16 %v836
          %v839 = vunpack.c.h.bf16 %v836
          %v840 = vunpack.c.l.bf16 %v837
          %v841 = vunpack.c.h.bf16 %v837
          %v874 = vunpack.c.l.b16 %v801
          %v875 = vunpack.c.h.b16 %v801
          %v876 = vunpack.c.l.b16 %v802
          %v877 = vunpack.c.h.b16 %v802
          %v878 = vunpack.c.l.b16 %v803
          %v879 = vunpack.c.h.b16 %v803
          %v880 = vunpack.c.l.b16 %v804
          %v881 = vunpack.c.h.b16 %v804
          %v882 = vunpack.c.l.b16 %v805
          %v883 = vunpack.c.h.b16 %v805
          %v884 = vunpack.c.l.b16 %v806
          %v885 = vunpack.c.h.b16 %v806
          %v886 = vunpack.c.l.b16 %v807
          %v887 = vunpack.c.h.b16 %v807
          %v888 = vunpack.c.l.b16 %v808
          %v889 = vunpack.c.h.b16 %v808
          %v890 = vunpack.c.l.b16 %v809
          %v891 = vunpack.c.h.b16 %v809
          %v892 = vunpack.c.l.b16 %v810
          %v893 = vunpack.c.h.b16 %v810
          %v894 = vunpack.c.l.b16 %v811
          %v895 = vunpack.c.h.b16 %v811
          %v896 = vunpack.c.l.b16 %v812
          %v897 = vunpack.c.h.b16 %v812
          %v898 = vunpack.c.l.b16 %v813
          %v899 = vunpack.c.h.b16 %v813
          %v900 = vunpack.c.l.b16 %v814
          %v901 = vunpack.c.h.b16 %v814
          %v902 = vunpack.c.l.b16 %v815
          %v903 = vunpack.c.h.b16 %v815
          %v904 = vunpack.c.l.b16 %v816
          %v905 = vunpack.c.h.b16 %v816
          %v906 = vunpack.c.l.b16 %v817
          %v907 = vunpack.c.h.b16 %v817
          %v908 = vunpack.c.l.b16 %v818
          %v909 = vunpack.c.h.b16 %v818
          %v910 = vunpack.c.l.b16 %v819
          %v911 = vunpack.c.h.b16 %v819
          %v912 = vunpack.c.l.b16 %v820
          %v913 = vunpack.c.h.b16 %v820
          %v914 = vunpack.c.l.b16 %v821
          %v915 = vunpack.c.h.b16 %v821
          %v916 = vunpack.c.l.b16 %v822
          %v917 = vunpack.c.h.b16 %v822
          %v918 = vunpack.c.l.b16 %v823
          %v919 = vunpack.c.h.b16 %v823
          %v920 = vunpack.c.l.b16 %v824
          %v921 = vunpack.c.h.b16 %v824
          %v922 = vunpack.c.l.b16 %v825
          %v923 = vunpack.c.h.b16 %v825
          %v924 = vunpack.c.l.b16 %v826
          %v925 = vunpack.c.h.b16 %v826
          %v926 = vunpack.c.l.b16 %v827
          %v927 = vunpack.c.h.b16 %v827
          %v928 = vunpack.c.l.b16 %v828
          %v929 = vunpack.c.h.b16 %v828
          %v930 = vunpack.c.l.b16 %v829
          %v931 = vunpack.c.h.b16 %v829
          %v932 = vunpack.c.l.b16 %v830
          %v933 = vunpack.c.h.b16 %v830
          %v934 = vunpack.c.l.b16 %v831
          %v935 = vunpack.c.h.b16 %v831
          %v936 = vunpack.c.l.b16 %v832
          %v937 = vunpack.c.h.b16 %v832
          %v938 = vpack.c.b16 %v878, %v874
          %v939 = vpack.c.b16 %v879, %v875
          %v940 = vpack.c.b16 %v880, %v876
          %v941 = vpack.c.b16 %v881, %v877
          %v942 = vpack.c.b16 %v886, %v882
          %v943 = vpack.c.b16 %v887, %v883
          %v944 = vpack.c.b16 %v888, %v884
          %v945 = vpack.c.b16 %v889, %v885
          %v946 = vpack.c.b16 %v894, %v890
          %v947 = vpack.c.b16 %v895, %v891
          %v948 = vpack.c.b16 %v896, %v892
          %v949 = vpack.c.b16 %v897, %v893
          %v950 = vpack.c.b16 %v902, %v898
          %v951 = vpack.c.b16 %v903, %v899
          %v952 = vpack.c.b16 %v904, %v900
          %v953 = vpack.c.b16 %v905, %v901
          %v954 = vpack.c.b16 %v910, %v906
          %v955 = vpack.c.b16 %v911, %v907
          %v956 = vpack.c.b16 %v912, %v908
          %v957 = vpack.c.b16 %v913, %v909
          %v958 = vpack.c.b16 %v918, %v914
          %v959 = vpack.c.b16 %v919, %v915
          %v960 = vpack.c.b16 %v920, %v916
          %v961 = vpack.c.b16 %v921, %v917
          %v962 = vpack.c.b16 %v926, %v922
          %v963 = vpack.c.b16 %v927, %v923
          %v964 = vpack.c.b16 %v928, %v924
          %v965 = vpack.c.b16 %v929, %v925
          %v966 = vpack.c.b16 %v934, %v930
          %v967 = vpack.c.b16 %v935, %v931
          %v968 = vpack.c.b16 %v936, %v932
          %v969 = vpack.c.b16 %v937, %v933
          %1002 = vmatprep.subr.bf16.mxu0 %v967
          %1003 = vmatpush1.bf16.msra.mxu0 %v966
          %1004 = vmatprep.subr.bf16.mxu0 %v963
          %1005 = vmatpush1.bf16.msra.mxu0 %v962
          %1006 = vmatprep.subr.bf16.mxu0 %v959
          %1007 = vmatpush1.bf16.msra.mxu0 %v958
          %1008 = vmatprep.subr.bf16.mxu0 %v955
          %1009 = vmatpush1.bf16.msra.mxu0 %v954
          %1010 = vmatprep.subr.bf16.mxu0 %v951
          %1011 = vmatpush1.bf16.msra.mxu0 %v950
          %1012 = vmatprep.subr.bf16.mxu0 %v947
          %1013 = vmatpush1.bf16.msra.mxu0 %v946
          %1014 = vmatprep.subr.bf16.mxu0 %v943
          %1015 = vmatpush1.bf16.msra.mxu0 %v942
          %1016 = vmatprep.subr.bf16.mxu0 %v939
          %1017 = vmatpush1.bf16.msra.mxu0 %v938
          %1018 = vmatprep.subr.bf16.mxu0 0
          %1019 = vmatpush2.bf16.msra.mxu0 0
          %1020 = vmatprep.subr.bf16.mxu0 0
          %1021 = vmatpush2.bf16.msra.mxu0 0
          %1022 = vmatprep.subr.bf16.mxu0 0
          %1023 = vmatpush2.bf16.msra.mxu0 0
          %1024 = vmatprep.subr.bf16.mxu0 0
          %1025 = vmatpush2.bf16.msra.mxu0 0
          %1026 = vmatprep.subr.bf16.mxu0 0
          %1027 = vmatpush2.bf16.msra.mxu0 0
          %1028 = vmatprep.subr.bf16.mxu0 0
          %1029 = vmatpush2.bf16.msra.mxu0 0
          %1030 = vmatprep.subr.bf16.mxu0 0
          %1031 = vmatpush2.bf16.msra.mxu0 0
          %1032 = vmatprep.subr.bf16.mxu0 0
          %1033 = vmatpush2.bf16.msra.mxu0 0
          %1034 = vmatprep.mubr.bf16.mxu0 0
          %1035 = vmatmul.mubr.bf16.gmra.mxu0 0
          %v1036 = vpop.f32.mrf.mxu0
          %v1037 = vadd.f32 %v838, %v1036
          %v1038 = vpop.f32.mrf.mxu0
          %v1039 = vadd.f32 %v839, %v1038
          %v1040 = vpop.f32.mrf.mxu0
          %v1041 = vpop.f32.mrf.mxu0
          %1042 = vdwg.mxu0
          %1043 = vmatprep.subr.bf16.mxu0 %v969
          %1044 = vmatpush1.bf16.msra.mxu0 %v968
          %1045 = vmatprep.subr.bf16.mxu0 %v965
          %1046 = vmatpush1.bf16.msra.mxu0 %v964
          %1047 = vmatprep.subr.bf16.mxu0 %v961
          %1048 = vmatpush1.bf16.msra.mxu0 %v960
          %1049 = vmatprep.subr.bf16.mxu0 %v957
          %1050 = vmatpush1.bf16.msra.mxu0 %v956
          %1051 = vmatprep.subr.bf16.mxu0 %v953
          %1052 = vmatpush1.bf16.msra.mxu0 %v952
          %1053 = vmatprep.subr.bf16.mxu0 %v949
          %1054 = vmatpush1.bf16.msra.mxu0 %v948
          %1055 = vmatprep.subr.bf16.mxu0 %v945
          %1056 = vmatpush1.bf16.msra.mxu0 %v944
          %1057 = vmatprep.subr.bf16.mxu0 %v941
          %1058 = vmatpush1.bf16.msra.mxu0 %v940
          %1059 = vmatprep.subr.bf16.mxu0 0
          %1060 = vmatpush2.bf16.msra.mxu0 0
          %1061 = vmatprep.subr.bf16.mxu0 0
          %1062 = vmatpush2.bf16.msra.mxu0 0
          %1063 = vmatprep.subr.bf16.mxu0 0
          %1064 = vmatpush2.bf16.msra.mxu0 0
          %1065 = vmatprep.subr.bf16.mxu0 0
          %1066 = vmatpush2.bf16.msra.mxu0 0
          %1067 = vmatprep.subr.bf16.mxu0 0
          %1068 = vmatpush2.bf16.msra.mxu0 0
          %1069 = vmatprep.subr.bf16.mxu0 0
          %1070 = vmatpush2.bf16.msra.mxu0 0
          %1071 = vmatprep.subr.bf16.mxu0 0
          %1072 = vmatpush2.bf16.msra.mxu0 0
          %1073 = vmatprep.subr.bf16.mxu0 0
          %1074 = vmatpush2.bf16.msra.mxu0 0
          %1075 = vmatprep.mubr.bf16.mxu0 0
          %1076 = vmatmul.mubr.bf16.gmra.mxu0 0
          %v1077 = vpop.f32.mrf.mxu0
          %v1078 = vadd.f32 %v840, %v1077
          %v1079 = vpop.f32.mrf.mxu0
          %v1080 = vadd.f32 %v841, %v1079
          %v1081 = vpop.f32.mrf.mxu0
          %v1082 = vpop.f32.mrf.mxu0
          %1083 = vdwg.mxu0
          %v1085 = vlaneseq
          %v1086 = vshrl.u32 %v1085, 7
          %v1087 = vsub.s32 0, %v1086
          %v1088 = vrot.slane %v796, %v1087
          %v1089 = vlaneseq
          %v1090 = vshrl.u32 %v1089, 7
          %v1091 = vsub.s32 1, %v1090
          %v1092 = vrot.slane %v796, %v1091
          %v1093 = vlaneseq
          %v1094 = vshrl.u32 %v1093, 7
          %v1095 = vsub.s32 2, %v1094
          %v1096 = vrot.slane %v796, %v1095
          %v1097 = vlaneseq
          %v1098 = vshrl.u32 %v1097, 7
          %v1099 = vsub.s32 3, %v1098
          %v1100 = vrot.slane %v796, %v1099
          %v1105 = vadd.f32 %v1037, %v1088
          %v1106 = vadd.f32 %v1039, %v1092
          %v1107 = vadd.f32 %v1078, %v1096
          %v1108 = vadd.f32 %v1080, %v1100
          %v1109 = vxor.u32 %v1105, 2147483648
          %v1110 = vxor.u32 %v1106, 2147483648
          %v1111 = vxor.u32 %v1107, 2147483648
          %v1112 = vmul.f32 %v1109, 1.442695
          %v1113 = vpow.pop %v1112
          %v1114 = vmul.f32 %v1110, 1.442695
          %v1115 = vpow.pop %v1114
          %v1116 = vmul.f32 %v1111, 1.442695
          %v1117 = vpow.pop %v1116
          %v1118 = vadd.f32 %v1113, 1.0
          %v1119 = vadd.f32 %v1115, 1.0
          %v1120 = vadd.f32 %v1117, 1.0
          %v1121 = vrcp.pop %v1118
          %v1122 = vmul.f32 1.0, %v1121
          %v1123 = vrcp.pop %v1119
          %v1124 = vmul.f32 1.0, %v1123
          %v1125 = vrcp.pop %v1120
          %v1126 = vmul.f32 1.0, %v1125
          %v1127 = vtanh.pop %v1108
          %v1128 = vmul.f32 %v1124, 0.0
          %v1129 = vmul.f32 %v1122, %v1127
          %v1130 = vadd.f32 %v1128, %v1129
          %v1131 = vtanh.pop %v1130
          %v1132 = vmul.f32 %v1126, %v1131
          %vm1133 = vcmp.gt.s32.totalorder %v795, 0
          %v1134 = vsel %vm1133, 1, 0
          %v1135 = vcvt.s32.f32 %v1134
          %1137 = vset.pattern.permute.xlu0 0
          %1138 = vperm.xlu0 %1137, %v1135
          %v1139 = vpop.permute.xlu0 %1138
          %v1141 = vmul.f32 %v1132, %v1139
          %v1142 = vmul.f32 %v1130, %v1139
          %1143 = vst [vmem:[%s307] sm:$0xff] %v1141
          %v1144 = vpack.c.bf16 %v1141, %v1141
          %v1145 = vld [vmem:[%s272] sm:$0xff]
          %v1146 = vld [vmem:[%s272 + $0x8] sm:$0xff]
          %v1147 = vld [vmem:[%s272 + $0x10] sm:$0xff]
          %v1148 = vld [vmem:[%s272 + $0x18] sm:$0xff]
          %v1149 = vld [vmem:[%s272 + $0x20] sm:$0xff]
          %v1150 = vld [vmem:[%s272 + $0x28] sm:$0xff]
          %v1151 = vld [vmem:[%s272 + $0x30] sm:$0xff]
          %v1152 = vld [vmem:[%s272 + $0x38] sm:$0xff]
          %v1153 = vld [vmem:[%s272 + $0x40] sm:$0xff]
          %v1154 = vld [vmem:[%s272 + $0x48] sm:$0xff]
          %v1155 = vld [vmem:[%s272 + $0x50] sm:$0xff]
          %v1156 = vld [vmem:[%s272 + $0x58] sm:$0xff]
          %v1157 = vld [vmem:[%s272 + $0x60] sm:$0xff]
          %v1158 = vld [vmem:[%s272 + $0x68] sm:$0xff]
          %v1159 = vld [vmem:[%s272 + $0x70] sm:$0xff]
          %v1160 = vld [vmem:[%s272 + $0x78] sm:$0xff]
          %v1161 = vld [vmem:[%s272 + $0x80] sm:$0xff]
          %v1162 = vld [vmem:[%s272 + $0x88] sm:$0xff]
          %v1163 = vld [vmem:[%s272 + $0x90] sm:$0xff]
          %v1164 = vld [vmem:[%s272 + $0x98] sm:$0xff]
          %v1165 = vld [vmem:[%s272 + $0xa0] sm:$0xff]
          %v1166 = vld [vmem:[%s272 + $0xa8] sm:$0xff]
          %v1167 = vld [vmem:[%s272 + $0xb0] sm:$0xff]
          %v1168 = vld [vmem:[%s272 + $0xb8] sm:$0xff]
          %v1169 = vld [vmem:[%s272 + $0xc0] sm:$0xff]
          %v1170 = vld [vmem:[%s272 + $0xc8] sm:$0xff]
          %v1171 = vld [vmem:[%s272 + $0xd0] sm:$0xff]
          %v1172 = vld [vmem:[%s272 + $0xd8] sm:$0xff]
          %v1173 = vld [vmem:[%s272 + $0xe0] sm:$0xff]
          %v1174 = vld [vmem:[%s272 + $0xe8] sm:$0xff]
          %v1175 = vld [vmem:[%s272 + $0xf0] sm:$0xff]
          %v1176 = vld [vmem:[%s272 + $0xf8] sm:$0xff]
          %s1177 = smul.u32 1, 4
          %s1178 = smul.addr %s1177, 4
          %s1179 = scalar_lea.vmem [#allocation2], %s1178
          %v1180 = vld [vmem:[%s1179] sm:$0xff]
          %v1181 = vld [vmem:[%s1179 + $0x8] sm:$0xff]
          %v1182 = vunpack.c.l.bf16 %v1180
          %v1183 = vunpack.c.h.bf16 %v1180
          %v1184 = vunpack.c.l.bf16 %v1181
          %v1185 = vunpack.c.h.bf16 %v1181
          %v1218 = vunpack.c.l.b16 %v1145
          %v1219 = vunpack.c.h.b16 %v1145
          %v1220 = vunpack.c.l.b16 %v1146
          %v1221 = vunpack.c.h.b16 %v1146
          %v1222 = vunpack.c.l.b16 %v1147
          %v1223 = vunpack.c.h.b16 %v1147
          %v1224 = vunpack.c.l.b16 %v1148
          %v1225 = vunpack.c.h.b16 %v1148
          %v1226 = vunpack.c.l.b16 %v1149
          %v1227 = vunpack.c.h.b16 %v1149
          %v1228 = vunpack.c.l.b16 %v1150
          %v1229 = vunpack.c.h.b16 %v1150
          %v1230 = vunpack.c.l.b16 %v1151
          %v1231 = vunpack.c.h.b16 %v1151
          %v1232 = vunpack.c.l.b16 %v1152
          %v1233 = vunpack.c.h.b16 %v1152
          %v1234 = vunpack.c.l.b16 %v1153
          %v1235 = vunpack.c.h.b16 %v1153
          %v1236 = vunpack.c.l.b16 %v1154
          %v1237 = vunpack.c.h.b16 %v1154
          %v1238 = vunpack.c.l.b16 %v1155
          %v1239 = vunpack.c.h.b16 %v1155
          %v1240 = vunpack.c.l.b16 %v1156
          %v1241 = vunpack.c.h.b16 %v1156
          %v1242 = vunpack.c.l.b16 %v1157
          %v1243 = vunpack.c.h.b16 %v1157
          %v1244 = vunpack.c.l.b16 %v1158
          %v1245 = vunpack.c.h.b16 %v1158
          %v1246 = vunpack.c.l.b16 %v1159
          %v1247 = vunpack.c.h.b16 %v1159
          %v1248 = vunpack.c.l.b16 %v1160
          %v1249 = vunpack.c.h.b16 %v1160
          %v1250 = vunpack.c.l.b16 %v1161
          %v1251 = vunpack.c.h.b16 %v1161
          %v1252 = vunpack.c.l.b16 %v1162
          %v1253 = vunpack.c.h.b16 %v1162
          %v1254 = vunpack.c.l.b16 %v1163
          %v1255 = vunpack.c.h.b16 %v1163
          %v1256 = vunpack.c.l.b16 %v1164
          %v1257 = vunpack.c.h.b16 %v1164
          %v1258 = vunpack.c.l.b16 %v1165
          %v1259 = vunpack.c.h.b16 %v1165
          %v1260 = vunpack.c.l.b16 %v1166
          %v1261 = vunpack.c.h.b16 %v1166
          %v1262 = vunpack.c.l.b16 %v1167
          %v1263 = vunpack.c.h.b16 %v1167
          %v1264 = vunpack.c.l.b16 %v1168
          %v1265 = vunpack.c.h.b16 %v1168
          %v1266 = vunpack.c.l.b16 %v1169
          %v1267 = vunpack.c.h.b16 %v1169
          %v1268 = vunpack.c.l.b16 %v1170
          %v1269 = vunpack.c.h.b16 %v1170
          %v1270 = vunpack.c.l.b16 %v1171
          %v1271 = vunpack.c.h.b16 %v1171
          %v1272 = vunpack.c.l.b16 %v1172
          %v1273 = vunpack.c.h.b16 %v1172
          %v1274 = vunpack.c.l.b16 %v1173
          %v1275 = vunpack.c.h.b16 %v1173
          %v1276 = vunpack.c.l.b16 %v1174
          %v1277 = vunpack.c.h.b16 %v1174
          %v1278 = vunpack.c.l.b16 %v1175
          %v1279 = vunpack.c.h.b16 %v1175
          %v1280 = vunpack.c.l.b16 %v1176
          %v1281 = vunpack.c.h.b16 %v1176
          %v1282 = vpack.c.b16 %v1222, %v1218
          %v1283 = vpack.c.b16 %v1223, %v1219
          %v1284 = vpack.c.b16 %v1224, %v1220
          %v1285 = vpack.c.b16 %v1225, %v1221
          %v1286 = vpack.c.b16 %v1230, %v1226
          %v1287 = vpack.c.b16 %v1231, %v1227
          %v1288 = vpack.c.b16 %v1232, %v1228
          %v1289 = vpack.c.b16 %v1233, %v1229
          %v1290 = vpack.c.b16 %v1238, %v1234
          %v1291 = vpack.c.b16 %v1239, %v1235
          %v1292 = vpack.c.b16 %v1240, %v1236
          %v1293 = vpack.c.b16 %v1241, %v1237
          %v1294 = vpack.c.b16 %v1246, %v1242
          %v1295 = vpack.c.b16 %v1247, %v1243
          %v1296 = vpack.c.b16 %v1248, %v1244
          %v1297 = vpack.c.b16 %v1249, %v1245
          %v1298 = vpack.c.b16 %v1254, %v1250
          %v1299 = vpack.c.b16 %v1255, %v1251
          %v1300 = vpack.c.b16 %v1256, %v1252
          %v1301 = vpack.c.b16 %v1257, %v1253
          %v1302 = vpack.c.b16 %v1262, %v1258
          %v1303 = vpack.c.b16 %v1263, %v1259
          %v1304 = vpack.c.b16 %v1264, %v1260
          %v1305 = vpack.c.b16 %v1265, %v1261
          %v1306 = vpack.c.b16 %v1270, %v1266
          %v1307 = vpack.c.b16 %v1271, %v1267
          %v1308 = vpack.c.b16 %v1272, %v1268
          %v1309 = vpack.c.b16 %v1273, %v1269
          %v1310 = vpack.c.b16 %v1278, %v1274
          %v1311 = vpack.c.b16 %v1279, %v1275
          %v1312 = vpack.c.b16 %v1280, %v1276
          %v1313 = vpack.c.b16 %v1281, %v1277
          %1346 = vmatprep.subr.bf16.mxu0 %v1311
          %1347 = vmatpush1.bf16.msra.mxu0 %v1310
          %1348 = vmatprep.subr.bf16.mxu0 %v1307
          %1349 = vmatpush1.bf16.msra.mxu0 %v1306
          %1350 = vmatprep.subr.bf16.mxu0 %v1303
          %1351 = vmatpush1.bf16.msra.mxu0 %v1302
          %1352 = vmatprep.subr.bf16.mxu0 %v1299
          %1353 = vmatpush1.bf16.msra.mxu0 %v1298
          %1354 = vmatprep.subr.bf16.mxu0 %v1295
          %1355 = vmatpush1.bf16.msra.mxu0 %v1294
          %1356 = vmatprep.subr.bf16.mxu0 %v1291
          %1357 = vmatpush1.bf16.msra.mxu0 %v1290
          %1358 = vmatprep.subr.bf16.mxu0 %v1287
          %1359 = vmatpush1.bf16.msra.mxu0 %v1286
          %1360 = vmatprep.subr.bf16.mxu0 %v1283
          %1361 = vmatpush1.bf16.msra.mxu0 %v1282
          %1362 = vmatprep.subr.bf16.mxu0 0
          %1363 = vmatpush2.bf16.msra.mxu0 0
          %1364 = vmatprep.subr.bf16.mxu0 0
          %1365 = vmatpush2.bf16.msra.mxu0 0
          %1366 = vmatprep.subr.bf16.mxu0 0
          %1367 = vmatpush2.bf16.msra.mxu0 0
          %1368 = vmatprep.subr.bf16.mxu0 0
          %1369 = vmatpush2.bf16.msra.mxu0 0
          %1370 = vmatprep.subr.bf16.mxu0 0
          %1371 = vmatpush2.bf16.msra.mxu0 0
          %1372 = vmatprep.subr.bf16.mxu0 0
          %1373 = vmatpush2.bf16.msra.mxu0 0
          %1374 = vmatprep.subr.bf16.mxu0 0
          %1375 = vmatpush2.bf16.msra.mxu0 0
          %1376 = vmatprep.subr.bf16.mxu0 0
          %1377 = vmatpush2.bf16.msra.mxu0 0
          %1378 = vmatprep.mubr.bf16.mxu0 0
          %1379 = vmatmul.mubr.bf16.gmra.mxu0 %v1144
          %v1380 = vpop.f32.mrf.mxu0
          %v1381 = vadd.f32 %v1182, %v1380
          %v1382 = vpop.f32.mrf.mxu0
          %v1383 = vadd.f32 %v1183, %v1382
          %v1384 = vpop.f32.mrf.mxu0
          %v1385 = vpop.f32.mrf.mxu0
          %1386 = vdwg.mxu0
          %1387 = vmatprep.subr.bf16.mxu0 %v1313
          %1388 = vmatpush1.bf16.msra.mxu0 %v1312
          %1389 = vmatprep.subr.bf16.mxu0 %v1309
          %1390 = vmatpush1.bf16.msra.mxu0 %v1308
          %1391 = vmatprep.subr.bf16.mxu0 %v1305
          %1392 = vmatpush1.bf16.msra.mxu0 %v1304
          %1393 = vmatprep.subr.bf16.mxu0 %v1301
          %1394 = vmatpush1.bf16.msra.mxu0 %v1300
          %1395 = vmatprep.subr.bf16.mxu0 %v1297
          %1396 = vmatpush1.bf16.msra.mxu0 %v1296
          %1397 = vmatprep.subr.bf16.mxu0 %v1293
          %1398 = vmatpush1.bf16.msra.mxu0 %v1292
          %1399 = vmatprep.subr.bf16.mxu0 %v1289
          %1400 = vmatpush1.bf16.msra.mxu0 %v1288
          %1401 = vmatprep.subr.bf16.mxu0 %v1285
          %1402 = vmatpush1.bf16.msra.mxu0 %v1284
          %1403 = vmatprep.subr.bf16.mxu0 0
          %1404 = vmatpush2.bf16.msra.mxu0 0
          %1405 = vmatprep.subr.bf16.mxu0 0
          %1406 = vmatpush2.bf16.msra.mxu0 0
          %1407 = vmatprep.subr.bf16.mxu0 0
          %1408 = vmatpush2.bf16.msra.mxu0 0
          %1409 = vmatprep.subr.bf16.mxu0 0
          %1410 = vmatpush2.bf16.msra.mxu0 0
          %1411 = vmatprep.subr.bf16.mxu0 0
          %1412 = vmatpush2.bf16.msra.mxu0 0
          %1413 = vmatprep.subr.bf16.mxu0 0
          %1414 = vmatpush2.bf16.msra.mxu0 0
          %1415 = vmatprep.subr.bf16.mxu0 0
          %1416 = vmatpush2.bf16.msra.mxu0 0
          %1417 = vmatprep.subr.bf16.mxu0 0
          %1418 = vmatpush2.bf16.msra.mxu0 0
          %1419 = vmatprep.mubr.bf16.mxu0 0
          %1420 = vmatmul.mubr.bf16.gmra.mxu0 %v1144
          %v1421 = vpop.f32.mrf.mxu0
          %v1422 = vadd.f32 %v1184, %v1421
          %v1423 = vpop.f32.mrf.mxu0
          %v1424 = vadd.f32 %v1185, %v1423
          %v1425 = vpop.f32.mrf.mxu0
          %v1426 = vpop.f32.mrf.mxu0
          %1427 = vdwg.mxu0
          %v1428 = vadd.f32 %v1381, %v1088
          %v1429 = vadd.f32 %v1383, %v1092
          %v1430 = vadd.f32 %v1422, %v1096
          %v1431 = vadd.f32 %v1424, %v1100
          %v1432 = vxor.u32 %v1428, 2147483648
          %v1433 = vxor.u32 %v1429, 2147483648
          %v1434 = vxor.u32 %v1430, 2147483648
          %v1435 = vmul.f32 %v1432, 1.442695
          %v1436 = vpow.pop %v1435
          %v1437 = vmul.f32 %v1433, 1.442695
          %v1438 = vpow.pop %v1437
          %v1439 = vmul.f32 %v1434, 1.442695
          %v1440 = vpow.pop %v1439
          %v1441 = vadd.f32 %v1436, 1.0
          %v1442 = vadd.f32 %v1438, 1.0
          %v1443 = vadd.f32 %v1440, 1.0
          %v1444 = vrcp.pop %v1441
          %v1445 = vmul.f32 1.0, %v1444
          %v1446 = vrcp.pop %v1442
          %v1447 = vmul.f32 1.0, %v1446
          %v1448 = vrcp.pop %v1443
          %v1449 = vmul.f32 1.0, %v1448
          %v1450 = vtanh.pop %v1431
          %v1451 = vmul.f32 %v1447, %v1142
          %v1452 = vmul.f32 %v1445, %v1450
          %v1453 = vadd.f32 %v1451, %v1452
          %v1454 = vtanh.pop %v1453
          %v1455 = vmul.f32 %v1449, %v1454
          %vm1456 = vcmp.gt.s32.totalorder %v795, 1
          %v1457 = vsel %vm1456, 1, 0
          %v1458 = vcvt.s32.f32 %v1457
          %1460 = vset.pattern.permute.xlu0 0
          %1461 = vperm.xlu0 %1460, %v1458
          %v1462 = vpop.permute.xlu0 %1461
          %v1464 = vmul.f32 %v1455, %v1462
          %v1465 = vmul.f32 %v1453, %v1462
          %s1466 = scalar_lea.vmem %s307, 8 [#allocation9]
          %1467 = vst [vmem:[%s1466] sm:$0xff] %v1464
          %v1468 = vpack.c.bf16 %v1464, %v1464
          %v1469 = vld [vmem:[%s272] sm:$0xff]
          %v1470 = vld [vmem:[%s272 + $0x8] sm:$0xff]
          %v1471 = vld [vmem:[%s272 + $0x10] sm:$0xff]
          %v1472 = vld [vmem:[%s272 + $0x18] sm:$0xff]
          %v1473 = vld [vmem:[%s272 + $0x20] sm:$0xff]
          %v1474 = vld [vmem:[%s272 + $0x28] sm:$0xff]
          %v1475 = vld [vmem:[%s272 + $0x30] sm:$0xff]
          %v1476 = vld [vmem:[%s272 + $0x38] sm:$0xff]
          %v1477 = vld [vmem:[%s272 + $0x40] sm:$0xff]
          %v1478 = vld [vmem:[%s272 + $0x48] sm:$0xff]
          %v1479 = vld [vmem:[%s272 + $0x50] sm:$0xff]
          %v1480 = vld [vmem:[%s272 + $0x58] sm:$0xff]
          %v1481 = vld [vmem:[%s272 + $0x60] sm:$0xff]
          %v1482 = vld [vmem:[%s272 + $0x68] sm:$0xff]
          %v1483 = vld [vmem:[%s272 + $0x70] sm:$0xff]
          %v1484 = vld [vmem:[%s272 + $0x78] sm:$0xff]
          %v1485 = vld [vmem:[%s272 + $0x80] sm:$0xff]
          %v1486 = vld [vmem:[%s272 + $0x88] sm:$0xff]
          %v1487 = vld [vmem:[%s272 + $0x90] sm:$0xff]
          %v1488 = vld [vmem:[%s272 + $0x98] sm:$0xff]
          %v1489 = vld [vmem:[%s272 + $0xa0] sm:$0xff]
          %v1490 = vld [vmem:[%s272 + $0xa8] sm:$0xff]
          %v1491 = vld [vmem:[%s272 + $0xb0] sm:$0xff]
          %v1492 = vld [vmem:[%s272 + $0xb8] sm:$0xff]
          %v1493 = vld [vmem:[%s272 + $0xc0] sm:$0xff]
          %v1494 = vld [vmem:[%s272 + $0xc8] sm:$0xff]
          %v1495 = vld [vmem:[%s272 + $0xd0] sm:$0xff]
          %v1496 = vld [vmem:[%s272 + $0xd8] sm:$0xff]
          %v1497 = vld [vmem:[%s272 + $0xe0] sm:$0xff]
          %v1498 = vld [vmem:[%s272 + $0xe8] sm:$0xff]
          %v1499 = vld [vmem:[%s272 + $0xf0] sm:$0xff]
          %v1500 = vld [vmem:[%s272 + $0xf8] sm:$0xff]
          %s1501 = smul.u32 2, 4
          %s1502 = smul.addr %s1501, 4
          %s1503 = scalar_lea.vmem [#allocation2], %s1502
          %v1504 = vld [vmem:[%s1503] sm:$0xff]
          %v1505 = vld [vmem:[%s1503 + $0x8] sm:$0xff]
          %v1506 = vunpack.c.l.bf16 %v1504
          %v1507 = vunpack.c.h.bf16 %v1504
          %v1508 = vunpack.c.l.bf16 %v1505
          %v1509 = vunpack.c.h.bf16 %v1505
          %v1542 = vunpack.c.l.b16 %v1469
          %v1543 = vunpack.c.h.b16 %v1469
          %v1544 = vunpack.c.l.b16 %v1470
          %v1545 = vunpack.c.h.b16 %v1470
          %v1546 = vunpack.c.l.b16 %v1471
          %v1547 = vunpack.c.h.b16 %v1471
          %v1548 = vunpack.c.l.b16 %v1472
          %v1549 = vunpack.c.h.b16 %v1472
          %v1550 = vunpack.c.l.b16 %v1473
          %v1551 = vunpack.c.h.b16 %v1473
          %v1552 = vunpack.c.l.b16 %v1474
          %v1553 = vunpack.c.h.b16 %v1474
          %v1554 = vunpack.c.l.b16 %v1475
          %v1555 = vunpack.c.h.b16 %v1475
          %v1556 = vunpack.c.l.b16 %v1476
          %v1557 = vunpack.c.h.b16 %v1476
          %v1558 = vunpack.c.l.b16 %v1477
          %v1559 = vunpack.c.h.b16 %v1477
          %v1560 = vunpack.c.l.b16 %v1478
          %v1561 = vunpack.c.h.b16 %v1478
          %v1562 = vunpack.c.l.b16 %v1479
          %v1563 = vunpack.c.h.b16 %v1479
          %v1564 = vunpack.c.l.b16 %v1480
          %v1565 = vunpack.c.h.b16 %v1480
          %v1566 = vunpack.c.l.b16 %v1481
          %v1567 = vunpack.c.h.b16 %v1481
          %v1568 = vunpack.c.l.b16 %v1482
          %v1569 = vunpack.c.h.b16 %v1482
          %v1570 = vunpack.c.l.b16 %v1483
          %v1571 = vunpack.c.h.b16 %v1483
          %v1572 = vunpack.c.l.b16 %v1484
          %v1573 = vunpack.c.h.b16 %v1484
          %v1574 = vunpack.c.l.b16 %v1485
          %v1575 = vunpack.c.h.b16 %v1485
          %v1576 = vunpack.c.l.b16 %v1486
          %v1577 = vunpack.c.h.b16 %v1486
          %v1578 = vunpack.c.l.b16 %v1487
          %v1579 = vunpack.c.h.b16 %v1487
          %v1580 = vunpack.c.l.b16 %v1488
          %v1581 = vunpack.c.h.b16 %v1488
          %v1582 = vunpack.c.l.b16 %v1489
          %v1583 = vunpack.c.h.b16 %v1489
          %v1584 = vunpack.c.l.b16 %v1490
          %v1585 = vunpack.c.h.b16 %v1490
          %v1586 = vunpack.c.l.b16 %v1491
          %v1587 = vunpack.c.h.b16 %v1491
          %v1588 = vunpack.c.l.b16 %v1492
          %v1589 = vunpack.c.h.b16 %v1492
          %v1590 = vunpack.c.l.b16 %v1493
          %v1591 = vunpack.c.h.b16 %v1493
          %v1592 = vunpack.c.l.b16 %v1494
          %v1593 = vunpack.c.h.b16 %v1494
          %v1594 = vunpack.c.l.b16 %v1495
          %v1595 = vunpack.c.h.b16 %v1495
          %v1596 = vunpack.c.l.b16 %v1496
          %v1597 = vunpack.c.h.b16 %v1496
          %v1598 = vunpack.c.l.b16 %v1497
          %v1599 = vunpack.c.h.b16 %v1497
          %v1600 = vunpack.c.l.b16 %v1498
          %v1601 = vunpack.c.h.b16 %v1498
          %v1602 = vunpack.c.l.b16 %v1499
          %v1603 = vunpack.c.h.b16 %v1499
          %v1604 = vunpack.c.l.b16 %v1500
          %v1605 = vunpack.c.h.b16 %v1500
          %v1606 = vpack.c.b16 %v1546, %v1542
          %v1607 = vpack.c.b16 %v1547, %v1543
          %v1608 = vpack.c.b16 %v1548, %v1544
          %v1609 = vpack.c.b16 %v1549, %v1545
          %v1610 = vpack.c.b16 %v1554, %v1550
          %v1611 = vpack.c.b16 %v1555, %v1551
          %v1612 = vpack.c.b16 %v1556, %v1552
          %v1613 = vpack.c.b16 %v1557, %v1553
          %v1614 = vpack.c.b16 %v1562, %v1558
          %v1615 = vpack.c.b16 %v1563, %v1559
          %v1616 = vpack.c.b16 %v1564, %v1560
          %v1617 = vpack.c.b16 %v1565, %v1561
          %v1618 = vpack.c.b16 %v1570, %v1566
          %v1619 = vpack.c.b16 %v1571, %v1567
          %v1620 = vpack.c.b16 %v1572, %v1568
          %v1621 = vpack.c.b16 %v1573, %v1569
          %v1622 = vpack.c.b16 %v1578, %v1574
          %v1623 = vpack.c.b16 %v1579, %v1575
          %v1624 = vpack.c.b16 %v1580, %v1576
          %v1625 = vpack.c.b16 %v1581, %v1577
          %v1626 = vpack.c.b16 %v1586, %v1582
          %v1627 = vpack.c.b16 %v1587, %v1583
          %v1628 = vpack.c.b16 %v1588, %v1584
          %v1629 = vpack.c.b16 %v1589, %v1585
          %v1630 = vpack.c.b16 %v1594, %v1590
          %v1631 = vpack.c.b16 %v1595, %v1591
          %v1632 = vpack.c.b16 %v1596, %v1592
          %v1633 = vpack.c.b16 %v1597, %v1593
          %v1634 = vpack.c.b16 %v1602, %v1598
          %v1635 = vpack.c.b16 %v1603, %v1599
          %v1636 = vpack.c.b16 %v1604, %v1600
          %v1637 = vpack.c.b16 %v1605, %v1601
          %1670 = vmatprep.subr.bf16.mxu0 %v1635
          %1671 = vmatpush1.bf16.msra.mxu0 %v1634
          %1672 = vmatprep.subr.bf16.mxu0 %v1631
          %1673 = vmatpush1.bf16.msra.mxu0 %v1630
          %1674 = vmatprep.subr.bf16.mxu0 %v1627
          %1675 = vmatpush1.bf16.msra.mxu0 %v1626
          %1676 = vmatprep.subr.bf16.mxu0 %v1623
          %1677 = vmatpush1.bf16.msra.mxu0 %v1622
          %1678 = vmatprep.subr.bf16.mxu0 %v1619
          %1679 = vmatpush1.bf16.msra.mxu0 %v1618
          %1680 = vmatprep.subr.bf16.mxu0 %v1615
          %1681 = vmatpush1.bf16.msra.mxu0 %v1614
          %1682 = vmatprep.subr.bf16.mxu0 %v1611
          %1683 = vmatpush1.bf16.msra.mxu0 %v1610
          %1684 = vmatprep.subr.bf16.mxu0 %v1607
          %1685 = vmatpush1.bf16.msra.mxu0 %v1606
          %1686 = vmatprep.subr.bf16.mxu0 0
          %1687 = vmatpush2.bf16.msra.mxu0 0
          %1688 = vmatprep.subr.bf16.mxu0 0
          %1689 = vmatpush2.bf16.msra.mxu0 0
          %1690 = vmatprep.subr.bf16.mxu0 0
          %1691 = vmatpush2.bf16.msra.mxu0 0
          %1692 = vmatprep.subr.bf16.mxu0 0
          %1693 = vmatpush2.bf16.msra.mxu0 0
          %1694 = vmatprep.subr.bf16.mxu0 0
          %1695 = vmatpush2.bf16.msra.mxu0 0
          %1696 = vmatprep.subr.bf16.mxu0 0
          %1697 = vmatpush2.bf16.msra.mxu0 0
          %1698 = vmatprep.subr.bf16.mxu0 0
          %1699 = vmatpush2.bf16.msra.mxu0 0
          %1700 = vmatprep.subr.bf16.mxu0 0
          %1701 = vmatpush2.bf16.msra.mxu0 0
          %1702 = vmatprep.mubr.bf16.mxu0 0
          %1703 = vmatmul.mubr.bf16.gmra.mxu0 %v1468
          %v1704 = vpop.f32.mrf.mxu0
          %v1705 = vadd.f32 %v1506, %v1704
          %v1706 = vpop.f32.mrf.mxu0
          %v1707 = vadd.f32 %v1507, %v1706
          %v1708 = vpop.f32.mrf.mxu0
          %v1709 = vpop.f32.mrf.mxu0
          %1710 = vdwg.mxu0
          %1711 = vmatprep.subr.bf16.mxu0 %v1637
          %1712 = vmatpush1.bf16.msra.mxu0 %v1636
          %1713 = vmatprep.subr.bf16.mxu0 %v1633
          %1714 = vmatpush1.bf16.msra.mxu0 %v1632
          %1715 = vmatprep.subr.bf16.mxu0 %v1629
          %1716 = vmatpush1.bf16.msra.mxu0 %v1628
          %1717 = vmatprep.subr.bf16.mxu0 %v1625
          %1718 = vmatpush1.bf16.msra.mxu0 %v1624
          %1719 = vmatprep.subr.bf16.mxu0 %v1621
          %1720 = vmatpush1.bf16.msra.mxu0 %v1620
          %1721 = vmatprep.subr.bf16.mxu0 %v1617
          %1722 = vmatpush1.bf16.msra.mxu0 %v1616
          %1723 = vmatprep.subr.bf16.mxu0 %v1613
          %1724 = vmatpush1.bf16.msra.mxu0 %v1612
          %1725 = vmatprep.subr.bf16.mxu0 %v1609
          %1726 = vmatpush1.bf16.msra.mxu0 %v1608
          %1727 = vmatprep.subr.bf16.mxu0 0
          %1728 = vmatpush2.bf16.msra.mxu0 0
          %1729 = vmatprep.subr.bf16.mxu0 0
          %1730 = vmatpush2.bf16.msra.mxu0 0
          %1731 = vmatprep.subr.bf16.mxu0 0
          %1732 = vmatpush2.bf16.msra.mxu0 0
          %1733 = vmatprep.subr.bf16.mxu0 0
          %1734 = vmatpush2.bf16.msra.mxu0 0
          %1735 = vmatprep.subr.bf16.mxu0 0
          %1736 = vmatpush2.bf16.msra.mxu0 0
          %1737 = vmatprep.subr.bf16.mxu0 0
          %1738 = vmatpush2.bf16.msra.mxu0 0
          %1739 = vmatprep.subr.bf16.mxu0 0
          %1740 = vmatpush2.bf16.msra.mxu0 0
          %1741 = vmatprep.subr.bf16.mxu0 0
          %1742 = vmatpush2.bf16.msra.mxu0 0
          %1743 = vmatprep.mubr.bf16.mxu0 0
          %1744 = vmatmul.mubr.bf16.gmra.mxu0 %v1468
          %v1745 = vpop.f32.mrf.mxu0
          %v1746 = vadd.f32 %v1508, %v1745
          %v1747 = vpop.f32.mrf.mxu0
          %v1748 = vadd.f32 %v1509, %v1747
          %v1749 = vpop.f32.mrf.mxu0
          %v1750 = vpop.f32.mrf.mxu0
          %1751 = vdwg.mxu0
          %v1752 = vadd.f32 %v1705, %v1088
          %v1753 = vadd.f32 %v1707, %v1092
          %v1754 = vadd.f32 %v1746, %v1096
          %v1755 = vadd.f32 %v1748, %v1100
          %v1756 = vxor.u32 %v1752, 2147483648
          %v1757 = vxor.u32 %v1753, 2147483648
          %v1758 = vxor.u32 %v1754, 2147483648
          %v1759 = vmul.f32 %v1756, 1.442695
          %v1760 = vpow.pop %v1759
          %v1761 = vmul.f32 %v1757, 1.442695
          %v1762 = vpow.pop %v1761
          %v1763 = vmul.f32 %v1758, 1.442695
          %v1764 = vpow.pop %v1763
          %v1765 = vadd.f32 %v1760, 1.0
          %v1766 = vadd.f32 %v1762, 1.0
          %v1767 = vadd.f32 %v1764, 1.0
          %v1768 = vrcp.pop %v1765
          %v1769 = vmul.f32 1.0, %v1768
          %v1770 = vrcp.pop %v1766
          %v1771 = vmul.f32 1.0, %v1770
          %v1772 = vrcp.pop %v1767
          %v1773 = vmul.f32 1.0, %v1772
          %v1774 = vtanh.pop %v1755
          %v1775 = vmul.f32 %v1771, %v1465
          %v1776 = vmul.f32 %v1769, %v1774
          %v1777 = vadd.f32 %v1775, %v1776
          %v1778 = vtanh.pop %v1777
          %v1779 = vmul.f32 %v1773, %v1778
          %vm1780 = vcmp.gt.s32.totalorder %v795, 2
          %v1781 = vsel %vm1780, 1, 0
          %v1782 = vcvt.s32.f32 %v1781
          %1784 = vset.pattern.permute.xlu0 0
          %1785 = vperm.xlu0 %1784, %v1782
          %v1786 = vpop.permute.xlu0 %1785
          %v1788 = vmul.f32 %v1779, %v1786
          %v1789 = vmul.f32 %v1777, %v1786
          %s1790 = scalar_lea.vmem %s307, 16 [#allocation9]
          %1791 = vst [vmem:[%s1790] sm:$0xff] %v1788
          %v1792 = vpack.c.bf16 %v1788, %v1788
          %v1793 = vld [vmem:[%s272] sm:$0xff]
          %v1794 = vld [vmem:[%s272 + $0x8] sm:$0xff]
          %v1795 = vld [vmem:[%s272 + $0x10] sm:$0xff]
          %v1796 = vld [vmem:[%s272 + $0x18] sm:$0xff]
          %v1797 = vld [vmem:[%s272 + $0x20] sm:$0xff]
          %v1798 = vld [vmem:[%s272 + $0x28] sm:$0xff]
          %v1799 = vld [vmem:[%s272 + $0x30] sm:$0xff]
          %v1800 = vld [vmem:[%s272 + $0x38] sm:$0xff]
          %v1801 = vld [vmem:[%s272 + $0x40] sm:$0xff]
          %v1802 = vld [vmem:[%s272 + $0x48] sm:$0xff]
          %v1803 = vld [vmem:[%s272 + $0x50] sm:$0xff]
          %v1804 = vld [vmem:[%s272 + $0x58] sm:$0xff]
          %v1805 = vld [vmem:[%s272 + $0x60] sm:$0xff]
          %v1806 = vld [vmem:[%s272 + $0x68] sm:$0xff]
          %v1807 = vld [vmem:[%s272 + $0x70] sm:$0xff]
          %v1808 = vld [vmem:[%s272 + $0x78] sm:$0xff]
          %v1809 = vld [vmem:[%s272 + $0x80] sm:$0xff]
          %v1810 = vld [vmem:[%s272 + $0x88] sm:$0xff]
          %v1811 = vld [vmem:[%s272 + $0x90] sm:$0xff]
          %v1812 = vld [vmem:[%s272 + $0x98] sm:$0xff]
          %v1813 = vld [vmem:[%s272 + $0xa0] sm:$0xff]
          %v1814 = vld [vmem:[%s272 + $0xa8] sm:$0xff]
          %v1815 = vld [vmem:[%s272 + $0xb0] sm:$0xff]
          %v1816 = vld [vmem:[%s272 + $0xb8] sm:$0xff]
          %v1817 = vld [vmem:[%s272 + $0xc0] sm:$0xff]
          %v1818 = vld [vmem:[%s272 + $0xc8] sm:$0xff]
          %v1819 = vld [vmem:[%s272 + $0xd0] sm:$0xff]
          %v1820 = vld [vmem:[%s272 + $0xd8] sm:$0xff]
          %v1821 = vld [vmem:[%s272 + $0xe0] sm:$0xff]
          %v1822 = vld [vmem:[%s272 + $0xe8] sm:$0xff]
          %v1823 = vld [vmem:[%s272 + $0xf0] sm:$0xff]
          %v1824 = vld [vmem:[%s272 + $0xf8] sm:$0xff]
          %s1825 = smul.u32 3, 4
          %s1826 = smul.addr %s1825, 4
          %s1827 = scalar_lea.vmem [#allocation2], %s1826
          %v1828 = vld [vmem:[%s1827] sm:$0xff]
          %v1829 = vld [vmem:[%s1827 + $0x8] sm:$0xff]
          %v1830 = vunpack.c.l.bf16 %v1828
          %v1831 = vunpack.c.h.bf16 %v1828
          %v1832 = vunpack.c.l.bf16 %v1829
          %v1833 = vunpack.c.h.bf16 %v1829
          %v1866 = vunpack.c.l.b16 %v1793
          %v1867 = vunpack.c.h.b16 %v1793
          %v1868 = vunpack.c.l.b16 %v1794
          %v1869 = vunpack.c.h.b16 %v1794
          %v1870 = vunpack.c.l.b16 %v1795
          %v1871 = vunpack.c.h.b16 %v1795
          %v1872 = vunpack.c.l.b16 %v1796
          %v1873 = vunpack.c.h.b16 %v1796
          %v1874 = vunpack.c.l.b16 %v1797
          %v1875 = vunpack.c.h.b16 %v1797
          %v1876 = vunpack.c.l.b16 %v1798
          %v1877 = vunpack.c.h.b16 %v1798
          %v1878 = vunpack.c.l.b16 %v1799
          %v1879 = vunpack.c.h.b16 %v1799
          %v1880 = vunpack.c.l.b16 %v1800
          %v1881 = vunpack.c.h.b16 %v1800
          %v1882 = vunpack.c.l.b16 %v1801
          %v1883 = vunpack.c.h.b16 %v1801
          %v1884 = vunpack.c.l.b16 %v1802
          %v1885 = vunpack.c.h.b16 %v1802
          %v1886 = vunpack.c.l.b16 %v1803
          %v1887 = vunpack.c.h.b16 %v1803
          %v1888 = vunpack.c.l.b16 %v1804
          %v1889 = vunpack.c.h.b16 %v1804
          %v1890 = vunpack.c.l.b16 %v1805
          %v1891 = vunpack.c.h.b16 %v1805
          %v1892 = vunpack.c.l.b16 %v1806
          %v1893 = vunpack.c.h.b16 %v1806
          %v1894 = vunpack.c.l.b16 %v1807
          %v1895 = vunpack.c.h.b16 %v1807
          %v1896 = vunpack.c.l.b16 %v1808
          %v1897 = vunpack.c.h.b16 %v1808
          %v1898 = vunpack.c.l.b16 %v1809
          %v1899 = vunpack.c.h.b16 %v1809
          %v1900 = vunpack.c.l.b16 %v1810
          %v1901 = vunpack.c.h.b16 %v1810
          %v1902 = vunpack.c.l.b16 %v1811
          %v1903 = vunpack.c.h.b16 %v1811
          %v1904 = vunpack.c.l.b16 %v1812
          %v1905 = vunpack.c.h.b16 %v1812
          %v1906 = vunpack.c.l.b16 %v1813
          %v1907 = vunpack.c.h.b16 %v1813
          %v1908 = vunpack.c.l.b16 %v1814
          %v1909 = vunpack.c.h.b16 %v1814
          %v1910 = vunpack.c.l.b16 %v1815
          %v1911 = vunpack.c.h.b16 %v1815
          %v1912 = vunpack.c.l.b16 %v1816
          %v1913 = vunpack.c.h.b16 %v1816
          %v1914 = vunpack.c.l.b16 %v1817
          %v1915 = vunpack.c.h.b16 %v1817
          %v1916 = vunpack.c.l.b16 %v1818
          %v1917 = vunpack.c.h.b16 %v1818
          %v1918 = vunpack.c.l.b16 %v1819
          %v1919 = vunpack.c.h.b16 %v1819
          %v1920 = vunpack.c.l.b16 %v1820
          %v1921 = vunpack.c.h.b16 %v1820
          %v1922 = vunpack.c.l.b16 %v1821
          %v1923 = vunpack.c.h.b16 %v1821
          %v1924 = vunpack.c.l.b16 %v1822
          %v1925 = vunpack.c.h.b16 %v1822
          %v1926 = vunpack.c.l.b16 %v1823
          %v1927 = vunpack.c.h.b16 %v1823
          %v1928 = vunpack.c.l.b16 %v1824
          %v1929 = vunpack.c.h.b16 %v1824
          %v1930 = vpack.c.b16 %v1870, %v1866
          %v1931 = vpack.c.b16 %v1871, %v1867
          %v1932 = vpack.c.b16 %v1872, %v1868
          %v1933 = vpack.c.b16 %v1873, %v1869
          %v1934 = vpack.c.b16 %v1878, %v1874
          %v1935 = vpack.c.b16 %v1879, %v1875
          %v1936 = vpack.c.b16 %v1880, %v1876
          %v1937 = vpack.c.b16 %v1881, %v1877
          %v1938 = vpack.c.b16 %v1886, %v1882
          %v1939 = vpack.c.b16 %v1887, %v1883
          %v1940 = vpack.c.b16 %v1888, %v1884
          %v1941 = vpack.c.b16 %v1889, %v1885
          %v1942 = vpack.c.b16 %v1894, %v1890
          %v1943 = vpack.c.b16 %v1895, %v1891
          %v1944 = vpack.c.b16 %v1896, %v1892
          %v1945 = vpack.c.b16 %v1897, %v1893
          %v1946 = vpack.c.b16 %v1902, %v1898
          %v1947 = vpack.c.b16 %v1903, %v1899
          %v1948 = vpack.c.b16 %v1904, %v1900
          %v1949 = vpack.c.b16 %v1905, %v1901
          %v1950 = vpack.c.b16 %v1910, %v1906
          %v1951 = vpack.c.b16 %v1911, %v1907
          %v1952 = vpack.c.b16 %v1912, %v1908
          %v1953 = vpack.c.b16 %v1913, %v1909
          %v1954 = vpack.c.b16 %v1918, %v1914
          %v1955 = vpack.c.b16 %v1919, %v1915
          %v1956 = vpack.c.b16 %v1920, %v1916
          %v1957 = vpack.c.b16 %v1921, %v1917
          %v1958 = vpack.c.b16 %v1926, %v1922
          %v1959 = vpack.c.b16 %v1927, %v1923
          %v1960 = vpack.c.b16 %v1928, %v1924
          %v1961 = vpack.c.b16 %v1929, %v1925
          %1994 = vmatprep.subr.bf16.mxu0 %v1959
          %1995 = vmatpush1.bf16.msra.mxu0 %v1958
          %1996 = vmatprep.subr.bf16.mxu0 %v1955
          %1997 = vmatpush1.bf16.msra.mxu0 %v1954
          %1998 = vmatprep.subr.bf16.mxu0 %v1951
          %1999 = vmatpush1.bf16.msra.mxu0 %v1950
          %2000 = vmatprep.subr.bf16.mxu0 %v1947
          %2001 = vmatpush1.bf16.msra.mxu0 %v1946
          %2002 = vmatprep.subr.bf16.mxu0 %v1943
          %2003 = vmatpush1.bf16.msra.mxu0 %v1942
          %2004 = vmatprep.subr.bf16.mxu0 %v1939
          %2005 = vmatpush1.bf16.msra.mxu0 %v1938
          %2006 = vmatprep.subr.bf16.mxu0 %v1935
          %2007 = vmatpush1.bf16.msra.mxu0 %v1934
          %2008 = vmatprep.subr.bf16.mxu0 %v1931
          %2009 = vmatpush1.bf16.msra.mxu0 %v1930
          %2010 = vmatprep.subr.bf16.mxu0 0
          %2011 = vmatpush2.bf16.msra.mxu0 0
          %2012 = vmatprep.subr.bf16.mxu0 0
          %2013 = vmatpush2.bf16.msra.mxu0 0
          %2014 = vmatprep.subr.bf16.mxu0 0
          %2015 = vmatpush2.bf16.msra.mxu0 0
          %2016 = vmatprep.subr.bf16.mxu0 0
          %2017 = vmatpush2.bf16.msra.mxu0 0
          %2018 = vmatprep.subr.bf16.mxu0 0
          %2019 = vmatpush2.bf16.msra.mxu0 0
          %2020 = vmatprep.subr.bf16.mxu0 0
          %2021 = vmatpush2.bf16.msra.mxu0 0
          %2022 = vmatprep.subr.bf16.mxu0 0
          %2023 = vmatpush2.bf16.msra.mxu0 0
          %2024 = vmatprep.subr.bf16.mxu0 0
          %2025 = vmatpush2.bf16.msra.mxu0 0
          %2026 = vmatprep.mubr.bf16.mxu0 0
          %2027 = vmatmul.mubr.bf16.gmra.mxu0 %v1792
          %v2028 = vpop.f32.mrf.mxu0
          %v2029 = vadd.f32 %v1830, %v2028
          %v2030 = vpop.f32.mrf.mxu0
          %v2031 = vadd.f32 %v1831, %v2030
          %v2032 = vpop.f32.mrf.mxu0
          %v2033 = vpop.f32.mrf.mxu0
          %2034 = vdwg.mxu0
          %2035 = vmatprep.subr.bf16.mxu0 %v1961
          %2036 = vmatpush1.bf16.msra.mxu0 %v1960
          %2037 = vmatprep.subr.bf16.mxu0 %v1957
          %2038 = vmatpush1.bf16.msra.mxu0 %v1956
          %2039 = vmatprep.subr.bf16.mxu0 %v1953
          %2040 = vmatpush1.bf16.msra.mxu0 %v1952
          %2041 = vmatprep.subr.bf16.mxu0 %v1949
          %2042 = vmatpush1.bf16.msra.mxu0 %v1948
          %2043 = vmatprep.subr.bf16.mxu0 %v1945
          %2044 = vmatpush1.bf16.msra.mxu0 %v1944
          %2045 = vmatprep.subr.bf16.mxu0 %v1941
          %2046 = vmatpush1.bf16.msra.mxu0 %v1940
          %2047 = vmatprep.subr.bf16.mxu0 %v1937
          %2048 = vmatpush1.bf16.msra.mxu0 %v1936
          %2049 = vmatprep.subr.bf16.mxu0 %v1933
          %2050 = vmatpush1.bf16.msra.mxu0 %v1932
          %2051 = vmatprep.subr.bf16.mxu0 0
          %2052 = vmatpush2.bf16.msra.mxu0 0
          %2053 = vmatprep.subr.bf16.mxu0 0
          %2054 = vmatpush2.bf16.msra.mxu0 0
          %2055 = vmatprep.subr.bf16.mxu0 0
          %2056 = vmatpush2.bf16.msra.mxu0 0
          %2057 = vmatprep.subr.bf16.mxu0 0
          %2058 = vmatpush2.bf16.msra.mxu0 0
          %2059 = vmatprep.subr.bf16.mxu0 0
          %2060 = vmatpush2.bf16.msra.mxu0 0
          %2061 = vmatprep.subr.bf16.mxu0 0
          %2062 = vmatpush2.bf16.msra.mxu0 0
          %2063 = vmatprep.subr.bf16.mxu0 0
          %2064 = vmatpush2.bf16.msra.mxu0 0
          %2065 = vmatprep.subr.bf16.mxu0 0
          %2066 = vmatpush2.bf16.msra.mxu0 0
          %2067 = vmatprep.mubr.bf16.mxu0 0
          %2068 = vmatmul.mubr.bf16.gmra.mxu0 %v1792
          %v2069 = vpop.f32.mrf.mxu0
          %v2070 = vadd.f32 %v1832, %v2069
          %v2071 = vpop.f32.mrf.mxu0
          %v2072 = vadd.f32 %v1833, %v2071
          %v2073 = vpop.f32.mrf.mxu0
          %v2074 = vpop.f32.mrf.mxu0
          %2075 = vdwg.mxu0
          %v2076 = vadd.f32 %v2029, %v1088
          %v2077 = vadd.f32 %v2031, %v1092
          %v2078 = vadd.f32 %v2070, %v1096
          %v2079 = vadd.f32 %v2072, %v1100
          %v2080 = vxor.u32 %v2076, 2147483648
          %v2081 = vxor.u32 %v2077, 2147483648
          %v2082 = vxor.u32 %v2078, 2147483648
          %v2083 = vmul.f32 %v2080, 1.442695
          %v2084 = vpow.pop %v2083
          %v2085 = vmul.f32 %v2081, 1.442695
          %v2086 = vpow.pop %v2085
          %v2087 = vmul.f32 %v2082, 1.442695
          %v2088 = vpow.pop %v2087
          %v2089 = vadd.f32 %v2084, 1.0
          %v2090 = vadd.f32 %v2086, 1.0
          %v2091 = vadd.f32 %v2088, 1.0
          %v2092 = vrcp.pop %v2089
          %v2093 = vmul.f32 1.0, %v2092
          %v2094 = vrcp.pop %v2090
          %v2095 = vmul.f32 1.0, %v2094
          %v2096 = vrcp.pop %v2091
          %v2097 = vmul.f32 1.0, %v2096
          %v2098 = vtanh.pop %v2079
          %v2099 = vmul.f32 %v2095, %v1789
          %v2100 = vmul.f32 %v2093, %v2098
          %v2101 = vadd.f32 %v2099, %v2100
          %v2102 = vtanh.pop %v2101
          %v2103 = vmul.f32 %v2097, %v2102
          %vm2104 = vcmp.gt.s32.totalorder %v795, 3
          %v2105 = vsel %vm2104, 1, 0
          %v2106 = vcvt.s32.f32 %v2105
          %2108 = vset.pattern.permute.xlu0 0
          %2109 = vperm.xlu0 %2108, %v2106
          %v2110 = vpop.permute.xlu0 %2109
          %v2112 = vmul.f32 %v2103, %v2110
          %v2113 = vmul.f32 %v2101, %v2110
          %s2114 = scalar_lea.vmem %s307, 24 [#allocation9]
          %2115 = vst [vmem:[%s2114] sm:$0xff] %v2112
          %v2116 = vpack.c.bf16 %v2112, %v2112
          %v2117 = vld [vmem:[%s272] sm:$0xff]
          %v2118 = vld [vmem:[%s272 + $0x8] sm:$0xff]
          %v2119 = vld [vmem:[%s272 + $0x10] sm:$0xff]
          %v2120 = vld [vmem:[%s272 + $0x18] sm:$0xff]
          %v2121 = vld [vmem:[%s272 + $0x20] sm:$0xff]
          %v2122 = vld [vmem:[%s272 + $0x28] sm:$0xff]
          %v2123 = vld [vmem:[%s272 + $0x30] sm:$0xff]
          %v2124 = vld [vmem:[%s272 + $0x38] sm:$0xff]
          %v2125 = vld [vmem:[%s272 + $0x40] sm:$0xff]
          %v2126 = vld [vmem:[%s272 + $0x48] sm:$0xff]
          %v2127 = vld [vmem:[%s272 + $0x50] sm:$0xff]
          %v2128 = vld [vmem:[%s272 + $0x58] sm:$0xff]
          %v2129 = vld [vmem:[%s272 + $0x60] sm:$0xff]
          %v2130 = vld [vmem:[%s272 + $0x68] sm:$0xff]
          %v2131 = vld [vmem:[%s272 + $0x70] sm:$0xff]
          %v2132 = vld [vmem:[%s272 + $0x78] sm:$0xff]
          %v2133 = vld [vmem:[%s272 + $0x80] sm:$0xff]
          %v2134 = vld [vmem:[%s272 + $0x88] sm:$0xff]
          %v2135 = vld [vmem:[%s272 + $0x90] sm:$0xff]
          %v2136 = vld [vmem:[%s272 + $0x98] sm:$0xff]
          %v2137 = vld [vmem:[%s272 + $0xa0] sm:$0xff]
          %v2138 = vld [vmem:[%s272 + $0xa8] sm:$0xff]
          %v2139 = vld [vmem:[%s272 + $0xb0] sm:$0xff]
          %v2140 = vld [vmem:[%s272 + $0xb8] sm:$0xff]
          %v2141 = vld [vmem:[%s272 + $0xc0] sm:$0xff]
          %v2142 = vld [vmem:[%s272 + $0xc8] sm:$0xff]
          %v2143 = vld [vmem:[%s272 + $0xd0] sm:$0xff]
          %v2144 = vld [vmem:[%s272 + $0xd8] sm:$0xff]
          %v2145 = vld [vmem:[%s272 + $0xe0] sm:$0xff]
          %v2146 = vld [vmem:[%s272 + $0xe8] sm:$0xff]
          %v2147 = vld [vmem:[%s272 + $0xf0] sm:$0xff]
          %v2148 = vld [vmem:[%s272 + $0xf8] sm:$0xff]
          %s2149 = smul.u32 4, 4
          %s2150 = smul.addr %s2149, 4
          %s2151 = scalar_lea.vmem [#allocation2], %s2150
          %v2152 = vld [vmem:[%s2151] sm:$0xff]
          %v2153 = vld [vmem:[%s2151 + $0x8] sm:$0xff]
          %v2154 = vunpack.c.l.bf16 %v2152
          %v2155 = vunpack.c.h.bf16 %v2152
          %v2156 = vunpack.c.l.bf16 %v2153
          %v2157 = vunpack.c.h.bf16 %v2153
          %v2190 = vunpack.c.l.b16 %v2117
          %v2191 = vunpack.c.h.b16 %v2117
          %v2192 = vunpack.c.l.b16 %v2118
          %v2193 = vunpack.c.h.b16 %v2118
          %v2194 = vunpack.c.l.b16 %v2119
          %v2195 = vunpack.c.h.b16 %v2119
          %v2196 = vunpack.c.l.b16 %v2120
          %v2197 = vunpack.c.h.b16 %v2120
          %v2198 = vunpack.c.l.b16 %v2121
          %v2199 = vunpack.c.h.b16 %v2121
          %v2200 = vunpack.c.l.b16 %v2122
          %v2201 = vunpack.c.h.b16 %v2122
          %v2202 = vunpack.c.l.b16 %v2123
          %v2203 = vunpack.c.h.b16 %v2123
          %v2204 = vunpack.c.l.b16 %v2124
          %v2205 = vunpack.c.h.b16 %v2124
          %v2206 = vunpack.c.l.b16 %v2125
          %v2207 = vunpack.c.h.b16 %v2125
          %v2208 = vunpack.c.l.b16 %v2126
          %v2209 = vunpack.c.h.b16 %v2126
          %v2210 = vunpack.c.l.b16 %v2127
          %v2211 = vunpack.c.h.b16 %v2127
          %v2212 = vunpack.c.l.b16 %v2128
          %v2213 = vunpack.c.h.b16 %v2128
          %v2214 = vunpack.c.l.b16 %v2129
          %v2215 = vunpack.c.h.b16 %v2129
          %v2216 = vunpack.c.l.b16 %v2130
          %v2217 = vunpack.c.h.b16 %v2130
          %v2218 = vunpack.c.l.b16 %v2131
          %v2219 = vunpack.c.h.b16 %v2131
          %v2220 = vunpack.c.l.b16 %v2132
          %v2221 = vunpack.c.h.b16 %v2132
          %v2222 = vunpack.c.l.b16 %v2133
          %v2223 = vunpack.c.h.b16 %v2133
          %v2224 = vunpack.c.l.b16 %v2134
          %v2225 = vunpack.c.h.b16 %v2134
          %v2226 = vunpack.c.l.b16 %v2135
          %v2227 = vunpack.c.h.b16 %v2135
          %v2228 = vunpack.c.l.b16 %v2136
          %v2229 = vunpack.c.h.b16 %v2136
          %v2230 = vunpack.c.l.b16 %v2137
          %v2231 = vunpack.c.h.b16 %v2137
          %v2232 = vunpack.c.l.b16 %v2138
          %v2233 = vunpack.c.h.b16 %v2138
          %v2234 = vunpack.c.l.b16 %v2139
          %v2235 = vunpack.c.h.b16 %v2139
          %v2236 = vunpack.c.l.b16 %v2140
          %v2237 = vunpack.c.h.b16 %v2140
          %v2238 = vunpack.c.l.b16 %v2141
          %v2239 = vunpack.c.h.b16 %v2141
          %v2240 = vunpack.c.l.b16 %v2142
          %v2241 = vunpack.c.h.b16 %v2142
          %v2242 = vunpack.c.l.b16 %v2143
          %v2243 = vunpack.c.h.b16 %v2143
          %v2244 = vunpack.c.l.b16 %v2144
          %v2245 = vunpack.c.h.b16 %v2144
          %v2246 = vunpack.c.l.b16 %v2145
          %v2247 = vunpack.c.h.b16 %v2145
          %v2248 = vunpack.c.l.b16 %v2146
          %v2249 = vunpack.c.h.b16 %v2146
          %v2250 = vunpack.c.l.b16 %v2147
          %v2251 = vunpack.c.h.b16 %v2147
          %v2252 = vunpack.c.l.b16 %v2148
          %v2253 = vunpack.c.h.b16 %v2148
          %v2254 = vpack.c.b16 %v2194, %v2190
          %v2255 = vpack.c.b16 %v2195, %v2191
          %v2256 = vpack.c.b16 %v2196, %v2192
          %v2257 = vpack.c.b16 %v2197, %v2193
          %v2258 = vpack.c.b16 %v2202, %v2198
          %v2259 = vpack.c.b16 %v2203, %v2199
          %v2260 = vpack.c.b16 %v2204, %v2200
          %v2261 = vpack.c.b16 %v2205, %v2201
          %v2262 = vpack.c.b16 %v2210, %v2206
          %v2263 = vpack.c.b16 %v2211, %v2207
          %v2264 = vpack.c.b16 %v2212, %v2208
          %v2265 = vpack.c.b16 %v2213, %v2209
          %v2266 = vpack.c.b16 %v2218, %v2214
          %v2267 = vpack.c.b16 %v2219, %v2215
          %v2268 = vpack.c.b16 %v2220, %v2216
          %v2269 = vpack.c.b16 %v2221, %v2217
          %v2270 = vpack.c.b16 %v2226, %v2222
          %v2271 = vpack.c.b16 %v2227, %v2223
          %v2272 = vpack.c.b16 %v2228, %v2224
          %v2273 = vpack.c.b16 %v2229, %v2225
          %v2274 = vpack.c.b16 %v2234, %v2230
          %v2275 = vpack.c.b16 %v2235, %v2231
          %v2276 = vpack.c.b16 %v2236, %v2232
          %v2277 = vpack.c.b16 %v2237, %v2233
          %v2278 = vpack.c.b16 %v2242, %v2238
          %v2279 = vpack.c.b16 %v2243, %v2239
          %v2280 = vpack.c.b16 %v2244, %v2240
          %v2281 = vpack.c.b16 %v2245, %v2241
          %v2282 = vpack.c.b16 %v2250, %v2246
          %v2283 = vpack.c.b16 %v2251, %v2247
          %v2284 = vpack.c.b16 %v2252, %v2248
          %v2285 = vpack.c.b16 %v2253, %v2249
          %2318 = vmatprep.subr.bf16.mxu0 %v2283
          %2319 = vmatpush1.bf16.msra.mxu0 %v2282
          %2320 = vmatprep.subr.bf16.mxu0 %v2279
          %2321 = vmatpush1.bf16.msra.mxu0 %v2278
          %2322 = vmatprep.subr.bf16.mxu0 %v2275
          %2323 = vmatpush1.bf16.msra.mxu0 %v2274
          %2324 = vmatprep.subr.bf16.mxu0 %v2271
          %2325 = vmatpush1.bf16.msra.mxu0 %v2270
          %2326 = vmatprep.subr.bf16.mxu0 %v2267
          %2327 = vmatpush1.bf16.msra.mxu0 %v2266
          %2328 = vmatprep.subr.bf16.mxu0 %v2263
          %2329 = vmatpush1.bf16.msra.mxu0 %v2262
          %2330 = vmatprep.subr.bf16.mxu0 %v2259
          %2331 = vmatpush1.bf16.msra.mxu0 %v2258
          %2332 = vmatprep.subr.bf16.mxu0 %v2255
          %2333 = vmatpush1.bf16.msra.mxu0 %v2254
          %2334 = vmatprep.subr.bf16.mxu0 0
          %2335 = vmatpush2.bf16.msra.mxu0 0
          %2336 = vmatprep.subr.bf16.mxu0 0
          %2337 = vmatpush2.bf16.msra.mxu0 0
          %2338 = vmatprep.subr.bf16.mxu0 0
          %2339 = vmatpush2.bf16.msra.mxu0 0
          %2340 = vmatprep.subr.bf16.mxu0 0
          %2341 = vmatpush2.bf16.msra.mxu0 0
          %2342 = vmatprep.subr.bf16.mxu0 0
          %2343 = vmatpush2.bf16.msra.mxu0 0
          %2344 = vmatprep.subr.bf16.mxu0 0
          %2345 = vmatpush2.bf16.msra.mxu0 0
          %2346 = vmatprep.subr.bf16.mxu0 0
          %2347 = vmatpush2.bf16.msra.mxu0 0
          %2348 = vmatprep.subr.bf16.mxu0 0
          %2349 = vmatpush2.bf16.msra.mxu0 0
          %2350 = vmatprep.mubr.bf16.mxu0 0
          %2351 = vmatmul.mubr.bf16.gmra.mxu0 %v2116
          %v2352 = vpop.f32.mrf.mxu0
          %v2353 = vadd.f32 %v2154, %v2352
          %v2354 = vpop.f32.mrf.mxu0
          %v2355 = vadd.f32 %v2155, %v2354
          %v2356 = vpop.f32.mrf.mxu0
          %v2357 = vpop.f32.mrf.mxu0
          %2358 = vdwg.mxu0
          %2359 = vmatprep.subr.bf16.mxu0 %v2285
          %2360 = vmatpush1.bf16.msra.mxu0 %v2284
          %2361 = vmatprep.subr.bf16.mxu0 %v2281
          %2362 = vmatpush1.bf16.msra.mxu0 %v2280
          %2363 = vmatprep.subr.bf16.mxu0 %v2277
          %2364 = vmatpush1.bf16.msra.mxu0 %v2276
          %2365 = vmatprep.subr.bf16.mxu0 %v2273
          %2366 = vmatpush1.bf16.msra.mxu0 %v2272
          %2367 = vmatprep.subr.bf16.mxu0 %v2269
          %2368 = vmatpush1.bf16.msra.mxu0 %v2268
          %2369 = vmatprep.subr.bf16.mxu0 %v2265
          %2370 = vmatpush1.bf16.msra.mxu0 %v2264
          %2371 = vmatprep.subr.bf16.mxu0 %v2261
          %2372 = vmatpush1.bf16.msra.mxu0 %v2260
          %2373 = vmatprep.subr.bf16.mxu0 %v2257
          %2374 = vmatpush1.bf16.msra.mxu0 %v2256
          %2375 = vmatprep.subr.bf16.mxu0 0
          %2376 = vmatpush2.bf16.msra.mxu0 0
          %2377 = vmatprep.subr.bf16.mxu0 0
          %2378 = vmatpush2.bf16.msra.mxu0 0
          %2379 = vmatprep.subr.bf16.mxu0 0
          %2380 = vmatpush2.bf16.msra.mxu0 0
          %2381 = vmatprep.subr.bf16.mxu0 0
          %2382 = vmatpush2.bf16.msra.mxu0 0
          %2383 = vmatprep.subr.bf16.mxu0 0
          %2384 = vmatpush2.bf16.msra.mxu0 0
          %2385 = vmatprep.subr.bf16.mxu0 0
          %2386 = vmatpush2.bf16.msra.mxu0 0
          %2387 = vmatprep.subr.bf16.mxu0 0
          %2388 = vmatpush2.bf16.msra.mxu0 0
          %2389 = vmatprep.subr.bf16.mxu0 0
          %2390 = vmatpush2.bf16.msra.mxu0 0
          %2391 = vmatprep.mubr.bf16.mxu0 0
          %2392 = vmatmul.mubr.bf16.gmra.mxu0 %v2116
          %v2393 = vpop.f32.mrf.mxu0
          %v2394 = vadd.f32 %v2156, %v2393
          %v2395 = vpop.f32.mrf.mxu0
          %v2396 = vadd.f32 %v2157, %v2395
          %v2397 = vpop.f32.mrf.mxu0
          %v2398 = vpop.f32.mrf.mxu0
          %2399 = vdwg.mxu0
          %v2400 = vadd.f32 %v2353, %v1088
          %v2401 = vadd.f32 %v2355, %v1092
          %v2402 = vadd.f32 %v2394, %v1096
          %v2403 = vadd.f32 %v2396, %v1100
          %v2404 = vxor.u32 %v2400, 2147483648
          %v2405 = vxor.u32 %v2401, 2147483648
          %v2406 = vxor.u32 %v2402, 2147483648
          %v2407 = vmul.f32 %v2404, 1.442695
          %v2408 = vpow.pop %v2407
          %v2409 = vmul.f32 %v2405, 1.442695
          %v2410 = vpow.pop %v2409
          %v2411 = vmul.f32 %v2406, 1.442695
          %v2412 = vpow.pop %v2411
          %v2413 = vadd.f32 %v2408, 1.0
          %v2414 = vadd.f32 %v2410, 1.0
          %v2415 = vadd.f32 %v2412, 1.0
          %v2416 = vrcp.pop %v2413
          %v2417 = vmul.f32 1.0, %v2416
          %v2418 = vrcp.pop %v2414
          %v2419 = vmul.f32 1.0, %v2418
          %v2420 = vrcp.pop %v2415
          %v2421 = vmul.f32 1.0, %v2420
          %v2422 = vtanh.pop %v2403
          %v2423 = vmul.f32 %v2419, %v2113
          %v2424 = vmul.f32 %v2417, %v2422
          %v2425 = vadd.f32 %v2423, %v2424
          %v2426 = vtanh.pop %v2425
          %v2427 = vmul.f32 %v2421, %v2426
          %vm2428 = vcmp.gt.s32.totalorder %v795, 4
          %v2429 = vsel %vm2428, 1, 0
          %v2430 = vcvt.s32.f32 %v2429
          %2432 = vset.pattern.permute.xlu0 0
          %2433 = vperm.xlu0 %2432, %v2430
          %v2434 = vpop.permute.xlu0 %2433
          %v2436 = vmul.f32 %v2427, %v2434
          %v2437 = vmul.f32 %v2425, %v2434
          %s2438 = scalar_lea.vmem %s307, 32 [#allocation9]
          %2439 = vst [vmem:[%s2438] sm:$0xff] %v2436
          %v2440 = vpack.c.bf16 %v2436, %v2436
          %v2441 = vld [vmem:[%s272] sm:$0xff]
          %v2442 = vld [vmem:[%s272 + $0x8] sm:$0xff]
          %v2443 = vld [vmem:[%s272 + $0x10] sm:$0xff]
          %v2444 = vld [vmem:[%s272 + $0x18] sm:$0xff]
          %v2445 = vld [vmem:[%s272 + $0x20] sm:$0xff]
          %v2446 = vld [vmem:[%s272 + $0x28] sm:$0xff]
          %v2447 = vld [vmem:[%s272 + $0x30] sm:$0xff]
          %v2448 = vld [vmem:[%s272 + $0x38] sm:$0xff]
          %v2449 = vld [vmem:[%s272 + $0x40] sm:$0xff]
          %v2450 = vld [vmem:[%s272 + $0x48] sm:$0xff]
          %v2451 = vld [vmem:[%s272 + $0x50] sm:$0xff]
          %v2452 = vld [vmem:[%s272 + $0x58] sm:$0xff]
          %v2453 = vld [vmem:[%s272 + $0x60] sm:$0xff]
          %v2454 = vld [vmem:[%s272 + $0x68] sm:$0xff]
          %v2455 = vld [vmem:[%s272 + $0x70] sm:$0xff]
          %v2456 = vld [vmem:[%s272 + $0x78] sm:$0xff]
          %v2457 = vld [vmem:[%s272 + $0x80] sm:$0xff]
          %v2458 = vld [vmem:[%s272 + $0x88] sm:$0xff]
          %v2459 = vld [vmem:[%s272 + $0x90] sm:$0xff]
          %v2460 = vld [vmem:[%s272 + $0x98] sm:$0xff]
          %v2461 = vld [vmem:[%s272 + $0xa0] sm:$0xff]
          %v2462 = vld [vmem:[%s272 + $0xa8] sm:$0xff]
          %v2463 = vld [vmem:[%s272 + $0xb0] sm:$0xff]
          %v2464 = vld [vmem:[%s272 + $0xb8] sm:$0xff]
          %v2465 = vld [vmem:[%s272 + $0xc0] sm:$0xff]
          %v2466 = vld [vmem:[%s272 + $0xc8] sm:$0xff]
          %v2467 = vld [vmem:[%s272 + $0xd0] sm:$0xff]
          %v2468 = vld [vmem:[%s272 + $0xd8] sm:$0xff]
          %v2469 = vld [vmem:[%s272 + $0xe0] sm:$0xff]
          %v2470 = vld [vmem:[%s272 + $0xe8] sm:$0xff]
          %v2471 = vld [vmem:[%s272 + $0xf0] sm:$0xff]
          %v2472 = vld [vmem:[%s272 + $0xf8] sm:$0xff]
          %s2473 = smul.u32 5, 4
          %s2474 = smul.addr %s2473, 4
          %s2475 = scalar_lea.vmem [#allocation2], %s2474
          %v2476 = vld [vmem:[%s2475] sm:$0xff]
          %v2477 = vld [vmem:[%s2475 + $0x8] sm:$0xff]
          %v2478 = vunpack.c.l.bf16 %v2476
          %v2479 = vunpack.c.h.bf16 %v2476
          %v2480 = vunpack.c.l.bf16 %v2477
          %v2481 = vunpack.c.h.bf16 %v2477
          %v2514 = vunpack.c.l.b16 %v2441
          %v2515 = vunpack.c.h.b16 %v2441
          %v2516 = vunpack.c.l.b16 %v2442
          %v2517 = vunpack.c.h.b16 %v2442
          %v2518 = vunpack.c.l.b16 %v2443
          %v2519 = vunpack.c.h.b16 %v2443
          %v2520 = vunpack.c.l.b16 %v2444
          %v2521 = vunpack.c.h.b16 %v2444
          %v2522 = vunpack.c.l.b16 %v2445
          %v2523 = vunpack.c.h.b16 %v2445
          %v2524 = vunpack.c.l.b16 %v2446
          %v2525 = vunpack.c.h.b16 %v2446
          %v2526 = vunpack.c.l.b16 %v2447
          %v2527 = vunpack.c.h.b16 %v2447
          %v2528 = vunpack.c.l.b16 %v2448
          %v2529 = vunpack.c.h.b16 %v2448
          %v2530 = vunpack.c.l.b16 %v2449
          %v2531 = vunpack.c.h.b16 %v2449
          %v2532 = vunpack.c.l.b16 %v2450
          %v2533 = vunpack.c.h.b16 %v2450
          %v2534 = vunpack.c.l.b16 %v2451
          %v2535 = vunpack.c.h.b16 %v2451
          %v2536 = vunpack.c.l.b16 %v2452
          %v2537 = vunpack.c.h.b16 %v2452
          %v2538 = vunpack.c.l.b16 %v2453
          %v2539 = vunpack.c.h.b16 %v2453
          %v2540 = vunpack.c.l.b16 %v2454
          %v2541 = vunpack.c.h.b16 %v2454
          %v2542 = vunpack.c.l.b16 %v2455
          %v2543 = vunpack.c.h.b16 %v2455
          %v2544 = vunpack.c.l.b16 %v2456
          %v2545 = vunpack.c.h.b16 %v2456
          %v2546 = vunpack.c.l.b16 %v2457
          %v2547 = vunpack.c.h.b16 %v2457
          %v2548 = vunpack.c.l.b16 %v2458
          %v2549 = vunpack.c.h.b16 %v2458
          %v2550 = vunpack.c.l.b16 %v2459
          %v2551 = vunpack.c.h.b16 %v2459
          %v2552 = vunpack.c.l.b16 %v2460
          %v2553 = vunpack.c.h.b16 %v2460
          %v2554 = vunpack.c.l.b16 %v2461
          %v2555 = vunpack.c.h.b16 %v2461
          %v2556 = vunpack.c.l.b16 %v2462
          %v2557 = vunpack.c.h.b16 %v2462
          %v2558 = vunpack.c.l.b16 %v2463
          %v2559 = vunpack.c.h.b16 %v2463
          %v2560 = vunpack.c.l.b16 %v2464
          %v2561 = vunpack.c.h.b16 %v2464
          %v2562 = vunpack.c.l.b16 %v2465
          %v2563 = vunpack.c.h.b16 %v2465
          %v2564 = vunpack.c.l.b16 %v2466
          %v2565 = vunpack.c.h.b16 %v2466
          %v2566 = vunpack.c.l.b16 %v2467
          %v2567 = vunpack.c.h.b16 %v2467
          %v2568 = vunpack.c.l.b16 %v2468
          %v2569 = vunpack.c.h.b16 %v2468
          %v2570 = vunpack.c.l.b16 %v2469
          %v2571 = vunpack.c.h.b16 %v2469
          %v2572 = vunpack.c.l.b16 %v2470
          %v2573 = vunpack.c.h.b16 %v2470
          %v2574 = vunpack.c.l.b16 %v2471
          %v2575 = vunpack.c.h.b16 %v2471
          %v2576 = vunpack.c.l.b16 %v2472
          %v2577 = vunpack.c.h.b16 %v2472
          %v2578 = vpack.c.b16 %v2518, %v2514
          %v2579 = vpack.c.b16 %v2519, %v2515
          %v2580 = vpack.c.b16 %v2520, %v2516
          %v2581 = vpack.c.b16 %v2521, %v2517
          %v2582 = vpack.c.b16 %v2526, %v2522
          %v2583 = vpack.c.b16 %v2527, %v2523
          %v2584 = vpack.c.b16 %v2528, %v2524
          %v2585 = vpack.c.b16 %v2529, %v2525
          %v2586 = vpack.c.b16 %v2534, %v2530
          %v2587 = vpack.c.b16 %v2535, %v2531
          %v2588 = vpack.c.b16 %v2536, %v2532
          %v2589 = vpack.c.b16 %v2537, %v2533
          %v2590 = vpack.c.b16 %v2542, %v2538
          %v2591 = vpack.c.b16 %v2543, %v2539
          %v2592 = vpack.c.b16 %v2544, %v2540
          %v2593 = vpack.c.b16 %v2545, %v2541
          %v2594 = vpack.c.b16 %v2550, %v2546
          %v2595 = vpack.c.b16 %v2551, %v2547
          %v2596 = vpack.c.b16 %v2552, %v2548
          %v2597 = vpack.c.b16 %v2553, %v2549
          %v2598 = vpack.c.b16 %v2558, %v2554
          %v2599 = vpack.c.b16 %v2559, %v2555
          %v2600 = vpack.c.b16 %v2560, %v2556
          %v2601 = vpack.c.b16 %v2561, %v2557
          %v2602 = vpack.c.b16 %v2566, %v2562
          %v2603 = vpack.c.b16 %v2567, %v2563
          %v2604 = vpack.c.b16 %v2568, %v2564
          %v2605 = vpack.c.b16 %v2569, %v2565
          %v2606 = vpack.c.b16 %v2574, %v2570
          %v2607 = vpack.c.b16 %v2575, %v2571
          %v2608 = vpack.c.b16 %v2576, %v2572
          %v2609 = vpack.c.b16 %v2577, %v2573
          %2642 = vmatprep.subr.bf16.mxu0 %v2607
          %2643 = vmatpush1.bf16.msra.mxu0 %v2606
          %2644 = vmatprep.subr.bf16.mxu0 %v2603
          %2645 = vmatpush1.bf16.msra.mxu0 %v2602
          %2646 = vmatprep.subr.bf16.mxu0 %v2599
          %2647 = vmatpush1.bf16.msra.mxu0 %v2598
          %2648 = vmatprep.subr.bf16.mxu0 %v2595
          %2649 = vmatpush1.bf16.msra.mxu0 %v2594
          %2650 = vmatprep.subr.bf16.mxu0 %v2591
          %2651 = vmatpush1.bf16.msra.mxu0 %v2590
          %2652 = vmatprep.subr.bf16.mxu0 %v2587
          %2653 = vmatpush1.bf16.msra.mxu0 %v2586
          %2654 = vmatprep.subr.bf16.mxu0 %v2583
          %2655 = vmatpush1.bf16.msra.mxu0 %v2582
          %2656 = vmatprep.subr.bf16.mxu0 %v2579
          %2657 = vmatpush1.bf16.msra.mxu0 %v2578
          %2658 = vmatprep.subr.bf16.mxu0 0
          %2659 = vmatpush2.bf16.msra.mxu0 0
          %2660 = vmatprep.subr.bf16.mxu0 0
          %2661 = vmatpush2.bf16.msra.mxu0 0
          %2662 = vmatprep.subr.bf16.mxu0 0
          %2663 = vmatpush2.bf16.msra.mxu0 0
          %2664 = vmatprep.subr.bf16.mxu0 0
          %2665 = vmatpush2.bf16.msra.mxu0 0
          %2666 = vmatprep.subr.bf16.mxu0 0
          %2667 = vmatpush2.bf16.msra.mxu0 0
          %2668 = vmatprep.subr.bf16.mxu0 0
          %2669 = vmatpush2.bf16.msra.mxu0 0
          %2670 = vmatprep.subr.bf16.mxu0 0
          %2671 = vmatpush2.bf16.msra.mxu0 0
          %2672 = vmatprep.subr.bf16.mxu0 0
          %2673 = vmatpush2.bf16.msra.mxu0 0
          %2674 = vmatprep.mubr.bf16.mxu0 0
          %2675 = vmatmul.mubr.bf16.gmra.mxu0 %v2440
          %v2676 = vpop.f32.mrf.mxu0
          %v2677 = vadd.f32 %v2478, %v2676
          %v2678 = vpop.f32.mrf.mxu0
          %v2679 = vadd.f32 %v2479, %v2678
          %v2680 = vpop.f32.mrf.mxu0
          %v2681 = vpop.f32.mrf.mxu0
          %2682 = vdwg.mxu0
          %2683 = vmatprep.subr.bf16.mxu0 %v2609
          %2684 = vmatpush1.bf16.msra.mxu0 %v2608
          %2685 = vmatprep.subr.bf16.mxu0 %v2605
          %2686 = vmatpush1.bf16.msra.mxu0 %v2604
          %2687 = vmatprep.subr.bf16.mxu0 %v2601
          %2688 = vmatpush1.bf16.msra.mxu0 %v2600
          %2689 = vmatprep.subr.bf16.mxu0 %v2597
          %2690 = vmatpush1.bf16.msra.mxu0 %v2596
          %2691 = vmatprep.subr.bf16.mxu0 %v2593
          %2692 = vmatpush1.bf16.msra.mxu0 %v2592
          %2693 = vmatprep.subr.bf16.mxu0 %v2589
          %2694 = vmatpush1.bf16.msra.mxu0 %v2588
          %2695 = vmatprep.subr.bf16.mxu0 %v2585
          %2696 = vmatpush1.bf16.msra.mxu0 %v2584
          %2697 = vmatprep.subr.bf16.mxu0 %v2581
          %2698 = vmatpush1.bf16.msra.mxu0 %v2580
          %2699 = vmatprep.subr.bf16.mxu0 0
          %2700 = vmatpush2.bf16.msra.mxu0 0
          %2701 = vmatprep.subr.bf16.mxu0 0
          %2702 = vmatpush2.bf16.msra.mxu0 0
          %2703 = vmatprep.subr.bf16.mxu0 0
          %2704 = vmatpush2.bf16.msra.mxu0 0
          %2705 = vmatprep.subr.bf16.mxu0 0
          %2706 = vmatpush2.bf16.msra.mxu0 0
          %2707 = vmatprep.subr.bf16.mxu0 0
          %2708 = vmatpush2.bf16.msra.mxu0 0
          %2709 = vmatprep.subr.bf16.mxu0 0
          %2710 = vmatpush2.bf16.msra.mxu0 0
          %2711 = vmatprep.subr.bf16.mxu0 0
          %2712 = vmatpush2.bf16.msra.mxu0 0
          %2713 = vmatprep.subr.bf16.mxu0 0
          %2714 = vmatpush2.bf16.msra.mxu0 0
          %2715 = vmatprep.mubr.bf16.mxu0 0
          %2716 = vmatmul.mubr.bf16.gmra.mxu0 %v2440
          %v2717 = vpop.f32.mrf.mxu0
          %v2718 = vadd.f32 %v2480, %v2717
          %v2719 = vpop.f32.mrf.mxu0
          %v2720 = vadd.f32 %v2481, %v2719
          %v2721 = vpop.f32.mrf.mxu0
          %v2722 = vpop.f32.mrf.mxu0
          %2723 = vdwg.mxu0
          %v2724 = vadd.f32 %v2677, %v1088
          %v2725 = vadd.f32 %v2679, %v1092
          %v2726 = vadd.f32 %v2718, %v1096
          %v2727 = vadd.f32 %v2720, %v1100
          %v2728 = vxor.u32 %v2724, 2147483648
          %v2729 = vxor.u32 %v2725, 2147483648
          %v2730 = vxor.u32 %v2726, 2147483648
          %v2731 = vmul.f32 %v2728, 1.442695
          %v2732 = vpow.pop %v2731
          %v2733 = vmul.f32 %v2729, 1.442695
          %v2734 = vpow.pop %v2733
          %v2735 = vmul.f32 %v2730, 1.442695
          %v2736 = vpow.pop %v2735
          %v2737 = vadd.f32 %v2732, 1.0
          %v2738 = vadd.f32 %v2734, 1.0
          %v2739 = vadd.f32 %v2736, 1.0
          %v2740 = vrcp.pop %v2737
          %v2741 = vmul.f32 1.0, %v2740
          %v2742 = vrcp.pop %v2738
          %v2743 = vmul.f32 1.0, %v2742
          %v2744 = vrcp.pop %v2739
          %v2745 = vmul.f32 1.0, %v2744
          %v2746 = vtanh.pop %v2727
          %v2747 = vmul.f32 %v2743, %v2437
          %v2748 = vmul.f32 %v2741, %v2746
          %v2749 = vadd.f32 %v2747, %v2748
          %v2750 = vtanh.pop %v2749
          %v2751 = vmul.f32 %v2745, %v2750
          %vm2752 = vcmp.gt.s32.totalorder %v795, 5
          %v2753 = vsel %vm2752, 1, 0
          %v2754 = vcvt.s32.f32 %v2753
          %2756 = vset.pattern.permute.xlu0 0
          %2757 = vperm.xlu0 %2756, %v2754
          %v2758 = vpop.permute.xlu0 %2757
          %v2760 = vmul.f32 %v2751, %v2758
          %v2761 = vmul.f32 %v2749, %v2758
          %s2762 = scalar_lea.vmem %s307, 40 [#allocation9]
          %2763 = vst [vmem:[%s2762] sm:$0xff] %v2760
          %v2764 = vpack.c.bf16 %v2760, %v2760
          %v2765 = vld [vmem:[%s272] sm:$0xff]
          %v2766 = vld [vmem:[%s272 + $0x8] sm:$0xff]
          %v2767 = vld [vmem:[%s272 + $0x10] sm:$0xff]
          %v2768 = vld [vmem:[%s272 + $0x18] sm:$0xff]
          %v2769 = vld [vmem:[%s272 + $0x20] sm:$0xff]
          %v2770 = vld [vmem:[%s272 + $0x28] sm:$0xff]
          %v2771 = vld [vmem:[%s272 + $0x30] sm:$0xff]
          %v2772 = vld [vmem:[%s272 + $0x38] sm:$0xff]
          %v2773 = vld [vmem:[%s272 + $0x40] sm:$0xff]
          %v2774 = vld [vmem:[%s272 + $0x48] sm:$0xff]
          %v2775 = vld [vmem:[%s272 + $0x50] sm:$0xff]
          %v2776 = vld [vmem:[%s272 + $0x58] sm:$0xff]
          %v2777 = vld [vmem:[%s272 + $0x60] sm:$0xff]
          %v2778 = vld [vmem:[%s272 + $0x68] sm:$0xff]
          %v2779 = vld [vmem:[%s272 + $0x70] sm:$0xff]
          %v2780 = vld [vmem:[%s272 + $0x78] sm:$0xff]
          %v2781 = vld [vmem:[%s272 + $0x80] sm:$0xff]
          %v2782 = vld [vmem:[%s272 + $0x88] sm:$0xff]
          %v2783 = vld [vmem:[%s272 + $0x90] sm:$0xff]
          %v2784 = vld [vmem:[%s272 + $0x98] sm:$0xff]
          %v2785 = vld [vmem:[%s272 + $0xa0] sm:$0xff]
          %v2786 = vld [vmem:[%s272 + $0xa8] sm:$0xff]
          %v2787 = vld [vmem:[%s272 + $0xb0] sm:$0xff]
          %v2788 = vld [vmem:[%s272 + $0xb8] sm:$0xff]
          %v2789 = vld [vmem:[%s272 + $0xc0] sm:$0xff]
          %v2790 = vld [vmem:[%s272 + $0xc8] sm:$0xff]
          %v2791 = vld [vmem:[%s272 + $0xd0] sm:$0xff]
          %v2792 = vld [vmem:[%s272 + $0xd8] sm:$0xff]
          %v2793 = vld [vmem:[%s272 + $0xe0] sm:$0xff]
          %v2794 = vld [vmem:[%s272 + $0xe8] sm:$0xff]
          %v2795 = vld [vmem:[%s272 + $0xf0] sm:$0xff]
          %v2796 = vld [vmem:[%s272 + $0xf8] sm:$0xff]
          %s2797 = smul.u32 6, 4
          %s2798 = smul.addr %s2797, 4
          %s2799 = scalar_lea.vmem [#allocation2], %s2798
          %v2800 = vld [vmem:[%s2799] sm:$0xff]
          %v2801 = vld [vmem:[%s2799 + $0x8] sm:$0xff]
          %v2802 = vunpack.c.l.bf16 %v2800
          %v2803 = vunpack.c.h.bf16 %v2800
          %v2804 = vunpack.c.l.bf16 %v2801
          %v2805 = vunpack.c.h.bf16 %v2801
          %v2838 = vunpack.c.l.b16 %v2765
          %v2839 = vunpack.c.h.b16 %v2765
          %v2840 = vunpack.c.l.b16 %v2766
          %v2841 = vunpack.c.h.b16 %v2766
          %v2842 = vunpack.c.l.b16 %v2767
          %v2843 = vunpack.c.h.b16 %v2767
          %v2844 = vunpack.c.l.b16 %v2768
          %v2845 = vunpack.c.h.b16 %v2768
          %v2846 = vunpack.c.l.b16 %v2769
          %v2847 = vunpack.c.h.b16 %v2769
          %v2848 = vunpack.c.l.b16 %v2770
          %v2849 = vunpack.c.h.b16 %v2770
          %v2850 = vunpack.c.l.b16 %v2771
          %v2851 = vunpack.c.h.b16 %v2771
          %v2852 = vunpack.c.l.b16 %v2772
          %v2853 = vunpack.c.h.b16 %v2772
          %v2854 = vunpack.c.l.b16 %v2773
          %v2855 = vunpack.c.h.b16 %v2773
          %v2856 = vunpack.c.l.b16 %v2774
          %v2857 = vunpack.c.h.b16 %v2774
          %v2858 = vunpack.c.l.b16 %v2775
          %v2859 = vunpack.c.h.b16 %v2775
          %v2860 = vunpack.c.l.b16 %v2776
          %v2861 = vunpack.c.h.b16 %v2776
          %v2862 = vunpack.c.l.b16 %v2777
          %v2863 = vunpack.c.h.b16 %v2777
          %v2864 = vunpack.c.l.b16 %v2778
          %v2865 = vunpack.c.h.b16 %v2778
          %v2866 = vunpack.c.l.b16 %v2779
          %v2867 = vunpack.c.h.b16 %v2779
          %v2868 = vunpack.c.l.b16 %v2780
          %v2869 = vunpack.c.h.b16 %v2780
          %v2870 = vunpack.c.l.b16 %v2781
          %v2871 = vunpack.c.h.b16 %v2781
          %v2872 = vunpack.c.l.b16 %v2782
          %v2873 = vunpack.c.h.b16 %v2782
          %v2874 = vunpack.c.l.b16 %v2783
          %v2875 = vunpack.c.h.b16 %v2783
          %v2876 = vunpack.c.l.b16 %v2784
          %v2877 = vunpack.c.h.b16 %v2784
          %v2878 = vunpack.c.l.b16 %v2785
          %v2879 = vunpack.c.h.b16 %v2785
          %v2880 = vunpack.c.l.b16 %v2786
          %v2881 = vunpack.c.h.b16 %v2786
          %v2882 = vunpack.c.l.b16 %v2787
          %v2883 = vunpack.c.h.b16 %v2787
          %v2884 = vunpack.c.l.b16 %v2788
          %v2885 = vunpack.c.h.b16 %v2788
          %v2886 = vunpack.c.l.b16 %v2789
          %v2887 = vunpack.c.h.b16 %v2789
          %v2888 = vunpack.c.l.b16 %v2790
          %v2889 = vunpack.c.h.b16 %v2790
          %v2890 = vunpack.c.l.b16 %v2791
          %v2891 = vunpack.c.h.b16 %v2791
          %v2892 = vunpack.c.l.b16 %v2792
          %v2893 = vunpack.c.h.b16 %v2792
          %v2894 = vunpack.c.l.b16 %v2793
          %v2895 = vunpack.c.h.b16 %v2793
          %v2896 = vunpack.c.l.b16 %v2794
          %v2897 = vunpack.c.h.b16 %v2794
          %v2898 = vunpack.c.l.b16 %v2795
          %v2899 = vunpack.c.h.b16 %v2795
          %v2900 = vunpack.c.l.b16 %v2796
          %v2901 = vunpack.c.h.b16 %v2796
          %v2902 = vpack.c.b16 %v2842, %v2838
          %v2903 = vpack.c.b16 %v2843, %v2839
          %v2904 = vpack.c.b16 %v2844, %v2840
          %v2905 = vpack.c.b16 %v2845, %v2841
          %v2906 = vpack.c.b16 %v2850, %v2846
          %v2907 = vpack.c.b16 %v2851, %v2847
          %v2908 = vpack.c.b16 %v2852, %v2848
          %v2909 = vpack.c.b16 %v2853, %v2849
          %v2910 = vpack.c.b16 %v2858, %v2854
          %v2911 = vpack.c.b16 %v2859, %v2855
          %v2912 = vpack.c.b16 %v2860, %v2856
          %v2913 = vpack.c.b16 %v2861, %v2857
          %v2914 = vpack.c.b16 %v2866, %v2862
          %v2915 = vpack.c.b16 %v2867, %v2863
          %v2916 = vpack.c.b16 %v2868, %v2864
          %v2917 = vpack.c.b16 %v2869, %v2865
          %v2918 = vpack.c.b16 %v2874, %v2870
          %v2919 = vpack.c.b16 %v2875, %v2871
          %v2920 = vpack.c.b16 %v2876, %v2872
          %v2921 = vpack.c.b16 %v2877, %v2873
          %v2922 = vpack.c.b16 %v2882, %v2878
          %v2923 = vpack.c.b16 %v2883, %v2879
          %v2924 = vpack.c.b16 %v2884, %v2880
          %v2925 = vpack.c.b16 %v2885, %v2881
          %v2926 = vpack.c.b16 %v2890, %v2886
          %v2927 = vpack.c.b16 %v2891, %v2887
          %v2928 = vpack.c.b16 %v2892, %v2888
          %v2929 = vpack.c.b16 %v2893, %v2889
          %v2930 = vpack.c.b16 %v2898, %v2894
          %v2931 = vpack.c.b16 %v2899, %v2895
          %v2932 = vpack.c.b16 %v2900, %v2896
          %v2933 = vpack.c.b16 %v2901, %v2897
          %2966 = vmatprep.subr.bf16.mxu0 %v2931
          %2967 = vmatpush1.bf16.msra.mxu0 %v2930
          %2968 = vmatprep.subr.bf16.mxu0 %v2927
          %2969 = vmatpush1.bf16.msra.mxu0 %v2926
          %2970 = vmatprep.subr.bf16.mxu0 %v2923
          %2971 = vmatpush1.bf16.msra.mxu0 %v2922
          %2972 = vmatprep.subr.bf16.mxu0 %v2919
          %2973 = vmatpush1.bf16.msra.mxu0 %v2918
          %2974 = vmatprep.subr.bf16.mxu0 %v2915
          %2975 = vmatpush1.bf16.msra.mxu0 %v2914
          %2976 = vmatprep.subr.bf16.mxu0 %v2911
          %2977 = vmatpush1.bf16.msra.mxu0 %v2910
          %2978 = vmatprep.subr.bf16.mxu0 %v2907
          %2979 = vmatpush1.bf16.msra.mxu0 %v2906
          %2980 = vmatprep.subr.bf16.mxu0 %v2903
          %2981 = vmatpush1.bf16.msra.mxu0 %v2902
          %2982 = vmatprep.subr.bf16.mxu0 0
          %2983 = vmatpush2.bf16.msra.mxu0 0
          %2984 = vmatprep.subr.bf16.mxu0 0
          %2985 = vmatpush2.bf16.msra.mxu0 0
          %2986 = vmatprep.subr.bf16.mxu0 0
          %2987 = vmatpush2.bf16.msra.mxu0 0
          %2988 = vmatprep.subr.bf16.mxu0 0
          %2989 = vmatpush2.bf16.msra.mxu0 0
          %2990 = vmatprep.subr.bf16.mxu0 0
          %2991 = vmatpush2.bf16.msra.mxu0 0
          %2992 = vmatprep.subr.bf16.mxu0 0
          %2993 = vmatpush2.bf16.msra.mxu0 0
          %2994 = vmatprep.subr.bf16.mxu0 0
          %2995 = vmatpush2.bf16.msra.mxu0 0
          %2996 = vmatprep.subr.bf16.mxu0 0
          %2997 = vmatpush2.bf16.msra.mxu0 0
          %2998 = vmatprep.mubr.bf16.mxu0 0
          %2999 = vmatmul.mubr.bf16.gmra.mxu0 %v2764
          %v3000 = vpop.f32.mrf.mxu0
          %v3001 = vadd.f32 %v2802, %v3000
          %v3002 = vpop.f32.mrf.mxu0
          %v3003 = vadd.f32 %v2803, %v3002
          %v3004 = vpop.f32.mrf.mxu0
          %v3005 = vpop.f32.mrf.mxu0
          %3006 = vdwg.mxu0
          %3007 = vmatprep.subr.bf16.mxu0 %v2933
          %3008 = vmatpush1.bf16.msra.mxu0 %v2932
          %3009 = vmatprep.subr.bf16.mxu0 %v2929
          %3010 = vmatpush1.bf16.msra.mxu0 %v2928
          %3011 = vmatprep.subr.bf16.mxu0 %v2925
          %3012 = vmatpush1.bf16.msra.mxu0 %v2924
          %3013 = vmatprep.subr.bf16.mxu0 %v2921
          %3014 = vmatpush1.bf16.msra.mxu0 %v2920
          %3015 = vmatprep.subr.bf16.mxu0 %v2917
          %3016 = vmatpush1.bf16.msra.mxu0 %v2916
          %3017 = vmatprep.subr.bf16.mxu0 %v2913
          %3018 = vmatpush1.bf16.msra.mxu0 %v2912
          %3019 = vmatprep.subr.bf16.mxu0 %v2909
          %3020 = vmatpush1.bf16.msra.mxu0 %v2908
          %3021 = vmatprep.subr.bf16.mxu0 %v2905
          %3022 = vmatpush1.bf16.msra.mxu0 %v2904
          %3023 = vmatprep.subr.bf16.mxu0 0
          %3024 = vmatpush2.bf16.msra.mxu0 0
          %3025 = vmatprep.subr.bf16.mxu0 0
          %3026 = vmatpush2.bf16.msra.mxu0 0
          %3027 = vmatprep.subr.bf16.mxu0 0
          %3028 = vmatpush2.bf16.msra.mxu0 0
          %3029 = vmatprep.subr.bf16.mxu0 0
          %3030 = vmatpush2.bf16.msra.mxu0 0
          %3031 = vmatprep.subr.bf16.mxu0 0
          %3032 = vmatpush2.bf16.msra.mxu0 0
          %3033 = vmatprep.subr.bf16.mxu0 0
          %3034 = vmatpush2.bf16.msra.mxu0 0
          %3035 = vmatprep.subr.bf16.mxu0 0
          %3036 = vmatpush2.bf16.msra.mxu0 0
          %3037 = vmatprep.subr.bf16.mxu0 0
          %3038 = vmatpush2.bf16.msra.mxu0 0
          %3039 = vmatprep.mubr.bf16.mxu0 0
          %3040 = vmatmul.mubr.bf16.gmra.mxu0 %v2764
          %v3041 = vpop.f32.mrf.mxu0
          %v3042 = vadd.f32 %v2804, %v3041
          %v3043 = vpop.f32.mrf.mxu0
          %v3044 = vadd.f32 %v2805, %v3043
          %v3045 = vpop.f32.mrf.mxu0
          %v3046 = vpop.f32.mrf.mxu0
          %3047 = vdwg.mxu0
          %v3048 = vadd.f32 %v3001, %v1088
          %v3049 = vadd.f32 %v3003, %v1092
          %v3050 = vadd.f32 %v3042, %v1096
          %v3051 = vadd.f32 %v3044, %v1100
          %v3052 = vxor.u32 %v3048, 2147483648
          %v3053 = vxor.u32 %v3049, 2147483648
          %v3054 = vxor.u32 %v3050, 2147483648
          %v3055 = vmul.f32 %v3052, 1.442695
          %v3056 = vpow.pop %v3055
          %v3057 = vmul.f32 %v3053, 1.442695
          %v3058 = vpow.pop %v3057
          %v3059 = vmul.f32 %v3054, 1.442695
          %v3060 = vpow.pop %v3059
          %v3061 = vadd.f32 %v3056, 1.0
          %v3062 = vadd.f32 %v3058, 1.0
          %v3063 = vadd.f32 %v3060, 1.0
          %v3064 = vrcp.pop %v3061
          %v3065 = vmul.f32 1.0, %v3064
          %v3066 = vrcp.pop %v3062
          %v3067 = vmul.f32 1.0, %v3066
          %v3068 = vrcp.pop %v3063
          %v3069 = vmul.f32 1.0, %v3068
          %v3070 = vtanh.pop %v3051
          %v3071 = vmul.f32 %v3067, %v2761
          %v3072 = vmul.f32 %v3065, %v3070
          %v3073 = vadd.f32 %v3071, %v3072
          %v3074 = vtanh.pop %v3073
          %v3075 = vmul.f32 %v3069, %v3074
          %vm3076 = vcmp.gt.s32.totalorder %v795, 6
          %v3077 = vsel %vm3076, 1, 0
          %v3078 = vcvt.s32.f32 %v3077
          %3080 = vset.pattern.permute.xlu0 0
          %3081 = vperm.xlu0 %3080, %v3078
          %v3082 = vpop.permute.xlu0 %3081
          %v3084 = vmul.f32 %v3075, %v3082
          %v3085 = vmul.f32 %v3073, %v3082
          %s3086 = scalar_lea.vmem %s307, 48 [#allocation9]
          %3087 = vst [vmem:[%s3086] sm:$0xff] %v3084
          %v3088 = vpack.c.bf16 %v3084, %v3084
          %v3089 = vld [vmem:[%s272] sm:$0xff]
          %v3090 = vld [vmem:[%s272 + $0x8] sm:$0xff]
          %v3091 = vld [vmem:[%s272 + $0x10] sm:$0xff]
          %v3092 = vld [vmem:[%s272 + $0x18] sm:$0xff]
          %v3093 = vld [vmem:[%s272 + $0x20] sm:$0xff]
          %v3094 = vld [vmem:[%s272 + $0x28] sm:$0xff]
          %v3095 = vld [vmem:[%s272 + $0x30] sm:$0xff]
          %v3096 = vld [vmem:[%s272 + $0x38] sm:$0xff]
          %v3097 = vld [vmem:[%s272 + $0x40] sm:$0xff]
          %v3098 = vld [vmem:[%s272 + $0x48] sm:$0xff]
          %v3099 = vld [vmem:[%s272 + $0x50] sm:$0xff]
          %v3100 = vld [vmem:[%s272 + $0x58] sm:$0xff]
          %v3101 = vld [vmem:[%s272 + $0x60] sm:$0xff]
          %v3102 = vld [vmem:[%s272 + $0x68] sm:$0xff]
          %v3103 = vld [vmem:[%s272 + $0x70] sm:$0xff]
          %v3104 = vld [vmem:[%s272 + $0x78] sm:$0xff]
          %v3105 = vld [vmem:[%s272 + $0x80] sm:$0xff]
          %v3106 = vld [vmem:[%s272 + $0x88] sm:$0xff]
          %v3107 = vld [vmem:[%s272 + $0x90] sm:$0xff]
          %v3108 = vld [vmem:[%s272 + $0x98] sm:$0xff]
          %v3109 = vld [vmem:[%s272 + $0xa0] sm:$0xff]
          %v3110 = vld [vmem:[%s272 + $0xa8] sm:$0xff]
          %v3111 = vld [vmem:[%s272 + $0xb0] sm:$0xff]
          %v3112 = vld [vmem:[%s272 + $0xb8] sm:$0xff]
          %v3113 = vld [vmem:[%s272 + $0xc0] sm:$0xff]
          %v3114 = vld [vmem:[%s272 + $0xc8] sm:$0xff]
          %v3115 = vld [vmem:[%s272 + $0xd0] sm:$0xff]
          %v3116 = vld [vmem:[%s272 + $0xd8] sm:$0xff]
          %v3117 = vld [vmem:[%s272 + $0xe0] sm:$0xff]
          %v3118 = vld [vmem:[%s272 + $0xe8] sm:$0xff]
          %v3119 = vld [vmem:[%s272 + $0xf0] sm:$0xff]
          %v3120 = vld [vmem:[%s272 + $0xf8] sm:$0xff]
          %s3121 = smul.u32 7, 4
          %s3122 = smul.addr %s3121, 4
          %s3123 = scalar_lea.vmem [#allocation2], %s3122
          %v3124 = vld [vmem:[%s3123] sm:$0xff]
          %v3125 = vld [vmem:[%s3123 + $0x8] sm:$0xff]
          %v3126 = vunpack.c.l.bf16 %v3124
          %v3127 = vunpack.c.h.bf16 %v3124
          %v3128 = vunpack.c.l.bf16 %v3125
          %v3129 = vunpack.c.h.bf16 %v3125
          %v3162 = vunpack.c.l.b16 %v3089
          %v3163 = vunpack.c.h.b16 %v3089
          %v3164 = vunpack.c.l.b16 %v3090
          %v3165 = vunpack.c.h.b16 %v3090
          %v3166 = vunpack.c.l.b16 %v3091
          %v3167 = vunpack.c.h.b16 %v3091
          %v3168 = vunpack.c.l.b16 %v3092
          %v3169 = vunpack.c.h.b16 %v3092
          %v3170 = vunpack.c.l.b16 %v3093
          %v3171 = vunpack.c.h.b16 %v3093
          %v3172 = vunpack.c.l.b16 %v3094
          %v3173 = vunpack.c.h.b16 %v3094
          %v3174 = vunpack.c.l.b16 %v3095
          %v3175 = vunpack.c.h.b16 %v3095
          %v3176 = vunpack.c.l.b16 %v3096
          %v3177 = vunpack.c.h.b16 %v3096
          %v3178 = vunpack.c.l.b16 %v3097
          %v3179 = vunpack.c.h.b16 %v3097
          %v3180 = vunpack.c.l.b16 %v3098
          %v3181 = vunpack.c.h.b16 %v3098
          %v3182 = vunpack.c.l.b16 %v3099
          %v3183 = vunpack.c.h.b16 %v3099
          %v3184 = vunpack.c.l.b16 %v3100
          %v3185 = vunpack.c.h.b16 %v3100
          %v3186 = vunpack.c.l.b16 %v3101
          %v3187 = vunpack.c.h.b16 %v3101
          %v3188 = vunpack.c.l.b16 %v3102
          %v3189 = vunpack.c.h.b16 %v3102
          %v3190 = vunpack.c.l.b16 %v3103
          %v3191 = vunpack.c.h.b16 %v3103
          %v3192 = vunpack.c.l.b16 %v3104
          %v3193 = vunpack.c.h.b16 %v3104
          %v3194 = vunpack.c.l.b16 %v3105
          %v3195 = vunpack.c.h.b16 %v3105
          %v3196 = vunpack.c.l.b16 %v3106
          %v3197 = vunpack.c.h.b16 %v3106
          %v3198 = vunpack.c.l.b16 %v3107
          %v3199 = vunpack.c.h.b16 %v3107
          %v3200 = vunpack.c.l.b16 %v3108
          %v3201 = vunpack.c.h.b16 %v3108
          %v3202 = vunpack.c.l.b16 %v3109
          %v3203 = vunpack.c.h.b16 %v3109
          %v3204 = vunpack.c.l.b16 %v3110
          %v3205 = vunpack.c.h.b16 %v3110
          %v3206 = vunpack.c.l.b16 %v3111
          %v3207 = vunpack.c.h.b16 %v3111
          %v3208 = vunpack.c.l.b16 %v3112
          %v3209 = vunpack.c.h.b16 %v3112
          %v3210 = vunpack.c.l.b16 %v3113
          %v3211 = vunpack.c.h.b16 %v3113
          %v3212 = vunpack.c.l.b16 %v3114
          %v3213 = vunpack.c.h.b16 %v3114
          %v3214 = vunpack.c.l.b16 %v3115
          %v3215 = vunpack.c.h.b16 %v3115
          %v3216 = vunpack.c.l.b16 %v3116
          %v3217 = vunpack.c.h.b16 %v3116
          %v3218 = vunpack.c.l.b16 %v3117
          %v3219 = vunpack.c.h.b16 %v3117
          %v3220 = vunpack.c.l.b16 %v3118
          %v3221 = vunpack.c.h.b16 %v3118
          %v3222 = vunpack.c.l.b16 %v3119
          %v3223 = vunpack.c.h.b16 %v3119
          %v3224 = vunpack.c.l.b16 %v3120
          %v3225 = vunpack.c.h.b16 %v3120
          %v3226 = vpack.c.b16 %v3166, %v3162
          %v3227 = vpack.c.b16 %v3167, %v3163
          %v3228 = vpack.c.b16 %v3168, %v3164
          %v3229 = vpack.c.b16 %v3169, %v3165
          %v3230 = vpack.c.b16 %v3174, %v3170
          %v3231 = vpack.c.b16 %v3175, %v3171
          %v3232 = vpack.c.b16 %v3176, %v3172
          %v3233 = vpack.c.b16 %v3177, %v3173
          %v3234 = vpack.c.b16 %v3182, %v3178
          %v3235 = vpack.c.b16 %v3183, %v3179
          %v3236 = vpack.c.b16 %v3184, %v3180
          %v3237 = vpack.c.b16 %v3185, %v3181
          %v3238 = vpack.c.b16 %v3190, %v3186
          %v3239 = vpack.c.b16 %v3191, %v3187
          %v3240 = vpack.c.b16 %v3192, %v3188
          %v3241 = vpack.c.b16 %v3193, %v3189
          %v3242 = vpack.c.b16 %v3198, %v3194
          %v3243 = vpack.c.b16 %v3199, %v3195
          %v3244 = vpack.c.b16 %v3200, %v3196
          %v3245 = vpack.c.b16 %v3201, %v3197
          %v3246 = vpack.c.b16 %v3206, %v3202
          %v3247 = vpack.c.b16 %v3207, %v3203
          %v3248 = vpack.c.b16 %v3208, %v3204
          %v3249 = vpack.c.b16 %v3209, %v3205
          %v3250 = vpack.c.b16 %v3214, %v3210
          %v3251 = vpack.c.b16 %v3215, %v3211
          %v3252 = vpack.c.b16 %v3216, %v3212
          %v3253 = vpack.c.b16 %v3217, %v3213
          %v3254 = vpack.c.b16 %v3222, %v3218
          %v3255 = vpack.c.b16 %v3223, %v3219
          %v3256 = vpack.c.b16 %v3224, %v3220
          %v3257 = vpack.c.b16 %v3225, %v3221
          %3290 = vmatprep.subr.bf16.mxu0 %v3255
          %3291 = vmatpush1.bf16.msra.mxu0 %v3254
          %3292 = vmatprep.subr.bf16.mxu0 %v3251
          %3293 = vmatpush1.bf16.msra.mxu0 %v3250
          %3294 = vmatprep.subr.bf16.mxu0 %v3247
          %3295 = vmatpush1.bf16.msra.mxu0 %v3246
          %3296 = vmatprep.subr.bf16.mxu0 %v3243
          %3297 = vmatpush1.bf16.msra.mxu0 %v3242
          %3298 = vmatprep.subr.bf16.mxu0 %v3239
          %3299 = vmatpush1.bf16.msra.mxu0 %v3238
          %3300 = vmatprep.subr.bf16.mxu0 %v3235
          %3301 = vmatpush1.bf16.msra.mxu0 %v3234
          %3302 = vmatprep.subr.bf16.mxu0 %v3231
          %3303 = vmatpush1.bf16.msra.mxu0 %v3230
          %3304 = vmatprep.subr.bf16.mxu0 %v3227
          %3305 = vmatpush1.bf16.msra.mxu0 %v3226
          %3306 = vmatprep.subr.bf16.mxu0 0
          %3307 = vmatpush2.bf16.msra.mxu0 0
          %3308 = vmatprep.subr.bf16.mxu0 0
          %3309 = vmatpush2.bf16.msra.mxu0 0
          %3310 = vmatprep.subr.bf16.mxu0 0
          %3311 = vmatpush2.bf16.msra.mxu0 0
          %3312 = vmatprep.subr.bf16.mxu0 0
          %3313 = vmatpush2.bf16.msra.mxu0 0
          %3314 = vmatprep.subr.bf16.mxu0 0
          %3315 = vmatpush2.bf16.msra.mxu0 0
          %3316 = vmatprep.subr.bf16.mxu0 0
          %3317 = vmatpush2.bf16.msra.mxu0 0
          %3318 = vmatprep.subr.bf16.mxu0 0
          %3319 = vmatpush2.bf16.msra.mxu0 0
          %3320 = vmatprep.subr.bf16.mxu0 0
          %3321 = vmatpush2.bf16.msra.mxu0 0
          %3322 = vmatprep.mubr.bf16.mxu0 0
          %3323 = vmatmul.mubr.bf16.gmra.mxu0 %v3088
          %v3324 = vpop.f32.mrf.mxu0
          %v3325 = vadd.f32 %v3126, %v3324
          %v3326 = vpop.f32.mrf.mxu0
          %v3327 = vadd.f32 %v3127, %v3326
          %v3328 = vpop.f32.mrf.mxu0
          %v3329 = vpop.f32.mrf.mxu0
          %3330 = vdwg.mxu0
          %3331 = vmatprep.subr.bf16.mxu0 %v3257
          %3332 = vmatpush1.bf16.msra.mxu0 %v3256
          %3333 = vmatprep.subr.bf16.mxu0 %v3253
          %3334 = vmatpush1.bf16.msra.mxu0 %v3252
          %3335 = vmatprep.subr.bf16.mxu0 %v3249
          %3336 = vmatpush1.bf16.msra.mxu0 %v3248
          %3337 = vmatprep.subr.bf16.mxu0 %v3245
          %3338 = vmatpush1.bf16.msra.mxu0 %v3244
          %3339 = vmatprep.subr.bf16.mxu0 %v3241
          %3340 = vmatpush1.bf16.msra.mxu0 %v3240
          %3341 = vmatprep.subr.bf16.mxu0 %v3237
          %3342 = vmatpush1.bf16.msra.mxu0 %v3236
          %3343 = vmatprep.subr.bf16.mxu0 %v3233
          %3344 = vmatpush1.bf16.msra.mxu0 %v3232
          %3345 = vmatprep.subr.bf16.mxu0 %v3229
          %3346 = vmatpush1.bf16.msra.mxu0 %v3228
          %3347 = vmatprep.subr.bf16.mxu0 0
          %3348 = vmatpush2.bf16.msra.mxu0 0
          %3349 = vmatprep.subr.bf16.mxu0 0
          %3350 = vmatpush2.bf16.msra.mxu0 0
          %3351 = vmatprep.subr.bf16.mxu0 0
          %3352 = vmatpush2.bf16.msra.mxu0 0
          %3353 = vmatprep.subr.bf16.mxu0 0
          %3354 = vmatpush2.bf16.msra.mxu0 0
          %3355 = vmatprep.subr.bf16.mxu0 0
          %3356 = vmatpush2.bf16.msra.mxu0 0
          %3357 = vmatprep.subr.bf16.mxu0 0
          %3358 = vmatpush2.bf16.msra.mxu0 0
          %3359 = vmatprep.subr.bf16.mxu0 0
          %3360 = vmatpush2.bf16.msra.mxu0 0
          %3361 = vmatprep.subr.bf16.mxu0 0
          %3362 = vmatpush2.bf16.msra.mxu0 0
          %3363 = vmatprep.mubr.bf16.mxu0 0
          %3364 = vmatmul.mubr.bf16.gmra.mxu0 %v3088
          %v3365 = vpop.f32.mrf.mxu0
          %v3366 = vadd.f32 %v3128, %v3365
          %v3367 = vpop.f32.mrf.mxu0
          %v3368 = vadd.f32 %v3129, %v3367
          %v3369 = vpop.f32.mrf.mxu0
          %v3370 = vpop.f32.mrf.mxu0
          %3371 = vdwg.mxu0
          %v3372 = vadd.f32 %v3325, %v1088
          %v3373 = vadd.f32 %v3327, %v1092
          %v3374 = vadd.f32 %v3366, %v1096
          %v3375 = vadd.f32 %v3368, %v1100
          %v3376 = vxor.u32 %v3372, 2147483648
          %v3377 = vxor.u32 %v3373, 2147483648
          %v3378 = vxor.u32 %v3374, 2147483648
          %v3379 = vmul.f32 %v3376, 1.442695
          %v3380 = vpow.pop %v3379
          %v3381 = vmul.f32 %v3377, 1.442695
          %v3382 = vpow.pop %v3381
          %v3383 = vmul.f32 %v3378, 1.442695
          %v3384 = vpow.pop %v3383
          %v3385 = vadd.f32 %v3380, 1.0
          %v3386 = vadd.f32 %v3382, 1.0
          %v3387 = vadd.f32 %v3384, 1.0
          %v3388 = vrcp.pop %v3385
          %v3389 = vmul.f32 1.0, %v3388
          %v3390 = vrcp.pop %v3386
          %v3391 = vmul.f32 1.0, %v3390
          %v3392 = vrcp.pop %v3387
          %v3393 = vmul.f32 1.0, %v3392
          %v3394 = vtanh.pop %v3375
          %v3395 = vmul.f32 %v3391, %v3085
          %v3396 = vmul.f32 %v3389, %v3394
          %v3397 = vadd.f32 %v3395, %v3396
          %v3398 = vtanh.pop %v3397
          %v3399 = vmul.f32 %v3393, %v3398
          %vm3400 = vcmp.gt.s32.totalorder %v795, 7
          %v3401 = vsel %vm3400, 1, 0
          %v3402 = vcvt.s32.f32 %v3401
          %3404 = vset.pattern.permute.xlu0 0
          %3405 = vperm.xlu0 %3404, %v3402
          %v3406 = vpop.permute.xlu0 %3405
          %v3408 = vmul.f32 %v3399, %v3406
          %s3409 = scalar_lea.vmem %s307, 56 [#allocation9]
          %3410 = vst [vmem:[%s3409] sm:$0xff] %v3408
        $region56: #{tpu_custom_call.1} parent=39 // pred_fallthru
          _
        %p3411 = scmp.eq.s32.totalorder %s23, 1
        // Predicated region
        $region57: #{tpu_custom_call.1} parent=39 // pred_check
          %p3412 = pneg %p3411
        $region58: #{tpu_custom_call.1} parent=39 // pred_check_branch
          %3414 = sbr.rel (%p3412) target = $region60
        $region59: #{tpu_custom_call.1} parent=39 // pred_region
          %v3415 = vld [vmem:[%s272] sm:$0xff]
          %v3416 = vld [vmem:[%s272 + $0x8] sm:$0xff]
          %v3417 = vld [vmem:[%s272 + $0x10] sm:$0xff]
          %v3418 = vld [vmem:[%s272 + $0x18] sm:$0xff]
          %v3419 = vld [vmem:[%s272 + $0x20] sm:$0xff]
          %v3420 = vld [vmem:[%s272 + $0x28] sm:$0xff]
          %v3421 = vld [vmem:[%s272 + $0x30] sm:$0xff]
          %v3422 = vld [vmem:[%s272 + $0x38] sm:$0xff]
          %v3423 = vld [vmem:[%s272 + $0x40] sm:$0xff]
          %v3424 = vld [vmem:[%s272 + $0x48] sm:$0xff]
          %v3425 = vld [vmem:[%s272 + $0x50] sm:$0xff]
          %v3426 = vld [vmem:[%s272 + $0x58] sm:$0xff]
          %v3427 = vld [vmem:[%s272 + $0x60] sm:$0xff]
          %v3428 = vld [vmem:[%s272 + $0x68] sm:$0xff]
          %v3429 = vld [vmem:[%s272 + $0x70] sm:$0xff]
          %v3430 = vld [vmem:[%s272 + $0x78] sm:$0xff]
          %v3431 = vld [vmem:[%s272 + $0x80] sm:$0xff]
          %v3432 = vld [vmem:[%s272 + $0x88] sm:$0xff]
          %v3433 = vld [vmem:[%s272 + $0x90] sm:$0xff]
          %v3434 = vld [vmem:[%s272 + $0x98] sm:$0xff]
          %v3435 = vld [vmem:[%s272 + $0xa0] sm:$0xff]
          %v3436 = vld [vmem:[%s272 + $0xa8] sm:$0xff]
          %v3437 = vld [vmem:[%s272 + $0xb0] sm:$0xff]
          %v3438 = vld [vmem:[%s272 + $0xb8] sm:$0xff]
          %v3439 = vld [vmem:[%s272 + $0xc0] sm:$0xff]
          %v3440 = vld [vmem:[%s272 + $0xc8] sm:$0xff]
          %v3441 = vld [vmem:[%s272 + $0xd0] sm:$0xff]
          %v3442 = vld [vmem:[%s272 + $0xd8] sm:$0xff]
          %v3443 = vld [vmem:[%s272 + $0xe0] sm:$0xff]
          %v3444 = vld [vmem:[%s272 + $0xe8] sm:$0xff]
          %v3445 = vld [vmem:[%s272 + $0xf0] sm:$0xff]
          %v3446 = vld [vmem:[%s272 + $0xf8] sm:$0xff]
          %s3447 = smul.u32 7, 4
          %s3448 = smul.addr %s3447, 4
          %s3449 = scalar_lea.vmem [#allocation2], %s3448
          %v3450 = vld [vmem:[%s3449] sm:$0xff]
          %v3451 = vld [vmem:[%s3449 + $0x8] sm:$0xff]
          %v3452 = vunpack.c.l.bf16 %v3450
          %v3453 = vunpack.c.h.bf16 %v3450
          %v3454 = vunpack.c.l.bf16 %v3451
          %v3455 = vunpack.c.h.bf16 %v3451
          %v3488 = vunpack.c.l.b16 %v3415
          %v3489 = vunpack.c.h.b16 %v3415
          %v3490 = vunpack.c.l.b16 %v3416
          %v3491 = vunpack.c.h.b16 %v3416
          %v3492 = vunpack.c.l.b16 %v3417
          %v3493 = vunpack.c.h.b16 %v3417
          %v3494 = vunpack.c.l.b16 %v3418
          %v3495 = vunpack.c.h.b16 %v3418
          %v3496 = vunpack.c.l.b16 %v3419
          %v3497 = vunpack.c.h.b16 %v3419
          %v3498 = vunpack.c.l.b16 %v3420
          %v3499 = vunpack.c.h.b16 %v3420
          %v3500 = vunpack.c.l.b16 %v3421
          %v3501 = vunpack.c.h.b16 %v3421
          %v3502 = vunpack.c.l.b16 %v3422
          %v3503 = vunpack.c.h.b16 %v3422
          %v3504 = vunpack.c.l.b16 %v3423
          %v3505 = vunpack.c.h.b16 %v3423
          %v3506 = vunpack.c.l.b16 %v3424
          %v3507 = vunpack.c.h.b16 %v3424
          %v3508 = vunpack.c.l.b16 %v3425
          %v3509 = vunpack.c.h.b16 %v3425
          %v3510 = vunpack.c.l.b16 %v3426
          %v3511 = vunpack.c.h.b16 %v3426
          %v3512 = vunpack.c.l.b16 %v3427
          %v3513 = vunpack.c.h.b16 %v3427
          %v3514 = vunpack.c.l.b16 %v3428
          %v3515 = vunpack.c.h.b16 %v3428
          %v3516 = vunpack.c.l.b16 %v3429
          %v3517 = vunpack.c.h.b16 %v3429
          %v3518 = vunpack.c.l.b16 %v3430
          %v3519 = vunpack.c.h.b16 %v3430
          %v3520 = vunpack.c.l.b16 %v3431
          %v3521 = vunpack.c.h.b16 %v3431
          %v3522 = vunpack.c.l.b16 %v3432
          %v3523 = vunpack.c.h.b16 %v3432
          %v3524 = vunpack.c.l.b16 %v3433
          %v3525 = vunpack.c.h.b16 %v3433
          %v3526 = vunpack.c.l.b16 %v3434
          %v3527 = vunpack.c.h.b16 %v3434
          %v3528 = vunpack.c.l.b16 %v3435
          %v3529 = vunpack.c.h.b16 %v3435
          %v3530 = vunpack.c.l.b16 %v3436
          %v3531 = vunpack.c.h.b16 %v3436
          %v3532 = vunpack.c.l.b16 %v3437
          %v3533 = vunpack.c.h.b16 %v3437
          %v3534 = vunpack.c.l.b16 %v3438
          %v3535 = vunpack.c.h.b16 %v3438
          %v3536 = vunpack.c.l.b16 %v3439
          %v3537 = vunpack.c.h.b16 %v3439
          %v3538 = vunpack.c.l.b16 %v3440
          %v3539 = vunpack.c.h.b16 %v3440
          %v3540 = vunpack.c.l.b16 %v3441
          %v3541 = vunpack.c.h.b16 %v3441
          %v3542 = vunpack.c.l.b16 %v3442
          %v3543 = vunpack.c.h.b16 %v3442
          %v3544 = vunpack.c.l.b16 %v3443
          %v3545 = vunpack.c.h.b16 %v3443
          %v3546 = vunpack.c.l.b16 %v3444
          %v3547 = vunpack.c.h.b16 %v3444
          %v3548 = vunpack.c.l.b16 %v3445
          %v3549 = vunpack.c.h.b16 %v3445
          %v3550 = vunpack.c.l.b16 %v3446
          %v3551 = vunpack.c.h.b16 %v3446
          %v3552 = vpack.c.b16 %v3492, %v3488
          %v3553 = vpack.c.b16 %v3493, %v3489
          %v3554 = vpack.c.b16 %v3494, %v3490
          %v3555 = vpack.c.b16 %v3495, %v3491
          %v3556 = vpack.c.b16 %v3500, %v3496
          %v3557 = vpack.c.b16 %v3501, %v3497
          %v3558 = vpack.c.b16 %v3502, %v3498
          %v3559 = vpack.c.b16 %v3503, %v3499
          %v3560 = vpack.c.b16 %v3508, %v3504
          %v3561 = vpack.c.b16 %v3509, %v3505
          %v3562 = vpack.c.b16 %v3510, %v3506
          %v3563 = vpack.c.b16 %v3511, %v3507
          %v3564 = vpack.c.b16 %v3516, %v3512
          %v3565 = vpack.c.b16 %v3517, %v3513
          %v3566 = vpack.c.b16 %v3518, %v3514
          %v3567 = vpack.c.b16 %v3519, %v3515
          %v3568 = vpack.c.b16 %v3524, %v3520
          %v3569 = vpack.c.b16 %v3525, %v3521
          %v3570 = vpack.c.b16 %v3526, %v3522
          %v3571 = vpack.c.b16 %v3527, %v3523
          %v3572 = vpack.c.b16 %v3532, %v3528
          %v3573 = vpack.c.b16 %v3533, %v3529
          %v3574 = vpack.c.b16 %v3534, %v3530
          %v3575 = vpack.c.b16 %v3535, %v3531
          %v3576 = vpack.c.b16 %v3540, %v3536
          %v3577 = vpack.c.b16 %v3541, %v3537
          %v3578 = vpack.c.b16 %v3542, %v3538
          %v3579 = vpack.c.b16 %v3543, %v3539
          %v3580 = vpack.c.b16 %v3548, %v3544
          %v3581 = vpack.c.b16 %v3549, %v3545
          %v3582 = vpack.c.b16 %v3550, %v3546
          %v3583 = vpack.c.b16 %v3551, %v3547
          %3616 = vmatprep.subr.bf16.mxu0 %v3581
          %3617 = vmatpush1.bf16.msra.mxu0 %v3580
          %3618 = vmatprep.subr.bf16.mxu0 %v3577
          %3619 = vmatpush1.bf16.msra.mxu0 %v3576
          %3620 = vmatprep.subr.bf16.mxu0 %v3573
          %3621 = vmatpush1.bf16.msra.mxu0 %v3572
          %3622 = vmatprep.subr.bf16.mxu0 %v3569
          %3623 = vmatpush1.bf16.msra.mxu0 %v3568
          %3624 = vmatprep.subr.bf16.mxu0 %v3565
          %3625 = vmatpush1.bf16.msra.mxu0 %v3564
          %3626 = vmatprep.subr.bf16.mxu0 %v3561
          %3627 = vmatpush1.bf16.msra.mxu0 %v3560
          %3628 = vmatprep.subr.bf16.mxu0 %v3557
          %3629 = vmatpush1.bf16.msra.mxu0 %v3556
          %3630 = vmatprep.subr.bf16.mxu0 %v3553
          %3631 = vmatpush1.bf16.msra.mxu0 %v3552
          %3632 = vmatprep.subr.bf16.mxu0 0
          %3633 = vmatpush2.bf16.msra.mxu0 0
          %3634 = vmatprep.subr.bf16.mxu0 0
          %3635 = vmatpush2.bf16.msra.mxu0 0
          %3636 = vmatprep.subr.bf16.mxu0 0
          %3637 = vmatpush2.bf16.msra.mxu0 0
          %3638 = vmatprep.subr.bf16.mxu0 0
          %3639 = vmatpush2.bf16.msra.mxu0 0
          %3640 = vmatprep.subr.bf16.mxu0 0
          %3641 = vmatpush2.bf16.msra.mxu0 0
          %3642 = vmatprep.subr.bf16.mxu0 0
          %3643 = vmatpush2.bf16.msra.mxu0 0
          %3644 = vmatprep.subr.bf16.mxu0 0
          %3645 = vmatpush2.bf16.msra.mxu0 0
          %3646 = vmatprep.subr.bf16.mxu0 0
          %3647 = vmatpush2.bf16.msra.mxu0 0
          %3648 = vmatprep.mubr.bf16.mxu0 0
          %3649 = vmatmul.mubr.bf16.gmra.mxu0 0
          %v3650 = vpop.f32.mrf.mxu0
          %v3651 = vadd.f32 %v3452, %v3650
          %v3652 = vpop.f32.mrf.mxu0
          %v3653 = vadd.f32 %v3453, %v3652
          %v3654 = vpop.f32.mrf.mxu0
          %v3655 = vpop.f32.mrf.mxu0
          %3656 = vdwg.mxu0
          %3657 = vmatprep.subr.bf16.mxu0 %v3583
          %3658 = vmatpush1.bf16.msra.mxu0 %v3582
          %3659 = vmatprep.subr.bf16.mxu0 %v3579
          %3660 = vmatpush1.bf16.msra.mxu0 %v3578
          %3661 = vmatprep.subr.bf16.mxu0 %v3575
          %3662 = vmatpush1.bf16.msra.mxu0 %v3574
          %3663 = vmatprep.subr.bf16.mxu0 %v3571
          %3664 = vmatpush1.bf16.msra.mxu0 %v3570
          %3665 = vmatprep.subr.bf16.mxu0 %v3567
          %3666 = vmatpush1.bf16.msra.mxu0 %v3566
          %3667 = vmatprep.subr.bf16.mxu0 %v3563
          %3668 = vmatpush1.bf16.msra.mxu0 %v3562
          %3669 = vmatprep.subr.bf16.mxu0 %v3559
          %3670 = vmatpush1.bf16.msra.mxu0 %v3558
          %3671 = vmatprep.subr.bf16.mxu0 %v3555
          %3672 = vmatpush1.bf16.msra.mxu0 %v3554
          %3673 = vmatprep.subr.bf16.mxu0 0
          %3674 = vmatpush2.bf16.msra.mxu0 0
          %3675 = vmatprep.subr.bf16.mxu0 0
          %3676 = vmatpush2.bf16.msra.mxu0 0
          %3677 = vmatprep.subr.bf16.mxu0 0
          %3678 = vmatpush2.bf16.msra.mxu0 0
          %3679 = vmatprep.subr.bf16.mxu0 0
          %3680 = vmatpush2.bf16.msra.mxu0 0
          %3681 = vmatprep.subr.bf16.mxu0 0
          %3682 = vmatpush2.bf16.msra.mxu0 0
          %3683 = vmatprep.subr.bf16.mxu0 0
          %3684 = vmatpush2.bf16.msra.mxu0 0
          %3685 = vmatprep.subr.bf16.mxu0 0
          %3686 = vmatpush2.bf16.msra.mxu0 0
          %3687 = vmatprep.subr.bf16.mxu0 0
          %3688 = vmatpush2.bf16.msra.mxu0 0
          %3689 = vmatprep.mubr.bf16.mxu0 0
          %3690 = vmatmul.mubr.bf16.gmra.mxu0 0
          %v3691 = vpop.f32.mrf.mxu0
          %v3692 = vadd.f32 %v3454, %v3691
          %v3693 = vpop.f32.mrf.mxu0
          %v3694 = vadd.f32 %v3455, %v3693
          %v3695 = vpop.f32.mrf.mxu0
          %v3696 = vpop.f32.mrf.mxu0
          %3697 = vdwg.mxu0
          %v3699 = vlaneseq
          %v3700 = vshrl.u32 %v3699, 7
          %v3701 = vsub.s32 0, %v3700
          %v3702 = vrot.slane %v796, %v3701
          %v3703 = vlaneseq
          %v3704 = vshrl.u32 %v3703, 7
          %v3705 = vsub.s32 1, %v3704
          %v3706 = vrot.slane %v796, %v3705
          %v3707 = vlaneseq
          %v3708 = vshrl.u32 %v3707, 7
          %v3709 = vsub.s32 2, %v3708
          %v3710 = vrot.slane %v796, %v3709
          %v3711 = vlaneseq
          %v3712 = vshrl.u32 %v3711, 7
          %v3713 = vsub.s32 3, %v3712
          %v3714 = vrot.slane %v796, %v3713
          %v3719 = vadd.f32 %v3651, %v3702
          %v3720 = vadd.f32 %v3653, %v3706
          %v3721 = vadd.f32 %v3692, %v3710
          %v3722 = vadd.f32 %v3694, %v3714
          %v3723 = vxor.u32 %v3719, 2147483648
          %v3724 = vxor.u32 %v3720, 2147483648
          %v3725 = vxor.u32 %v3721, 2147483648
          %v3726 = vmul.f32 %v3723, 1.442695
          %v3727 = vpow.pop %v3726
          %v3728 = vmul.f32 %v3724, 1.442695
          %v3729 = vpow.pop %v3728
          %v3730 = vmul.f32 %v3725, 1.442695
          %v3731 = vpow.pop %v3730
          %v3732 = vadd.f32 %v3727, 1.0
          %v3733 = vadd.f32 %v3729, 1.0
          %v3734 = vadd.f32 %v3731, 1.0
          %v3735 = vrcp.pop %v3732
          %v3736 = vmul.f32 1.0, %v3735
          %v3737 = vrcp.pop %v3733
          %v3738 = vmul.f32 1.0, %v3737
          %v3739 = vrcp.pop %v3734
          %v3740 = vmul.f32 1.0, %v3739
          %v3741 = vtanh.pop %v3722
          %v3742 = vmul.f32 %v3738, 0.0
          %v3743 = vmul.f32 %v3736, %v3741
          %v3744 = vadd.f32 %v3742, %v3743
          %v3745 = vtanh.pop %v3744
          %v3746 = vmul.f32 %v3740, %v3745
          %vm3747 = vcmp.gt.s32.totalorder %v795, 7
          %v3748 = vsel %vm3747, 1, 0
          %v3749 = vcvt.s32.f32 %v3748
          %3751 = vset.pattern.permute.xlu0 0
          %3752 = vperm.xlu0 %3751, %v3749
          %v3753 = vpop.permute.xlu0 %3752
          %v3755 = vmul.f32 %v3746, %v3753
          %v3756 = vmul.f32 %v3744, %v3753
          %s3757 = scalar_lea.vmem %s307, 56 [#allocation9]
          %3758 = vst [vmem:[%s3757] sm:$0xff] %v3755
          %v3759 = vpack.c.bf16 %v3755, %v3755
          %v3760 = vld [vmem:[%s272] sm:$0xff]
          %v3761 = vld [vmem:[%s272 + $0x8] sm:$0xff]
          %v3762 = vld [vmem:[%s272 + $0x10] sm:$0xff]
          %v3763 = vld [vmem:[%s272 + $0x18] sm:$0xff]
          %v3764 = vld [vmem:[%s272 + $0x20] sm:$0xff]
          %v3765 = vld [vmem:[%s272 + $0x28] sm:$0xff]
          %v3766 = vld [vmem:[%s272 + $0x30] sm:$0xff]
          %v3767 = vld [vmem:[%s272 + $0x38] sm:$0xff]
          %v3768 = vld [vmem:[%s272 + $0x40] sm:$0xff]
          %v3769 = vld [vmem:[%s272 + $0x48] sm:$0xff]
          %v3770 = vld [vmem:[%s272 + $0x50] sm:$0xff]
          %v3771 = vld [vmem:[%s272 + $0x58] sm:$0xff]
          %v3772 = vld [vmem:[%s272 + $0x60] sm:$0xff]
          %v3773 = vld [vmem:[%s272 + $0x68] sm:$0xff]
          %v3774 = vld [vmem:[%s272 + $0x70] sm:$0xff]
          %v3775 = vld [vmem:[%s272 + $0x78] sm:$0xff]
          %v3776 = vld [vmem:[%s272 + $0x80] sm:$0xff]
          %v3777 = vld [vmem:[%s272 + $0x88] sm:$0xff]
          %v3778 = vld [vmem:[%s272 + $0x90] sm:$0xff]
          %v3779 = vld [vmem:[%s272 + $0x98] sm:$0xff]
          %v3780 = vld [vmem:[%s272 + $0xa0] sm:$0xff]
          %v3781 = vld [vmem:[%s272 + $0xa8] sm:$0xff]
          %v3782 = vld [vmem:[%s272 + $0xb0] sm:$0xff]
          %v3783 = vld [vmem:[%s272 + $0xb8] sm:$0xff]
          %v3784 = vld [vmem:[%s272 + $0xc0] sm:$0xff]
          %v3785 = vld [vmem:[%s272 + $0xc8] sm:$0xff]
          %v3786 = vld [vmem:[%s272 + $0xd0] sm:$0xff]
          %v3787 = vld [vmem:[%s272 + $0xd8] sm:$0xff]
          %v3788 = vld [vmem:[%s272 + $0xe0] sm:$0xff]
          %v3789 = vld [vmem:[%s272 + $0xe8] sm:$0xff]
          %v3790 = vld [vmem:[%s272 + $0xf0] sm:$0xff]
          %v3791 = vld [vmem:[%s272 + $0xf8] sm:$0xff]
          %s3792 = smul.u32 6, 4
          %s3793 = smul.addr %s3792, 4
          %s3794 = scalar_lea.vmem [#allocation2], %s3793
          %v3795 = vld [vmem:[%s3794] sm:$0xff]
          %v3796 = vld [vmem:[%s3794 + $0x8] sm:$0xff]
          %v3797 = vunpack.c.l.bf16 %v3795
          %v3798 = vunpack.c.h.bf16 %v3795
          %v3799 = vunpack.c.l.bf16 %v3796
          %v3800 = vunpack.c.h.bf16 %v3796
          %v3833 = vunpack.c.l.b16 %v3760
          %v3834 = vunpack.c.h.b16 %v3760
          %v3835 = vunpack.c.l.b16 %v3761
          %v3836 = vunpack.c.h.b16 %v3761
          %v3837 = vunpack.c.l.b16 %v3762
          %v3838 = vunpack.c.h.b16 %v3762
          %v3839 = vunpack.c.l.b16 %v3763
          %v3840 = vunpack.c.h.b16 %v3763
          %v3841 = vunpack.c.l.b16 %v3764
          %v3842 = vunpack.c.h.b16 %v3764
          %v3843 = vunpack.c.l.b16 %v3765
          %v3844 = vunpack.c.h.b16 %v3765
          %v3845 = vunpack.c.l.b16 %v3766
          %v3846 = vunpack.c.h.b16 %v3766
          %v3847 = vunpack.c.l.b16 %v3767
          %v3848 = vunpack.c.h.b16 %v3767
          %v3849 = vunpack.c.l.b16 %v3768
          %v3850 = vunpack.c.h.b16 %v3768
          %v3851 = vunpack.c.l.b16 %v3769
          %v3852 = vunpack.c.h.b16 %v3769
          %v3853 = vunpack.c.l.b16 %v3770
          %v3854 = vunpack.c.h.b16 %v3770
          %v3855 = vunpack.c.l.b16 %v3771
          %v3856 = vunpack.c.h.b16 %v3771
          %v3857 = vunpack.c.l.b16 %v3772
          %v3858 = vunpack.c.h.b16 %v3772
          %v3859 = vunpack.c.l.b16 %v3773
          %v3860 = vunpack.c.h.b16 %v3773
          %v3861 = vunpack.c.l.b16 %v3774
          %v3862 = vunpack.c.h.b16 %v3774
          %v3863 = vunpack.c.l.b16 %v3775
          %v3864 = vunpack.c.h.b16 %v3775
          %v3865 = vunpack.c.l.b16 %v3776
          %v3866 = vunpack.c.h.b16 %v3776
          %v3867 = vunpack.c.l.b16 %v3777
          %v3868 = vunpack.c.h.b16 %v3777
          %v3869 = vunpack.c.l.b16 %v3778
          %v3870 = vunpack.c.h.b16 %v3778
          %v3871 = vunpack.c.l.b16 %v3779
          %v3872 = vunpack.c.h.b16 %v3779
          %v3873 = vunpack.c.l.b16 %v3780
          %v3874 = vunpack.c.h.b16 %v3780
          %v3875 = vunpack.c.l.b16 %v3781
          %v3876 = vunpack.c.h.b16 %v3781
          %v3877 = vunpack.c.l.b16 %v3782
          %v3878 = vunpack.c.h.b16 %v3782
          %v3879 = vunpack.c.l.b16 %v3783
          %v3880 = vunpack.c.h.b16 %v3783
          %v3881 = vunpack.c.l.b16 %v3784
          %v3882 = vunpack.c.h.b16 %v3784
          %v3883 = vunpack.c.l.b16 %v3785
          %v3884 = vunpack.c.h.b16 %v3785
          %v3885 = vunpack.c.l.b16 %v3786
          %v3886 = vunpack.c.h.b16 %v3786
          %v3887 = vunpack.c.l.b16 %v3787
          %v3888 = vunpack.c.h.b16 %v3787
          %v3889 = vunpack.c.l.b16 %v3788
          %v3890 = vunpack.c.h.b16 %v3788
          %v3891 = vunpack.c.l.b16 %v3789
          %v3892 = vunpack.c.h.b16 %v3789
          %v3893 = vunpack.c.l.b16 %v3790
          %v3894 = vunpack.c.h.b16 %v3790
          %v3895 = vunpack.c.l.b16 %v3791
          %v3896 = vunpack.c.h.b16 %v3791
          %v3897 = vpack.c.b16 %v3837, %v3833
          %v3898 = vpack.c.b16 %v3838, %v3834
          %v3899 = vpack.c.b16 %v3839, %v3835
          %v3900 = vpack.c.b16 %v3840, %v3836
          %v3901 = vpack.c.b16 %v3845, %v3841
          %v3902 = vpack.c.b16 %v3846, %v3842
          %v3903 = vpack.c.b16 %v3847, %v3843
          %v3904 = vpack.c.b16 %v3848, %v3844
          %v3905 = vpack.c.b16 %v3853, %v3849
          %v3906 = vpack.c.b16 %v3854, %v3850
          %v3907 = vpack.c.b16 %v3855, %v3851
          %v3908 = vpack.c.b16 %v3856, %v3852
          %v3909 = vpack.c.b16 %v3861, %v3857
          %v3910 = vpack.c.b16 %v3862, %v3858
          %v3911 = vpack.c.b16 %v3863, %v3859
          %v3912 = vpack.c.b16 %v3864, %v3860
          %v3913 = vpack.c.b16 %v3869, %v3865
          %v3914 = vpack.c.b16 %v3870, %v3866
          %v3915 = vpack.c.b16 %v3871, %v3867
          %v3916 = vpack.c.b16 %v3872, %v3868
          %v3917 = vpack.c.b16 %v3877, %v3873
          %v3918 = vpack.c.b16 %v3878, %v3874
          %v3919 = vpack.c.b16 %v3879, %v3875
          %v3920 = vpack.c.b16 %v3880, %v3876
          %v3921 = vpack.c.b16 %v3885, %v3881
          %v3922 = vpack.c.b16 %v3886, %v3882
          %v3923 = vpack.c.b16 %v3887, %v3883
          %v3924 = vpack.c.b16 %v3888, %v3884
          %v3925 = vpack.c.b16 %v3893, %v3889
          %v3926 = vpack.c.b16 %v3894, %v3890
          %v3927 = vpack.c.b16 %v3895, %v3891
          %v3928 = vpack.c.b16 %v3896, %v3892
          %3961 = vmatprep.subr.bf16.mxu0 %v3926
          %3962 = vmatpush1.bf16.msra.mxu0 %v3925
          %3963 = vmatprep.subr.bf16.mxu0 %v3922
          %3964 = vmatpush1.bf16.msra.mxu0 %v3921
          %3965 = vmatprep.subr.bf16.mxu0 %v3918
          %3966 = vmatpush1.bf16.msra.mxu0 %v3917
          %3967 = vmatprep.subr.bf16.mxu0 %v3914
          %3968 = vmatpush1.bf16.msra.mxu0 %v3913
          %3969 = vmatprep.subr.bf16.mxu0 %v3910
          %3970 = vmatpush1.bf16.msra.mxu0 %v3909
          %3971 = vmatprep.subr.bf16.mxu0 %v3906
          %3972 = vmatpush1.bf16.msra.mxu0 %v3905
          %3973 = vmatprep.subr.bf16.mxu0 %v3902
          %3974 = vmatpush1.bf16.msra.mxu0 %v3901
          %3975 = vmatprep.subr.bf16.mxu0 %v3898
          %3976 = vmatpush1.bf16.msra.mxu0 %v3897
          %3977 = vmatprep.subr.bf16.mxu0 0
          %3978 = vmatpush2.bf16.msra.mxu0 0
          %3979 = vmatprep.subr.bf16.mxu0 0
          %3980 = vmatpush2.bf16.msra.mxu0 0
          %3981 = vmatprep.subr.bf16.mxu0 0
          %3982 = vmatpush2.bf16.msra.mxu0 0
          %3983 = vmatprep.subr.bf16.mxu0 0
          %3984 = vmatpush2.bf16.msra.mxu0 0
          %3985 = vmatprep.subr.bf16.mxu0 0
          %3986 = vmatpush2.bf16.msra.mxu0 0
          %3987 = vmatprep.subr.bf16.mxu0 0
          %3988 = vmatpush2.bf16.msra.mxu0 0
          %3989 = vmatprep.subr.bf16.mxu0 0
          %3990 = vmatpush2.bf16.msra.mxu0 0
          %3991 = vmatprep.subr.bf16.mxu0 0
          %3992 = vmatpush2.bf16.msra.mxu0 0
          %3993 = vmatprep.mubr.bf16.mxu0 0
          %3994 = vmatmul.mubr.bf16.gmra.mxu0 %v3759
          %v3995 = vpop.f32.mrf.mxu0
          %v3996 = vadd.f32 %v3797, %v3995
          %v3997 = vpop.f32.mrf.mxu0
          %v3998 = vadd.f32 %v3798, %v3997
          %v3999 = vpop.f32.mrf.mxu0
          %v4000 = vpop.f32.mrf.mxu0
          %4001 = vdwg.mxu0
          %4002 = vmatprep.subr.bf16.mxu0 %v3928
          %4003 = vmatpush1.bf16.msra.mxu0 %v3927
          %4004 = vmatprep.subr.bf16.mxu0 %v3924
          %4005 = vmatpush1.bf16.msra.mxu0 %v3923
          %4006 = vmatprep.subr.bf16.mxu0 %v3920
          %4007 = vmatpush1.bf16.msra.mxu0 %v3919
          %4008 = vmatprep.subr.bf16.mxu0 %v3916
          %4009 = vmatpush1.bf16.msra.mxu0 %v3915
          %4010 = vmatprep.subr.bf16.mxu0 %v3912
          %4011 = vmatpush1.bf16.msra.mxu0 %v3911
          %4012 = vmatprep.subr.bf16.mxu0 %v3908
          %4013 = vmatpush1.bf16.msra.mxu0 %v3907
          %4014 = vmatprep.subr.bf16.mxu0 %v3904
          %4015 = vmatpush1.bf16.msra.mxu0 %v3903
          %4016 = vmatprep.subr.bf16.mxu0 %v3900
          %4017 = vmatpush1.bf16.msra.mxu0 %v3899
          %4018 = vmatprep.subr.bf16.mxu0 0
          %4019 = vmatpush2.bf16.msra.mxu0 0
          %4020 = vmatprep.subr.bf16.mxu0 0
          %4021 = vmatpush2.bf16.msra.mxu0 0
          %4022 = vmatprep.subr.bf16.mxu0 0
          %4023 = vmatpush2.bf16.msra.mxu0 0
          %4024 = vmatprep.subr.bf16.mxu0 0
          %4025 = vmatpush2.bf16.msra.mxu0 0
          %4026 = vmatprep.subr.bf16.mxu0 0
          %4027 = vmatpush2.bf16.msra.mxu0 0
          %4028 = vmatprep.subr.bf16.mxu0 0
          %4029 = vmatpush2.bf16.msra.mxu0 0
          %4030 = vmatprep.subr.bf16.mxu0 0
          %4031 = vmatpush2.bf16.msra.mxu0 0
          %4032 = vmatprep.subr.bf16.mxu0 0
          %4033 = vmatpush2.bf16.msra.mxu0 0
          %4034 = vmatprep.mubr.bf16.mxu0 0
          %4035 = vmatmul.mubr.bf16.gmra.mxu0 %v3759
          %v4036 = vpop.f32.mrf.mxu0
          %v4037 = vadd.f32 %v3799, %v4036
          %v4038 = vpop.f32.mrf.mxu0
          %v4039 = vadd.f32 %v3800, %v4038
          %v4040 = vpop.f32.mrf.mxu0
          %v4041 = vpop.f32.mrf.mxu0
          %4042 = vdwg.mxu0
          %v4043 = vadd.f32 %v3996, %v3702
          %v4044 = vadd.f32 %v3998, %v3706
          %v4045 = vadd.f32 %v4037, %v3710
          %v4046 = vadd.f32 %v4039, %v3714
          %v4047 = vxor.u32 %v4043, 2147483648
          %v4048 = vxor.u32 %v4044, 2147483648
          %v4049 = vxor.u32 %v4045, 2147483648
          %v4050 = vmul.f32 %v4047, 1.442695
          %v4051 = vpow.pop %v4050
          %v4052 = vmul.f32 %v4048, 1.442695
          %v4053 = vpow.pop %v4052
          %v4054 = vmul.f32 %v4049, 1.442695
          %v4055 = vpow.pop %v4054
          %v4056 = vadd.f32 %v4051, 1.0
          %v4057 = vadd.f32 %v4053, 1.0
          %v4058 = vadd.f32 %v4055, 1.0
          %v4059 = vrcp.pop %v4056
          %v4060 = vmul.f32 1.0, %v4059
          %v4061 = vrcp.pop %v4057
          %v4062 = vmul.f32 1.0, %v4061
          %v4063 = vrcp.pop %v4058
          %v4064 = vmul.f32 1.0, %v4063
          %v4065 = vtanh.pop %v4046
          %v4066 = vmul.f32 %v4062, %v3756
          %v4067 = vmul.f32 %v4060, %v4065
          %v4068 = vadd.f32 %v4066, %v4067
          %v4069 = vtanh.pop %v4068
          %v4070 = vmul.f32 %v4064, %v4069
          %vm4071 = vcmp.gt.s32.totalorder %v795, 6
          %v4072 = vsel %vm4071, 1, 0
          %v4073 = vcvt.s32.f32 %v4072
          %4075 = vset.pattern.permute.xlu0 0
          %4076 = vperm.xlu0 %4075, %v4073
          %v4077 = vpop.permute.xlu0 %4076
          %v4079 = vmul.f32 %v4070, %v4077
          %v4080 = vmul.f32 %v4068, %v4077
          %s4081 = scalar_lea.vmem %s307, 48 [#allocation9]
          %4082 = vst [vmem:[%s4081] sm:$0xff] %v4079
          %v4083 = vpack.c.bf16 %v4079, %v4079
          %v4084 = vld [vmem:[%s272] sm:$0xff]
          %v4085 = vld [vmem:[%s272 + $0x8] sm:$0xff]
          %v4086 = vld [vmem:[%s272 + $0x10] sm:$0xff]
          %v4087 = vld [vmem:[%s272 + $0x18] sm:$0xff]
          %v4088 = vld [vmem:[%s272 + $0x20] sm:$0xff]
          %v4089 = vld [vmem:[%s272 + $0x28] sm:$0xff]
          %v4090 = vld [vmem:[%s272 + $0x30] sm:$0xff]
          %v4091 = vld [vmem:[%s272 + $0x38] sm:$0xff]
          %v4092 = vld [vmem:[%s272 + $0x40] sm:$0xff]
          %v4093 = vld [vmem:[%s272 + $0x48] sm:$0xff]
          %v4094 = vld [vmem:[%s272 + $0x50] sm:$0xff]
          %v4095 = vld [vmem:[%s272 + $0x58] sm:$0xff]
          %v4096 = vld [vmem:[%s272 + $0x60] sm:$0xff]
          %v4097 = vld [vmem:[%s272 + $0x68] sm:$0xff]
          %v4098 = vld [vmem:[%s272 + $0x70] sm:$0xff]
          %v4099 = vld [vmem:[%s272 + $0x78] sm:$0xff]
          %v4100 = vld [vmem:[%s272 + $0x80] sm:$0xff]
          %v4101 = vld [vmem:[%s272 + $0x88] sm:$0xff]
          %v4102 = vld [vmem:[%s272 + $0x90] sm:$0xff]
          %v4103 = vld [vmem:[%s272 + $0x98] sm:$0xff]
          %v4104 = vld [vmem:[%s272 + $0xa0] sm:$0xff]
          %v4105 = vld [vmem:[%s272 + $0xa8] sm:$0xff]
          %v4106 = vld [vmem:[%s272 + $0xb0] sm:$0xff]
          %v4107 = vld [vmem:[%s272 + $0xb8] sm:$0xff]
          %v4108 = vld [vmem:[%s272 + $0xc0] sm:$0xff]
          %v4109 = vld [vmem:[%s272 + $0xc8] sm:$0xff]
          %v4110 = vld [vmem:[%s272 + $0xd0] sm:$0xff]
          %v4111 = vld [vmem:[%s272 + $0xd8] sm:$0xff]
          %v4112 = vld [vmem:[%s272 + $0xe0] sm:$0xff]
          %v4113 = vld [vmem:[%s272 + $0xe8] sm:$0xff]
          %v4114 = vld [vmem:[%s272 + $0xf0] sm:$0xff]
          %v4115 = vld [vmem:[%s272 + $0xf8] sm:$0xff]
          %s4116 = smul.u32 5, 4
          %s4117 = smul.addr %s4116, 4
          %s4118 = scalar_lea.vmem [#allocation2], %s4117
          %v4119 = vld [vmem:[%s4118] sm:$0xff]
          %v4120 = vld [vmem:[%s4118 + $0x8] sm:$0xff]
          %v4121 = vunpack.c.l.bf16 %v4119
          %v4122 = vunpack.c.h.bf16 %v4119
          %v4123 = vunpack.c.l.bf16 %v4120
          %v4124 = vunpack.c.h.bf16 %v4120
          %v4157 = vunpack.c.l.b16 %v4084
          %v4158 = vunpack.c.h.b16 %v4084
          %v4159 = vunpack.c.l.b16 %v4085
          %v4160 = vunpack.c.h.b16 %v4085
          %v4161 = vunpack.c.l.b16 %v4086
          %v4162 = vunpack.c.h.b16 %v4086
          %v4163 = vunpack.c.l.b16 %v4087
          %v4164 = vunpack.c.h.b16 %v4087
          %v4165 = vunpack.c.l.b16 %v4088
          %v4166 = vunpack.c.h.b16 %v4088
          %v4167 = vunpack.c.l.b16 %v4089
          %v4168 = vunpack.c.h.b16 %v4089
          %v4169 = vunpack.c.l.b16 %v4090
          %v4170 = vunpack.c.h.b16 %v4090
          %v4171 = vunpack.c.l.b16 %v4091
          %v4172 = vunpack.c.h.b16 %v4091
          %v4173 = vunpack.c.l.b16 %v4092
          %v4174 = vunpack.c.h.b16 %v4092
          %v4175 = vunpack.c.l.b16 %v4093
          %v4176 = vunpack.c.h.b16 %v4093
          %v4177 = vunpack.c.l.b16 %v4094
          %v4178 = vunpack.c.h.b16 %v4094
          %v4179 = vunpack.c.l.b16 %v4095
          %v4180 = vunpack.c.h.b16 %v4095
          %v4181 = vunpack.c.l.b16 %v4096
          %v4182 = vunpack.c.h.b16 %v4096
          %v4183 = vunpack.c.l.b16 %v4097
          %v4184 = vunpack.c.h.b16 %v4097
          %v4185 = vunpack.c.l.b16 %v4098
          %v4186 = vunpack.c.h.b16 %v4098
          %v4187 = vunpack.c.l.b16 %v4099
          %v4188 = vunpack.c.h.b16 %v4099
          %v4189 = vunpack.c.l.b16 %v4100
          %v4190 = vunpack.c.h.b16 %v4100
          %v4191 = vunpack.c.l.b16 %v4101
          %v4192 = vunpack.c.h.b16 %v4101
          %v4193 = vunpack.c.l.b16 %v4102
          %v4194 = vunpack.c.h.b16 %v4102
          %v4195 = vunpack.c.l.b16 %v4103
          %v4196 = vunpack.c.h.b16 %v4103
          %v4197 = vunpack.c.l.b16 %v4104
          %v4198 = vunpack.c.h.b16 %v4104
          %v4199 = vunpack.c.l.b16 %v4105
          %v4200 = vunpack.c.h.b16 %v4105
          %v4201 = vunpack.c.l.b16 %v4106
          %v4202 = vunpack.c.h.b16 %v4106
          %v4203 = vunpack.c.l.b16 %v4107
          %v4204 = vunpack.c.h.b16 %v4107
          %v4205 = vunpack.c.l.b16 %v4108
          %v4206 = vunpack.c.h.b16 %v4108
          %v4207 = vunpack.c.l.b16 %v4109
          %v4208 = vunpack.c.h.b16 %v4109
          %v4209 = vunpack.c.l.b16 %v4110
          %v4210 = vunpack.c.h.b16 %v4110
          %v4211 = vunpack.c.l.b16 %v4111
          %v4212 = vunpack.c.h.b16 %v4111
          %v4213 = vunpack.c.l.b16 %v4112
          %v4214 = vunpack.c.h.b16 %v4112
          %v4215 = vunpack.c.l.b16 %v4113
          %v4216 = vunpack.c.h.b16 %v4113
          %v4217 = vunpack.c.l.b16 %v4114
          %v4218 = vunpack.c.h.b16 %v4114
          %v4219 = vunpack.c.l.b16 %v4115
          %v4220 = vunpack.c.h.b16 %v4115
          %v4221 = vpack.c.b16 %v4161, %v4157
          %v4222 = vpack.c.b16 %v4162, %v4158
          %v4223 = vpack.c.b16 %v4163, %v4159
          %v4224 = vpack.c.b16 %v4164, %v4160
          %v4225 = vpack.c.b16 %v4169, %v4165
          %v4226 = vpack.c.b16 %v4170, %v4166
          %v4227 = vpack.c.b16 %v4171, %v4167
          %v4228 = vpack.c.b16 %v4172, %v4168
          %v4229 = vpack.c.b16 %v4177, %v4173
          %v4230 = vpack.c.b16 %v4178, %v4174
          %v4231 = vpack.c.b16 %v4179, %v4175
          %v4232 = vpack.c.b16 %v4180, %v4176
          %v4233 = vpack.c.b16 %v4185, %v4181
          %v4234 = vpack.c.b16 %v4186, %v4182
          %v4235 = vpack.c.b16 %v4187, %v4183
          %v4236 = vpack.c.b16 %v4188, %v4184
          %v4237 = vpack.c.b16 %v4193, %v4189
          %v4238 = vpack.c.b16 %v4194, %v4190
          %v4239 = vpack.c.b16 %v4195, %v4191
          %v4240 = vpack.c.b16 %v4196, %v4192
          %v4241 = vpack.c.b16 %v4201, %v4197
          %v4242 = vpack.c.b16 %v4202, %v4198
          %v4243 = vpack.c.b16 %v4203, %v4199
          %v4244 = vpack.c.b16 %v4204, %v4200
          %v4245 = vpack.c.b16 %v4209, %v4205
          %v4246 = vpack.c.b16 %v4210, %v4206
          %v4247 = vpack.c.b16 %v4211, %v4207
          %v4248 = vpack.c.b16 %v4212, %v4208
          %v4249 = vpack.c.b16 %v4217, %v4213
          %v4250 = vpack.c.b16 %v4218, %v4214
          %v4251 = vpack.c.b16 %v4219, %v4215
          %v4252 = vpack.c.b16 %v4220, %v4216
          %4285 = vmatprep.subr.bf16.mxu0 %v4250
          %4286 = vmatpush1.bf16.msra.mxu0 %v4249
          %4287 = vmatprep.subr.bf16.mxu0 %v4246
          %4288 = vmatpush1.bf16.msra.mxu0 %v4245
          %4289 = vmatprep.subr.bf16.mxu0 %v4242
          %4290 = vmatpush1.bf16.msra.mxu0 %v4241
          %4291 = vmatprep.subr.bf16.mxu0 %v4238
          %4292 = vmatpush1.bf16.msra.mxu0 %v4237
          %4293 = vmatprep.subr.bf16.mxu0 %v4234
          %4294 = vmatpush1.bf16.msra.mxu0 %v4233
          %4295 = vmatprep.subr.bf16.mxu0 %v4230
          %4296 = vmatpush1.bf16.msra.mxu0 %v4229
          %4297 = vmatprep.subr.bf16.mxu0 %v4226
          %4298 = vmatpush1.bf16.msra.mxu0 %v4225
          %4299 = vmatprep.subr.bf16.mxu0 %v4222
          %4300 = vmatpush1.bf16.msra.mxu0 %v4221
          %4301 = vmatprep.subr.bf16.mxu0 0
          %4302 = vmatpush2.bf16.msra.mxu0 0
          %4303 = vmatprep.subr.bf16.mxu0 0
          %4304 = vmatpush2.bf16.msra.mxu0 0
          %4305 = vmatprep.subr.bf16.mxu0 0
          %4306 = vmatpush2.bf16.msra.mxu0 0
          %4307 = vmatprep.subr.bf16.mxu0 0
          %4308 = vmatpush2.bf16.msra.mxu0 0
          %4309 = vmatprep.subr.bf16.mxu0 0
          %4310 = vmatpush2.bf16.msra.mxu0 0
          %4311 = vmatprep.subr.bf16.mxu0 0
          %4312 = vmatpush2.bf16.msra.mxu0 0
          %4313 = vmatprep.subr.bf16.mxu0 0
          %4314 = vmatpush2.bf16.msra.mxu0 0
          %4315 = vmatprep.subr.bf16.mxu0 0
          %4316 = vmatpush2.bf16.msra.mxu0 0
          %4317 = vmatprep.mubr.bf16.mxu0 0
          %4318 = vmatmul.mubr.bf16.gmra.mxu0 %v4083
          %v4319 = vpop.f32.mrf.mxu0
          %v4320 = vadd.f32 %v4121, %v4319
          %v4321 = vpop.f32.mrf.mxu0
          %v4322 = vadd.f32 %v4122, %v4321
          %v4323 = vpop.f32.mrf.mxu0
          %v4324 = vpop.f32.mrf.mxu0
          %4325 = vdwg.mxu0
          %4326 = vmatprep.subr.bf16.mxu0 %v4252
          %4327 = vmatpush1.bf16.msra.mxu0 %v4251
          %4328 = vmatprep.subr.bf16.mxu0 %v4248
          %4329 = vmatpush1.bf16.msra.mxu0 %v4247
          %4330 = vmatprep.subr.bf16.mxu0 %v4244
          %4331 = vmatpush1.bf16.msra.mxu0 %v4243
          %4332 = vmatprep.subr.bf16.mxu0 %v4240
          %4333 = vmatpush1.bf16.msra.mxu0 %v4239
          %4334 = vmatprep.subr.bf16.mxu0 %v4236
          %4335 = vmatpush1.bf16.msra.mxu0 %v4235
          %4336 = vmatprep.subr.bf16.mxu0 %v4232
          %4337 = vmatpush1.bf16.msra.mxu0 %v4231
          %4338 = vmatprep.subr.bf16.mxu0 %v4228
          %4339 = vmatpush1.bf16.msra.mxu0 %v4227
          %4340 = vmatprep.subr.bf16.mxu0 %v4224
          %4341 = vmatpush1.bf16.msra.mxu0 %v4223
          %4342 = vmatprep.subr.bf16.mxu0 0
          %4343 = vmatpush2.bf16.msra.mxu0 0
          %4344 = vmatprep.subr.bf16.mxu0 0
          %4345 = vmatpush2.bf16.msra.mxu0 0
          %4346 = vmatprep.subr.bf16.mxu0 0
          %4347 = vmatpush2.bf16.msra.mxu0 0
          %4348 = vmatprep.subr.bf16.mxu0 0
          %4349 = vmatpush2.bf16.msra.mxu0 0
          %4350 = vmatprep.subr.bf16.mxu0 0
          %4351 = vmatpush2.bf16.msra.mxu0 0
          %4352 = vmatprep.subr.bf16.mxu0 0
          %4353 = vmatpush2.bf16.msra.mxu0 0
          %4354 = vmatprep.subr.bf16.mxu0 0
          %4355 = vmatpush2.bf16.msra.mxu0 0
          %4356 = vmatprep.subr.bf16.mxu0 0
          %4357 = vmatpush2.bf16.msra.mxu0 0
          %4358 = vmatprep.mubr.bf16.mxu0 0
          %4359 = vmatmul.mubr.bf16.gmra.mxu0 %v4083
          %v4360 = vpop.f32.mrf.mxu0
          %v4361 = vadd.f32 %v4123, %v4360
          %v4362 = vpop.f32.mrf.mxu0
          %v4363 = vadd.f32 %v4124, %v4362
          %v4364 = vpop.f32.mrf.mxu0
          %v4365 = vpop.f32.mrf.mxu0
          %4366 = vdwg.mxu0
          %v4367 = vadd.f32 %v4320, %v3702
          %v4368 = vadd.f32 %v4322, %v3706
          %v4369 = vadd.f32 %v4361, %v3710
          %v4370 = vadd.f32 %v4363, %v3714
          %v4371 = vxor.u32 %v4367, 2147483648
          %v4372 = vxor.u32 %v4368, 2147483648
          %v4373 = vxor.u32 %v4369, 2147483648
          %v4374 = vmul.f32 %v4371, 1.442695
          %v4375 = vpow.pop %v4374
          %v4376 = vmul.f32 %v4372, 1.442695
          %v4377 = vpow.pop %v4376
          %v4378 = vmul.f32 %v4373, 1.442695
          %v4379 = vpow.pop %v4378
          %v4380 = vadd.f32 %v4375, 1.0
          %v4381 = vadd.f32 %v4377, 1.0
          %v4382 = vadd.f32 %v4379, 1.0
          %v4383 = vrcp.pop %v4380
          %v4384 = vmul.f32 1.0, %v4383
          %v4385 = vrcp.pop %v4381
          %v4386 = vmul.f32 1.0, %v4385
          %v4387 = vrcp.pop %v4382
          %v4388 = vmul.f32 1.0, %v4387
          %v4389 = vtanh.pop %v4370
          %v4390 = vmul.f32 %v4386, %v4080
          %v4391 = vmul.f32 %v4384, %v4389
          %v4392 = vadd.f32 %v4390, %v4391
          %v4393 = vtanh.pop %v4392
          %v4394 = vmul.f32 %v4388, %v4393
          %vm4395 = vcmp.gt.s32.totalorder %v795, 5
          %v4396 = vsel %vm4395, 1, 0
          %v4397 = vcvt.s32.f32 %v4396
          %4399 = vset.pattern.permute.xlu0 0
          %4400 = vperm.xlu0 %4399, %v4397
          %v4401 = vpop.permute.xlu0 %4400
          %v4403 = vmul.f32 %v4394, %v4401
          %v4404 = vmul.f32 %v4392, %v4401
          %s4405 = scalar_lea.vmem %s307, 40 [#allocation9]
          %4406 = vst [vmem:[%s4405] sm:$0xff] %v4403
          %v4407 = vpack.c.bf16 %v4403, %v4403
          %v4408 = vld [vmem:[%s272] sm:$0xff]
          %v4409 = vld [vmem:[%s272 + $0x8] sm:$0xff]
          %v4410 = vld [vmem:[%s272 + $0x10] sm:$0xff]
          %v4411 = vld [vmem:[%s272 + $0x18] sm:$0xff]
          %v4412 = vld [vmem:[%s272 + $0x20] sm:$0xff]
          %v4413 = vld [vmem:[%s272 + $0x28] sm:$0xff]
          %v4414 = vld [vmem:[%s272 + $0x30] sm:$0xff]
          %v4415 = vld [vmem:[%s272 + $0x38] sm:$0xff]
          %v4416 = vld [vmem:[%s272 + $0x40] sm:$0xff]
          %v4417 = vld [vmem:[%s272 + $0x48] sm:$0xff]
          %v4418 = vld [vmem:[%s272 + $0x50] sm:$0xff]
          %v4419 = vld [vmem:[%s272 + $0x58] sm:$0xff]
          %v4420 = vld [vmem:[%s272 + $0x60] sm:$0xff]
          %v4421 = vld [vmem:[%s272 + $0x68] sm:$0xff]
          %v4422 = vld [vmem:[%s272 + $0x70] sm:$0xff]
          %v4423 = vld [vmem:[%s272 + $0x78] sm:$0xff]
          %v4424 = vld [vmem:[%s272 + $0x80] sm:$0xff]
          %v4425 = vld [vmem:[%s272 + $0x88] sm:$0xff]
          %v4426 = vld [vmem:[%s272 + $0x90] sm:$0xff]
          %v4427 = vld [vmem:[%s272 + $0x98] sm:$0xff]
          %v4428 = vld [vmem:[%s272 + $0xa0] sm:$0xff]
          %v4429 = vld [vmem:[%s272 + $0xa8] sm:$0xff]
          %v4430 = vld [vmem:[%s272 + $0xb0] sm:$0xff]
          %v4431 = vld [vmem:[%s272 + $0xb8] sm:$0xff]
          %v4432 = vld [vmem:[%s272 + $0xc0] sm:$0xff]
          %v4433 = vld [vmem:[%s272 + $0xc8] sm:$0xff]
          %v4434 = vld [vmem:[%s272 + $0xd0] sm:$0xff]
          %v4435 = vld [vmem:[%s272 + $0xd8] sm:$0xff]
          %v4436 = vld [vmem:[%s272 + $0xe0] sm:$0xff]
          %v4437 = vld [vmem:[%s272 + $0xe8] sm:$0xff]
          %v4438 = vld [vmem:[%s272 + $0xf0] sm:$0xff]
          %v4439 = vld [vmem:[%s272 + $0xf8] sm:$0xff]
          %s4440 = smul.u32 4, 4
          %s4441 = smul.addr %s4440, 4
          %s4442 = scalar_lea.vmem [#allocation2], %s4441
          %v4443 = vld [vmem:[%s4442] sm:$0xff]
          %v4444 = vld [vmem:[%s4442 + $0x8] sm:$0xff]
          %v4445 = vunpack.c.l.bf16 %v4443
          %v4446 = vunpack.c.h.bf16 %v4443
          %v4447 = vunpack.c.l.bf16 %v4444
          %v4448 = vunpack.c.h.bf16 %v4444
          %v4481 = vunpack.c.l.b16 %v4408
          %v4482 = vunpack.c.h.b16 %v4408
          %v4483 = vunpack.c.l.b16 %v4409
          %v4484 = vunpack.c.h.b16 %v4409
          %v4485 = vunpack.c.l.b16 %v4410
          %v4486 = vunpack.c.h.b16 %v4410
          %v4487 = vunpack.c.l.b16 %v4411
          %v4488 = vunpack.c.h.b16 %v4411
          %v4489 = vunpack.c.l.b16 %v4412
          %v4490 = vunpack.c.h.b16 %v4412
          %v4491 = vunpack.c.l.b16 %v4413
          %v4492 = vunpack.c.h.b16 %v4413
          %v4493 = vunpack.c.l.b16 %v4414
          %v4494 = vunpack.c.h.b16 %v4414
          %v4495 = vunpack.c.l.b16 %v4415
          %v4496 = vunpack.c.h.b16 %v4415
          %v4497 = vunpack.c.l.b16 %v4416
          %v4498 = vunpack.c.h.b16 %v4416
          %v4499 = vunpack.c.l.b16 %v4417
          %v4500 = vunpack.c.h.b16 %v4417
          %v4501 = vunpack.c.l.b16 %v4418
          %v4502 = vunpack.c.h.b16 %v4418
          %v4503 = vunpack.c.l.b16 %v4419
          %v4504 = vunpack.c.h.b16 %v4419
          %v4505 = vunpack.c.l.b16 %v4420
          %v4506 = vunpack.c.h.b16 %v4420
          %v4507 = vunpack.c.l.b16 %v4421
          %v4508 = vunpack.c.h.b16 %v4421
          %v4509 = vunpack.c.l.b16 %v4422
          %v4510 = vunpack.c.h.b16 %v4422
          %v4511 = vunpack.c.l.b16 %v4423
          %v4512 = vunpack.c.h.b16 %v4423
          %v4513 = vunpack.c.l.b16 %v4424
          %v4514 = vunpack.c.h.b16 %v4424
          %v4515 = vunpack.c.l.b16 %v4425
          %v4516 = vunpack.c.h.b16 %v4425
          %v4517 = vunpack.c.l.b16 %v4426
          %v4518 = vunpack.c.h.b16 %v4426
          %v4519 = vunpack.c.l.b16 %v4427
          %v4520 = vunpack.c.h.b16 %v4427
          %v4521 = vunpack.c.l.b16 %v4428
          %v4522 = vunpack.c.h.b16 %v4428
          %v4523 = vunpack.c.l.b16 %v4429
          %v4524 = vunpack.c.h.b16 %v4429
          %v4525 = vunpack.c.l.b16 %v4430
          %v4526 = vunpack.c.h.b16 %v4430
          %v4527 = vunpack.c.l.b16 %v4431
          %v4528 = vunpack.c.h.b16 %v4431
          %v4529 = vunpack.c.l.b16 %v4432
          %v4530 = vunpack.c.h.b16 %v4432
          %v4531 = vunpack.c.l.b16 %v4433
          %v4532 = vunpack.c.h.b16 %v4433
          %v4533 = vunpack.c.l.b16 %v4434
          %v4534 = vunpack.c.h.b16 %v4434
          %v4535 = vunpack.c.l.b16 %v4435
          %v4536 = vunpack.c.h.b16 %v4435
          %v4537 = vunpack.c.l.b16 %v4436
          %v4538 = vunpack.c.h.b16 %v4436
          %v4539 = vunpack.c.l.b16 %v4437
          %v4540 = vunpack.c.h.b16 %v4437
          %v4541 = vunpack.c.l.b16 %v4438
          %v4542 = vunpack.c.h.b16 %v4438
          %v4543 = vunpack.c.l.b16 %v4439
          %v4544 = vunpack.c.h.b16 %v4439
          %v4545 = vpack.c.b16 %v4485, %v4481
          %v4546 = vpack.c.b16 %v4486, %v4482
          %v4547 = vpack.c.b16 %v4487, %v4483
          %v4548 = vpack.c.b16 %v4488, %v4484
          %v4549 = vpack.c.b16 %v4493, %v4489
          %v4550 = vpack.c.b16 %v4494, %v4490
          %v4551 = vpack.c.b16 %v4495, %v4491
          %v4552 = vpack.c.b16 %v4496, %v4492
          %v4553 = vpack.c.b16 %v4501, %v4497
          %v4554 = vpack.c.b16 %v4502, %v4498
          %v4555 = vpack.c.b16 %v4503, %v4499
          %v4556 = vpack.c.b16 %v4504, %v4500
          %v4557 = vpack.c.b16 %v4509, %v4505
          %v4558 = vpack.c.b16 %v4510, %v4506
          %v4559 = vpack.c.b16 %v4511, %v4507
          %v4560 = vpack.c.b16 %v4512, %v4508
          %v4561 = vpack.c.b16 %v4517, %v4513
          %v4562 = vpack.c.b16 %v4518, %v4514
          %v4563 = vpack.c.b16 %v4519, %v4515
          %v4564 = vpack.c.b16 %v4520, %v4516
          %v4565 = vpack.c.b16 %v4525, %v4521
          %v4566 = vpack.c.b16 %v4526, %v4522
          %v4567 = vpack.c.b16 %v4527, %v4523
          %v4568 = vpack.c.b16 %v4528, %v4524
          %v4569 = vpack.c.b16 %v4533, %v4529
          %v4570 = vpack.c.b16 %v4534, %v4530
          %v4571 = vpack.c.b16 %v4535, %v4531
          %v4572 = vpack.c.b16 %v4536, %v4532
          %v4573 = vpack.c.b16 %v4541, %v4537
          %v4574 = vpack.c.b16 %v4542, %v4538
          %v4575 = vpack.c.b16 %v4543, %v4539
          %v4576 = vpack.c.b16 %v4544, %v4540
          %4609 = vmatprep.subr.bf16.mxu0 %v4574
          %4610 = vmatpush1.bf16.msra.mxu0 %v4573
          %4611 = vmatprep.subr.bf16.mxu0 %v4570
          %4612 = vmatpush1.bf16.msra.mxu0 %v4569
          %4613 = vmatprep.subr.bf16.mxu0 %v4566
          %4614 = vmatpush1.bf16.msra.mxu0 %v4565
          %4615 = vmatprep.subr.bf16.mxu0 %v4562
          %4616 = vmatpush1.bf16.msra.mxu0 %v4561
          %4617 = vmatprep.subr.bf16.mxu0 %v4558
          %4618 = vmatpush1.bf16.msra.mxu0 %v4557
          %4619 = vmatprep.subr.bf16.mxu0 %v4554
          %4620 = vmatpush1.bf16.msra.mxu0 %v4553
          %4621 = vmatprep.subr.bf16.mxu0 %v4550
          %4622 = vmatpush1.bf16.msra.mxu0 %v4549
          %4623 = vmatprep.subr.bf16.mxu0 %v4546
          %4624 = vmatpush1.bf16.msra.mxu0 %v4545
          %4625 = vmatprep.subr.bf16.mxu0 0
          %4626 = vmatpush2.bf16.msra.mxu0 0
          %4627 = vmatprep.subr.bf16.mxu0 0
          %4628 = vmatpush2.bf16.msra.mxu0 0
          %4629 = vmatprep.subr.bf16.mxu0 0
          %4630 = vmatpush2.bf16.msra.mxu0 0
          %4631 = vmatprep.subr.bf16.mxu0 0
          %4632 = vmatpush2.bf16.msra.mxu0 0
          %4633 = vmatprep.subr.bf16.mxu0 0
          %4634 = vmatpush2.bf16.msra.mxu0 0
          %4635 = vmatprep.subr.bf16.mxu0 0
          %4636 = vmatpush2.bf16.msra.mxu0 0
          %4637 = vmatprep.subr.bf16.mxu0 0
          %4638 = vmatpush2.bf16.msra.mxu0 0
          %4639 = vmatprep.subr.bf16.mxu0 0
          %4640 = vmatpush2.bf16.msra.mxu0 0
          %4641 = vmatprep.mubr.bf16.mxu0 0
          %4642 = vmatmul.mubr.bf16.gmra.mxu0 %v4407
          %v4643 = vpop.f32.mrf.mxu0
          %v4644 = vadd.f32 %v4445, %v4643
          %v4645 = vpop.f32.mrf.mxu0
          %v4646 = vadd.f32 %v4446, %v4645
          %v4647 = vpop.f32.mrf.mxu0
          %v4648 = vpop.f32.mrf.mxu0
          %4649 = vdwg.mxu0
          %4650 = vmatprep.subr.bf16.mxu0 %v4576
          %4651 = vmatpush1.bf16.msra.mxu0 %v4575
          %4652 = vmatprep.subr.bf16.mxu0 %v4572
          %4653 = vmatpush1.bf16.msra.mxu0 %v4571
          %4654 = vmatprep.subr.bf16.mxu0 %v4568
          %4655 = vmatpush1.bf16.msra.mxu0 %v4567
          %4656 = vmatprep.subr.bf16.mxu0 %v4564
          %4657 = vmatpush1.bf16.msra.mxu0 %v4563
          %4658 = vmatprep.subr.bf16.mxu0 %v4560
          %4659 = vmatpush1.bf16.msra.mxu0 %v4559
          %4660 = vmatprep.subr.bf16.mxu0 %v4556
          %4661 = vmatpush1.bf16.msra.mxu0 %v4555
          %4662 = vmatprep.subr.bf16.mxu0 %v4552
          %4663 = vmatpush1.bf16.msra.mxu0 %v4551
          %4664 = vmatprep.subr.bf16.mxu0 %v4548
          %4665 = vmatpush1.bf16.msra.mxu0 %v4547
          %4666 = vmatprep.subr.bf16.mxu0 0
          %4667 = vmatpush2.bf16.msra.mxu0 0
          %4668 = vmatprep.subr.bf16.mxu0 0
          %4669 = vmatpush2.bf16.msra.mxu0 0
          %4670 = vmatprep.subr.bf16.mxu0 0
          %4671 = vmatpush2.bf16.msra.mxu0 0
          %4672 = vmatprep.subr.bf16.mxu0 0
          %4673 = vmatpush2.bf16.msra.mxu0 0
          %4674 = vmatprep.subr.bf16.mxu0 0
          %4675 = vmatpush2.bf16.msra.mxu0 0
          %4676 = vmatprep.subr.bf16.mxu0 0
          %4677 = vmatpush2.bf16.msra.mxu0 0
          %4678 = vmatprep.subr.bf16.mxu0 0
          %4679 = vmatpush2.bf16.msra.mxu0 0
          %4680 = vmatprep.subr.bf16.mxu0 0
          %4681 = vmatpush2.bf16.msra.mxu0 0
          %4682 = vmatprep.mubr.bf16.mxu0 0
          %4683 = vmatmul.mubr.bf16.gmra.mxu0 %v4407
          %v4684 = vpop.f32.mrf.mxu0
          %v4685 = vadd.f32 %v4447, %v4684
          %v4686 = vpop.f32.mrf.mxu0
          %v4687 = vadd.f32 %v4448, %v4686
          %v4688 = vpop.f32.mrf.mxu0
          %v4689 = vpop.f32.mrf.mxu0
          %4690 = vdwg.mxu0
          %v4691 = vadd.f32 %v4644, %v3702
          %v4692 = vadd.f32 %v4646, %v3706
          %v4693 = vadd.f32 %v4685, %v3710
          %v4694 = vadd.f32 %v4687, %v3714
          %v4695 = vxor.u32 %v4691, 2147483648
          %v4696 = vxor.u32 %v4692, 2147483648
          %v4697 = vxor.u32 %v4693, 2147483648
          %v4698 = vmul.f32 %v4695, 1.442695
          %v4699 = vpow.pop %v4698
          %v4700 = vmul.f32 %v4696, 1.442695
          %v4701 = vpow.pop %v4700
          %v4702 = vmul.f32 %v4697, 1.442695
          %v4703 = vpow.pop %v4702
          %v4704 = vadd.f32 %v4699, 1.0
          %v4705 = vadd.f32 %v4701, 1.0
          %v4706 = vadd.f32 %v4703, 1.0
          %v4707 = vrcp.pop %v4704
          %v4708 = vmul.f32 1.0, %v4707
          %v4709 = vrcp.pop %v4705
          %v4710 = vmul.f32 1.0, %v4709
          %v4711 = vrcp.pop %v4706
          %v4712 = vmul.f32 1.0, %v4711
          %v4713 = vtanh.pop %v4694
          %v4714 = vmul.f32 %v4710, %v4404
          %v4715 = vmul.f32 %v4708, %v4713
          %v4716 = vadd.f32 %v4714, %v4715
          %v4717 = vtanh.pop %v4716
          %v4718 = vmul.f32 %v4712, %v4717
          %vm4719 = vcmp.gt.s32.totalorder %v795, 4
          %v4720 = vsel %vm4719, 1, 0
          %v4721 = vcvt.s32.f32 %v4720
          %4723 = vset.pattern.permute.xlu0 0
          %4724 = vperm.xlu0 %4723, %v4721
          %v4725 = vpop.permute.xlu0 %4724
          %v4727 = vmul.f32 %v4718, %v4725
          %v4728 = vmul.f32 %v4716, %v4725
          %s4729 = scalar_lea.vmem %s307, 32 [#allocation9]
          %4730 = vst [vmem:[%s4729] sm:$0xff] %v4727
          %v4731 = vpack.c.bf16 %v4727, %v4727
          %v4732 = vld [vmem:[%s272] sm:$0xff]
          %v4733 = vld [vmem:[%s272 + $0x8] sm:$0xff]
          %v4734 = vld [vmem:[%s272 + $0x10] sm:$0xff]
          %v4735 = vld [vmem:[%s272 + $0x18] sm:$0xff]
          %v4736 = vld [vmem:[%s272 + $0x20] sm:$0xff]
          %v4737 = vld [vmem:[%s272 + $0x28] sm:$0xff]
          %v4738 = vld [vmem:[%s272 + $0x30] sm:$0xff]
          %v4739 = vld [vmem:[%s272 + $0x38] sm:$0xff]
          %v4740 = vld [vmem:[%s272 + $0x40] sm:$0xff]
          %v4741 = vld [vmem:[%s272 + $0x48] sm:$0xff]
          %v4742 = vld [vmem:[%s272 + $0x50] sm:$0xff]
          %v4743 = vld [vmem:[%s272 + $0x58] sm:$0xff]
          %v4744 = vld [vmem:[%s272 + $0x60] sm:$0xff]
          %v4745 = vld [vmem:[%s272 + $0x68] sm:$0xff]
          %v4746 = vld [vmem:[%s272 + $0x70] sm:$0xff]
          %v4747 = vld [vmem:[%s272 + $0x78] sm:$0xff]
          %v4748 = vld [vmem:[%s272 + $0x80] sm:$0xff]
          %v4749 = vld [vmem:[%s272 + $0x88] sm:$0xff]
          %v4750 = vld [vmem:[%s272 + $0x90] sm:$0xff]
          %v4751 = vld [vmem:[%s272 + $0x98] sm:$0xff]
          %v4752 = vld [vmem:[%s272 + $0xa0] sm:$0xff]
          %v4753 = vld [vmem:[%s272 + $0xa8] sm:$0xff]
          %v4754 = vld [vmem:[%s272 + $0xb0] sm:$0xff]
          %v4755 = vld [vmem:[%s272 + $0xb8] sm:$0xff]
          %v4756 = vld [vmem:[%s272 + $0xc0] sm:$0xff]
          %v4757 = vld [vmem:[%s272 + $0xc8] sm:$0xff]
          %v4758 = vld [vmem:[%s272 + $0xd0] sm:$0xff]
          %v4759 = vld [vmem:[%s272 + $0xd8] sm:$0xff]
          %v4760 = vld [vmem:[%s272 + $0xe0] sm:$0xff]
          %v4761 = vld [vmem:[%s272 + $0xe8] sm:$0xff]
          %v4762 = vld [vmem:[%s272 + $0xf0] sm:$0xff]
          %v4763 = vld [vmem:[%s272 + $0xf8] sm:$0xff]
          %s4764 = smul.u32 3, 4
          %s4765 = smul.addr %s4764, 4
          %s4766 = scalar_lea.vmem [#allocation2], %s4765
          %v4767 = vld [vmem:[%s4766] sm:$0xff]
          %v4768 = vld [vmem:[%s4766 + $0x8] sm:$0xff]
          %v4769 = vunpack.c.l.bf16 %v4767
          %v4770 = vunpack.c.h.bf16 %v4767
          %v4771 = vunpack.c.l.bf16 %v4768
          %v4772 = vunpack.c.h.bf16 %v4768
          %v4805 = vunpack.c.l.b16 %v4732
          %v4806 = vunpack.c.h.b16 %v4732
          %v4807 = vunpack.c.l.b16 %v4733
          %v4808 = vunpack.c.h.b16 %v4733
          %v4809 = vunpack.c.l.b16 %v4734
          %v4810 = vunpack.c.h.b16 %v4734
          %v4811 = vunpack.c.l.b16 %v4735
          %v4812 = vunpack.c.h.b16 %v4735
          %v4813 = vunpack.c.l.b16 %v4736
          %v4814 = vunpack.c.h.b16 %v4736
          %v4815 = vunpack.c.l.b16 %v4737
          %v4816 = vunpack.c.h.b16 %v4737
          %v4817 = vunpack.c.l.b16 %v4738
          %v4818 = vunpack.c.h.b16 %v4738
          %v4819 = vunpack.c.l.b16 %v4739
          %v4820 = vunpack.c.h.b16 %v4739
          %v4821 = vunpack.c.l.b16 %v4740
          %v4822 = vunpack.c.h.b16 %v4740
          %v4823 = vunpack.c.l.b16 %v4741
          %v4824 = vunpack.c.h.b16 %v4741
          %v4825 = vunpack.c.l.b16 %v4742
          %v4826 = vunpack.c.h.b16 %v4742
          %v4827 = vunpack.c.l.b16 %v4743
          %v4828 = vunpack.c.h.b16 %v4743
          %v4829 = vunpack.c.l.b16 %v4744
          %v4830 = vunpack.c.h.b16 %v4744
          %v4831 = vunpack.c.l.b16 %v4745
          %v4832 = vunpack.c.h.b16 %v4745
          %v4833 = vunpack.c.l.b16 %v4746
          %v4834 = vunpack.c.h.b16 %v4746
          %v4835 = vunpack.c.l.b16 %v4747
          %v4836 = vunpack.c.h.b16 %v4747
          %v4837 = vunpack.c.l.b16 %v4748
          %v4838 = vunpack.c.h.b16 %v4748
          %v4839 = vunpack.c.l.b16 %v4749
          %v4840 = vunpack.c.h.b16 %v4749
          %v4841 = vunpack.c.l.b16 %v4750
          %v4842 = vunpack.c.h.b16 %v4750
          %v4843 = vunpack.c.l.b16 %v4751
          %v4844 = vunpack.c.h.b16 %v4751
          %v4845 = vunpack.c.l.b16 %v4752
          %v4846 = vunpack.c.h.b16 %v4752
          %v4847 = vunpack.c.l.b16 %v4753
          %v4848 = vunpack.c.h.b16 %v4753
          %v4849 = vunpack.c.l.b16 %v4754
          %v4850 = vunpack.c.h.b16 %v4754
          %v4851 = vunpack.c.l.b16 %v4755
          %v4852 = vunpack.c.h.b16 %v4755
          %v4853 = vunpack.c.l.b16 %v4756
          %v4854 = vunpack.c.h.b16 %v4756
          %v4855 = vunpack.c.l.b16 %v4757
          %v4856 = vunpack.c.h.b16 %v4757
          %v4857 = vunpack.c.l.b16 %v4758
          %v4858 = vunpack.c.h.b16 %v4758
          %v4859 = vunpack.c.l.b16 %v4759
          %v4860 = vunpack.c.h.b16 %v4759
          %v4861 = vunpack.c.l.b16 %v4760
          %v4862 = vunpack.c.h.b16 %v4760
          %v4863 = vunpack.c.l.b16 %v4761
          %v4864 = vunpack.c.h.b16 %v4761
          %v4865 = vunpack.c.l.b16 %v4762
          %v4866 = vunpack.c.h.b16 %v4762
          %v4867 = vunpack.c.l.b16 %v4763
          %v4868 = vunpack.c.h.b16 %v4763
          %v4869 = vpack.c.b16 %v4809, %v4805
          %v4870 = vpack.c.b16 %v4810, %v4806
          %v4871 = vpack.c.b16 %v4811, %v4807
          %v4872 = vpack.c.b16 %v4812, %v4808
          %v4873 = vpack.c.b16 %v4817, %v4813
          %v4874 = vpack.c.b16 %v4818, %v4814
          %v4875 = vpack.c.b16 %v4819, %v4815
          %v4876 = vpack.c.b16 %v4820, %v4816
          %v4877 = vpack.c.b16 %v4825, %v4821
          %v4878 = vpack.c.b16 %v4826, %v4822
          %v4879 = vpack.c.b16 %v4827, %v4823
          %v4880 = vpack.c.b16 %v4828, %v4824
          %v4881 = vpack.c.b16 %v4833, %v4829
          %v4882 = vpack.c.b16 %v4834, %v4830
          %v4883 = vpack.c.b16 %v4835, %v4831
          %v4884 = vpack.c.b16 %v4836, %v4832
          %v4885 = vpack.c.b16 %v4841, %v4837
          %v4886 = vpack.c.b16 %v4842, %v4838
          %v4887 = vpack.c.b16 %v4843, %v4839
          %v4888 = vpack.c.b16 %v4844, %v4840
          %v4889 = vpack.c.b16 %v4849, %v4845
          %v4890 = vpack.c.b16 %v4850, %v4846
          %v4891 = vpack.c.b16 %v4851, %v4847
          %v4892 = vpack.c.b16 %v4852, %v4848
          %v4893 = vpack.c.b16 %v4857, %v4853
          %v4894 = vpack.c.b16 %v4858, %v4854
          %v4895 = vpack.c.b16 %v4859, %v4855
          %v4896 = vpack.c.b16 %v4860, %v4856
          %v4897 = vpack.c.b16 %v4865, %v4861
          %v4898 = vpack.c.b16 %v4866, %v4862
          %v4899 = vpack.c.b16 %v4867, %v4863
          %v4900 = vpack.c.b16 %v4868, %v4864
          %4933 = vmatprep.subr.bf16.mxu0 %v4898
          %4934 = vmatpush1.bf16.msra.mxu0 %v4897
          %4935 = vmatprep.subr.bf16.mxu0 %v4894
          %4936 = vmatpush1.bf16.msra.mxu0 %v4893
          %4937 = vmatprep.subr.bf16.mxu0 %v4890
          %4938 = vmatpush1.bf16.msra.mxu0 %v4889
          %4939 = vmatprep.subr.bf16.mxu0 %v4886
          %4940 = vmatpush1.bf16.msra.mxu0 %v4885
          %4941 = vmatprep.subr.bf16.mxu0 %v4882
          %4942 = vmatpush1.bf16.msra.mxu0 %v4881
          %4943 = vmatprep.subr.bf16.mxu0 %v4878
          %4944 = vmatpush1.bf16.msra.mxu0 %v4877
          %4945 = vmatprep.subr.bf16.mxu0 %v4874
          %4946 = vmatpush1.bf16.msra.mxu0 %v4873
          %4947 = vmatprep.subr.bf16.mxu0 %v4870
          %4948 = vmatpush1.bf16.msra.mxu0 %v4869
          %4949 = vmatprep.subr.bf16.mxu0 0
          %4950 = vmatpush2.bf16.msra.mxu0 0
          %4951 = vmatprep.subr.bf16.mxu0 0
          %4952 = vmatpush2.bf16.msra.mxu0 0
          %4953 = vmatprep.subr.bf16.mxu0 0
          %4954 = vmatpush2.bf16.msra.mxu0 0
          %4955 = vmatprep.subr.bf16.mxu0 0
          %4956 = vmatpush2.bf16.msra.mxu0 0
          %4957 = vmatprep.subr.bf16.mxu0 0
          %4958 = vmatpush2.bf16.msra.mxu0 0
          %4959 = vmatprep.subr.bf16.mxu0 0
          %4960 = vmatpush2.bf16.msra.mxu0 0
          %4961 = vmatprep.subr.bf16.mxu0 0
          %4962 = vmatpush2.bf16.msra.mxu0 0
          %4963 = vmatprep.subr.bf16.mxu0 0
          %4964 = vmatpush2.bf16.msra.mxu0 0
          %4965 = vmatprep.mubr.bf16.mxu0 0
          %4966 = vmatmul.mubr.bf16.gmra.mxu0 %v4731
          %v4967 = vpop.f32.mrf.mxu0
          %v4968 = vadd.f32 %v4769, %v4967
          %v4969 = vpop.f32.mrf.mxu0
          %v4970 = vadd.f32 %v4770, %v4969
          %v4971 = vpop.f32.mrf.mxu0
          %v4972 = vpop.f32.mrf.mxu0
          %4973 = vdwg.mxu0
          %4974 = vmatprep.subr.bf16.mxu0 %v4900
          %4975 = vmatpush1.bf16.msra.mxu0 %v4899
          %4976 = vmatprep.subr.bf16.mxu0 %v4896
          %4977 = vmatpush1.bf16.msra.mxu0 %v4895
          %4978 = vmatprep.subr.bf16.mxu0 %v4892
          %4979 = vmatpush1.bf16.msra.mxu0 %v4891
          %4980 = vmatprep.subr.bf16.mxu0 %v4888
          %4981 = vmatpush1.bf16.msra.mxu0 %v4887
          %4982 = vmatprep.subr.bf16.mxu0 %v4884
          %4983 = vmatpush1.bf16.msra.mxu0 %v4883
          %4984 = vmatprep.subr.bf16.mxu0 %v4880
          %4985 = vmatpush1.bf16.msra.mxu0 %v4879
          %4986 = vmatprep.subr.bf16.mxu0 %v4876
          %4987 = vmatpush1.bf16.msra.mxu0 %v4875
          %4988 = vmatprep.subr.bf16.mxu0 %v4872
          %4989 = vmatpush1.bf16.msra.mxu0 %v4871
          %4990 = vmatprep.subr.bf16.mxu0 0
          %4991 = vmatpush2.bf16.msra.mxu0 0
          %4992 = vmatprep.subr.bf16.mxu0 0
          %4993 = vmatpush2.bf16.msra.mxu0 0
          %4994 = vmatprep.subr.bf16.mxu0 0
          %4995 = vmatpush2.bf16.msra.mxu0 0
          %4996 = vmatprep.subr.bf16.mxu0 0
          %4997 = vmatpush2.bf16.msra.mxu0 0
          %4998 = vmatprep.subr.bf16.mxu0 0
          %4999 = vmatpush2.bf16.msra.mxu0 0
          %5000 = vmatprep.subr.bf16.mxu0 0
          %5001 = vmatpush2.bf16.msra.mxu0 0
          %5002 = vmatprep.subr.bf16.mxu0 0
          %5003 = vmatpush2.bf16.msra.mxu0 0
          %5004 = vmatprep.subr.bf16.mxu0 0
          %5005 = vmatpush2.bf16.msra.mxu0 0
          %5006 = vmatprep.mubr.bf16.mxu0 0
          %5007 = vmatmul.mubr.bf16.gmra.mxu0 %v4731
          %v5008 = vpop.f32.mrf.mxu0
          %v5009 = vadd.f32 %v4771, %v5008
          %v5010 = vpop.f32.mrf.mxu0
          %v5011 = vadd.f32 %v4772, %v5010
          %v5012 = vpop.f32.mrf.mxu0
          %v5013 = vpop.f32.mrf.mxu0
          %5014 = vdwg.mxu0
          %v5015 = vadd.f32 %v4968, %v3702
          %v5016 = vadd.f32 %v4970, %v3706
          %v5017 = vadd.f32 %v5009, %v3710
          %v5018 = vadd.f32 %v5011, %v3714
          %v5019 = vxor.u32 %v5015, 2147483648
          %v5020 = vxor.u32 %v5016, 2147483648
          %v5021 = vxor.u32 %v5017, 2147483648
          %v5022 = vmul.f32 %v5019, 1.442695
          %v5023 = vpow.pop %v5022
          %v5024 = vmul.f32 %v5020, 1.442695
          %v5025 = vpow.pop %v5024
          %v5026 = vmul.f32 %v5021, 1.442695
          %v5027 = vpow.pop %v5026
          %v5028 = vadd.f32 %v5023, 1.0
          %v5029 = vadd.f32 %v5025, 1.0
          %v5030 = vadd.f32 %v5027, 1.0
          %v5031 = vrcp.pop %v5028
          %v5032 = vmul.f32 1.0, %v5031
          %v5033 = vrcp.pop %v5029
          %v5034 = vmul.f32 1.0, %v5033
          %v5035 = vrcp.pop %v5030
          %v5036 = vmul.f32 1.0, %v5035
          %v5037 = vtanh.pop %v5018
          %v5038 = vmul.f32 %v5034, %v4728
          %v5039 = vmul.f32 %v5032, %v5037
          %v5040 = vadd.f32 %v5038, %v5039
          %v5041 = vtanh.pop %v5040
          %v5042 = vmul.f32 %v5036, %v5041
          %vm5043 = vcmp.gt.s32.totalorder %v795, 3
          %v5044 = vsel %vm5043, 1, 0
          %v5045 = vcvt.s32.f32 %v5044
          %5047 = vset.pattern.permute.xlu0 0
          %5048 = vperm.xlu0 %5047, %v5045
          %v5049 = vpop.permute.xlu0 %5048
          %v5051 = vmul.f32 %v5042, %v5049
          %v5052 = vmul.f32 %v5040, %v5049
          %s5053 = scalar_lea.vmem %s307, 24 [#allocation9]
          %5054 = vst [vmem:[%s5053] sm:$0xff] %v5051
          %v5055 = vpack.c.bf16 %v5051, %v5051
          %v5056 = vld [vmem:[%s272] sm:$0xff]
          %v5057 = vld [vmem:[%s272 + $0x8] sm:$0xff]
          %v5058 = vld [vmem:[%s272 + $0x10] sm:$0xff]
          %v5059 = vld [vmem:[%s272 + $0x18] sm:$0xff]
          %v5060 = vld [vmem:[%s272 + $0x20] sm:$0xff]
          %v5061 = vld [vmem:[%s272 + $0x28] sm:$0xff]
          %v5062 = vld [vmem:[%s272 + $0x30] sm:$0xff]
          %v5063 = vld [vmem:[%s272 + $0x38] sm:$0xff]
          %v5064 = vld [vmem:[%s272 + $0x40] sm:$0xff]
          %v5065 = vld [vmem:[%s272 + $0x48] sm:$0xff]
          %v5066 = vld [vmem:[%s272 + $0x50] sm:$0xff]
          %v5067 = vld [vmem:[%s272 + $0x58] sm:$0xff]
          %v5068 = vld [vmem:[%s272 + $0x60] sm:$0xff]
          %v5069 = vld [vmem:[%s272 + $0x68] sm:$0xff]
          %v5070 = vld [vmem:[%s272 + $0x70] sm:$0xff]
          %v5071 = vld [vmem:[%s272 + $0x78] sm:$0xff]
          %v5072 = vld [vmem:[%s272 + $0x80] sm:$0xff]
          %v5073 = vld [vmem:[%s272 + $0x88] sm:$0xff]
          %v5074 = vld [vmem:[%s272 + $0x90] sm:$0xff]
          %v5075 = vld [vmem:[%s272 + $0x98] sm:$0xff]
          %v5076 = vld [vmem:[%s272 + $0xa0] sm:$0xff]
          %v5077 = vld [vmem:[%s272 + $0xa8] sm:$0xff]
          %v5078 = vld [vmem:[%s272 + $0xb0] sm:$0xff]
          %v5079 = vld [vmem:[%s272 + $0xb8] sm:$0xff]
          %v5080 = vld [vmem:[%s272 + $0xc0] sm:$0xff]
          %v5081 = vld [vmem:[%s272 + $0xc8] sm:$0xff]
          %v5082 = vld [vmem:[%s272 + $0xd0] sm:$0xff]
          %v5083 = vld [vmem:[%s272 + $0xd8] sm:$0xff]
          %v5084 = vld [vmem:[%s272 + $0xe0] sm:$0xff]
          %v5085 = vld [vmem:[%s272 + $0xe8] sm:$0xff]
          %v5086 = vld [vmem:[%s272 + $0xf0] sm:$0xff]
          %v5087 = vld [vmem:[%s272 + $0xf8] sm:$0xff]
          %s5088 = smul.u32 2, 4
          %s5089 = smul.addr %s5088, 4
          %s5090 = scalar_lea.vmem [#allocation2], %s5089
          %v5091 = vld [vmem:[%s5090] sm:$0xff]
          %v5092 = vld [vmem:[%s5090 + $0x8] sm:$0xff]
          %v5093 = vunpack.c.l.bf16 %v5091
          %v5094 = vunpack.c.h.bf16 %v5091
          %v5095 = vunpack.c.l.bf16 %v5092
          %v5096 = vunpack.c.h.bf16 %v5092
          %v5129 = vunpack.c.l.b16 %v5056
          %v5130 = vunpack.c.h.b16 %v5056
          %v5131 = vunpack.c.l.b16 %v5057
          %v5132 = vunpack.c.h.b16 %v5057
          %v5133 = vunpack.c.l.b16 %v5058
          %v5134 = vunpack.c.h.b16 %v5058
          %v5135 = vunpack.c.l.b16 %v5059
          %v5136 = vunpack.c.h.b16 %v5059
          %v5137 = vunpack.c.l.b16 %v5060
          %v5138 = vunpack.c.h.b16 %v5060
          %v5139 = vunpack.c.l.b16 %v5061
          %v5140 = vunpack.c.h.b16 %v5061
          %v5141 = vunpack.c.l.b16 %v5062
          %v5142 = vunpack.c.h.b16 %v5062
          %v5143 = vunpack.c.l.b16 %v5063
          %v5144 = vunpack.c.h.b16 %v5063
          %v5145 = vunpack.c.l.b16 %v5064
          %v5146 = vunpack.c.h.b16 %v5064
          %v5147 = vunpack.c.l.b16 %v5065
          %v5148 = vunpack.c.h.b16 %v5065
          %v5149 = vunpack.c.l.b16 %v5066
          %v5150 = vunpack.c.h.b16 %v5066
          %v5151 = vunpack.c.l.b16 %v5067
          %v5152 = vunpack.c.h.b16 %v5067
          %v5153 = vunpack.c.l.b16 %v5068
          %v5154 = vunpack.c.h.b16 %v5068
          %v5155 = vunpack.c.l.b16 %v5069
          %v5156 = vunpack.c.h.b16 %v5069
          %v5157 = vunpack.c.l.b16 %v5070
          %v5158 = vunpack.c.h.b16 %v5070
          %v5159 = vunpack.c.l.b16 %v5071
          %v5160 = vunpack.c.h.b16 %v5071
          %v5161 = vunpack.c.l.b16 %v5072
          %v5162 = vunpack.c.h.b16 %v5072
          %v5163 = vunpack.c.l.b16 %v5073
          %v5164 = vunpack.c.h.b16 %v5073
          %v5165 = vunpack.c.l.b16 %v5074
          %v5166 = vunpack.c.h.b16 %v5074
          %v5167 = vunpack.c.l.b16 %v5075
          %v5168 = vunpack.c.h.b16 %v5075
          %v5169 = vunpack.c.l.b16 %v5076
          %v5170 = vunpack.c.h.b16 %v5076
          %v5171 = vunpack.c.l.b16 %v5077
          %v5172 = vunpack.c.h.b16 %v5077
          %v5173 = vunpack.c.l.b16 %v5078
          %v5174 = vunpack.c.h.b16 %v5078
          %v5175 = vunpack.c.l.b16 %v5079
          %v5176 = vunpack.c.h.b16 %v5079
          %v5177 = vunpack.c.l.b16 %v5080
          %v5178 = vunpack.c.h.b16 %v5080
          %v5179 = vunpack.c.l.b16 %v5081
          %v5180 = vunpack.c.h.b16 %v5081
          %v5181 = vunpack.c.l.b16 %v5082
          %v5182 = vunpack.c.h.b16 %v5082
          %v5183 = vunpack.c.l.b16 %v5083
          %v5184 = vunpack.c.h.b16 %v5083
          %v5185 = vunpack.c.l.b16 %v5084
          %v5186 = vunpack.c.h.b16 %v5084
          %v5187 = vunpack.c.l.b16 %v5085
          %v5188 = vunpack.c.h.b16 %v5085
          %v5189 = vunpack.c.l.b16 %v5086
          %v5190 = vunpack.c.h.b16 %v5086
          %v5191 = vunpack.c.l.b16 %v5087
          %v5192 = vunpack.c.h.b16 %v5087
          %v5193 = vpack.c.b16 %v5133, %v5129
          %v5194 = vpack.c.b16 %v5134, %v5130
          %v5195 = vpack.c.b16 %v5135, %v5131
          %v5196 = vpack.c.b16 %v5136, %v5132
          %v5197 = vpack.c.b16 %v5141, %v5137
          %v5198 = vpack.c.b16 %v5142, %v5138
          %v5199 = vpack.c.b16 %v5143, %v5139
          %v5200 = vpack.c.b16 %v5144, %v5140
          %v5201 = vpack.c.b16 %v5149, %v5145
          %v5202 = vpack.c.b16 %v5150, %v5146
          %v5203 = vpack.c.b16 %v5151, %v5147
          %v5204 = vpack.c.b16 %v5152, %v5148
          %v5205 = vpack.c.b16 %v5157, %v5153
          %v5206 = vpack.c.b16 %v5158, %v5154
          %v5207 = vpack.c.b16 %v5159, %v5155
          %v5208 = vpack.c.b16 %v5160, %v5156
          %v5209 = vpack.c.b16 %v5165, %v5161
          %v5210 = vpack.c.b16 %v5166, %v5162
          %v5211 = vpack.c.b16 %v5167, %v5163
          %v5212 = vpack.c.b16 %v5168, %v5164
          %v5213 = vpack.c.b16 %v5173, %v5169
          %v5214 = vpack.c.b16 %v5174, %v5170
          %v5215 = vpack.c.b16 %v5175, %v5171
          %v5216 = vpack.c.b16 %v5176, %v5172
          %v5217 = vpack.c.b16 %v5181, %v5177
          %v5218 = vpack.c.b16 %v5182, %v5178
          %v5219 = vpack.c.b16 %v5183, %v5179
          %v5220 = vpack.c.b16 %v5184, %v5180
          %v5221 = vpack.c.b16 %v5189, %v5185
          %v5222 = vpack.c.b16 %v5190, %v5186
          %v5223 = vpack.c.b16 %v5191, %v5187
          %v5224 = vpack.c.b16 %v5192, %v5188
          %5257 = vmatprep.subr.bf16.mxu0 %v5222
          %5258 = vmatpush1.bf16.msra.mxu0 %v5221
          %5259 = vmatprep.subr.bf16.mxu0 %v5218
          %5260 = vmatpush1.bf16.msra.mxu0 %v5217
          %5261 = vmatprep.subr.bf16.mxu0 %v5214
          %5262 = vmatpush1.bf16.msra.mxu0 %v5213
          %5263 = vmatprep.subr.bf16.mxu0 %v5210
          %5264 = vmatpush1.bf16.msra.mxu0 %v5209
          %5265 = vmatprep.subr.bf16.mxu0 %v5206
          %5266 = vmatpush1.bf16.msra.mxu0 %v5205
          %5267 = vmatprep.subr.bf16.mxu0 %v5202
          %5268 = vmatpush1.bf16.msra.mxu0 %v5201
          %5269 = vmatprep.subr.bf16.mxu0 %v5198
          %5270 = vmatpush1.bf16.msra.mxu0 %v5197
          %5271 = vmatprep.subr.bf16.mxu0 %v5194
          %5272 = vmatpush1.bf16.msra.mxu0 %v5193
          %5273 = vmatprep.subr.bf16.mxu0 0
          %5274 = vmatpush2.bf16.msra.mxu0 0
          %5275 = vmatprep.subr.bf16.mxu0 0
          %5276 = vmatpush2.bf16.msra.mxu0 0
          %5277 = vmatprep.subr.bf16.mxu0 0
          %5278 = vmatpush2.bf16.msra.mxu0 0
          %5279 = vmatprep.subr.bf16.mxu0 0
          %5280 = vmatpush2.bf16.msra.mxu0 0
          %5281 = vmatprep.subr.bf16.mxu0 0
          %5282 = vmatpush2.bf16.msra.mxu0 0
          %5283 = vmatprep.subr.bf16.mxu0 0
          %5284 = vmatpush2.bf16.msra.mxu0 0
          %5285 = vmatprep.subr.bf16.mxu0 0
          %5286 = vmatpush2.bf16.msra.mxu0 0
          %5287 = vmatprep.subr.bf16.mxu0 0
          %5288 = vmatpush2.bf16.msra.mxu0 0
          %5289 = vmatprep.mubr.bf16.mxu0 0
          %5290 = vmatmul.mubr.bf16.gmra.mxu0 %v5055
          %v5291 = vpop.f32.mrf.mxu0
          %v5292 = vadd.f32 %v5093, %v5291
          %v5293 = vpop.f32.mrf.mxu0
          %v5294 = vadd.f32 %v5094, %v5293
          %v5295 = vpop.f32.mrf.mxu0
          %v5296 = vpop.f32.mrf.mxu0
          %5297 = vdwg.mxu0
          %5298 = vmatprep.subr.bf16.mxu0 %v5224
          %5299 = vmatpush1.bf16.msra.mxu0 %v5223
          %5300 = vmatprep.subr.bf16.mxu0 %v5220
          %5301 = vmatpush1.bf16.msra.mxu0 %v5219
          %5302 = vmatprep.subr.bf16.mxu0 %v5216
          %5303 = vmatpush1.bf16.msra.mxu0 %v5215
          %5304 = vmatprep.subr.bf16.mxu0 %v5212
          %5305 = vmatpush1.bf16.msra.mxu0 %v5211
          %5306 = vmatprep.subr.bf16.mxu0 %v5208
          %5307 = vmatpush1.bf16.msra.mxu0 %v5207
          %5308 = vmatprep.subr.bf16.mxu0 %v5204
          %5309 = vmatpush1.bf16.msra.mxu0 %v5203
          %5310 = vmatprep.subr.bf16.mxu0 %v5200
          %5311 = vmatpush1.bf16.msra.mxu0 %v5199
          %5312 = vmatprep.subr.bf16.mxu0 %v5196
          %5313 = vmatpush1.bf16.msra.mxu0 %v5195
          %5314 = vmatprep.subr.bf16.mxu0 0
          %5315 = vmatpush2.bf16.msra.mxu0 0
          %5316 = vmatprep.subr.bf16.mxu0 0
          %5317 = vmatpush2.bf16.msra.mxu0 0
          %5318 = vmatprep.subr.bf16.mxu0 0
          %5319 = vmatpush2.bf16.msra.mxu0 0
          %5320 = vmatprep.subr.bf16.mxu0 0
          %5321 = vmatpush2.bf16.msra.mxu0 0
          %5322 = vmatprep.subr.bf16.mxu0 0
          %5323 = vmatpush2.bf16.msra.mxu0 0
          %5324 = vmatprep.subr.bf16.mxu0 0
          %5325 = vmatpush2.bf16.msra.mxu0 0
          %5326 = vmatprep.subr.bf16.mxu0 0
          %5327 = vmatpush2.bf16.msra.mxu0 0
          %5328 = vmatprep.subr.bf16.mxu0 0
          %5329 = vmatpush2.bf16.msra.mxu0 0
          %5330 = vmatprep.mubr.bf16.mxu0 0
          %5331 = vmatmul.mubr.bf16.gmra.mxu0 %v5055
          %v5332 = vpop.f32.mrf.mxu0
          %v5333 = vadd.f32 %v5095, %v5332
          %v5334 = vpop.f32.mrf.mxu0
          %v5335 = vadd.f32 %v5096, %v5334
          %v5336 = vpop.f32.mrf.mxu0
          %v5337 = vpop.f32.mrf.mxu0
          %5338 = vdwg.mxu0
          %v5339 = vadd.f32 %v5292, %v3702
          %v5340 = vadd.f32 %v5294, %v3706
          %v5341 = vadd.f32 %v5333, %v3710
          %v5342 = vadd.f32 %v5335, %v3714
          %v5343 = vxor.u32 %v5339, 2147483648
          %v5344 = vxor.u32 %v5340, 2147483648
          %v5345 = vxor.u32 %v5341, 2147483648
          %v5346 = vmul.f32 %v5343, 1.442695
          %v5347 = vpow.pop %v5346
          %v5348 = vmul.f32 %v5344, 1.442695
          %v5349 = vpow.pop %v5348
          %v5350 = vmul.f32 %v5345, 1.442695
          %v5351 = vpow.pop %v5350
          %v5352 = vadd.f32 %v5347, 1.0
          %v5353 = vadd.f32 %v5349, 1.0
          %v5354 = vadd.f32 %v5351, 1.0
          %v5355 = vrcp.pop %v5352
          %v5356 = vmul.f32 1.0, %v5355
          %v5357 = vrcp.pop %v5353
          %v5358 = vmul.f32 1.0, %v5357
          %v5359 = vrcp.pop %v5354
          %v5360 = vmul.f32 1.0, %v5359
          %v5361 = vtanh.pop %v5342
          %v5362 = vmul.f32 %v5358, %v5052
          %v5363 = vmul.f32 %v5356, %v5361
          %v5364 = vadd.f32 %v5362, %v5363
          %v5365 = vtanh.pop %v5364
          %v5366 = vmul.f32 %v5360, %v5365
          %vm5367 = vcmp.gt.s32.totalorder %v795, 2
          %v5368 = vsel %vm5367, 1, 0
          %v5369 = vcvt.s32.f32 %v5368
          %5371 = vset.pattern.permute.xlu0 0
          %5372 = vperm.xlu0 %5371, %v5369
          %v5373 = vpop.permute.xlu0 %5372
          %v5375 = vmul.f32 %v5366, %v5373
          %v5376 = vmul.f32 %v5364, %v5373
          %s5377 = scalar_lea.vmem %s307, 16 [#allocation9]
          %5378 = vst [vmem:[%s5377] sm:$0xff] %v5375
          %v5379 = vpack.c.bf16 %v5375, %v5375
          %v5380 = vld [vmem:[%s272] sm:$0xff]
          %v5381 = vld [vmem:[%s272 + $0x8] sm:$0xff]
          %v5382 = vld [vmem:[%s272 + $0x10] sm:$0xff]
          %v5383 = vld [vmem:[%s272 + $0x18] sm:$0xff]
          %v5384 = vld [vmem:[%s272 + $0x20] sm:$0xff]
          %v5385 = vld [vmem:[%s272 + $0x28] sm:$0xff]
          %v5386 = vld [vmem:[%s272 + $0x30] sm:$0xff]
          %v5387 = vld [vmem:[%s272 + $0x38] sm:$0xff]
          %v5388 = vld [vmem:[%s272 + $0x40] sm:$0xff]
          %v5389 = vld [vmem:[%s272 + $0x48] sm:$0xff]
          %v5390 = vld [vmem:[%s272 + $0x50] sm:$0xff]
          %v5391 = vld [vmem:[%s272 + $0x58] sm:$0xff]
          %v5392 = vld [vmem:[%s272 + $0x60] sm:$0xff]
          %v5393 = vld [vmem:[%s272 + $0x68] sm:$0xff]
          %v5394 = vld [vmem:[%s272 + $0x70] sm:$0xff]
          %v5395 = vld [vmem:[%s272 + $0x78] sm:$0xff]
          %v5396 = vld [vmem:[%s272 + $0x80] sm:$0xff]
          %v5397 = vld [vmem:[%s272 + $0x88] sm:$0xff]
          %v5398 = vld [vmem:[%s272 + $0x90] sm:$0xff]
          %v5399 = vld [vmem:[%s272 + $0x98] sm:$0xff]
          %v5400 = vld [vmem:[%s272 + $0xa0] sm:$0xff]
          %v5401 = vld [vmem:[%s272 + $0xa8] sm:$0xff]
          %v5402 = vld [vmem:[%s272 + $0xb0] sm:$0xff]
          %v5403 = vld [vmem:[%s272 + $0xb8] sm:$0xff]
          %v5404 = vld [vmem:[%s272 + $0xc0] sm:$0xff]
          %v5405 = vld [vmem:[%s272 + $0xc8] sm:$0xff]
          %v5406 = vld [vmem:[%s272 + $0xd0] sm:$0xff]
          %v5407 = vld [vmem:[%s272 + $0xd8] sm:$0xff]
          %v5408 = vld [vmem:[%s272 + $0xe0] sm:$0xff]
          %v5409 = vld [vmem:[%s272 + $0xe8] sm:$0xff]
          %v5410 = vld [vmem:[%s272 + $0xf0] sm:$0xff]
          %v5411 = vld [vmem:[%s272 + $0xf8] sm:$0xff]
          %s5412 = smul.u32 1, 4
          %s5413 = smul.addr %s5412, 4
          %s5414 = scalar_lea.vmem [#allocation2], %s5413
          %v5415 = vld [vmem:[%s5414] sm:$0xff]
          %v5416 = vld [vmem:[%s5414 + $0x8] sm:$0xff]
          %v5417 = vunpack.c.l.bf16 %v5415
          %v5418 = vunpack.c.h.bf16 %v5415
          %v5419 = vunpack.c.l.bf16 %v5416
          %v5420 = vunpack.c.h.bf16 %v5416
          %v5453 = vunpack.c.l.b16 %v5380
          %v5454 = vunpack.c.h.b16 %v5380
          %v5455 = vunpack.c.l.b16 %v5381
          %v5456 = vunpack.c.h.b16 %v5381
          %v5457 = vunpack.c.l.b16 %v5382
          %v5458 = vunpack.c.h.b16 %v5382
          %v5459 = vunpack.c.l.b16 %v5383
          %v5460 = vunpack.c.h.b16 %v5383
          %v5461 = vunpack.c.l.b16 %v5384
          %v5462 = vunpack.c.h.b16 %v5384
          %v5463 = vunpack.c.l.b16 %v5385
          %v5464 = vunpack.c.h.b16 %v5385
          %v5465 = vunpack.c.l.b16 %v5386
          %v5466 = vunpack.c.h.b16 %v5386
          %v5467 = vunpack.c.l.b16 %v5387
          %v5468 = vunpack.c.h.b16 %v5387
          %v5469 = vunpack.c.l.b16 %v5388
          %v5470 = vunpack.c.h.b16 %v5388
          %v5471 = vunpack.c.l.b16 %v5389
          %v5472 = vunpack.c.h.b16 %v5389
          %v5473 = vunpack.c.l.b16 %v5390
          %v5474 = vunpack.c.h.b16 %v5390
          %v5475 = vunpack.c.l.b16 %v5391
          %v5476 = vunpack.c.h.b16 %v5391
          %v5477 = vunpack.c.l.b16 %v5392
          %v5478 = vunpack.c.h.b16 %v5392
          %v5479 = vunpack.c.l.b16 %v5393
          %v5480 = vunpack.c.h.b16 %v5393
          %v5481 = vunpack.c.l.b16 %v5394
          %v5482 = vunpack.c.h.b16 %v5394
          %v5483 = vunpack.c.l.b16 %v5395
          %v5484 = vunpack.c.h.b16 %v5395
          %v5485 = vunpack.c.l.b16 %v5396
          %v5486 = vunpack.c.h.b16 %v5396
          %v5487 = vunpack.c.l.b16 %v5397
          %v5488 = vunpack.c.h.b16 %v5397
          %v5489 = vunpack.c.l.b16 %v5398
          %v5490 = vunpack.c.h.b16 %v5398
          %v5491 = vunpack.c.l.b16 %v5399
          %v5492 = vunpack.c.h.b16 %v5399
          %v5493 = vunpack.c.l.b16 %v5400
          %v5494 = vunpack.c.h.b16 %v5400
          %v5495 = vunpack.c.l.b16 %v5401
          %v5496 = vunpack.c.h.b16 %v5401
          %v5497 = vunpack.c.l.b16 %v5402
          %v5498 = vunpack.c.h.b16 %v5402
          %v5499 = vunpack.c.l.b16 %v5403
          %v5500 = vunpack.c.h.b16 %v5403
          %v5501 = vunpack.c.l.b16 %v5404
          %v5502 = vunpack.c.h.b16 %v5404
          %v5503 = vunpack.c.l.b16 %v5405
          %v5504 = vunpack.c.h.b16 %v5405
          %v5505 = vunpack.c.l.b16 %v5406
          %v5506 = vunpack.c.h.b16 %v5406
          %v5507 = vunpack.c.l.b16 %v5407
          %v5508 = vunpack.c.h.b16 %v5407
          %v5509 = vunpack.c.l.b16 %v5408
          %v5510 = vunpack.c.h.b16 %v5408
          %v5511 = vunpack.c.l.b16 %v5409
          %v5512 = vunpack.c.h.b16 %v5409
          %v5513 = vunpack.c.l.b16 %v5410
          %v5514 = vunpack.c.h.b16 %v5410
          %v5515 = vunpack.c.l.b16 %v5411
          %v5516 = vunpack.c.h.b16 %v5411
          %v5517 = vpack.c.b16 %v5457, %v5453
          %v5518 = vpack.c.b16 %v5458, %v5454
          %v5519 = vpack.c.b16 %v5459, %v5455
          %v5520 = vpack.c.b16 %v5460, %v5456
          %v5521 = vpack.c.b16 %v5465, %v5461
          %v5522 = vpack.c.b16 %v5466, %v5462
          %v5523 = vpack.c.b16 %v5467, %v5463
          %v5524 = vpack.c.b16 %v5468, %v5464
          %v5525 = vpack.c.b16 %v5473, %v5469
          %v5526 = vpack.c.b16 %v5474, %v5470
          %v5527 = vpack.c.b16 %v5475, %v5471
          %v5528 = vpack.c.b16 %v5476, %v5472
          %v5529 = vpack.c.b16 %v5481, %v5477
          %v5530 = vpack.c.b16 %v5482, %v5478
          %v5531 = vpack.c.b16 %v5483, %v5479
          %v5532 = vpack.c.b16 %v5484, %v5480
          %v5533 = vpack.c.b16 %v5489, %v5485
          %v5534 = vpack.c.b16 %v5490, %v5486
          %v5535 = vpack.c.b16 %v5491, %v5487
          %v5536 = vpack.c.b16 %v5492, %v5488
          %v5537 = vpack.c.b16 %v5497, %v5493
          %v5538 = vpack.c.b16 %v5498, %v5494
          %v5539 = vpack.c.b16 %v5499, %v5495
          %v5540 = vpack.c.b16 %v5500, %v5496
          %v5541 = vpack.c.b16 %v5505, %v5501
          %v5542 = vpack.c.b16 %v5506, %v5502
          %v5543 = vpack.c.b16 %v5507, %v5503
          %v5544 = vpack.c.b16 %v5508, %v5504
          %v5545 = vpack.c.b16 %v5513, %v5509
          %v5546 = vpack.c.b16 %v5514, %v5510
          %v5547 = vpack.c.b16 %v5515, %v5511
          %v5548 = vpack.c.b16 %v5516, %v5512
          %5581 = vmatprep.subr.bf16.mxu0 %v5546
          %5582 = vmatpush1.bf16.msra.mxu0 %v5545
          %5583 = vmatprep.subr.bf16.mxu0 %v5542
          %5584 = vmatpush1.bf16.msra.mxu0 %v5541
          %5585 = vmatprep.subr.bf16.mxu0 %v5538
          %5586 = vmatpush1.bf16.msra.mxu0 %v5537
          %5587 = vmatprep.subr.bf16.mxu0 %v5534
          %5588 = vmatpush1.bf16.msra.mxu0 %v5533
          %5589 = vmatprep.subr.bf16.mxu0 %v5530
          %5590 = vmatpush1.bf16.msra.mxu0 %v5529
          %5591 = vmatprep.subr.bf16.mxu0 %v5526
          %5592 = vmatpush1.bf16.msra.mxu0 %v5525
          %5593 = vmatprep.subr.bf16.mxu0 %v5522
          %5594 = vmatpush1.bf16.msra.mxu0 %v5521
          %5595 = vmatprep.subr.bf16.mxu0 %v5518
          %5596 = vmatpush1.bf16.msra.mxu0 %v5517
          %5597 = vmatprep.subr.bf16.mxu0 0
          %5598 = vmatpush2.bf16.msra.mxu0 0
          %5599 = vmatprep.subr.bf16.mxu0 0
          %5600 = vmatpush2.bf16.msra.mxu0 0
          %5601 = vmatprep.subr.bf16.mxu0 0
          %5602 = vmatpush2.bf16.msra.mxu0 0
          %5603 = vmatprep.subr.bf16.mxu0 0
          %5604 = vmatpush2.bf16.msra.mxu0 0
          %5605 = vmatprep.subr.bf16.mxu0 0
          %5606 = vmatpush2.bf16.msra.mxu0 0
          %5607 = vmatprep.subr.bf16.mxu0 0
          %5608 = vmatpush2.bf16.msra.mxu0 0
          %5609 = vmatprep.subr.bf16.mxu0 0
          %5610 = vmatpush2.bf16.msra.mxu0 0
          %5611 = vmatprep.subr.bf16.mxu0 0
          %5612 = vmatpush2.bf16.msra.mxu0 0
          %5613 = vmatprep.mubr.bf16.mxu0 0
          %5614 = vmatmul.mubr.bf16.gmra.mxu0 %v5379
          %v5615 = vpop.f32.mrf.mxu0
          %v5616 = vadd.f32 %v5417, %v5615
          %v5617 = vpop.f32.mrf.mxu0
          %v5618 = vadd.f32 %v5418, %v5617
          %v5619 = vpop.f32.mrf.mxu0
          %v5620 = vpop.f32.mrf.mxu0
          %5621 = vdwg.mxu0
          %5622 = vmatprep.subr.bf16.mxu0 %v5548
          %5623 = vmatpush1.bf16.msra.mxu0 %v5547
          %5624 = vmatprep.subr.bf16.mxu0 %v5544
          %5625 = vmatpush1.bf16.msra.mxu0 %v5543
          %5626 = vmatprep.subr.bf16.mxu0 %v5540
          %5627 = vmatpush1.bf16.msra.mxu0 %v5539
          %5628 = vmatprep.subr.bf16.mxu0 %v5536
          %5629 = vmatpush1.bf16.msra.mxu0 %v5535
          %5630 = vmatprep.subr.bf16.mxu0 %v5532
          %5631 = vmatpush1.bf16.msra.mxu0 %v5531
          %5632 = vmatprep.subr.bf16.mxu0 %v5528
          %5633 = vmatpush1.bf16.msra.mxu0 %v5527
          %5634 = vmatprep.subr.bf16.mxu0 %v5524
          %5635 = vmatpush1.bf16.msra.mxu0 %v5523
          %5636 = vmatprep.subr.bf16.mxu0 %v5520
          %5637 = vmatpush1.bf16.msra.mxu0 %v5519
          %5638 = vmatprep.subr.bf16.mxu0 0
          %5639 = vmatpush2.bf16.msra.mxu0 0
          %5640 = vmatprep.subr.bf16.mxu0 0
          %5641 = vmatpush2.bf16.msra.mxu0 0
          %5642 = vmatprep.subr.bf16.mxu0 0
          %5643 = vmatpush2.bf16.msra.mxu0 0
          %5644 = vmatprep.subr.bf16.mxu0 0
          %5645 = vmatpush2.bf16.msra.mxu0 0
          %5646 = vmatprep.subr.bf16.mxu0 0
          %5647 = vmatpush2.bf16.msra.mxu0 0
          %5648 = vmatprep.subr.bf16.mxu0 0
          %5649 = vmatpush2.bf16.msra.mxu0 0
          %5650 = vmatprep.subr.bf16.mxu0 0
          %5651 = vmatpush2.bf16.msra.mxu0 0
          %5652 = vmatprep.subr.bf16.mxu0 0
          %5653 = vmatpush2.bf16.msra.mxu0 0
          %5654 = vmatprep.mubr.bf16.mxu0 0
          %5655 = vmatmul.mubr.bf16.gmra.mxu0 %v5379
          %v5656 = vpop.f32.mrf.mxu0
          %v5657 = vadd.f32 %v5419, %v5656
          %v5658 = vpop.f32.mrf.mxu0
          %v5659 = vadd.f32 %v5420, %v5658
          %v5660 = vpop.f32.mrf.mxu0
          %v5661 = vpop.f32.mrf.mxu0
          %5662 = vdwg.mxu0
          %v5663 = vadd.f32 %v5616, %v3702
          %v5664 = vadd.f32 %v5618, %v3706
          %v5665 = vadd.f32 %v5657, %v3710
          %v5666 = vadd.f32 %v5659, %v3714
          %v5667 = vxor.u32 %v5663, 2147483648
          %v5668 = vxor.u32 %v5664, 2147483648
          %v5669 = vxor.u32 %v5665, 2147483648
          %v5670 = vmul.f32 %v5667, 1.442695
          %v5671 = vpow.pop %v5670
          %v5672 = vmul.f32 %v5668, 1.442695
          %v5673 = vpow.pop %v5672
          %v5674 = vmul.f32 %v5669, 1.442695
          %v5675 = vpow.pop %v5674
          %v5676 = vadd.f32 %v5671, 1.0
          %v5677 = vadd.f32 %v5673, 1.0
          %v5678 = vadd.f32 %v5675, 1.0
          %v5679 = vrcp.pop %v5676
          %v5680 = vmul.f32 1.0, %v5679
          %v5681 = vrcp.pop %v5677
          %v5682 = vmul.f32 1.0, %v5681
          %v5683 = vrcp.pop %v5678
          %v5684 = vmul.f32 1.0, %v5683
          %v5685 = vtanh.pop %v5666
          %v5686 = vmul.f32 %v5682, %v5376
          %v5687 = vmul.f32 %v5680, %v5685
          %v5688 = vadd.f32 %v5686, %v5687
          %v5689 = vtanh.pop %v5688
          %v5690 = vmul.f32 %v5684, %v5689
          %vm5691 = vcmp.gt.s32.totalorder %v795, 1
          %v5692 = vsel %vm5691, 1, 0
          %v5693 = vcvt.s32.f32 %v5692
          %5695 = vset.pattern.permute.xlu0 0
          %5696 = vperm.xlu0 %5695, %v5693
          %v5697 = vpop.permute.xlu0 %5696
          %v5699 = vmul.f32 %v5690, %v5697
          %v5700 = vmul.f32 %v5688, %v5697
          %s5701 = scalar_lea.vmem %s307, 8 [#allocation9]
          %5702 = vst [vmem:[%s5701] sm:$0xff] %v5699
          %v5703 = vpack.c.bf16 %v5699, %v5699
          %v5704 = vld [vmem:[%s272] sm:$0xff]
          %v5705 = vld [vmem:[%s272 + $0x8] sm:$0xff]
          %v5706 = vld [vmem:[%s272 + $0x10] sm:$0xff]
          %v5707 = vld [vmem:[%s272 + $0x18] sm:$0xff]
          %v5708 = vld [vmem:[%s272 + $0x20] sm:$0xff]
          %v5709 = vld [vmem:[%s272 + $0x28] sm:$0xff]
          %v5710 = vld [vmem:[%s272 + $0x30] sm:$0xff]
          %v5711 = vld [vmem:[%s272 + $0x38] sm:$0xff]
          %v5712 = vld [vmem:[%s272 + $0x40] sm:$0xff]
          %v5713 = vld [vmem:[%s272 + $0x48] sm:$0xff]
          %v5714 = vld [vmem:[%s272 + $0x50] sm:$0xff]
          %v5715 = vld [vmem:[%s272 + $0x58] sm:$0xff]
          %v5716 = vld [vmem:[%s272 + $0x60] sm:$0xff]
          %v5717 = vld [vmem:[%s272 + $0x68] sm:$0xff]
          %v5718 = vld [vmem:[%s272 + $0x70] sm:$0xff]
          %v5719 = vld [vmem:[%s272 + $0x78] sm:$0xff]
          %v5720 = vld [vmem:[%s272 + $0x80] sm:$0xff]
          %v5721 = vld [vmem:[%s272 + $0x88] sm:$0xff]
          %v5722 = vld [vmem:[%s272 + $0x90] sm:$0xff]
          %v5723 = vld [vmem:[%s272 + $0x98] sm:$0xff]
          %v5724 = vld [vmem:[%s272 + $0xa0] sm:$0xff]
          %v5725 = vld [vmem:[%s272 + $0xa8] sm:$0xff]
          %v5726 = vld [vmem:[%s272 + $0xb0] sm:$0xff]
          %v5727 = vld [vmem:[%s272 + $0xb8] sm:$0xff]
          %v5728 = vld [vmem:[%s272 + $0xc0] sm:$0xff]
          %v5729 = vld [vmem:[%s272 + $0xc8] sm:$0xff]
          %v5730 = vld [vmem:[%s272 + $0xd0] sm:$0xff]
          %v5731 = vld [vmem:[%s272 + $0xd8] sm:$0xff]
          %v5732 = vld [vmem:[%s272 + $0xe0] sm:$0xff]
          %v5733 = vld [vmem:[%s272 + $0xe8] sm:$0xff]
          %v5734 = vld [vmem:[%s272 + $0xf0] sm:$0xff]
          %v5735 = vld [vmem:[%s272 + $0xf8] sm:$0xff]
          %s5736 = smul.u32 0, 4
          %s5737 = smul.addr %s5736, 4
          %s5738 = scalar_lea.vmem [#allocation2], %s5737
          %v5739 = vld [vmem:[%s5738] sm:$0xff]
          %v5740 = vld [vmem:[%s5738 + $0x8] sm:$0xff]
          %v5741 = vunpack.c.l.bf16 %v5739
          %v5742 = vunpack.c.h.bf16 %v5739
          %v5743 = vunpack.c.l.bf16 %v5740
          %v5744 = vunpack.c.h.bf16 %v5740
          %v5777 = vunpack.c.l.b16 %v5704
          %v5778 = vunpack.c.h.b16 %v5704
          %v5779 = vunpack.c.l.b16 %v5705
          %v5780 = vunpack.c.h.b16 %v5705
          %v5781 = vunpack.c.l.b16 %v5706
          %v5782 = vunpack.c.h.b16 %v5706
          %v5783 = vunpack.c.l.b16 %v5707
          %v5784 = vunpack.c.h.b16 %v5707
          %v5785 = vunpack.c.l.b16 %v5708
          %v5786 = vunpack.c.h.b16 %v5708
          %v5787 = vunpack.c.l.b16 %v5709
          %v5788 = vunpack.c.h.b16 %v5709
          %v5789 = vunpack.c.l.b16 %v5710
          %v5790 = vunpack.c.h.b16 %v5710
          %v5791 = vunpack.c.l.b16 %v5711
          %v5792 = vunpack.c.h.b16 %v5711
          %v5793 = vunpack.c.l.b16 %v5712
          %v5794 = vunpack.c.h.b16 %v5712
          %v5795 = vunpack.c.l.b16 %v5713
          %v5796 = vunpack.c.h.b16 %v5713
          %v5797 = vunpack.c.l.b16 %v5714
          %v5798 = vunpack.c.h.b16 %v5714
          %v5799 = vunpack.c.l.b16 %v5715
          %v5800 = vunpack.c.h.b16 %v5715
          %v5801 = vunpack.c.l.b16 %v5716
          %v5802 = vunpack.c.h.b16 %v5716
          %v5803 = vunpack.c.l.b16 %v5717
          %v5804 = vunpack.c.h.b16 %v5717
          %v5805 = vunpack.c.l.b16 %v5718
          %v5806 = vunpack.c.h.b16 %v5718
          %v5807 = vunpack.c.l.b16 %v5719
          %v5808 = vunpack.c.h.b16 %v5719
          %v5809 = vunpack.c.l.b16 %v5720
          %v5810 = vunpack.c.h.b16 %v5720
          %v5811 = vunpack.c.l.b16 %v5721
          %v5812 = vunpack.c.h.b16 %v5721
          %v5813 = vunpack.c.l.b16 %v5722
          %v5814 = vunpack.c.h.b16 %v5722
          %v5815 = vunpack.c.l.b16 %v5723
          %v5816 = vunpack.c.h.b16 %v5723
          %v5817 = vunpack.c.l.b16 %v5724
          %v5818 = vunpack.c.h.b16 %v5724
          %v5819 = vunpack.c.l.b16 %v5725
          %v5820 = vunpack.c.h.b16 %v5725
          %v5821 = vunpack.c.l.b16 %v5726
          %v5822 = vunpack.c.h.b16 %v5726
          %v5823 = vunpack.c.l.b16 %v5727
          %v5824 = vunpack.c.h.b16 %v5727
          %v5825 = vunpack.c.l.b16 %v5728
          %v5826 = vunpack.c.h.b16 %v5728
          %v5827 = vunpack.c.l.b16 %v5729
          %v5828 = vunpack.c.h.b16 %v5729
          %v5829 = vunpack.c.l.b16 %v5730
          %v5830 = vunpack.c.h.b16 %v5730
          %v5831 = vunpack.c.l.b16 %v5731
          %v5832 = vunpack.c.h.b16 %v5731
          %v5833 = vunpack.c.l.b16 %v5732
          %v5834 = vunpack.c.h.b16 %v5732
          %v5835 = vunpack.c.l.b16 %v5733
          %v5836 = vunpack.c.h.b16 %v5733
          %v5837 = vunpack.c.l.b16 %v5734
          %v5838 = vunpack.c.h.b16 %v5734
          %v5839 = vunpack.c.l.b16 %v5735
          %v5840 = vunpack.c.h.b16 %v5735
          %v5841 = vpack.c.b16 %v5781, %v5777
          %v5842 = vpack.c.b16 %v5782, %v5778
          %v5843 = vpack.c.b16 %v5783, %v5779
          %v5844 = vpack.c.b16 %v5784, %v5780
          %v5845 = vpack.c.b16 %v5789, %v5785
          %v5846 = vpack.c.b16 %v5790, %v5786
          %v5847 = vpack.c.b16 %v5791, %v5787
          %v5848 = vpack.c.b16 %v5792, %v5788
          %v5849 = vpack.c.b16 %v5797, %v5793
          %v5850 = vpack.c.b16 %v5798, %v5794
          %v5851 = vpack.c.b16 %v5799, %v5795
          %v5852 = vpack.c.b16 %v5800, %v5796
          %v5853 = vpack.c.b16 %v5805, %v5801
          %v5854 = vpack.c.b16 %v5806, %v5802
          %v5855 = vpack.c.b16 %v5807, %v5803
          %v5856 = vpack.c.b16 %v5808, %v5804
          %v5857 = vpack.c.b16 %v5813, %v5809
          %v5858 = vpack.c.b16 %v5814, %v5810
          %v5859 = vpack.c.b16 %v5815, %v5811
          %v5860 = vpack.c.b16 %v5816, %v5812
          %v5861 = vpack.c.b16 %v5821, %v5817
          %v5862 = vpack.c.b16 %v5822, %v5818
          %v5863 = vpack.c.b16 %v5823, %v5819
          %v5864 = vpack.c.b16 %v5824, %v5820
          %v5865 = vpack.c.b16 %v5829, %v5825
          %v5866 = vpack.c.b16 %v5830, %v5826
          %v5867 = vpack.c.b16 %v5831, %v5827
          %v5868 = vpack.c.b16 %v5832, %v5828
          %v5869 = vpack.c.b16 %v5837, %v5833
          %v5870 = vpack.c.b16 %v5838, %v5834
          %v5871 = vpack.c.b16 %v5839, %v5835
          %v5872 = vpack.c.b16 %v5840, %v5836
          %5905 = vmatprep.subr.bf16.mxu0 %v5870
          %5906 = vmatpush1.bf16.msra.mxu0 %v5869
          %5907 = vmatprep.subr.bf16.mxu0 %v5866
          %5908 = vmatpush1.bf16.msra.mxu0 %v5865
          %5909 = vmatprep.subr.bf16.mxu0 %v5862
          %5910 = vmatpush1.bf16.msra.mxu0 %v5861
          %5911 = vmatprep.subr.bf16.mxu0 %v5858
          %5912 = vmatpush1.bf16.msra.mxu0 %v5857
          %5913 = vmatprep.subr.bf16.mxu0 %v5854
          %5914 = vmatpush1.bf16.msra.mxu0 %v5853
          %5915 = vmatprep.subr.bf16.mxu0 %v5850
          %5916 = vmatpush1.bf16.msra.mxu0 %v5849
          %5917 = vmatprep.subr.bf16.mxu0 %v5846
          %5918 = vmatpush1.bf16.msra.mxu0 %v5845
          %5919 = vmatprep.subr.bf16.mxu0 %v5842
          %5920 = vmatpush1.bf16.msra.mxu0 %v5841
          %5921 = vmatprep.subr.bf16.mxu0 0
          %5922 = vmatpush2.bf16.msra.mxu0 0
          %5923 = vmatprep.subr.bf16.mxu0 0
          %5924 = vmatpush2.bf16.msra.mxu0 0
          %5925 = vmatprep.subr.bf16.mxu0 0
          %5926 = vmatpush2.bf16.msra.mxu0 0
          %5927 = vmatprep.subr.bf16.mxu0 0
          %5928 = vmatpush2.bf16.msra.mxu0 0
          %5929 = vmatprep.subr.bf16.mxu0 0
          %5930 = vmatpush2.bf16.msra.mxu0 0
          %5931 = vmatprep.subr.bf16.mxu0 0
          %5932 = vmatpush2.bf16.msra.mxu0 0
          %5933 = vmatprep.subr.bf16.mxu0 0
          %5934 = vmatpush2.bf16.msra.mxu0 0
          %5935 = vmatprep.subr.bf16.mxu0 0
          %5936 = vmatpush2.bf16.msra.mxu0 0
          %5937 = vmatprep.mubr.bf16.mxu0 0
          %5938 = vmatmul.mubr.bf16.gmra.mxu0 %v5703
          %v5939 = vpop.f32.mrf.mxu0
          %v5940 = vadd.f32 %v5741, %v5939
          %v5941 = vpop.f32.mrf.mxu0
          %v5942 = vadd.f32 %v5742, %v5941
          %v5943 = vpop.f32.mrf.mxu0
          %v5944 = vpop.f32.mrf.mxu0
          %5945 = vdwg.mxu0
          %5946 = vmatprep.subr.bf16.mxu0 %v5872
          %5947 = vmatpush1.bf16.msra.mxu0 %v5871
          %5948 = vmatprep.subr.bf16.mxu0 %v5868
          %5949 = vmatpush1.bf16.msra.mxu0 %v5867
          %5950 = vmatprep.subr.bf16.mxu0 %v5864
          %5951 = vmatpush1.bf16.msra.mxu0 %v5863
          %5952 = vmatprep.subr.bf16.mxu0 %v5860
          %5953 = vmatpush1.bf16.msra.mxu0 %v5859
          %5954 = vmatprep.subr.bf16.mxu0 %v5856
          %5955 = vmatpush1.bf16.msra.mxu0 %v5855
          %5956 = vmatprep.subr.bf16.mxu0 %v5852
          %5957 = vmatpush1.bf16.msra.mxu0 %v5851
          %5958 = vmatprep.subr.bf16.mxu0 %v5848
          %5959 = vmatpush1.bf16.msra.mxu0 %v5847
          %5960 = vmatprep.subr.bf16.mxu0 %v5844
          %5961 = vmatpush1.bf16.msra.mxu0 %v5843
          %5962 = vmatprep.subr.bf16.mxu0 0
          %5963 = vmatpush2.bf16.msra.mxu0 0
          %5964 = vmatprep.subr.bf16.mxu0 0
          %5965 = vmatpush2.bf16.msra.mxu0 0
          %5966 = vmatprep.subr.bf16.mxu0 0
          %5967 = vmatpush2.bf16.msra.mxu0 0
          %5968 = vmatprep.subr.bf16.mxu0 0
          %5969 = vmatpush2.bf16.msra.mxu0 0
          %5970 = vmatprep.subr.bf16.mxu0 0
          %5971 = vmatpush2.bf16.msra.mxu0 0
          %5972 = vmatprep.subr.bf16.mxu0 0
          %5973 = vmatpush2.bf16.msra.mxu0 0
          %5974 = vmatprep.subr.bf16.mxu0 0
          %5975 = vmatpush2.bf16.msra.mxu0 0
          %5976 = vmatprep.subr.bf16.mxu0 0
          %5977 = vmatpush2.bf16.msra.mxu0 0
          %5978 = vmatprep.mubr.bf16.mxu0 0
          %5979 = vmatmul.mubr.bf16.gmra.mxu0 %v5703
          %v5980 = vpop.f32.mrf.mxu0
          %v5981 = vadd.f32 %v5743, %v5980
          %v5982 = vpop.f32.mrf.mxu0
          %v5983 = vadd.f32 %v5744, %v5982
          %v5984 = vpop.f32.mrf.mxu0
          %v5985 = vpop.f32.mrf.mxu0
          %5986 = vdwg.mxu0
          %v5987 = vadd.f32 %v5940, %v3702
          %v5988 = vadd.f32 %v5942, %v3706
          %v5989 = vadd.f32 %v5981, %v3710
          %v5990 = vadd.f32 %v5983, %v3714
          %v5991 = vxor.u32 %v5987, 2147483648
          %v5992 = vxor.u32 %v5988, 2147483648
          %v5993 = vxor.u32 %v5989, 2147483648
          %v5994 = vmul.f32 %v5991, 1.442695
          %v5995 = vpow.pop %v5994
          %v5996 = vmul.f32 %v5992, 1.442695
          %v5997 = vpow.pop %v5996
          %v5998 = vmul.f32 %v5993, 1.442695
          %v5999 = vpow.pop %v5998
          %v6000 = vadd.f32 %v5995, 1.0
          %v6001 = vadd.f32 %v5997, 1.0
          %v6002 = vadd.f32 %v5999, 1.0
          %v6003 = vrcp.pop %v6000
          %v6004 = vmul.f32 1.0, %v6003
          %v6005 = vrcp.pop %v6001
          %v6006 = vmul.f32 1.0, %v6005
          %v6007 = vrcp.pop %v6002
          %v6008 = vmul.f32 1.0, %v6007
          %v6009 = vtanh.pop %v5990
          %v6010 = vmul.f32 %v6006, %v5700
          %v6011 = vmul.f32 %v6004, %v6009
          %v6012 = vadd.f32 %v6010, %v6011
          %v6013 = vtanh.pop %v6012
          %v6014 = vmul.f32 %v6008, %v6013
          %vm6015 = vcmp.gt.s32.totalorder %v795, 0
          %v6016 = vsel %vm6015, 1, 0
          %v6017 = vcvt.s32.f32 %v6016
          %6019 = vset.pattern.permute.xlu0 0
          %6020 = vperm.xlu0 %6019, %v6017
          %v6021 = vpop.permute.xlu0 %6020
          %v6023 = vmul.f32 %v6014, %v6021
          %6024 = vst [vmem:[%s307] sm:$0xff] %v6023
        $region60: #{tpu_custom_call.1} parent=39 // pred_fallthru
          _
        %s6025 = sand.u32 %s151, 1
        %s6026 = scalar_lea.sflag [#allocation5], %s6025
        %s6027 = sand.u32 %s151, 1
        %s6028 = smul.addr %s6027, 64
        %s6029 = scalar_lea.vmem [#allocation9], %s6028
        // Predicated region
        $region61: #{tpu_custom_call.1} parent=39 // pred_check
          %p6030 = pneg %p161
        $region62: #{tpu_custom_call.1} parent=39 // pred_check_branch
          %6032 = sbr.rel (%p6030) target = $region64
        $region63: #{tpu_custom_call.1} parent=39 // pred_region
          %s6034 = ssub.s32 1024, 1024
          %6035 = vsyncadd %s6026, %s6034
          %s6036 = smul.addr %s23, 128
          %s6037 = scalar_lea.hbm %s5, %s6036
          %s6038 = sshll.u32 %s6029, 4
          %s6039 = int_to_ptr.vmem [resolvable:$true] %s6038
          %6044 = dma.vmem_to_hbm [thread:$0]  %s6039, 1024, %s6037, %s6026, 128, 256, 8
        $region64: #{tpu_custom_call.1} parent=39 // pred_fallthru
          _
      $region40: #{tpu_custom_call.1} parent=5 // pred_fallthru
        _
      %p6045 = scmp.le.s32.totalorder 2, %s18
      // Predicated region
      $region65: #{tpu_custom_call.1} parent=5 // pred_check
        %p6046 = pneg %p6045
      $region66: #{tpu_custom_call.1} parent=5 // pred_check_branch
        %6048 = sbr.rel (%p6046) target = $region68
      $region67: #{tpu_custom_call.1} parent=5 // pred_region
        %s6049 = ssub.s32 %s18, 2
        // Predicated region
        $region69: #{tpu_custom_call.1} parent=67 // pred_check
          %p6050 = pneg %p167
        $region70: #{tpu_custom_call.1} parent=67 // pred_check_branch
          %6052 = sbr.rel (%p6050) target = $region72
        $region71: #{tpu_custom_call.1} parent=67 // pred_region
          %s6053 = sand.u32 %s152, 1
          %s6054 = scalar_lea.sflag [#allocation5], %s6053
          %s6055 = sand.u32 %s152, 1
          %s6056 = smul.addr %s6055, 64
          %s6057 = scalar_lea.vmem [#allocation9], %s6056
          %6058 = dma.done %s6054, 1024
        $region72: #{tpu_custom_call.1} parent=67 // pred_fallthru
          _
      $region68: #{tpu_custom_call.1} parent=5 // pred_fallthru
        _
    $region6: #{tpu_custom_call.1} parent=1 // loop_footer
      %s22 = sadd.s32 1, %s18
    $region7: #{tpu_custom_call.1} parent=1 // loop_footer_branch
      %17 = sbr.rel target = $region3
    $region8: #{tpu_custom_call.1} parent=1 // loop_exit
      _
    %6059 = vsyncpa [#allocation4], 1
    %s6060 = scalar_lea.sflag [#allocation4], 1
    %6061 = vsyncpa %s6060, 1
    %6062 = vsyncpa [#allocation7], 1
    %s6063 = scalar_lea.sflag [#allocation7], 1
    %6064 = vsyncpa %s6063, 1
    %6065 = vsyncpa [#allocation5], 1
    %s6066 = scalar_lea.sflag [#allocation5], 1
    %6067 = vsyncpa %s6066, 1

</llo_original>
